<compile_context>
chip_gen: v7x
topology: tpu7x:2x2x1
jax: 0.10.0
libtpu: 0.0.40
codegen_flags: <defaults>
</compile_context>

<pallas_src>
import math
from functools import partial

import jax
import jax.numpy as jnp
from jax.experimental import pallas as pl
from jax.experimental.pallas import tpu as pltpu


def _round_up(x, m):
    return (x + m - 1) // m * m


# ---------------------------------------------------------------------------
# Pallas kernel: tiled matmul + bias (+ReLU) for the conv (im2col) layers
# ---------------------------------------------------------------------------

def _dense_kernel(x_ref, w_ref, b_ref, o_ref, *, relu):
    y = jnp.dot(x_ref[...].astype(jnp.bfloat16),
                w_ref[...].astype(jnp.bfloat16),
                preferred_element_type=jnp.float32)
    y = y + b_ref[...]
    if relu:
        y = jnp.maximum(y, 0.0)
    o_ref[...] = y.astype(o_ref.dtype)


def dense(x, w, b, relu=False, tile_cap=2048):
    """(M, K) @ (K, N) + b, optional ReLU.  M tiled with large blocks; K, N whole."""
    M, K = x.shape
    N = w.shape[1]
    if M <= tile_cap:
        tm, Mp = M, M
    else:
        tm = next((t for t in (2048, 1024, 512, 256, 128, 64, 32, 16, 8) if M % t == 0), 8)
        Mp = _round_up(M, tm)
    if Mp != M:  # not hit for this model's shapes (4096 / 1024 / 256)
        x = jnp.pad(x, ((0, Mp - M), (0, 0)))
    out = pl.pallas_call(
        partial(_dense_kernel, relu=relu),
        out_shape=jax.ShapeDtypeStruct((Mp, N), jnp.float32),
        grid=(Mp // tm,),
        in_specs=[
            pl.BlockSpec((tm, K), lambda i: (i, 0)),
            pl.BlockSpec((K, N), lambda i: (0, 0)),
            pl.BlockSpec((1, N), lambda i: (0, 0)),
        ],
        out_specs=pl.BlockSpec((tm, N), lambda i: (i, 0)),
        compiler_params=pltpu.CompilerParams(dimension_semantics=("parallel",)),
    )(x, w, b.reshape(1, N))
    return out if Mp == M else out[:M]


# ---------------------------------------------------------------------------
# Pallas kernel: fused tail
#   fc1 -> fc2 -> contextnorm -> +pos-emb -> (fused-QKV MHA, O-proj, LN1,
#   FF1, FF2, LN2, final LN) -> mean-pool over T -> output linear
# All operands are whole-array VMEM blocks (B*T = 16 rows, D = 128).
# ---------------------------------------------------------------------------

def _tail_kernel(x_ref, fc1w_ref, fc1b_ref, fc2w_ref, fc2b_ref,
                 g_ref, bta_ref, pe_ref,
                 wqkv_ref, bqkv_ref, wo_ref, bo_ref,
                 ln1g_ref, ln1b_ref,
                 ff1w_ref, ff1b_ref, ff2w_ref, ff2b_ref,
                 ln2g_ref, ln2b_ref, lnfg_ref, lnfb_ref,
                 outw_ref, outb_ref,
                 o_ref,
                 *, B, T, num_heads, ln_eps, cn_eps):

    def mm(a, wmat):
        # bf16 MXU operands, f32 accumulation
        return jnp.dot(a.astype(jnp.bfloat16), wmat.astype(jnp.bfloat16),
                       preferred_element_type=jnp.float32)

    def layernorm(t, g, bb):
        mu = jnp.mean(t, axis=-1, keepdims=True)
        var = jnp.mean((t - mu) ** 2, axis=-1, keepdims=True)   # biased, torch LayerNorm
        return (t - mu) * jax.lax.rsqrt(var + ln_eps) * g + bb

    # ---- encoder FC tail ----
    x = x_ref[...].astype(jnp.float32)                                    # (B*T, 512)
    h = jnp.maximum(mm(x, fc1w_ref[...]) + fc1b_ref[...], 0.0)            # (B*T, 256)
    z = jnp.maximum(mm(h, fc2w_ref[...]) + fc2b_ref[...], 0.0)            # (B*T, 128)

    D = z.shape[-1]
    dh = D // num_heads
    gamma = g_ref[...]
    beta = bta_ref[...]
    pe = pe_ref[...]

    # ---- context norm (per batch, over T, unbiased var) + positional encoding ----
    parts = []
    for b in range(B):
        zb = z[b * T:(b + 1) * T, :]                                      # (T, D)
        mu = jnp.mean(zb, axis=0, keepdims=True)
        var = jnp.sum((zb - mu) ** 2, axis=0, keepdims=True) / (T - 1)
        zb = (zb - mu) / jnp.sqrt(var + cn_eps)
        zb = zb * gamma + beta
        parts.append(zb + pe)
    s = jnp.concatenate(parts, axis=0)                                    # (B*T, D)

    # ---- multi-head self-attention (fused QKV projection) ----
    qkv = mm(s, wqkv_ref[...]) + bqkv_ref[...]                            # (B*T, 3D)
    q = qkv[:, :D]
    k = qkv[:, D:2 * D]
    v = qkv[:, 2 * D:]
    scale = 1.0 / math.sqrt(dh)

    attn_parts = []
    for b in range(B):
        qb = q[b * T:(b + 1) * T, :]
        kb = k[b * T:(b + 1) * T, :]
        vb = v[b * T:(b + 1) * T, :]
        head_outs = []
        for hh in range(num_heads):
            sl = slice(hh * dh, (hh + 1) * dh)
            sc = jnp.dot(qb[:, sl], kb[:, sl].T,
                         preferred_element_type=jnp.float32) * scale      # (T, T)
            sc = sc - jnp.max(sc, axis=-1, keepdims=True)
            p = jnp.exp(sc)
            p = p / jnp.sum(p, axis=-1, keepdims=True)
            head_outs.append(jnp.dot(p, vb[:, sl],
                                     preferred_element_type=jnp.float32))  # (T, dh)
        attn_parts.append(jnp.concatenate(head_outs, axis=-1))            # (T, D)
    attn = jnp.concatenate(attn_parts, axis=0)                            # (B*T, D)
    attn = mm(attn, wo_ref[...]) + bo_ref[...]

    # ---- post-norm transformer encoder layer + final encoder LayerNorm ----
    h1 = layernorm(s + attn, ln1g_ref[...], ln1b_ref[...])
    ff = jnp.maximum(mm(h1, ff1w_ref[...]) + ff1b_ref[...], 0.0)
    ff = mm(ff, ff2w_ref[...]) + ff2b_ref[...]
    h2 = layernorm(h1 + ff, ln2g_ref[...], ln2b_ref[...])
    hf = layernorm(h2, lnfg_ref[...], lnfb_ref[...])                      # final norm (no residual)

    # ---- mean-pool over sequence + output linear ----
    pooled = jnp.concatenate(
        [jnp.mean(hf[b * T:(b + 1) * T, :], axis=0, keepdims=True) for b in range(B)],
        axis=0)                                                           # (B, D)
    logits = jnp.dot(pooled, outw_ref[...],
                     preferred_element_type=jnp.float32) + outb_ref[...]  # (B, y_dim)
    o_ref[...] = logits.astype(o_ref.dtype)


def fused_tail(feat, p, pe, B, T):
    y_dim = p["out_w"].shape[1]
    # fc1 rows are stored in torch NCHW-flatten order (c*16 + h*4 + w); permute to the
    # NHWC-flatten order (h*128 + w*32 + c) produced by the conv path.
    fc1_w = p["fc1_w"].reshape(32, 4, 4, 256).transpose(1, 2, 0, 3).reshape(512, 256)
    kernel = partial(_tail_kernel, B=B, T=T, num_heads=8, ln_eps=1e-5, cn_eps=1e-8)
    return pl.pallas_call(
        kernel,
        out_shape=jax.ShapeDtypeStruct((B, y_dim), jnp.float32),
    )(
        feat,
        fc1_w, p["fc1_b"].reshape(1, -1),
        p["fc2_w"], p["fc2_b"].reshape(1, -1),
        p["gamma"].reshape(1, -1), p["beta"].reshape(1, -1), pe,
        p["wqkv"], p["bqkv"].reshape(1, -1),
        p["wo"], p["bo"].reshape(1, -1),
        p["ln1_g"].reshape(1, -1), p["ln1_b"].reshape(1, -1),
        p["ff1_w"], p["ff1_b"].reshape(1, -1),
        p["ff2_w"], p["ff2_b"].reshape(1, -1),
        p["ln2_g"].reshape(1, -1), p["ln2_b"].reshape(1, -1),
        p["lnf_g"].reshape(1, -1), p["lnf_b"].reshape(1, -1),
        p["out_w"], p["out_b"].reshape(1, -1),
    )


# ---------------------------------------------------------------------------
# Conv encoder glue (NHWC throughout, torch-layout weights permuted once)
# ---------------------------------------------------------------------------

def im2col_nhwc(x, kh, kw, stride, pad):
    """x: (N, H, W, C) -> (N*OH*OW, kh*kw*C), columns ordered (kh, kw, Cin)."""
    xp = jnp.pad(x, ((0, 0), (pad, pad), (pad, pad), (0, 0)))
    N, H, W, C = xp.shape
    OH = (H - kh) // stride + 1
    OW = (W - kw) // stride + 1
    patches = []
    for i in range(kh):
        for j in range(kw):
            patches.append(xp[:, i:i + stride * OH:stride, j:j + stride * OW:stride, :])
    cols = jnp.stack(patches, axis=3)                      # (N, OH, OW, kh*kw, C)
    return cols.reshape(N * OH * OW, kh * kw * C), OH, OW


def conv2d_relu_nhwc(x, w, b, stride=2, pad=1):
    """NHWC conv using torch weight layout (Cout, Cin, KH, KW) via im2col + Pallas matmul."""
    Cout, Cin, KH, KW = w.shape
    N = x.shape[0]
    cols, OH, OW = im2col_nhwc(x, KH, KW, stride, pad)
    wmat = jnp.transpose(w, (2, 3, 1, 0)).reshape(KH * KW * Cin, Cout)   # (kh*kw*Cin, Cout)
    y = dense(cols, wmat, b, relu=True)                    # (N*OH*OW, Cout)
    return y.reshape(N, OH, OW, Cout)                      # stays NHWC


def encoder_conv_feats(x_nhwc, p):
    """x: (N, 32, 32, 1) -> (N, 512) flattened conv3 features (NHWC order)."""
    h = conv2d_relu_nhwc(x_nhwc, p["conv1_w"], p["conv1_b"])   # (N, 16, 16, 32)
    h = conv2d_relu_nhwc(h, p["conv2_w"], p["conv2_b"])        # (N, 8, 8, 32)
    h = conv2d_relu_nhwc(h, p["conv3_w"], p["conv3_b"])        # (N, 4, 4, 32)
    return h.reshape(h.shape[0], -1)                           # (N, 512), (h, w, c) order


def sinusoidal_pe(T, D):
    pos = jnp.arange(T, dtype=jnp.float32)[:, None]
    div = jnp.exp(jnp.arange(0, D, 2, dtype=jnp.float32) * (-math.log(10000.0) / D))
    pe = jnp.zeros((T, D), jnp.float32)
    pe = pe.at[:, 0::2].set(jnp.sin(pos * div))
    pe = pe.at[:, 1::2].set(jnp.cos(pos * div))
    return pe


def esbn_trans_forward(x, params):
    """x: (B, T, 32, 32) float32 -> (logits (B, y_dim), y_pred (B,))."""
    B, T = x.shape[0], x.shape[1]
    x_nhwc = x.reshape(B * T, 32, 32, 1)                       # C=1, so NHWC == NCHW data
    feat = encoder_conv_feats(x_nhwc, params)                  # (B*T, 512)
    # TODO(synk): PositionalEncoding source not provided; standard sinusoidal PE added
    #             over the sequence axis (dropout omitted, eval mode).
    pe = sinusoidal_pe(T, 128)                                 # static -> constant under jit
    logits = fused_tail(feat, params, pe, B, T)
    y_pred = jnp.argmax(logits, axis=1)
    return logits, y_pred


# ---------------------------------------------------------------------------
# Parameter init (torch layouts: conv (Cout,Cin,KH,KW); linears stored as (in, out))
# ---------------------------------------------------------------------------

def init_params(key, y_dim=4):
    ks = jax.random.split(key, 12)

    def kaiming(k, shape, fan_in):
        return jax.random.normal(k, shape, jnp.float32) * math.sqrt(2.0 / fan_in)

    D, FF = 128, 512
    return {
        # Encoder_conv
        "conv1_w": kaiming(ks[0], (32, 1, 4, 4), 1 * 16),
        "conv1_b": jnp.zeros((32,), jnp.float32),
        "conv2_w": kaiming(ks[1], (32, 32, 4, 4), 32 * 16),
        "conv2_b": jnp.zeros((32,), jnp.float32),
        "conv3_w": kaiming(ks[2], (32, 32, 4, 4), 32 * 16),
        "conv3_b": jnp.zeros((32,), jnp.float32),
        "fc1_w": kaiming(ks[3], (512, 256), 512),
        "fc1_b": jnp.zeros((256,), jnp.float32),
        "fc2_w": kaiming(ks[4], (256, 128), 256),
        "fc2_b": jnp.zeros((128,), jnp.float32),
        # context norm
        "gamma": jnp.ones((128,), jnp.float32),
        "beta": jnp.zeros((128,), jnp.float32),
        # transformer encoder layer (d_model=128, nhead=8, ff=512), fused QKV
        "wqkv": kaiming(ks[5], (D, 3 * D), D),
        "bqkv": jnp.zeros((3 * D,), jnp.float32),
        "wo": kaiming(ks[6], (D, D), D),
        "bo": jnp.zeros((D,), jnp.float32),
        "ln1_g": jnp.ones((D,), jnp.float32), "ln1_b": jnp.zeros((D,), jnp.float32),
        "ff1_w": kaiming(ks[7], (D, FF), D), "ff1_b": jnp.zeros((FF,), jnp.float32),
        "ff2_w": kaiming(ks[8], (FF, D), FF), "ff2_b": jnp.zeros((D,), jnp.float32),
        "ln2_g": jnp.ones((D,), jnp.float32), "ln2_b": jnp.zeros((D,), jnp.float32),
        "lnf_g": jnp.ones((D,), jnp.float32), "lnf_b": jnp.zeros((D,), jnp.float32),
        # output mlp
        "out_w": kaiming(ks[9], (D, y_dim), D),
        "out_b": jnp.zeros((y_dim,), jnp.float32),
    }


if __name__ == "__main__":
    key = jax.random.PRNGKey(0)
    kx, kp = jax.random.split(key)
    B, T, Y = 2, 8, 4
    x = jax.random.normal(kx, (B, T, 32, 32), jnp.float32)
    params = init_params(kp, y_dim=Y)

    logits, y_pred = jax.jit(esbn_trans_forward)(x, params)
    jax.block_until_ready((logits, y_pred))
    assert logits.shape == (B, Y) and y_pred.shape == (B,)
    print("KERNEL_OK")
</pallas_src>

<mosaic_0001>
module attributes {stable_mosaic.version = 11 : i64} {
  func.func @_dense_kernel(%arg0: i32, %arg1: memref<2048x16xf32, #tpu.memory_space<vmem>>, %arg2: memref<16x32xf32, #tpu.memory_space<vmem>>, %arg3: memref<1x32xf32, #tpu.memory_space<vmem>>, %arg4: memref<2048x32xf32, #tpu.memory_space<vmem>>) attributes {dimension_semantics = [#tpu.dimension_semantics<parallel>], iteration_bounds = array<i64: 2>, scalar_prefetch = 0 : i64, scratch_operands = 0 : i64, tpu.core_type = #tpu.core_type<tc>, window_params = [{transform_indices = @transform_0, window_bounds = array<i64: 2048, 16>}, {pipeline_mode = #tpu.pipeline_mode<synchronous>, transform_indices = @transform_1, window_bounds = array<i64: 16, 32>}, {pipeline_mode = #tpu.pipeline_mode<synchronous>, transform_indices = @transform_2, window_bounds = array<i64: 1, 32>}, {transform_indices = @transform_3, window_bounds = array<i64: 2048, 32>}]} {
    %c0 = arith.constant 0 : index
    %c0_0 = arith.constant 0 : index
    %0 = vector.load %arg1[%c0, %c0_0] : memref<2048x16xf32, #tpu.memory_space<vmem>>, vector<2048x16xf32>
    %1 = arith.truncf %0 : vector<2048x16xf32> to vector<2048x16xbf16>
    %c0_1 = arith.constant 0 : index
    %c0_2 = arith.constant 0 : index
    %2 = vector.load %arg2[%c0_1, %c0_2] : memref<16x32xf32, #tpu.memory_space<vmem>>, vector<16x32xf32>
    %3 = arith.truncf %2 : vector<16x32xf32> to vector<16x32xbf16>
    %cst = arith.constant dense<0.000000e+00> : vector<2048x32xf32>
    %4 = tpu.matmul %1, %3, %cst {dimension_numbers = #tpu.dot_dimension_numbers<[1], [0], [0], [1], [0, 0, 1, 1], [], []>} : vector<2048x16xbf16>, vector<16x32xbf16>, vector<2048x32xf32> -> vector<2048x32xf32>
    %c0_3 = arith.constant 0 : index
    %c0_4 = arith.constant 0 : index
    %5 = vector.load %arg3[%c0_3, %c0_4] : memref<1x32xf32, #tpu.memory_space<vmem>>, vector<1x32xf32>
    %6 = vector.broadcast %5 : vector<1x32xf32> to vector<2048x32xf32>
    %7 = arith.addf %4, %6 : vector<2048x32xf32>
    %cst_5 = arith.constant 0.000000e+00 : f32
    %8 = vector.broadcast %cst_5 : f32 to vector<2048x32xf32>
    %9 = arith.maximumf %7, %8 : vector<2048x32xf32>
    %c0_6 = arith.constant 0 : index
    %c0_7 = arith.constant 0 : index
    %10 = vector.load %arg4[%c0_6, %c0_7] : memref<2048x32xf32, #tpu.memory_space<vmem>>, vector<2048x32xf32>
    tpu.vector_store %arg4[%c0_6, %c0_7], %9 {strides = array<i32>} : memref<2048x32xf32, #tpu.memory_space<vmem>>, vector<2048x32xf32>,
    return
  }
  func.func @transform_0(%arg0: i32) -> (i32, i32) {
    %c0_i32 = arith.constant 0 : i32
    %c0_i32_0 = arith.constant 0 : i32
    return %arg0, %c0_i32 : i32, i32
  }
  func.func @transform_1(%arg0: i32) -> (i32, i32) {
    %c0_i32 = arith.constant 0 : i32
    %c0_i32_0 = arith.constant 0 : i32
    %c0_i32_1 = arith.constant 0 : i32
    return %c0_i32, %c0_i32_0 : i32, i32
  }
  func.func @transform_2(%arg0: i32) -> (i32, i32) {
    %c0_i32 = arith.constant 0 : i32
    %c0_i32_0 = arith.constant 0 : i32
    %c0_i32_1 = arith.constant 0 : i32
    return %c0_i32, %c0_i32_0 : i32, i32
  }
  func.func @transform_3(%arg0: i32) -> (i32, i32) {
    %c0_i32 = arith.constant 0 : i32
    %c0_i32_0 = arith.constant 0 : i32
    return %arg0, %c0_i32 : i32, i32
  }
}

module attributes {stable_mosaic.version = 11 : i64} {
  func.func @_dense_kernel(%arg0: i32, %arg1: memref<1024x512xf32, #tpu.memory_space<vmem>>, %arg2: memref<512x32xf32, #tpu.memory_space<vmem>>, %arg3: memref<1x32xf32, #tpu.memory_space<vmem>>, %arg4: memref<1024x32xf32, #tpu.memory_space<vmem>>) attributes {dimension_semantics = [#tpu.dimension_semantics<parallel>], iteration_bounds = array<i64: 1>, scalar_prefetch = 0 : i64, scratch_operands = 0 : i64, tpu.core_type = #tpu.core_type<tc>, window_params = [{transform_indices = @transform_0, window_bounds = array<i64: 1024, 512>}, {pipeline_mode = #tpu.pipeline_mode<synchronous>, transform_indices = @transform_1, window_bounds = array<i64: 512, 32>}, {pipeline_mode = #tpu.pipeline_mode<synchronous>, transform_indices = @transform_2, window_bounds = array<i64: 1, 32>}, {transform_indices = @transform_3, window_bounds = array<i64: 1024, 32>}]} {
    %c0 = arith.constant 0 : index
    %c0_0 = arith.constant 0 : index
    %0 = vector.load %arg1[%c0, %c0_0] : memref<1024x512xf32, #tpu.memory_space<vmem>>, vector<1024x512xf32>
    %1 = arith.truncf %0 : vector<1024x512xf32> to vector<1024x512xbf16>
    %c0_1 = arith.constant 0 : index
    %c0_2 = arith.constant 0 : index
    %2 = vector.load %arg2[%c0_1, %c0_2] : memref<512x32xf32, #tpu.memory_space<vmem>>, vector<512x32xf32>
    %3 = arith.truncf %2 : vector<512x32xf32> to vector<512x32xbf16>
    %cst = arith.constant dense<0.000000e+00> : vector<1024x32xf32>
    %4 = tpu.matmul %1, %3, %cst {dimension_numbers = #tpu.dot_dimension_numbers<[1], [0], [0], [1], [0, 0, 1, 1], [], []>} : vector<1024x512xbf16>, vector<512x32xbf16>, vector<1024x32xf32> -> vector<1024x32xf32>
    %c0_3 = arith.constant 0 : index
    %c0_4 = arith.constant 0 : index
    %5 = vector.load %arg3[%c0_3, %c0_4] : memref<1x32xf32, #tpu.memory_space<vmem>>, vector<1x32xf32>
    %6 = vector.broadcast %5 : vector<1x32xf32> to vector<1024x32xf32>
    %7 = arith.addf %4, %6 : vector<1024x32xf32>
    %cst_5 = arith.constant 0.000000e+00 : f32
    %8 = vector.broadcast %cst_5 : f32 to vector<1024x32xf32>
    %9 = arith.maximumf %7, %8 : vector<1024x32xf32>
    %c0_6 = arith.constant 0 : index
    %c0_7 = arith.constant 0 : index
    %10 = vector.load %arg4[%c0_6, %c0_7] : memref<1024x32xf32, #tpu.memory_space<vmem>>, vector<1024x32xf32>
    tpu.vector_store %arg4[%c0_6, %c0_7], %9 {strides = array<i32>} : memref<1024x32xf32, #tpu.memory_space<vmem>>, vector<1024x32xf32>,
    return
  }
  func.func @transform_0(%arg0: i32) -> (i32, i32) {
    %c0_i32 = arith.constant 0 : i32
    %c0_i32_0 = arith.constant 0 : i32
    return %arg0, %c0_i32 : i32, i32
  }
  func.func @transform_1(%arg0: i32) -> (i32, i32) {
    %c0_i32 = arith.constant 0 : i32
    %c0_i32_0 = arith.constant 0 : i32
    %c0_i32_1 = arith.constant 0 : i32
    return %c0_i32, %c0_i32_0 : i32, i32
  }
  func.func @transform_2(%arg0: i32) -> (i32, i32) {
    %c0_i32 = arith.constant 0 : i32
    %c0_i32_0 = arith.constant 0 : i32
    %c0_i32_1 = arith.constant 0 : i32
    return %c0_i32, %c0_i32_0 : i32, i32
  }
  func.func @transform_3(%arg0: i32) -> (i32, i32) {
    %c0_i32 = arith.constant 0 : i32
    %c0_i32_0 = arith.constant 0 : i32
    return %arg0, %c0_i32 : i32, i32
  }
}

module attributes {stable_mosaic.version = 11 : i64} {
  func.func @_dense_kernel(%arg0: i32, %arg1: memref<256x512xf32, #tpu.memory_space<vmem>>, %arg2: memref<512x32xf32, #tpu.memory_space<vmem>>, %arg3: memref<1x32xf32, #tpu.memory_space<vmem>>, %arg4: memref<256x32xf32, #tpu.memory_space<vmem>>) attributes {dimension_semantics = [#tpu.dimension_semantics<parallel>], iteration_bounds = array<i64: 1>, scalar_prefetch = 0 : i64, scratch_operands = 0 : i64, tpu.core_type = #tpu.core_type<tc>, window_params = [{transform_indices = @transform_0, window_bounds = array<i64: 256, 512>}, {pipeline_mode = #tpu.pipeline_mode<synchronous>, transform_indices = @transform_1, window_bounds = array<i64: 512, 32>}, {pipeline_mode = #tpu.pipeline_mode<synchronous>, transform_indices = @transform_2, window_bounds = array<i64: 1, 32>}, {transform_indices = @transform_3, window_bounds = array<i64: 256, 32>}]} {
    %c0 = arith.constant 0 : index
    %c0_0 = arith.constant 0 : index
    %0 = vector.load %arg1[%c0, %c0_0] : memref<256x512xf32, #tpu.memory_space<vmem>>, vector<256x512xf32>
    %1 = arith.truncf %0 : vector<256x512xf32> to vector<256x512xbf16>
    %c0_1 = arith.constant 0 : index
    %c0_2 = arith.constant 0 : index
    %2 = vector.load %arg2[%c0_1, %c0_2] : memref<512x32xf32, #tpu.memory_space<vmem>>, vector<512x32xf32>
    %3 = arith.truncf %2 : vector<512x32xf32> to vector<512x32xbf16>
    %cst = arith.constant dense<0.000000e+00> : vector<256x32xf32>
    %4 = tpu.matmul %1, %3, %cst {dimension_numbers = #tpu.dot_dimension_numbers<[1], [0], [0], [1], [0, 0, 1, 1], [], []>} : vector<256x512xbf16>, vector<512x32xbf16>, vector<256x32xf32> -> vector<256x32xf32>
    %c0_3 = arith.constant 0 : index
    %c0_4 = arith.constant 0 : index
    %5 = vector.load %arg3[%c0_3, %c0_4] : memref<1x32xf32, #tpu.memory_space<vmem>>, vector<1x32xf32>
    %6 = vector.broadcast %5 : vector<1x32xf32> to vector<256x32xf32>
    %7 = arith.addf %4, %6 : vector<256x32xf32>
    %cst_5 = arith.constant 0.000000e+00 : f32
    %8 = vector.broadcast %cst_5 : f32 to vector<256x32xf32>
    %9 = arith.maximumf %7, %8 : vector<256x32xf32>
    %c0_6 = arith.constant 0 : index
    %c0_7 = arith.constant 0 : index
    %10 = vector.load %arg4[%c0_6, %c0_7] : memref<256x32xf32, #tpu.memory_space<vmem>>, vector<256x32xf32>
    tpu.vector_store %arg4[%c0_6, %c0_7], %9 {strides = array<i32>} : memref<256x32xf32, #tpu.memory_space<vmem>>, vector<256x32xf32>,
    return
  }
  func.func @transform_0(%arg0: i32) -> (i32, i32) {
    %c0_i32 = arith.constant 0 : i32
    %c0_i32_0 = arith.constant 0 : i32
    return %arg0, %c0_i32 : i32, i32
  }
  func.func @transform_1(%arg0: i32) -> (i32, i32) {
    %c0_i32 = arith.constant 0 : i32
    %c0_i32_0 = arith.constant 0 : i32
    %c0_i32_1 = arith.constant 0 : i32
    return %c0_i32, %c0_i32_0 : i32, i32
  }
  func.func @transform_2(%arg0: i32) -> (i32, i32) {
    %c0_i32 = arith.constant 0 : i32
    %c0_i32_0 = arith.constant 0 : i32
    %c0_i32_1 = arith.constant 0 : i32
    return %c0_i32, %c0_i32_0 : i32, i32
  }
  func.func @transform_3(%arg0: i32) -> (i32, i32) {
    %c0_i32 = arith.constant 0 : i32
    %c0_i32_0 = arith.constant 0 : i32
    return %arg0, %c0_i32 : i32, i32
  }
}

module attributes {stable_mosaic.version = 11 : i64} {
  func.func @_tail_kernel(%arg0: memref<16x512xf32, #tpu.memory_space<vmem>>, %arg1: memref<512x256xf32, #tpu.memory_space<vmem>>, %arg2: memref<1x256xf32, #tpu.memory_space<vmem>>, %arg3: memref<256x128xf32, #tpu.memory_space<vmem>>, %arg4: memref<1x128xf32, #tpu.memory_space<vmem>>, %arg5: memref<1x128xf32, #tpu.memory_space<vmem>>, %arg6: memref<1x128xf32, #tpu.memory_space<vmem>>, %arg7: memref<8x128xf32, #tpu.memory_space<vmem>>, %arg8: memref<128x384xf32, #tpu.memory_space<vmem>>, %arg9: memref<1x384xf32, #tpu.memory_space<vmem>>, %arg10: memref<128x128xf32, #tpu.memory_space<vmem>>, %arg11: memref<1x128xf32, #tpu.memory_space<vmem>>, %arg12: memref<1x128xf32, #tpu.memory_space<vmem>>, %arg13: memref<1x128xf32, #tpu.memory_space<vmem>>, %arg14: memref<128x512xf32, #tpu.memory_space<vmem>>, %arg15: memref<1x512xf32, #tpu.memory_space<vmem>>, %arg16: memref<512x128xf32, #tpu.memory_space<vmem>>, %arg17: memref<1x128xf32, #tpu.memory_space<vmem>>, %arg18: memref<1x128xf32, #tpu.memory_space<vmem>>, %arg19: memref<1x128xf32, #tpu.memory_space<vmem>>, %arg20: memref<1x128xf32, #tpu.memory_space<vmem>>, %arg21: memref<1x128xf32, #tpu.memory_space<vmem>>, %arg22: memref<128x4xf32, #tpu.memory_space<vmem>>, %arg23: memref<1x4xf32, #tpu.memory_space<vmem>>, %arg24: memref<2x4xf32, #tpu.memory_space<vmem>>) attributes {dimension_semantics = [], scalar_prefetch = 0 : i64, scratch_operands = 0 : i64, tpu.core_type = #tpu.core_type<tc>} {
    %c0 = arith.constant 0 : index
    %c0_0 = arith.constant 0 : index
    %0 = vector.load %arg0[%c0, %c0_0] : memref<16x512xf32, #tpu.memory_space<vmem>>, vector<16x512xf32>
    %c0_1 = arith.constant 0 : index
    %c0_2 = arith.constant 0 : index
    %1 = vector.load %arg1[%c0_1, %c0_2] : memref<512x256xf32, #tpu.memory_space<vmem>>, vector<512x256xf32>
    %2 = arith.truncf %0 : vector<16x512xf32> to vector<16x512xbf16>
    %3 = arith.truncf %1 : vector<512x256xf32> to vector<512x256xbf16>
    %cst = arith.constant dense<0.000000e+00> : vector<16x256xf32>
    %4 = tpu.matmul %2, %3, %cst {dimension_numbers = #tpu.dot_dimension_numbers<[1], [0], [0], [1], [0, 0, 1, 1], [], []>} : vector<16x512xbf16>, vector<512x256xbf16>, vector<16x256xf32> -> vector<16x256xf32>
    %c0_3 = arith.constant 0 : index
    %c0_4 = arith.constant 0 : index
    %5 = vector.load %arg2[%c0_3, %c0_4] : memref<1x256xf32, #tpu.memory_space<vmem>>, vector<1x256xf32>
    %6 = vector.broadcast %5 : vector<1x256xf32> to vector<16x256xf32>
    %7 = arith.addf %4, %6 : vector<16x256xf32>
    %cst_5 = arith.constant 0.000000e+00 : f32
    %8 = vector.broadcast %cst_5 : f32 to vector<16x256xf32>
    %9 = arith.maximumf %7, %8 : vector<16x256xf32>
    %c0_6 = arith.constant 0 : index
    %c0_7 = arith.constant 0 : index
    %10 = vector.load %arg3[%c0_6, %c0_7] : memref<256x128xf32, #tpu.memory_space<vmem>>, vector<256x128xf32>
    %11 = arith.truncf %9 : vector<16x256xf32> to vector<16x256xbf16>
    %12 = arith.truncf %10 : vector<256x128xf32> to vector<256x128xbf16>
    %cst_8 = arith.constant dense<0.000000e+00> : vector<16x128xf32>
    %13 = tpu.matmul %11, %12, %cst_8 {dimension_numbers = #tpu.dot_dimension_numbers<[1], [0], [0], [1], [0, 0, 1, 1], [], []>} : vector<16x256xbf16>, vector<256x128xbf16>, vector<16x128xf32> -> vector<16x128xf32>
    %c0_9 = arith.constant 0 : index
    %c0_10 = arith.constant 0 : index
    %14 = vector.load %arg4[%c0_9, %c0_10] : memref<1x128xf32, #tpu.memory_space<vmem>>, vector<1x128xf32>
    %15 = vector.broadcast %14 : vector<1x128xf32> to vector<16x128xf32>
    %16 = arith.addf %13, %15 : vector<16x128xf32>
    %cst_11 = arith.constant 0.000000e+00 : f32
    %17 = vector.broadcast %cst_11 : f32 to vector<16x128xf32>
    %18 = arith.maximumf %16, %17 : vector<16x128xf32>
    %c0_12 = arith.constant 0 : index
    %c0_13 = arith.constant 0 : index
    %19 = vector.load %arg5[%c0_12, %c0_13] : memref<1x128xf32, #tpu.memory_space<vmem>>, vector<1x128xf32>
    %c0_14 = arith.constant 0 : index
    %c0_15 = arith.constant 0 : index
    %20 = vector.load %arg6[%c0_14, %c0_15] : memref<1x128xf32, #tpu.memory_space<vmem>>, vector<1x128xf32>
    %c0_16 = arith.constant 0 : index
    %c0_17 = arith.constant 0 : index
    %21 = vector.load %arg7[%c0_16, %c0_17] : memref<8x128xf32, #tpu.memory_space<vmem>>, vector<8x128xf32>
    %22 = vector.extract_strided_slice %18 {offsets = [0, 0], sizes = [8, 128], strides = [1, 1]} : vector<16x128xf32> to vector<8x128xf32>
    %cst_18 = arith.constant dense<0.000000e+00> : vector<128xf32>
    %23 = vector.multi_reduction <add>, %22, %cst_18 [0] : vector<8x128xf32> to vector<128xf32>
    %24 = vector.shape_cast %23 : vector<128xf32> to vector<1x128xf32>
    %cst_19 = arith.constant 8.000000e+00 : f32
    %25 = vector.broadcast %cst_19 : f32 to vector<1x128xf32>
    %26 = arith.divf %24, %25 : vector<1x128xf32>
    %27 = vector.broadcast %26 : vector<1x128xf32> to vector<8x128xf32>
    %28 = arith.subf %22, %27 : vector<8x128xf32>
    %29 = arith.mulf %28, %28 : vector<8x128xf32>
    %cst_20 = arith.constant dense<0.000000e+00> : vector<128xf32>
    %30 = vector.multi_reduction <add>, %29, %cst_20 [0] : vector<8x128xf32> to vector<128xf32>
    %31 = vector.shape_cast %30 : vector<128xf32> to vector<1x128xf32>
    %cst_21 = arith.constant 7.000000e+00 : f32
    %32 = vector.broadcast %cst_21 : f32 to vector<1x128xf32>
    %33 = arith.divf %31, %32 : vector<1x128xf32>
    %34 = vector.broadcast %26 : vector<1x128xf32> to vector<8x128xf32>
    %35 = arith.subf %22, %34 : vector<8x128xf32>
    %cst_22 = arith.constant 9.99999993E-9 : f32
    %36 = vector.broadcast %cst_22 : f32 to vector<1x128xf32>
    %37 = arith.addf %33, %36 : vector<1x128xf32>
    %38 = math.sqrt %37 : vector<1x128xf32>
    %39 = vector.broadcast %38 : vector<1x128xf32> to vector<8x128xf32>
    %40 = arith.divf %35, %39 : vector<8x128xf32>
    %41 = vector.broadcast %19 : vector<1x128xf32> to vector<8x128xf32>
    %42 = arith.mulf %40, %41 : vector<8x128xf32>
    %43 = vector.broadcast %20 : vector<1x128xf32> to vector<8x128xf32>
    %44 = arith.addf %42, %43 : vector<8x128xf32>
    %45 = arith.addf %44, %21 : vector<8x128xf32>
    %46 = vector.extract_strided_slice %18 {offsets = [8, 0], sizes = [8, 128], strides = [1, 1]} : vector<16x128xf32> to vector<8x128xf32>
    %cst_23 = arith.constant dense<0.000000e+00> : vector<128xf32>
    %47 = vector.multi_reduction <add>, %46, %cst_23 [0] : vector<8x128xf32> to vector<128xf32>
    %48 = vector.shape_cast %47 : vector<128xf32> to vector<1x128xf32>
    %cst_24 = arith.constant 8.000000e+00 : f32
    %49 = vector.broadcast %cst_24 : f32 to vector<1x128xf32>
    %50 = arith.divf %48, %49 : vector<1x128xf32>
    %51 = vector.broadcast %50 : vector<1x128xf32> to vector<8x128xf32>
    %52 = arith.subf %46, %51 : vector<8x128xf32>
    %53 = arith.mulf %52, %52 : vector<8x128xf32>
    %cst_25 = arith.constant dense<0.000000e+00> : vector<128xf32>
    %54 = vector.multi_reduction <add>, %53, %cst_25 [0] : vector<8x128xf32> to vector<128xf32>
    %55 = vector.shape_cast %54 : vector<128xf32> to vector<1x128xf32>
    %cst_26 = arith.constant 7.000000e+00 : f32
    %56 = vector.broadcast %cst_26 : f32 to vector<1x128xf32>
    %57 = arith.divf %55, %56 : vector<1x128xf32>
    %58 = vector.broadcast %50 : vector<1x128xf32> to vector<8x128xf32>
    %59 = arith.subf %46, %58 : vector<8x128xf32>
    %cst_27 = arith.constant 9.99999993E-9 : f32
    %60 = vector.broadcast %cst_27 : f32 to vector<1x128xf32>
    %61 = arith.addf %57, %60 : vector<1x128xf32>
    %62 = math.sqrt %61 : vector<1x128xf32>
    %63 = vector.broadcast %62 : vector<1x128xf32> to vector<8x128xf32>
    %64 = arith.divf %59, %63 : vector<8x128xf32>
    %65 = vector.broadcast %19 : vector<1x128xf32> to vector<8x128xf32>
    %66 = arith.mulf %64, %65 : vector<8x128xf32>
    %67 = vector.broadcast %20 : vector<1x128xf32> to vector<8x128xf32>
    %68 = arith.addf %66, %67 : vector<8x128xf32>
    %69 = arith.addf %68, %21 : vector<8x128xf32>
    %70 = tpu.concatenate %45, %69 in 0 : vector<8x128xf32>, vector<8x128xf32> -> vector<16x128xf32>
    %c0_28 = arith.constant 0 : index
    %c0_29 = arith.constant 0 : index
    %71 = vector.load %arg8[%c0_28, %c0_29] : memref<128x384xf32, #tpu.memory_space<vmem>>, vector<128x384xf32>
    %72 = arith.truncf %70 : vector<16x128xf32> to vector<16x128xbf16>
    %73 = arith.truncf %71 : vector<128x384xf32> to vector<128x384xbf16>
    %cst_30 = arith.constant dense<0.000000e+00> : vector<16x384xf32>
    %74 = tpu.matmul %72, %73, %cst_30 {dimension_numbers = #tpu.dot_dimension_numbers<[1], [0], [0], [1], [0, 0, 1, 1], [], []>} : vector<16x128xbf16>, vector<128x384xbf16>, vector<16x384xf32> -> vector<16x384xf32>
    %c0_31 = arith.constant 0 : index
    %c0_32 = arith.constant 0 : index
    %75 = vector.load %arg9[%c0_31, %c0_32] : memref<1x384xf32, #tpu.memory_space<vmem>>, vector<1x384xf32>
    %76 = vector.broadcast %75 : vector<1x384xf32> to vector<16x384xf32>
    %77 = arith.addf %74, %76 : vector<16x384xf32>
    %78 = vector.extract_strided_slice %77 {offsets = [0, 0], sizes = [16, 128], strides = [1, 1]} : vector<16x384xf32> to vector<16x128xf32>
    %79 = vector.extract_strided_slice %77 {offsets = [0, 128], sizes = [16, 128], strides = [1, 1]} : vector<16x384xf32> to vector<16x128xf32>
    %80 = vector.extract_strided_slice %77 {offsets = [0, 256], sizes = [16, 128], strides = [1, 1]} : vector<16x384xf32> to vector<16x128xf32>
    %81 = vector.extract_strided_slice %78 {offsets = [0, 0], sizes = [8, 128], strides = [1, 1]} : vector<16x128xf32> to vector<8x128xf32>
    %82 = vector.extract_strided_slice %79 {offsets = [0, 0], sizes = [8, 128], strides = [1, 1]} : vector<16x128xf32> to vector<8x128xf32>
    %83 = vector.extract_strided_slice %80 {offsets = [0, 0], sizes = [8, 128], strides = [1, 1]} : vector<16x128xf32> to vector<8x128xf32>
    %84 = vector.extract_strided_slice %81 {offsets = [0, 0], sizes = [8, 16], strides = [1, 1]} : vector<8x128xf32> to vector<8x16xf32>
    %85 = vector.extract_strided_slice %82 {offsets = [0, 0], sizes = [8, 16], strides = [1, 1]} : vector<8x128xf32> to vector<8x16xf32>
    %86 = tpu.transpose %85, [1, 0] : vector<8x16xf32> -> vector<16x8xf32>
    %cst_33 = arith.constant dense<0.000000e+00> : vector<8x8xf32>
    %87 = tpu.matmul %84, %86, %cst_33 {dimension_numbers = #tpu.dot_dimension_numbers<[1], [0], [0], [1], [0, 0, 1, 1], [], []>} : vector<8x16xf32>, vector<16x8xf32>, vector<8x8xf32> -> vector<8x8xf32>
    %cst_34 = arith.constant 2.500000e-01 : f32
    %88 = vector.broadcast %cst_34 : f32 to vector<8x8xf32>
    %89 = arith.mulf %87, %88 : vector<8x8xf32>
    %cst_35 = arith.constant dense<0xFF800000> : vector<8xf32>
    %90 = vector.multi_reduction <maximumf>, %89, %cst_35 [1] : vector<8x8xf32> to vector<8xf32>
    %91 = vector.shape_cast %90 : vector<8xf32> to vector<8x1xf32>
    %92 = vector.broadcast %91 : vector<8x1xf32> to vector<8x8xf32>
    %93 = arith.subf %89, %92 : vector<8x8xf32>
    %94 = math.exp %93 : vector<8x8xf32>
    %cst_36 = arith.constant dense<0.000000e+00> : vector<8xf32>
    %95 = vector.multi_reduction <add>, %94, %cst_36 [1] : vector<8x8xf32> to vector<8xf32>
    %96 = vector.shape_cast %95 : vector<8xf32> to vector<8x1xf32>
    %97 = vector.broadcast %96 : vector<8x1xf32> to vector<8x8xf32>
    %98 = arith.divf %94, %97 : vector<8x8xf32>
    %99 = vector.extract_strided_slice %83 {offsets = [0, 0], sizes = [8, 16], strides = [1, 1]} : vector<8x128xf32> to vector<8x16xf32>
    %cst_37 = arith.constant dense<0.000000e+00> : vector<8x16xf32>
    %100 = tpu.matmul %98, %99, %cst_37 {dimension_numbers = #tpu.dot_dimension_numbers<[1], [0], [0], [1], [0, 0, 1, 1], [], []>} : vector<8x8xf32>, vector<8x16xf32>, vector<8x16xf32> -> vector<8x16xf32>
    %101 = vector.extract_strided_slice %81 {offsets = [0, 16], sizes = [8, 16], strides = [1, 1]} : vector<8x128xf32> to vector<8x16xf32>
    %102 = vector.extract_strided_slice %82 {offsets = [0, 16], sizes = [8, 16], strides = [1, 1]} : vector<8x128xf32> to vector<8x16xf32>
    %103 = tpu.transpose %102, [1, 0] : vector<8x16xf32> -> vector<16x8xf32>
    %cst_38 = arith.constant dense<0.000000e+00> : vector<8x8xf32>
    %104 = tpu.matmul %101, %103, %cst_38 {dimension_numbers = #tpu.dot_dimension_numbers<[1], [0], [0], [1], [0, 0, 1, 1], [], []>} : vector<8x16xf32>, vector<16x8xf32>, vector<8x8xf32> -> vector<8x8xf32>
    %cst_39 = arith.constant 2.500000e-01 : f32
    %105 = vector.broadcast %cst_39 : f32 to vector<8x8xf32>
    %106 = arith.mulf %104, %105 : vector<8x8xf32>
    %cst_40 = arith.constant dense<0xFF800000> : vector<8xf32>
    %107 = vector.multi_reduction <maximumf>, %106, %cst_40 [1] : vector<8x8xf32> to vector<8xf32>
    %108 = vector.shape_cast %107 : vector<8xf32> to vector<8x1xf32>
    %109 = vector.broadcast %108 : vector<8x1xf32> to vector<8x8xf32>
    %110 = arith.subf %106, %109 : vector<8x8xf32>
    %111 = math.exp %110 : vector<8x8xf32>
    %cst_41 = arith.constant dense<0.000000e+00> : vector<8xf32>
    %112 = vector.multi_reduction <add>, %111, %cst_41 [1] : vector<8x8xf32> to vector<8xf32>
    %113 = vector.shape_cast %112 : vector<8xf32> to vector<8x1xf32>
    %114 = vector.broadcast %113 : vector<8x1xf32> to vector<8x8xf32>
    %115 = arith.divf %111, %114 : vector<8x8xf32>
    %116 = vector.extract_strided_slice %83 {offsets = [0, 16], sizes = [8, 16], strides = [1, 1]} : vector<8x128xf32> to vector<8x16xf32>
    %cst_42 = arith.constant dense<0.000000e+00> : vector<8x16xf32>
    %117 = tpu.matmul %115, %116, %cst_42 {dimension_numbers = #tpu.dot_dimension_numbers<[1], [0], [0], [1], [0, 0, 1, 1], [], []>} : vector<8x8xf32>, vector<8x16xf32>, vector<8x16xf32> -> vector<8x16xf32>
    %118 = vector.extract_strided_slice %81 {offsets = [0, 32], sizes = [8, 16], strides = [1, 1]} : vector<8x128xf32> to vector<8x16xf32>
    %119 = vector.extract_strided_slice %82 {offsets = [0, 32], sizes = [8, 16], strides = [1, 1]} : vector<8x128xf32> to vector<8x16xf32>
    %120 = tpu.transpose %119, [1, 0] : vector<8x16xf32> -> vector<16x8xf32>
    %cst_43 = arith.constant dense<0.000000e+00> : vector<8x8xf32>
    %121 = tpu.matmul %118, %120, %cst_43 {dimension_numbers = #tpu.dot_dimension_numbers<[1], [0], [0], [1], [0, 0, 1, 1], [], []>} : vector<8x16xf32>, vector<16x8xf32>, vector<8x8xf32> -> vector<8x8xf32>
    %cst_44 = arith.constant 2.500000e-01 : f32
    %122 = vector.broadcast %cst_44 : f32 to vector<8x8xf32>
    %123 = arith.mulf %121, %122 : vector<8x8xf32>
    %cst_45 = arith.constant dense<0xFF800000> : vector<8xf32>
    %124 = vector.multi_reduction <maximumf>, %123, %cst_45 [1] : vector<8x8xf32> to vector<8xf32>
    %125 = vector.shape_cast %124 : vector<8xf32> to vector<8x1xf32>
    %126 = vector.broadcast %125 : vector<8x1xf32> to vector<8x8xf32>
    %127 = arith.subf %123, %126 : vector<8x8xf32>
    %128 = math.exp %127 : vector<8x8xf32>
    %cst_46 = arith.constant dense<0.000000e+00> : vector<8xf32>
    %129 = vector.multi_reduction <add>, %128, %cst_46 [1] : vector<8x8xf32> to vector<8xf32>
    %130 = vector.shape_cast %129 : vector<8xf32> to vector<8x1xf32>
    %131 = vector.broadcast %130 : vector<8x1xf32> to vector<8x8xf32>
    %132 = arith.divf %128, %131 : vector<8x8xf32>
    %133 = vector.extract_strided_slice %83 {offsets = [0, 32], sizes = [8, 16], strides = [1, 1]} : vector<8x128xf32> to vector<8x16xf32>
    %cst_47 = arith.constant dense<0.000000e+00> : vector<8x16xf32>
    %134 = tpu.matmul %132, %133, %cst_47 {dimension_numbers = #tpu.dot_dimension_numbers<[1], [0], [0], [1], [0, 0, 1, 1], [], []>} : vector<8x8xf32>, vector<8x16xf32>, vector<8x16xf32> -> vector<8x16xf32>
    %135 = vector.extract_strided_slice %81 {offsets = [0, 48], sizes = [8, 16], strides = [1, 1]} : vector<8x128xf32> to vector<8x16xf32>
    %136 = vector.extract_strided_slice %82 {offsets = [0, 48], sizes = [8, 16], strides = [1, 1]} : vector<8x128xf32> to vector<8x16xf32>
    %137 = tpu.transpose %136, [1, 0] : vector<8x16xf32> -> vector<16x8xf32>
    %cst_48 = arith.constant dense<0.000000e+00> : vector<8x8xf32>
    %138 = tpu.matmul %135, %137, %cst_48 {dimension_numbers = #tpu.dot_dimension_numbers<[1], [0], [0], [1], [0, 0, 1, 1], [], []>} : vector<8x16xf32>, vector<16x8xf32>, vector<8x8xf32> -> vector<8x8xf32>
    %cst_49 = arith.constant 2.500000e-01 : f32
    %139 = vector.broadcast %cst_49 : f32 to vector<8x8xf32>
    %140 = arith.mulf %138, %139 : vector<8x8xf32>
    %cst_50 = arith.constant dense<0xFF800000> : vector<8xf32>
    %141 = vector.multi_reduction <maximumf>, %140, %cst_50 [1] : vector<8x8xf32> to vector<8xf32>
    %142 = vector.shape_cast %141 : vector<8xf32> to vector<8x1xf32>
    %143 = vector.broadcast %142 : vector<8x1xf32> to vector<8x8xf32>
    %144 = arith.subf %140, %143 : vector<8x8xf32>
    %145 = math.exp %144 : vector<8x8xf32>
    %cst_51 = arith.constant dense<0.000000e+00> : vector<8xf32>
    %146 = vector.multi_reduction <add>, %145, %cst_51 [1] : vector<8x8xf32> to vector<8xf32>
    %147 = vector.shape_cast %146 : vector<8xf32> to vector<8x1xf32>
    %148 = vector.broadcast %147 : vector<8x1xf32> to vector<8x8xf32>
    %149 = arith.divf %145, %148 : vector<8x8xf32>
    %150 = vector.extract_strided_slice %83 {offsets = [0, 48], sizes = [8, 16], strides = [1, 1]} : vector<8x128xf32> to vector<8x16xf32>
    %cst_52 = arith.constant dense<0.000000e+00> : vector<8x16xf32>
    %151 = tpu.matmul %149, %150, %cst_52 {dimension_numbers = #tpu.dot_dimension_numbers<[1], [0], [0], [1], [0, 0, 1, 1], [], []>} : vector<8x8xf32>, vector<8x16xf32>, vector<8x16xf32> -> vector<8x16xf32>
    %152 = vector.extract_strided_slice %81 {offsets = [0, 64], sizes = [8, 16], strides = [1, 1]} : vector<8x128xf32> to vector<8x16xf32>
    %153 = vector.extract_strided_slice %82 {offsets = [0, 64], sizes = [8, 16], strides = [1, 1]} : vector<8x128xf32> to vector<8x16xf32>
    %154 = tpu.transpose %153, [1, 0] : vector<8x16xf32> -> vector<16x8xf32>
    %cst_53 = arith.constant dense<0.000000e+00> : vector<8x8xf32>
    %155 = tpu.matmul %152, %154, %cst_53 {dimension_numbers = #tpu.dot_dimension_numbers<[1], [0], [0], [1], [0, 0, 1, 1], [], []>} : vector<8x16xf32>, vector<16x8xf32>, vector<8x8xf32> -> vector<8x8xf32>
    %cst_54 = arith.constant 2.500000e-01 : f32
    %156 = vector.broadcast %cst_54 : f32 to vector<8x8xf32>
    %157 = arith.mulf %155, %156 : vector<8x8xf32>
    %cst_55 = arith.constant dense<0xFF800000> : vector<8xf32>
    %158 = vector.multi_reduction <maximumf>, %157, %cst_55 [1] : vector<8x8xf32> to vector<8xf32>
    %159 = vector.shape_cast %158 : vector<8xf32> to vector<8x1xf32>
    %160 = vector.broadcast %159 : vector<8x1xf32> to vector<8x8xf32>
    %161 = arith.subf %157, %160 : vector<8x8xf32>
    %162 = math.exp %161 : vector<8x8xf32>
    %cst_56 = arith.constant dense<0.000000e+00> : vector<8xf32>
    %163 = vector.multi_reduction <add>, %162, %cst_56 [1] : vector<8x8xf32> to vector<8xf32>
    %164 = vector.shape_cast %163 : vector<8xf32> to vector<8x1xf32>
    %165 = vector.broadcast %164 : vector<8x1xf32> to vector<8x8xf32>
    %166 = arith.divf %162, %165 : vector<8x8xf32>
    %167 = vector.extract_strided_slice %83 {offsets = [0, 64], sizes = [8, 16], strides = [1, 1]} : vector<8x128xf32> to vector<8x16xf32>
    %cst_57 = arith.constant dense<0.000000e+00> : vector<8x16xf32>
    %168 = tpu.matmul %166, %167, %cst_57 {dimension_numbers = #tpu.dot_dimension_numbers<[1], [0], [0], [1], [0, 0, 1, 1], [], []>} : vector<8x8xf32>, vector<8x16xf32>, vector<8x16xf32> -> vector<8x16xf32>
    %169 = vector.extract_strided_slice %81 {offsets = [0, 80], sizes = [8, 16], strides = [1, 1]} : vector<8x128xf32> to vector<8x16xf32>
    %170 = vector.extract_strided_slice %82 {offsets = [0, 80], sizes = [8, 16], strides = [1, 1]} : vector<8x128xf32> to vector<8x16xf32>
    %171 = tpu.transpose %170, [1, 0] : vector<8x16xf32> -> vector<16x8xf32>
    %cst_58 = arith.constant dense<0.000000e+00> : vector<8x8xf32>
    %172 = tpu.matmul %169, %171, %cst_58 {dimension_numbers = #tpu.dot_dimension_numbers<[1], [0], [0], [1], [0, 0, 1, 1], [], []>} : vector<8x16xf32>, vector<16x8xf32>, vector<8x8xf32> -> vector<8x8xf32>
    %cst_59 = arith.constant 2.500000e-01 : f32
    %173 = vector.broadcast %cst_59 : f32 to vector<8x8xf32>
    %174 = arith.mulf %172, %173 : vector<8x8xf32>
    %cst_60 = arith.constant dense<0xFF800000> : vector<8xf32>
    %175 = vector.multi_reduction <maximumf>, %174, %cst_60 [1] : vector<8x8xf32> to vector<8xf32>
    %176 = vector.shape_cast %175 : vector<8xf32> to vector<8x1xf32>
    %177 = vector.broadcast %176 : vector<8x1xf32> to vector<8x8xf32>
    %178 = arith.subf %174, %177 : vector<8x8xf32>
    %179 = math.exp %178 : vector<8x8xf32>
    %cst_61 = arith.constant dense<0.000000e+00> : vector<8xf32>
    %180 = vector.multi_reduction <add>, %179, %cst_61 [1] : vector<8x8xf32> to vector<8xf32>
    %181 = vector.shape_cast %180 : vector<8xf32> to vector<8x1xf32>
    %182 = vector.broadcast %181 : vector<8x1xf32> to vector<8x8xf32>
    %183 = arith.divf %179, %182 : vector<8x8xf32>
    %184 = vector.extract_strided_slice %83 {offsets = [0, 80], sizes = [8, 16], strides = [1, 1]} : vector<8x128xf32> to vector<8x16xf32>
    %cst_62 = arith.constant dense<0.000000e+00> : vector<8x16xf32>
    %185 = tpu.matmul %183, %184, %cst_62 {dimension_numbers = #tpu.dot_dimension_numbers<[1], [0], [0], [1], [0, 0, 1, 1], [], []>} : vector<8x8xf32>, vector<8x16xf32>, vector<8x16xf32> -> vector<8x16xf32>
    %186 = vector.extract_strided_slice %81 {offsets = [0, 96], sizes = [8, 16], strides = [1, 1]} : vector<8x128xf32> to vector<8x16xf32>
    %187 = vector.extract_strided_slice %82 {offsets = [0, 96], sizes = [8, 16], strides = [1, 1]} : vector<8x128xf32> to vector<8x16xf32>
    %188 = tpu.transpose %187, [1, 0] : vector<8x16xf32> -> vector<16x8xf32>
    %cst_63 = arith.constant dense<0.000000e+00> : vector<8x8xf32>
    %189 = tpu.matmul %186, %188, %cst_63 {dimension_numbers = #tpu.dot_dimension_numbers<[1], [0], [0], [1], [0, 0, 1, 1], [], []>} : vector<8x16xf32>, vector<16x8xf32>, vector<8x8xf32> -> vector<8x8xf32>
    %cst_64 = arith.constant 2.500000e-01 : f32
    %190 = vector.broadcast %cst_64 : f32 to vector<8x8xf32>
    %191 = arith.mulf %189, %190 : vector<8x8xf32>
    %cst_65 = arith.constant dense<0xFF800000> : vector<8xf32>
    %192 = vector.multi_reduction <maximumf>, %191, %cst_65 [1] : vector<8x8xf32> to vector<8xf32>
    %193 = vector.shape_cast %192 : vector<8xf32> to vector<8x1xf32>
    %194 = vector.broadcast %193 : vector<8x1xf32> to vector<8x8xf32>
    %195 = arith.subf %191, %194 : vector<8x8xf32>
    %196 = math.exp %195 : vector<8x8xf32>
    %cst_66 = arith.constant dense<0.000000e+00> : vector<8xf32>
    %197 = vector.multi_reduction <add>, %196, %cst_66 [1] : vector<8x8xf32> to vector<8xf32>
    %198 = vector.shape_cast %197 : vector<8xf32> to vector<8x1xf32>
    %199 = vector.broadcast %198 : vector<8x1xf32> to vector<8x8xf32>
    %200 = arith.divf %196, %199 : vector<8x8xf32>
    %201 = vector.extract_strided_slice %83 {offsets = [0, 96], sizes = [8, 16], strides = [1, 1]} : vector<8x128xf32> to vector<8x16xf32>
    %cst_67 = arith.constant dense<0.000000e+00> : vector<8x16xf32>
    %202 = tpu.matmul %200, %201, %cst_67 {dimension_numbers = #tpu.dot_dimension_numbers<[1], [0], [0], [1], [0, 0, 1, 1], [], []>} : vector<8x8xf32>, vector<8x16xf32>, vector<8x16xf32> -> vector<8x16xf32>
    %203 = vector.extract_strided_slice %81 {offsets = [0, 112], sizes = [8, 16], strides = [1, 1]} : vector<8x128xf32> to vector<8x16xf32>
    %204 = vector.extract_strided_slice %82 {offsets = [0, 112], sizes = [8, 16], strides = [1, 1]} : vector<8x128xf32> to vector<8x16xf32>
    %205 = tpu.transpose %204, [1, 0] : vector<8x16xf32> -> vector<16x8xf32>
    %cst_68 = arith.constant dense<0.000000e+00> : vector<8x8xf32>
    %206 = tpu.matmul %203, %205, %cst_68 {dimension_numbers = #tpu.dot_dimension_numbers<[1], [0], [0], [1], [0, 0, 1, 1], [], []>} : vector<8x16xf32>, vector<16x8xf32>, vector<8x8xf32> -> vector<8x8xf32>
    %cst_69 = arith.constant 2.500000e-01 : f32
    %207 = vector.broadcast %cst_69 : f32 to vector<8x8xf32>
    %208 = arith.mulf %206, %207 : vector<8x8xf32>
    %cst_70 = arith.constant dense<0xFF800000> : vector<8xf32>
    %209 = vector.multi_reduction <maximumf>, %208, %cst_70 [1] : vector<8x8xf32> to vector<8xf32>
    %210 = vector.shape_cast %209 : vector<8xf32> to vector<8x1xf32>
    %211 = vector.broadcast %210 : vector<8x1xf32> to vector<8x8xf32>
    %212 = arith.subf %208, %211 : vector<8x8xf32>
    %213 = math.exp %212 : vector<8x8xf32>
    %cst_71 = arith.constant dense<0.000000e+00> : vector<8xf32>
    %214 = vector.multi_reduction <add>, %213, %cst_71 [1] : vector<8x8xf32> to vector<8xf32>
    %215 = vector.shape_cast %214 : vector<8xf32> to vector<8x1xf32>
    %216 = vector.broadcast %215 : vector<8x1xf32> to vector<8x8xf32>
    %217 = arith.divf %213, %216 : vector<8x8xf32>
    %218 = vector.extract_strided_slice %83 {offsets = [0, 112], sizes = [8, 16], strides = [1, 1]} : vector<8x128xf32> to vector<8x16xf32>
    %cst_72 = arith.constant dense<0.000000e+00> : vector<8x16xf32>
    %219 = tpu.matmul %217, %218, %cst_72 {dimension_numbers = #tpu.dot_dimension_numbers<[1], [0], [0], [1], [0, 0, 1, 1], [], []>} : vector<8x8xf32>, vector<8x16xf32>, vector<8x16xf32> -> vector<8x16xf32>
    %220 = tpu.concatenate %100, %117, %134, %151, %168, %185, %202, %219 in 1 : vector<8x16xf32>, vector<8x16xf32>, vector<8x16xf32>, vector<8x16xf32>, vector<8x16xf32>, vector<8x16xf32>, vector<8x16xf32>, vector<8x16xf32> -> vector<8x128xf32>
    %221 = vector.extract_strided_slice %78 {offsets = [8, 0], sizes = [8, 128], strides = [1, 1]} : vector<16x128xf32> to vector<8x128xf32>
    %222 = vector.extract_strided_slice %79 {offsets = [8, 0], sizes = [8, 128], strides = [1, 1]} : vector<16x128xf32> to vector<8x128xf32>
    %223 = vector.extract_strided_slice %80 {offsets = [8, 0], sizes = [8, 128], strides = [1, 1]} : vector<16x128xf32> to vector<8x128xf32>
    %224 = vector.extract_strided_slice %221 {offsets = [0, 0], sizes = [8, 16], strides = [1, 1]} : vector<8x128xf32> to vector<8x16xf32>
    %225 = vector.extract_strided_slice %222 {offsets = [0, 0], sizes = [8, 16], strides = [1, 1]} : vector<8x128xf32> to vector<8x16xf32>
    %226 = tpu.transpose %225, [1, 0] : vector<8x16xf32> -> vector<16x8xf32>
    %cst_73 = arith.constant dense<0.000000e+00> : vector<8x8xf32>
    %227 = tpu.matmul %224, %226, %cst_73 {dimension_numbers = #tpu.dot_dimension_numbers<[1], [0], [0], [1], [0, 0, 1, 1], [], []>} : vector<8x16xf32>, vector<16x8xf32>, vector<8x8xf32> -> vector<8x8xf32>
    %cst_74 = arith.constant 2.500000e-01 : f32
    %228 = vector.broadcast %cst_74 : f32 to vector<8x8xf32>
    %229 = arith.mulf %227, %228 : vector<8x8xf32>
    %cst_75 = arith.constant dense<0xFF800000> : vector<8xf32>
    %230 = vector.multi_reduction <maximumf>, %229, %cst_75 [1] : vector<8x8xf32> to vector<8xf32>
    %231 = vector.shape_cast %230 : vector<8xf32> to vector<8x1xf32>
    %232 = vector.broadcast %231 : vector<8x1xf32> to vector<8x8xf32>
    %233 = arith.subf %229, %232 : vector<8x8xf32>
    %234 = math.exp %233 : vector<8x8xf32>
    %cst_76 = arith.constant dense<0.000000e+00> : vector<8xf32>
    %235 = vector.multi_reduction <add>, %234, %cst_76 [1] : vector<8x8xf32> to vector<8xf32>
    %236 = vector.shape_cast %235 : vector<8xf32> to vector<8x1xf32>
    %237 = vector.broadcast %236 : vector<8x1xf32> to vector<8x8xf32>
    %238 = arith.divf %234, %237 : vector<8x8xf32>
    %239 = vector.extract_strided_slice %223 {offsets = [0, 0], sizes = [8, 16], strides = [1, 1]} : vector<8x128xf32> to vector<8x16xf32>
    %cst_77 = arith.constant dense<0.000000e+00> : vector<8x16xf32>
    %240 = tpu.matmul %238, %239, %cst_77 {dimension_numbers = #tpu.dot_dimension_numbers<[1], [0], [0], [1], [0, 0, 1, 1], [], []>} : vector<8x8xf32>, vector<8x16xf32>, vector<8x16xf32> -> vector<8x16xf32>
    %241 = vector.extract_strided_slice %221 {offsets = [0, 16], sizes = [8, 16], strides = [1, 1]} : vector<8x128xf32> to vector<8x16xf32>
    %242 = vector.extract_strided_slice %222 {offsets = [0, 16], sizes = [8, 16], strides = [1, 1]} : vector<8x128xf32> to vector<8x16xf32>
    %243 = tpu.transpose %242, [1, 0] : vector<8x16xf32> -> vector<16x8xf32>
    %cst_78 = arith.constant dense<0.000000e+00> : vector<8x8xf32>
    %244 = tpu.matmul %241, %243, %cst_78 {dimension_numbers = #tpu.dot_dimension_numbers<[1], [0], [0], [1], [0, 0, 1, 1], [], []>} : vector<8x16xf32>, vector<16x8xf32>, vector<8x8xf32> -> vector<8x8xf32>
    %cst_79 = arith.constant 2.500000e-01 : f32
    %245 = vector.broadcast %cst_79 : f32 to vector<8x8xf32>
    %246 = arith.mulf %244, %245 : vector<8x8xf32>
    %cst_80 = arith.constant dense<0xFF800000> : vector<8xf32>
    %247 = vector.multi_reduction <maximumf>, %246, %cst_80 [1] : vector<8x8xf32> to vector<8xf32>
    %248 = vector.shape_cast %247 : vector<8xf32> to vector<8x1xf32>
    %249 = vector.broadcast %248 : vector<8x1xf32> to vector<8x8xf32>
    %250 = arith.subf %246, %249 : vector<8x8xf32>
    %251 = math.exp %250 : vector<8x8xf32>
    %cst_81 = arith.constant dense<0.000000e+00> : vector<8xf32>
    %252 = vector.multi_reduction <add>, %251, %cst_81 [1] : vector<8x8xf32> to vector<8xf32>
    %253 = vector.shape_cast %252 : vector<8xf32> to vector<8x1xf32>
    %254 = vector.broadcast %253 : vector<8x1xf32> to vector<8x8xf32>
    %255 = arith.divf %251, %254 : vector<8x8xf32>
    %256 = vector.extract_strided_slice %223 {offsets = [0, 16], sizes = [8, 16], strides = [1, 1]} : vector<8x128xf32> to vector<8x16xf32>
    %cst_82 = arith.constant dense<0.000000e+00> : vector<8x16xf32>
    %257 = tpu.matmul %255, %256, %cst_82 {dimension_numbers = #tpu.dot_dimension_numbers<[1], [0], [0], [1], [0, 0, 1, 1], [], []>} : vector<8x8xf32>, vector<8x16xf32>, vector<8x16xf32> -> vector<8x16xf32>
    %258 = vector.extract_strided_slice %221 {offsets = [0, 32], sizes = [8, 16], strides = [1, 1]} : vector<8x128xf32> to vector<8x16xf32>
    %259 = vector.extract_strided_slice %222 {offsets = [0, 32], sizes = [8, 16], strides = [1, 1]} : vector<8x128xf32> to vector<8x16xf32>
    %260 = tpu.transpose %259, [1, 0] : vector<8x16xf32> -> vector<16x8xf32>
    %cst_83 = arith.constant dense<0.000000e+00> : vector<8x8xf32>
    %261 = tpu.matmul %258, %260, %cst_83 {dimension_numbers = #tpu.dot_dimension_numbers<[1], [0], [0], [1], [0, 0, 1, 1], [], []>} : vector<8x16xf32>, vector<16x8xf32>, vector<8x8xf32> -> vector<8x8xf32>
    %cst_84 = arith.constant 2.500000e-01 : f32
    %262 = vector.broadcast %cst_84 : f32 to vector<8x8xf32>
    %263 = arith.mulf %261, %262 : vector<8x8xf32>
    %cst_85 = arith.constant dense<0xFF800000> : vector<8xf32>
    %264 = vector.multi_reduction <maximumf>, %263, %cst_85 [1] : vector<8x8xf32> to vector<8xf32>
    %265 = vector.shape_cast %264 : vector<8xf32> to vector<8x1xf32>
    %266 = vector.broadcast %265 : vector<8x1xf32> to vector<8x8xf32>
    %267 = arith.subf %263, %266 : vector<8x8xf32>
    %268 = math.exp %267 : vector<8x8xf32>
    %cst_86 = arith.constant dense<0.000000e+00> : vector<8xf32>
    %269 = vector.multi_reduction <add>, %268, %cst_86 [1] : vector<8x8xf32> to vector<8xf32>
    %270 = vector.shape_cast %269 : vector<8xf32> to vector<8x1xf32>
    %271 = vector.broadcast %270 : vector<8x1xf32> to vector<8x8xf32>
    %272 = arith.divf %268, %271 : vector<8x8xf32>
    %273 = vector.extract_strided_slice %223 {offsets = [0, 32], sizes = [8, 16], strides = [1, 1]} : vector<8x128xf32> to vector<8x16xf32>
    %cst_87 = arith.constant dense<0.000000e+00> : vector<8x16xf32>
    %274 = tpu.matmul %272, %273, %cst_87 {dimension_numbers = #tpu.dot_dimension_numbers<[1], [0], [0], [1], [0, 0, 1, 1], [], []>} : vector<8x8xf32>, vector<8x16xf32>, vector<8x16xf32> -> vector<8x16xf32>
    %275 = vector.extract_strided_slice %221 {offsets = [0, 48], sizes = [8, 16], strides = [1, 1]} : vector<8x128xf32> to vector<8x16xf32>
    %276 = vector.extract_strided_slice %222 {offsets = [0, 48], sizes = [8, 16], strides = [1, 1]} : vector<8x128xf32> to vector<8x16xf32>
    %277 = tpu.transpose %276, [1, 0] : vector<8x16xf32> -> vector<16x8xf32>
    %cst_88 = arith.constant dense<0.000000e+00> : vector<8x8xf32>
    %278 = tpu.matmul %275, %277, %cst_88 {dimension_numbers = #tpu.dot_dimension_numbers<[1], [0], [0], [1], [0, 0, 1, 1], [], []>} : vector<8x16xf32>, vector<16x8xf32>, vector<8x8xf32> -> vector<8x8xf32>
    %cst_89 = arith.constant 2.500000e-01 : f32
    %279 = vector.broadcast %cst_89 : f32 to vector<8x8xf32>
    %280 = arith.mulf %278, %279 : vector<8x8xf32>
    %cst_90 = arith.constant dense<0xFF800000> : vector<8xf32>
    %281 = vector.multi_reduction <maximumf>, %280, %cst_90 [1] : vector<8x8xf32> to vector<8xf32>
    %282 = vector.shape_cast %281 : vector<8xf32> to vector<8x1xf32>
    %283 = vector.broadcast %282 : vector<8x1xf32> to vector<8x8xf32>
    %284 = arith.subf %280, %283 : vector<8x8xf32>
    %285 = math.exp %284 : vector<8x8xf32>
    %cst_91 = arith.constant dense<0.000000e+00> : vector<8xf32>
    %286 = vector.multi_reduction <add>, %285, %cst_91 [1] : vector<8x8xf32> to vector<8xf32>
    %287 = vector.shape_cast %286 : vector<8xf32> to vector<8x1xf32>
    %288 = vector.broadcast %287 : vector<8x1xf32> to vector<8x8xf32>
    %289 = arith.divf %285, %288 : vector<8x8xf32>
    %290 = vector.extract_strided_slice %223 {offsets = [0, 48], sizes = [8, 16], strides = [1, 1]} : vector<8x128xf32> to vector<8x16xf32>
    %cst_92 = arith.constant dense<0.000000e+00> : vector<8x16xf32>
    %291 = tpu.matmul %289, %290, %cst_92 {dimension_numbers = #tpu.dot_dimension_numbers<[1], [0], [0], [1], [0, 0, 1, 1], [], []>} : vector<8x8xf32>, vector<8x16xf32>, vector<8x16xf32> -> vector<8x16xf32>
    %292 = vector.extract_strided_slice %221 {offsets = [0, 64], sizes = [8, 16], strides = [1, 1]} : vector<8x128xf32> to vector<8x16xf32>
    %293 = vector.extract_strided_slice %222 {offsets = [0, 64], sizes = [8, 16], strides = [1, 1]} : vector<8x128xf32> to vector<8x16xf32>
    %294 = tpu.transpose %293, [1, 0] : vector<8x16xf32> -> vector<16x8xf32>
    %cst_93 = arith.constant dense<0.000000e+00> : vector<8x8xf32>
    %295 = tpu.matmul %292, %294, %cst_93 {dimension_numbers = #tpu.dot_dimension_numbers<[1], [0], [0], [1], [0, 0, 1, 1], [], []>} : vector<8x16xf32>, vector<16x8xf32>, vector<8x8xf32> -> vector<8x8xf32>
    %cst_94 = arith.constant 2.500000e-01 : f32
    %296 = vector.broadcast %cst_94 : f32 to vector<8x8xf32>
    %297 = arith.mulf %295, %296 : vector<8x8xf32>
    %cst_95 = arith.constant dense<0xFF800000> : vector<8xf32>
    %298 = vector.multi_reduction <maximumf>, %297, %cst_95 [1] : vector<8x8xf32> to vector<8xf32>
    %299 = vector.shape_cast %298 : vector<8xf32> to vector<8x1xf32>
    %300 = vector.broadcast %299 : vector<8x1xf32> to vector<8x8xf32>
    %301 = arith.subf %297, %300 : vector<8x8xf32>
    %302 = math.exp %301 : vector<8x8xf32>
    %cst_96 = arith.constant dense<0.000000e+00> : vector<8xf32>
    %303 = vector.multi_reduction <add>, %302, %cst_96 [1] : vector<8x8xf32> to vector<8xf32>
    %304 = vector.shape_cast %303 : vector<8xf32> to vector<8x1xf32>
    %305 = vector.broadcast %304 : vector<8x1xf32> to vector<8x8xf32>
    %306 = arith.divf %302, %305 : vector<8x8xf32>
    %307 = vector.extract_strided_slice %223 {offsets = [0, 64], sizes = [8, 16], strides = [1, 1]} : vector<8x128xf32> to vector<8x16xf32>
    %cst_97 = arith.constant dense<0.000000e+00> : vector<8x16xf32>
    %308 = tpu.matmul %306, %307, %cst_97 {dimension_numbers = #tpu.dot_dimension_numbers<[1], [0], [0], [1], [0, 0, 1, 1], [], []>} : vector<8x8xf32>, vector<8x16xf32>, vector<8x16xf32> -> vector<8x16xf32>
    %309 = vector.extract_strided_slice %221 {offsets = [0, 80], sizes = [8, 16], strides = [1, 1]} : vector<8x128xf32> to vector<8x16xf32>
    %310 = vector.extract_strided_slice %222 {offsets = [0, 80], sizes = [8, 16], strides = [1, 1]} : vector<8x128xf32> to vector<8x16xf32>
    %311 = tpu.transpose %310, [1, 0] : vector<8x16xf32> -> vector<16x8xf32>
    %cst_98 = arith.constant dense<0.000000e+00> : vector<8x8xf32>
    %312 = tpu.matmul %309, %311, %cst_98 {dimension_numbers = #tpu.dot_dimension_numbers<[1], [0], [0], [1], [0, 0, 1, 1], [], []>} : vector<8x16xf32>, vector<16x8xf32>, vector<8x8xf32> -> vector<8x8xf32>
    %cst_99 = arith.constant 2.500000e-01 : f32
    %313 = vector.broadcast %cst_99 : f32 to vector<8x8xf32>
    %314 = arith.mulf %312, %313 : vector<8x8xf32>
    %cst_100 = arith.constant dense<0xFF800000> : vector<8xf32>
    %315 = vector.multi_reduction <maximumf>, %314, %cst_100 [1] : vector<8x8xf32> to vector<8xf32>
    %316 = vector.shape_cast %315 : vector<8xf32> to vector<8x1xf32>
    %317 = vector.broadcast %316 : vector<8x1xf32> to vector<8x8xf32>
    %318 = arith.subf %314, %317 : vector<8x8xf32>
    %319 = math.exp %318 : vector<8x8xf32>
    %cst_101 = arith.constant dense<0.000000e+00> : vector<8xf32>
    %320 = vector.multi_reduction <add>, %319, %cst_101 [1] : vector<8x8xf32> to vector<8xf32>
    %321 = vector.shape_cast %320 : vector<8xf32> to vector<8x1xf32>
    %322 = vector.broadcast %321 : vector<8x1xf32> to vector<8x8xf32>
    %323 = arith.divf %319, %322 : vector<8x8xf32>
    %324 = vector.extract_strided_slice %223 {offsets = [0, 80], sizes = [8, 16], strides = [1, 1]} : vector<8x128xf32> to vector<8x16xf32>
    %cst_102 = arith.constant dense<0.000000e+00> : vector<8x16xf32>
    %325 = tpu.matmul %323, %324, %cst_102 {dimension_numbers = #tpu.dot_dimension_numbers<[1], [0], [0], [1], [0, 0, 1, 1], [], []>} : vector<8x8xf32>, vector<8x16xf32>, vector<8x16xf32> -> vector<8x16xf32>
    %326 = vector.extract_strided_slice %221 {offsets = [0, 96], sizes = [8, 16], strides = [1, 1]} : vector<8x128xf32> to vector<8x16xf32>
    %327 = vector.extract_strided_slice %222 {offsets = [0, 96], sizes = [8, 16], strides = [1, 1]} : vector<8x128xf32> to vector<8x16xf32>
    %328 = tpu.transpose %327, [1, 0] : vector<8x16xf32> -> vector<16x8xf32>
    %cst_103 = arith.constant dense<0.000000e+00> : vector<8x8xf32>
    %329 = tpu.matmul %326, %328, %cst_103 {dimension_numbers = #tpu.dot_dimension_numbers<[1], [0], [0], [1], [0, 0, 1, 1], [], []>} : vector<8x16xf32>, vector<16x8xf32>, vector<8x8xf32> -> vector<8x8xf32>
    %cst_104 = arith.constant 2.500000e-01 : f32
    %330 = vector.broadcast %cst_104 : f32 to vector<8x8xf32>
    %331 = arith.mulf %329, %330 : vector<8x8xf32>
    %cst_105 = arith.constant dense<0xFF800000> : vector<8xf32>
    %332 = vector.multi_reduction <maximumf>, %331, %cst_105 [1] : vector<8x8xf32> to vector<8xf32>
    %333 = vector.shape_cast %332 : vector<8xf32> to vector<8x1xf32>
    %334 = vector.broadcast %333 : vector<8x1xf32> to vector<8x8xf32>
    %335 = arith.subf %331, %334 : vector<8x8xf32>
    %336 = math.exp %335 : vector<8x8xf32>
    %cst_106 = arith.constant dense<0.000000e+00> : vector<8xf32>
    %337 = vector.multi_reduction <add>, %336, %cst_106 [1] : vector<8x8xf32> to vector<8xf32>
    %338 = vector.shape_cast %337 : vector<8xf32> to vector<8x1xf32>
    %339 = vector.broadcast %338 : vector<8x1xf32> to vector<8x8xf32>
    %340 = arith.divf %336, %339 : vector<8x8xf32>
    %341 = vector.extract_strided_slice %223 {offsets = [0, 96], sizes = [8, 16], strides = [1, 1]} : vector<8x128xf32> to vector<8x16xf32>
    %cst_107 = arith.constant dense<0.000000e+00> : vector<8x16xf32>
    %342 = tpu.matmul %340, %341, %cst_107 {dimension_numbers = #tpu.dot_dimension_numbers<[1], [0], [0], [1], [0, 0, 1, 1], [], []>} : vector<8x8xf32>, vector<8x16xf32>, vector<8x16xf32> -> vector<8x16xf32>
    %343 = vector.extract_strided_slice %221 {offsets = [0, 112], sizes = [8, 16], strides = [1, 1]} : vector<8x128xf32> to vector<8x16xf32>
    %344 = vector.extract_strided_slice %222 {offsets = [0, 112], sizes = [8, 16], strides = [1, 1]} : vector<8x128xf32> to vector<8x16xf32>
    %345 = tpu.transpose %344, [1, 0] : vector<8x16xf32> -> vector<16x8xf32>
    %cst_108 = arith.constant dense<0.000000e+00> : vector<8x8xf32>
    %346 = tpu.matmul %343, %345, %cst_108 {dimension_numbers = #tpu.dot_dimension_numbers<[1], [0], [0], [1], [0, 0, 1, 1], [], []>} : vector<8x16xf32>, vector<16x8xf32>, vector<8x8xf32> -> vector<8x8xf32>
    %cst_109 = arith.constant 2.500000e-01 : f32
    %347 = vector.broadcast %cst_109 : f32 to vector<8x8xf32>
    %348 = arith.mulf %346, %347 : vector<8x8xf32>
    %cst_110 = arith.constant dense<0xFF800000> : vector<8xf32>
    %349 = vector.multi_reduction <maximumf>, %348, %cst_110 [1] : vector<8x8xf32> to vector<8xf32>
    %350 = vector.shape_cast %349 : vector<8xf32> to vector<8x1xf32>
    %351 = vector.broadcast %350 : vector<8x1xf32> to vector<8x8xf32>
    %352 = arith.subf %348, %351 : vector<8x8xf32>
    %353 = math.exp %352 : vector<8x8xf32>
    %cst_111 = arith.constant dense<0.000000e+00> : vector<8xf32>
    %354 = vector.multi_reduction <add>, %353, %cst_111 [1] : vector<8x8xf32> to vector<8xf32>
    %355 = vector.shape_cast %354 : vector<8xf32> to vector<8x1xf32>
    %356 = vector.broadcast %355 : vector<8x1xf32> to vector<8x8xf32>
    %357 = arith.divf %353, %356 : vector<8x8xf32>
    %358 = vector.extract_strided_slice %223 {offsets = [0, 112], sizes = [8, 16], strides = [1, 1]} : vector<8x128xf32> to vector<8x16xf32>
    %cst_112 = arith.constant dense<0.000000e+00> : vector<8x16xf32>
    %359 = tpu.matmul %357, %358, %cst_112 {dimension_numbers = #tpu.dot_dimension_numbers<[1], [0], [0], [1], [0, 0, 1, 1], [], []>} : vector<8x8xf32>, vector<8x16xf32>, vector<8x16xf32> -> vector<8x16xf32>
    %360 = tpu.concatenate %240, %257, %274, %291, %308, %325, %342, %359 in 1 : vector<8x16xf32>, vector<8x16xf32>, vector<8x16xf32>, vector<8x16xf32>, vector<8x16xf32>, vector<8x16xf32>, vector<8x16xf32>, vector<8x16xf32> -> vector<8x128xf32>
    %361 = tpu.concatenate %220, %360 in 0 : vector<8x128xf32>, vector<8x128xf32> -> vector<16x128xf32>
    %c0_113 = arith.constant 0 : index
    %c0_114 = arith.constant 0 : index
    %362 = vector.load %arg10[%c0_113, %c0_114] : memref<128x128xf32, #tpu.memory_space<vmem>>, vector<128x128xf32>
    %363 = arith.truncf %361 : vector<16x128xf32> to vector<16x128xbf16>
    %364 = arith.truncf %362 : vector<128x128xf32> to vector<128x128xbf16>
    %cst_115 = arith.constant dense<0.000000e+00> : vector<16x128xf32>
    %365 = tpu.matmul %363, %364, %cst_115 {dimension_numbers = #tpu.dot_dimension_numbers<[1], [0], [0], [1], [0, 0, 1, 1], [], []>} : vector<16x128xbf16>, vector<128x128xbf16>, vector<16x128xf32> -> vector<16x128xf32>
    %c0_116 = arith.constant 0 : index
    %c0_117 = arith.constant 0 : index
    %366 = vector.load %arg11[%c0_116, %c0_117] : memref<1x128xf32, #tpu.memory_space<vmem>>, vector<1x128xf32>
    %367 = vector.broadcast %366 : vector<1x128xf32> to vector<16x128xf32>
    %368 = arith.addf %365, %367 : vector<16x128xf32>
    %369 = arith.addf %70, %368 : vector<16x128xf32>
    %c0_118 = arith.constant 0 : index
    %c0_119 = arith.constant 0 : index
    %370 = vector.load %arg12[%c0_118, %c0_119] : memref<1x128xf32, #tpu.memory_space<vmem>>, vector<1x128xf32>
    %c0_120 = arith.constant 0 : index
    %c0_121 = arith.constant 0 : index
    %371 = vector.load %arg13[%c0_120, %c0_121] : memref<1x128xf32, #tpu.memory_space<vmem>>, vector<1x128xf32>
    %cst_122 = arith.constant dense<0.000000e+00> : vector<16xf32>
    %372 = vector.multi_reduction <add>, %369, %cst_122 [1] : vector<16x128xf32> to vector<16xf32>
    %373 = vector.shape_cast %372 : vector<16xf32> to vector<16x1xf32>
    %cst_123 = arith.constant 1.280000e+02 : f32
    %374 = vector.broadcast %cst_123 : f32 to vector<16x1xf32>
    %375 = arith.divf %373, %374 : vector<16x1xf32>
    %376 = vector.broadcast %375 : vector<16x1xf32> to vector<16x128xf32>
    %377 = arith.subf %369, %376 : vector<16x128xf32>
    %378 = arith.mulf %377, %377 : vector<16x128xf32>
    %cst_124 = arith.constant dense<0.000000e+00> : vector<16xf32>
    %379 = vector.multi_reduction <add>, %378, %cst_124 [1] : vector<16x128xf32> to vector<16xf32>
    %380 = vector.shape_cast %379 : vector<16xf32> to vector<16x1xf32>
    %cst_125 = arith.constant 1.280000e+02 : f32
    %381 = vector.broadcast %cst_125 : f32 to vector<16x1xf32>
    %382 = arith.divf %380, %381 : vector<16x1xf32>
    %383 = vector.broadcast %375 : vector<16x1xf32> to vector<16x128xf32>
    %384 = arith.subf %369, %383 : vector<16x128xf32>
    %cst_126 = arith.constant 9.99999974E-6 : f32
    %385 = vector.broadcast %cst_126 : f32 to vector<16x1xf32>
    %386 = arith.addf %382, %385 : vector<16x1xf32>
    %387 = math.rsqrt %386 : vector<16x1xf32>
    %388 = vector.broadcast %387 : vector<16x1xf32> to vector<16x128xf32>
    %389 = arith.mulf %384, %388 : vector<16x128xf32>
    %390 = vector.broadcast %370 : vector<1x128xf32> to vector<16x128xf32>
    %391 = arith.mulf %389, %390 : vector<16x128xf32>
    %392 = vector.broadcast %371 : vector<1x128xf32> to vector<16x128xf32>
    %393 = arith.addf %391, %392 : vector<16x128xf32>
    %c0_127 = arith.constant 0 : index
    %c0_128 = arith.constant 0 : index
    %394 = vector.load %arg14[%c0_127, %c0_128] : memref<128x512xf32, #tpu.memory_space<vmem>>, vector<128x512xf32>
    %395 = arith.truncf %393 : vector<16x128xf32> to vector<16x128xbf16>
    %396 = arith.truncf %394 : vector<128x512xf32> to vector<128x512xbf16>
    %cst_129 = arith.constant dense<0.000000e+00> : vector<16x512xf32>
    %397 = tpu.matmul %395, %396, %cst_129 {dimension_numbers = #tpu.dot_dimension_numbers<[1], [0], [0], [1], [0, 0, 1, 1], [], []>} : vector<16x128xbf16>, vector<128x512xbf16>, vector<16x512xf32> -> vector<16x512xf32>
    %c0_130 = arith.constant 0 : index
    %c0_131 = arith.constant 0 : index
    %398 = vector.load %arg15[%c0_130, %c0_131] : memref<1x512xf32, #tpu.memory_space<vmem>>, vector<1x512xf32>
    %399 = vector.broadcast %398 : vector<1x512xf32> to vector<16x512xf32>
    %400 = arith.addf %397, %399 : vector<16x512xf32>
    %cst_132 = arith.constant 0.000000e+00 : f32
    %401 = vector.broadcast %cst_132 : f32 to vector<16x512xf32>
    %402 = arith.maximumf %400, %401 : vector<16x512xf32>
    %c0_133 = arith.constant 0 : index
    %c0_134 = arith.constant 0 : index
    %403 = vector.load %arg16[%c0_133, %c0_134] : memref<512x128xf32, #tpu.memory_space<vmem>>, vector<512x128xf32>
    %404 = arith.truncf %402 : vector<16x512xf32> to vector<16x512xbf16>
    %405 = arith.truncf %403 : vector<512x128xf32> to vector<512x128xbf16>
    %cst_135 = arith.constant dense<0.000000e+00> : vector<16x128xf32>
    %406 = tpu.matmul %404, %405, %cst_135 {dimension_numbers = #tpu.dot_dimension_numbers<[1], [0], [0], [1], [0, 0, 1, 1], [], []>} : vector<16x512xbf16>, vector<512x128xbf16>, vector<16x128xf32> -> vector<16x128xf32>
    %c0_136 = arith.constant 0 : index
    %c0_137 = arith.constant 0 : index
    %407 = vector.load %arg17[%c0_136, %c0_137] : memref<1x128xf32, #tpu.memory_space<vmem>>, vector<1x128xf32>
    %408 = vector.broadcast %407 : vector<1x128xf32> to vector<16x128xf32>
    %409 = arith.addf %406, %408 : vector<16x128xf32>
    %410 = arith.addf %393, %409 : vector<16x128xf32>
    %c0_138 = arith.constant 0 : index
    %c0_139 = arith.constant 0 : index
    %411 = vector.load %arg18[%c0_138, %c0_139] : memref<1x128xf32, #tpu.memory_space<vmem>>, vector<1x128xf32>
    %c0_140 = arith.constant 0 : index
    %c0_141 = arith.constant 0 : index
    %412 = vector.load %arg19[%c0_140, %c0_141] : memref<1x128xf32, #tpu.memory_space<vmem>>, vector<1x128xf32>
    %cst_142 = arith.constant dense<0.000000e+00> : vector<16xf32>
    %413 = vector.multi_reduction <add>, %410, %cst_142 [1] : vector<16x128xf32> to vector<16xf32>
    %414 = vector.shape_cast %413 : vector<16xf32> to vector<16x1xf32>
    %cst_143 = arith.constant 1.280000e+02 : f32
    %415 = vector.broadcast %cst_143 : f32 to vector<16x1xf32>
    %416 = arith.divf %414, %415 : vector<16x1xf32>
    %417 = vector.broadcast %416 : vector<16x1xf32> to vector<16x128xf32>
    %418 = arith.subf %410, %417 : vector<16x128xf32>
    %419 = arith.mulf %418, %418 : vector<16x128xf32>
    %cst_144 = arith.constant dense<0.000000e+00> : vector<16xf32>
    %420 = vector.multi_reduction <add>, %419, %cst_144 [1] : vector<16x128xf32> to vector<16xf32>
    %421 = vector.shape_cast %420 : vector<16xf32> to vector<16x1xf32>
    %cst_145 = arith.constant 1.280000e+02 : f32
    %422 = vector.broadcast %cst_145 : f32 to vector<16x1xf32>
    %423 = arith.divf %421, %422 : vector<16x1xf32>
    %424 = vector.broadcast %416 : vector<16x1xf32> to vector<16x128xf32>
    %425 = arith.subf %410, %424 : vector<16x128xf32>
    %cst_146 = arith.constant 9.99999974E-6 : f32
    %426 = vector.broadcast %cst_146 : f32 to vector<16x1xf32>
    %427 = arith.addf %423, %426 : vector<16x1xf32>
    %428 = math.rsqrt %427 : vector<16x1xf32>
    %429 = vector.broadcast %428 : vector<16x1xf32> to vector<16x128xf32>
    %430 = arith.mulf %425, %429 : vector<16x128xf32>
    %431 = vector.broadcast %411 : vector<1x128xf32> to vector<16x128xf32>
    %432 = arith.mulf %430, %431 : vector<16x128xf32>
    %433 = vector.broadcast %412 : vector<1x128xf32> to vector<16x128xf32>
    %434 = arith.addf %432, %433 : vector<16x128xf32>
    %c0_147 = arith.constant 0 : index
    %c0_148 = arith.constant 0 : index
    %435 = vector.load %arg20[%c0_147, %c0_148] : memref<1x128xf32, #tpu.memory_space<vmem>>, vector<1x128xf32>
    %c0_149 = arith.constant 0 : index
    %c0_150 = arith.constant 0 : index
    %436 = vector.load %arg21[%c0_149, %c0_150] : memref<1x128xf32, #tpu.memory_space<vmem>>, vector<1x128xf32>
    %cst_151 = arith.constant dense<0.000000e+00> : vector<16xf32>
    %437 = vector.multi_reduction <add>, %434, %cst_151 [1] : vector<16x128xf32> to vector<16xf32>
    %438 = vector.shape_cast %437 : vector<16xf32> to vector<16x1xf32>
    %cst_152 = arith.constant 1.280000e+02 : f32
    %439 = vector.broadcast %cst_152 : f32 to vector<16x1xf32>
    %440 = arith.divf %438, %439 : vector<16x1xf32>
    %441 = vector.broadcast %440 : vector<16x1xf32> to vector<16x128xf32>
    %442 = arith.subf %434, %441 : vector<16x128xf32>
    %443 = arith.mulf %442, %442 : vector<16x128xf32>
    %cst_153 = arith.constant dense<0.000000e+00> : vector<16xf32>
    %444 = vector.multi_reduction <add>, %443, %cst_153 [1] : vector<16x128xf32> to vector<16xf32>
    %445 = vector.shape_cast %444 : vector<16xf32> to vector<16x1xf32>
    %cst_154 = arith.constant 1.280000e+02 : f32
    %446 = vector.broadcast %cst_154 : f32 to vector<16x1xf32>
    %447 = arith.divf %445, %446 : vector<16x1xf32>
    %448 = vector.broadcast %440 : vector<16x1xf32> to vector<16x128xf32>
    %449 = arith.subf %434, %448 : vector<16x128xf32>
    %cst_155 = arith.constant 9.99999974E-6 : f32
    %450 = vector.broadcast %cst_155 : f32 to vector<16x1xf32>
    %451 = arith.addf %447, %450 : vector<16x1xf32>
    %452 = math.rsqrt %451 : vector<16x1xf32>
    %453 = vector.broadcast %452 : vector<16x1xf32> to vector<16x128xf32>
    %454 = arith.mulf %449, %453 : vector<16x128xf32>
    %455 = vector.broadcast %435 : vector<1x128xf32> to vector<16x128xf32>
    %456 = arith.mulf %454, %455 : vector<16x128xf32>
    %457 = vector.broadcast %436 : vector<1x128xf32> to vector<16x128xf32>
    %458 = arith.addf %456, %457 : vector<16x128xf32>
    %459 = vector.extract_strided_slice %458 {offsets = [0, 0], sizes = [8, 128], strides = [1, 1]} : vector<16x128xf32> to vector<8x128xf32>
    %cst_156 = arith.constant dense<0.000000e+00> : vector<128xf32>
    %460 = vector.multi_reduction <add>, %459, %cst_156 [0] : vector<8x128xf32> to vector<128xf32>
    %461 = vector.shape_cast %460 : vector<128xf32> to vector<1x128xf32>
    %cst_157 = arith.constant 8.000000e+00 : f32
    %462 = vector.broadcast %cst_157 : f32 to vector<1x128xf32>
    %463 = arith.divf %461, %462 : vector<1x128xf32>
    %464 = vector.extract_strided_slice %458 {offsets = [8, 0], sizes = [8, 128], strides = [1, 1]} : vector<16x128xf32> to vector<8x128xf32>
    %cst_158 = arith.constant dense<0.000000e+00> : vector<128xf32>
    %465 = vector.multi_reduction <add>, %464, %cst_158 [0] : vector<8x128xf32> to vector<128xf32>
    %466 = vector.shape_cast %465 : vector<128xf32> to vector<1x128xf32>
    %cst_159 = arith.constant 8.000000e+00 : f32
    %467 = vector.broadcast %cst_159 : f32 to vector<1x128xf32>
    %468 = arith.divf %466, %467 : vector<1x128xf32>
    %469 = tpu.concatenate %463, %468 in 0 : vector<1x128xf32>, vector<1x128xf32> -> vector<2x128xf32>
    %c0_160 = arith.constant 0 : index
    %c0_161 = arith.constant 0 : index
    %470 = vector.load %arg22[%c0_160, %c0_161] : memref<128x4xf32, #tpu.memory_space<vmem>>, vector<128x4xf32>
    %cst_162 = arith.constant dense<0.000000e+00> : vector<2x4xf32>
    %471 = tpu.matmul %469, %470, %cst_162 {dimension_numbers = #tpu.dot_dimension_numbers<[1], [0], [0], [1], [0, 0, 1, 1], [], []>} : vector<2x128xf32>, vector<128x4xf32>, vector<2x4xf32> -> vector<2x4xf32>
    %c0_163 = arith.constant 0 : index
    %c0_164 = arith.constant 0 : index
    %472 = vector.load %arg23[%c0_163, %c0_164] : memref<1x4xf32, #tpu.memory_space<vmem>>, vector<1x4xf32>
    %473 = vector.broadcast %472 : vector<1x4xf32> to vector<2x4xf32>
    %474 = arith.addf %471, %473 : vector<2x4xf32>
    %c0_165 = arith.constant 0 : index
    %c0_166 = arith.constant 0 : index
    %475 = vector.load %arg24[%c0_165, %c0_166] : memref<2x4xf32, #tpu.memory_space<vmem>>, vector<2x4xf32>
    tpu.vector_store %arg24[%c0_165, %c0_166], %474 {strides = array<i32>} : memref<2x4xf32, #tpu.memory_space<vmem>>, vector<2x4xf32>,
    return
  }
}

</mosaic_0001>

<llo_original>
// kernel: esbn_trans_forward.4
$region0: #{esbn_trans_forward.4}
  #allocation0 [shape = 'u32[]', space=smem, size = 0x4, offset = 0x4, fixed_abs, tag = 'smem constant byte address 0x4 - core index']
  #allocation1 [shape = 'u32[144,128]{1,0:T(1,128)}', space=vmem, size = 0x12000, scoped, tag = 'internal scratch']
  %s0 = inlined_call_operand.vmem [shape: f32[4096,16], index: 0, kind: input, shape index: {}]
  %s1 = inlined_call_operand.vmem [shape: f32[16,32], index: 1, kind: input, shape index: {}]
  %s2 = inlined_call_operand.vmem [shape: f32[1,32], index: 2, kind: input, shape index: {}]
  %s3 = inlined_call_operand.vmem [shape: f32[4096,32], index: 3, kind: output, shape index: {}]
  %s4 = sld [smem:[#allocation0]]
  $region45: #{esbn_trans_forward.4} parent=0
    _
  %s6 = ssub.s32 1, %s4
  %s7 = scalar_select 0, %s6, %s4
  loop: start=0, step=1, limit=4
  $region2: #{esbn_trans_forward.4} parent=0 // loop_pre_header
    _
  $region3: #{esbn_trans_forward.4} parent=0 // loop_header
    %s9 = sphi 0, %s13
    %p10 = scmp.ge.s32.totalorder %s9, 4
    %s19 = sphi 0, %s21
    %s22 = sphi 0, %s19
    %s23 = sphi 0, %s22
    %s39 = sphi 0, %s23
    %s43 = sphi 0, %s43
    %s45 = sphi 0, %s43
    %s46 = sphi 0, %s45
    %s60 = sphi 0, %s46
    %s64 = sphi 0, %s64
    %s66 = sphi 0, %s64
    %s67 = sphi 0, %s66
    %s81 = sphi 0, %s67
    %s87 = sphi 0, %s89
    %s90 = sphi 0, %s87
    %s91 = sphi 0, %s90
    %s107 = sphi 0, %s91
  $region4: #{esbn_trans_forward.4} parent=0 // loop_header_branch
    %12 = sbr.rel (%p10) target = $region8
  $region5: #{esbn_trans_forward.4} parent=0 // loop_body
    %s14 = ssub.s32 %s9, 1
    %s15 = ssub.s32 %s9, 2
    %s16 = sadd.s32 %s9, 1
    %s17 = ssub.s32 %s9, %s16
    %p18 = scmp.eq.s32.totalorder %s17, 0
    %s20 = sadd.s32 %s19, 1
    %s21 = scalar_select %p18, %s19, %s20
    %p24 = pneg %p18
    %p25 = scmp.eq.s32.totalorder %s9, 1
    %p26 = por %p24, %p25
    %p27 = scmp.ne.s32.totalorder %s19, %s22
    %p28 = scmp.eq.s32.totalorder %s9, 0
    %p29 = por %p27, %p28
    %p30 = scmp.ne.s32.totalorder %s19, %s22
    %p31 = scmp.eq.s32.totalorder %s14, 1
    %p32 = por %p30, %p31
    %p33 = scmp.ne.s32.totalorder %s22, %s23
    %p34 = scmp.eq.s32.totalorder %s14, 0
    %p35 = por %p33, %p34
    %p36 = scmp.ne.s32.totalorder %s22, %s23
    %p37 = scmp.eq.s32.totalorder %s15, 1
    %p38 = por %p36, %p37
    %p40 = scmp.ne.s32.totalorder %s23, %s39
    %p41 = scmp.eq.s32.totalorder %s15, 0
    %p42 = por %p40, %p41
    %s44 = sadd.s32 %s43, 1
    %p47 = scmp.eq.s32.totalorder %s9, 1
    %p48 = scmp.ne.s32.totalorder %s43, %s45
    %p49 = scmp.eq.s32.totalorder %s9, 0
    %p50 = por %p48, %p49
    %p51 = scmp.ne.s32.totalorder %s43, %s45
    %p52 = scmp.eq.s32.totalorder %s14, 1
    %p53 = por %p51, %p52
    %p54 = scmp.ne.s32.totalorder %s45, %s46
    %p55 = scmp.eq.s32.totalorder %s14, 0
    %p56 = por %p54, %p55
    %p57 = scmp.ne.s32.totalorder %s45, %s46
    %p58 = scmp.eq.s32.totalorder %s15, 1
    %p59 = por %p57, %p58
    %p61 = scmp.ne.s32.totalorder %s46, %s60
    %p62 = scmp.eq.s32.totalorder %s15, 0
    %p63 = por %p61, %p62
    %s65 = sadd.s32 %s64, 1
    %p68 = scmp.eq.s32.totalorder %s9, 1
    %p69 = scmp.ne.s32.totalorder %s64, %s66
    %p70 = scmp.eq.s32.totalorder %s9, 0
    %p71 = por %p69, %p70
    %p72 = scmp.ne.s32.totalorder %s64, %s66
    %p73 = scmp.eq.s32.totalorder %s14, 1
    %p74 = por %p72, %p73
    %p75 = scmp.ne.s32.totalorder %s66, %s67
    %p76 = scmp.eq.s32.totalorder %s14, 0
    %p77 = por %p75, %p76
    %p78 = scmp.ne.s32.totalorder %s66, %s67
    %p79 = scmp.eq.s32.totalorder %s15, 1
    %p80 = por %p78, %p79
    %p82 = scmp.ne.s32.totalorder %s67, %s81
    %p83 = scmp.eq.s32.totalorder %s15, 0
    %p84 = por %p82, %p83
    %s85 = ssub.s32 %s9, %s16
    %p86 = scmp.eq.s32.totalorder %s85, 0
    %s88 = sadd.s32 %s87, 1
    %s89 = scalar_select %p86, %s87, %s88
    %p92 = pneg %p86
    %p93 = scmp.eq.s32.totalorder %s9, 1
    %p94 = por %p92, %p93
    %p95 = scmp.ne.s32.totalorder %s87, %s90
    %p96 = scmp.eq.s32.totalorder %s9, 0
    %p97 = por %p95, %p96
    %p98 = scmp.ne.s32.totalorder %s87, %s90
    %p99 = scmp.eq.s32.totalorder %s14, 1
    %p100 = por %p98, %p99
    %p101 = scmp.ne.s32.totalorder %s90, %s91
    %p102 = scmp.eq.s32.totalorder %s14, 0
    %p103 = por %p101, %p102
    %p104 = scmp.ne.s32.totalorder %s90, %s91
    %p105 = scmp.eq.s32.totalorder %s15, 1
    %p106 = por %p104, %p105
    %p108 = scmp.ne.s32.totalorder %s91, %s107
    %p109 = scmp.eq.s32.totalorder %s15, 0
    %p110 = por %p108, %p109
    %p111 = scmp.le.s32.totalorder 1, %s9
    %p112 = scmp.lt.s32.totalorder %s9, 3
    %p113 = pnand %p111, %p112
    %p114 = pneg %p113
    // Predicated region
    $region9: #{esbn_trans_forward.4} parent=5 // pred_check
      _
    $region10: #{esbn_trans_forward.4} parent=5 // pred_check_branch
      %116 = sbr.rel (%p113) target = $region12
    $region11: #{esbn_trans_forward.4} parent=5 // pred_region
      %s117 = ssub.s32 %s9, 1
      // Predicated region
      $region13: #{esbn_trans_forward.4} parent=11 // pred_check
        %p118 = pneg %p56
      $region14: #{esbn_trans_forward.4} parent=11 // pred_check_branch
        %120 = sbr.rel (%p118) target = $region16
      $region15: #{esbn_trans_forward.4} parent=11 // pred_region
        _
      $region16: #{esbn_trans_forward.4} parent=11 // pred_fallthru
        _
      // Predicated region
      $region17: #{esbn_trans_forward.4} parent=11 // pred_check
        %p121 = pneg %p77
      $region18: #{esbn_trans_forward.4} parent=11 // pred_check_branch
        %123 = sbr.rel (%p121) target = $region20
      $region19: #{esbn_trans_forward.4} parent=11 // pred_region
        _
      $region20: #{esbn_trans_forward.4} parent=11 // pred_fallthru
        _
    $region12: #{esbn_trans_forward.4} parent=5 // pred_fallthru
      _
    %p124 = scmp.lt.s32.totalorder %s9, 2
    // Predicated region
    $region21: #{esbn_trans_forward.4} parent=5 // pred_check
      %p125 = pneg %p124
    $region22: #{esbn_trans_forward.4} parent=5 // pred_check_branch
      %127 = sbr.rel (%p125) target = $region24
    $region23: #{esbn_trans_forward.4} parent=5 // pred_region
      // Predicated region
      $region25: #{esbn_trans_forward.4} parent=23 // pred_check
        %p128 = pneg %p29
      $region26: #{esbn_trans_forward.4} parent=23 // pred_check_branch
        %130 = sbr.rel (%p128) target = $region28
      $region27: #{esbn_trans_forward.4} parent=23 // pred_region
        %s131 = smul.u32 256, %s9
        %p132 = scmp.lt.s32.totalorder %s131, 511
        %s133 = scalar_select %p132, %s131, 511
        %s134 = smul.addr %s133, 8
        %s135 = scalar_lea.vmem %s0, %s134
        %s136 = smul.u32 256, %s9
      $region28: #{esbn_trans_forward.4} parent=23 // pred_fallthru
        _
    $region24: #{esbn_trans_forward.4} parent=5 // pred_fallthru
      _
    %p137 = scmp.le.s32.totalorder 1, %s9
    %p138 = scmp.lt.s32.totalorder %s9, 3
    %p139 = pnand %p137, %p138
    %p140 = pneg %p139
    // Predicated region
    $region29: #{esbn_trans_forward.4} parent=5 // pred_check
      _
    $region30: #{esbn_trans_forward.4} parent=5 // pred_check_branch
      %142 = sbr.rel (%p139) target = $region32
    $region31: #{esbn_trans_forward.4} parent=5 // pred_region
      %s143 = ssub.s32 %s9, 1
      %s144 = smul.u32 256, %s14
      %p145 = scmp.lt.s32.totalorder %s144, 511
      %s146 = scalar_select %p145, %s144, 511
      %s147 = smul.addr %s146, 8
      %s148 = scalar_lea.vmem %s0, %s147
      %p149 = pneg %p35
      %p150 = pneg %p32
      %p151 = pneg %p56
      %p152 = pneg %p53
      %p153 = pneg %p77
      %p154 = pneg %p74
      %p155 = pneg %p103
      %p156 = pneg %p100
      %s157 = smul.u32 256, %s14
      %p158 = scmp.lt.s32.totalorder %s157, 511
      %s159 = scalar_select %p158, %s157, 511
      %s160 = smul.addr %s159, 8
      %s161 = scalar_lea.vmem %s3, %s160
      %s162 = smul.u32 256, %s14
      %p163 = scmp.lt.s32.totalorder %s162, 511
      %s164 = scalar_select %p163, %s162, 511
      %s165 = smul.addr %s164, 8
      %s166 = scalar_lea.vmem %s0, %s165
      %s167 = smul.u32 256, %s14
      %s168 = smul.u32 256, %s14
      %p169 = scmp.lt.s32.totalorder %s168, 511
      %s170 = scalar_select %p169, %s168, 511
      %s171 = smul.addr %s170, 8
      %s172 = scalar_lea.vmem %s3, %s171
      %s173 = smul.u32 256, %s14
      %v175 = vld [vmem:[%s166] sm:$0xff]
      %v176 = vld [vmem:[%s166 + $0x8] sm:$0xff]
      %v177 = vld [vmem:[%s166 + $0x10] sm:$0xff]
      %v178 = vld [vmem:[%s166 + $0x18] sm:$0xff]
      %v179 = vld [vmem:[%s166 + $0x20] sm:$0xff]
      %v180 = vld [vmem:[%s166 + $0x28] sm:$0xff]
      %v181 = vld [vmem:[%s166 + $0x30] sm:$0xff]
      %v182 = vld [vmem:[%s166 + $0x38] sm:$0xff]
      %v183 = vld [vmem:[%s166 + $0x40] sm:$0xff]
      %v184 = vld [vmem:[%s166 + $0x48] sm:$0xff]
      %v185 = vld [vmem:[%s166 + $0x50] sm:$0xff]
      %v186 = vld [vmem:[%s166 + $0x58] sm:$0xff]
      %v187 = vld [vmem:[%s166 + $0x60] sm:$0xff]
      %v188 = vld [vmem:[%s166 + $0x68] sm:$0xff]
      %v189 = vld [vmem:[%s166 + $0x70] sm:$0xff]
      %v190 = vld [vmem:[%s166 + $0x78] sm:$0xff]
      %v191 = vld [vmem:[%s166 + $0x80] sm:$0xff]
      %v192 = vld [vmem:[%s166 + $0x88] sm:$0xff]
      %v193 = vld [vmem:[%s166 + $0x90] sm:$0xff]
      %v194 = vld [vmem:[%s166 + $0x98] sm:$0xff]
      %v195 = vld [vmem:[%s166 + $0xa0] sm:$0xff]
      %v196 = vld [vmem:[%s166 + $0xa8] sm:$0xff]
      %v197 = vld [vmem:[%s166 + $0xb0] sm:$0xff]
      %v198 = vld [vmem:[%s166 + $0xb8] sm:$0xff]
      %v199 = vld [vmem:[%s166 + $0xc0] sm:$0xff]
      %v200 = vld [vmem:[%s166 + $0xc8] sm:$0xff]
      %v201 = vld [vmem:[%s166 + $0xd0] sm:$0xff]
      %v202 = vld [vmem:[%s166 + $0xd8] sm:$0xff]
      %v203 = vld [vmem:[%s166 + $0xe0] sm:$0xff]
      %v204 = vld [vmem:[%s166 + $0xe8] sm:$0xff]
      %v205 = vld [vmem:[%s166 + $0xf0] sm:$0xff]
      %v206 = vld [vmem:[%s166 + $0xf8] sm:$0xff]
      %v207 = vld [vmem:[%s166 + $0x100] sm:$0xff]
      %v208 = vld [vmem:[%s166 + $0x108] sm:$0xff]
      %v209 = vld [vmem:[%s166 + $0x110] sm:$0xff]
      %v210 = vld [vmem:[%s166 + $0x118] sm:$0xff]
      %v211 = vld [vmem:[%s166 + $0x120] sm:$0xff]
      %v212 = vld [vmem:[%s166 + $0x128] sm:$0xff]
      %v213 = vld [vmem:[%s166 + $0x130] sm:$0xff]
      %v214 = vld [vmem:[%s166 + $0x138] sm:$0xff]
      %v215 = vld [vmem:[%s166 + $0x140] sm:$0xff]
      %v216 = vld [vmem:[%s166 + $0x148] sm:$0xff]
      %v217 = vld [vmem:[%s166 + $0x150] sm:$0xff]
      %v218 = vld [vmem:[%s166 + $0x158] sm:$0xff]
      %v219 = vld [vmem:[%s166 + $0x160] sm:$0xff]
      %v220 = vld [vmem:[%s166 + $0x168] sm:$0xff]
      %v221 = vld [vmem:[%s166 + $0x170] sm:$0xff]
      %v222 = vld [vmem:[%s166 + $0x178] sm:$0xff]
      %v223 = vld [vmem:[%s166 + $0x180] sm:$0xff]
      %v224 = vld [vmem:[%s166 + $0x188] sm:$0xff]
      %v225 = vld [vmem:[%s166 + $0x190] sm:$0xff]
      %v226 = vld [vmem:[%s166 + $0x198] sm:$0xff]
      %v227 = vld [vmem:[%s166 + $0x1a0] sm:$0xff]
      %v228 = vld [vmem:[%s166 + $0x1a8] sm:$0xff]
      %v229 = vld [vmem:[%s166 + $0x1b0] sm:$0xff]
      %v230 = vld [vmem:[%s166 + $0x1b8] sm:$0xff]
      %v231 = vld [vmem:[%s166 + $0x1c0] sm:$0xff]
      %v232 = vld [vmem:[%s166 + $0x1c8] sm:$0xff]
      %v233 = vld [vmem:[%s166 + $0x1d0] sm:$0xff]
      %v234 = vld [vmem:[%s166 + $0x1d8] sm:$0xff]
      %v235 = vld [vmem:[%s166 + $0x1e0] sm:$0xff]
      %v236 = vld [vmem:[%s166 + $0x1e8] sm:$0xff]
      %v237 = vld [vmem:[%s166 + $0x1f0] sm:$0xff]
      %v238 = vld [vmem:[%s166 + $0x1f8] sm:$0xff]
      %v239 = vld [vmem:[%s166 + $0x200] sm:$0xff]
      %v240 = vld [vmem:[%s166 + $0x208] sm:$0xff]
      %v241 = vld [vmem:[%s166 + $0x210] sm:$0xff]
      %v242 = vld [vmem:[%s166 + $0x218] sm:$0xff]
      %v243 = vld [vmem:[%s166 + $0x220] sm:$0xff]
      %v244 = vld [vmem:[%s166 + $0x228] sm:$0xff]
      %v245 = vld [vmem:[%s166 + $0x230] sm:$0xff]
      %v246 = vld [vmem:[%s166 + $0x238] sm:$0xff]
      %v247 = vld [vmem:[%s166 + $0x240] sm:$0xff]
      %v248 = vld [vmem:[%s166 + $0x248] sm:$0xff]
      %v249 = vld [vmem:[%s166 + $0x250] sm:$0xff]
      %v250 = vld [vmem:[%s166 + $0x258] sm:$0xff]
      %v251 = vld [vmem:[%s166 + $0x260] sm:$0xff]
      %v252 = vld [vmem:[%s166 + $0x268] sm:$0xff]
      %v253 = vld [vmem:[%s166 + $0x270] sm:$0xff]
      %v254 = vld [vmem:[%s166 + $0x278] sm:$0xff]
      %v255 = vld [vmem:[%s166 + $0x280] sm:$0xff]
      %v256 = vld [vmem:[%s166 + $0x288] sm:$0xff]
      %v257 = vld [vmem:[%s166 + $0x290] sm:$0xff]
      %v258 = vld [vmem:[%s166 + $0x298] sm:$0xff]
      %v259 = vld [vmem:[%s166 + $0x2a0] sm:$0xff]
      %v260 = vld [vmem:[%s166 + $0x2a8] sm:$0xff]
      %v261 = vld [vmem:[%s166 + $0x2b0] sm:$0xff]
      %v262 = vld [vmem:[%s166 + $0x2b8] sm:$0xff]
      %v263 = vld [vmem:[%s166 + $0x2c0] sm:$0xff]
      %v264 = vld [vmem:[%s166 + $0x2c8] sm:$0xff]
      %v265 = vld [vmem:[%s166 + $0x2d0] sm:$0xff]
      %v266 = vld [vmem:[%s166 + $0x2d8] sm:$0xff]
      %v267 = vld [vmem:[%s166 + $0x2e0] sm:$0xff]
      %v268 = vld [vmem:[%s166 + $0x2e8] sm:$0xff]
      %v269 = vld [vmem:[%s166 + $0x2f0] sm:$0xff]
      %v270 = vld [vmem:[%s166 + $0x2f8] sm:$0xff]
      %v271 = vld [vmem:[%s166 + $0x300] sm:$0xff]
      %v272 = vld [vmem:[%s166 + $0x308] sm:$0xff]
      %v273 = vld [vmem:[%s166 + $0x310] sm:$0xff]
      %v274 = vld [vmem:[%s166 + $0x318] sm:$0xff]
      %v275 = vld [vmem:[%s166 + $0x320] sm:$0xff]
      %v276 = vld [vmem:[%s166 + $0x328] sm:$0xff]
      %v277 = vld [vmem:[%s166 + $0x330] sm:$0xff]
      %v278 = vld [vmem:[%s166 + $0x338] sm:$0xff]
      %v279 = vld [vmem:[%s166 + $0x340] sm:$0xff]
      %v280 = vld [vmem:[%s166 + $0x348] sm:$0xff]
      %v281 = vld [vmem:[%s166 + $0x350] sm:$0xff]
      %v282 = vld [vmem:[%s166 + $0x358] sm:$0xff]
      %v283 = vld [vmem:[%s166 + $0x360] sm:$0xff]
      %v284 = vld [vmem:[%s166 + $0x368] sm:$0xff]
      %v285 = vld [vmem:[%s166 + $0x370] sm:$0xff]
      %v286 = vld [vmem:[%s166 + $0x378] sm:$0xff]
      %v287 = vld [vmem:[%s166 + $0x380] sm:$0xff]
      %v288 = vld [vmem:[%s166 + $0x388] sm:$0xff]
      %v289 = vld [vmem:[%s166 + $0x390] sm:$0xff]
      %v290 = vld [vmem:[%s166 + $0x398] sm:$0xff]
      %v291 = vld [vmem:[%s166 + $0x3a0] sm:$0xff]
      %v292 = vld [vmem:[%s166 + $0x3a8] sm:$0xff]
      %v293 = vld [vmem:[%s166 + $0x3b0] sm:$0xff]
      %v294 = vld [vmem:[%s166 + $0x3b8] sm:$0xff]
      %v295 = vld [vmem:[%s166 + $0x3c0] sm:$0xff]
      %v296 = vld [vmem:[%s166 + $0x3c8] sm:$0xff]
      %v297 = vld [vmem:[%s166 + $0x3d0] sm:$0xff]
      %v298 = vld [vmem:[%s166 + $0x3d8] sm:$0xff]
      %v299 = vld [vmem:[%s166 + $0x3e0] sm:$0xff]
      %v300 = vld [vmem:[%s166 + $0x3e8] sm:$0xff]
      %v301 = vld [vmem:[%s166 + $0x3f0] sm:$0xff]
      %v302 = vld [vmem:[%s166 + $0x3f8] sm:$0xff]
      %v303 = vld [vmem:[%s166 + $0x400] sm:$0xff]
      %v304 = vld [vmem:[%s166 + $0x408] sm:$0xff]
      %v305 = vld [vmem:[%s166 + $0x410] sm:$0xff]
      %v306 = vld [vmem:[%s166 + $0x418] sm:$0xff]
      %v307 = vld [vmem:[%s166 + $0x420] sm:$0xff]
      %v308 = vld [vmem:[%s166 + $0x428] sm:$0xff]
      %v309 = vld [vmem:[%s166 + $0x430] sm:$0xff]
      %v310 = vld [vmem:[%s166 + $0x438] sm:$0xff]
      %v311 = vld [vmem:[%s166 + $0x440] sm:$0xff]
      %v312 = vld [vmem:[%s166 + $0x448] sm:$0xff]
      %v313 = vld [vmem:[%s166 + $0x450] sm:$0xff]
      %v314 = vld [vmem:[%s166 + $0x458] sm:$0xff]
      %v315 = vld [vmem:[%s166 + $0x460] sm:$0xff]
      %v316 = vld [vmem:[%s166 + $0x468] sm:$0xff]
      %v317 = vld [vmem:[%s166 + $0x470] sm:$0xff]
      %v318 = vld [vmem:[%s166 + $0x478] sm:$0xff]
      %v319 = vld [vmem:[%s166 + $0x480] sm:$0xff]
      %v320 = vld [vmem:[%s166 + $0x488] sm:$0xff]
      %v321 = vld [vmem:[%s166 + $0x490] sm:$0xff]
      %v322 = vld [vmem:[%s166 + $0x498] sm:$0xff]
      %v323 = vld [vmem:[%s166 + $0x4a0] sm:$0xff]
      %v324 = vld [vmem:[%s166 + $0x4a8] sm:$0xff]
      %v325 = vld [vmem:[%s166 + $0x4b0] sm:$0xff]
      %v326 = vld [vmem:[%s166 + $0x4b8] sm:$0xff]
      %v327 = vld [vmem:[%s166 + $0x4c0] sm:$0xff]
      %v328 = vld [vmem:[%s166 + $0x4c8] sm:$0xff]
      %v329 = vld [vmem:[%s166 + $0x4d0] sm:$0xff]
      %v330 = vld [vmem:[%s166 + $0x4d8] sm:$0xff]
      %v331 = vld [vmem:[%s166 + $0x4e0] sm:$0xff]
      %v332 = vld [vmem:[%s166 + $0x4e8] sm:$0xff]
      %v333 = vld [vmem:[%s166 + $0x4f0] sm:$0xff]
      %v334 = vld [vmem:[%s166 + $0x4f8] sm:$0xff]
      %v335 = vld [vmem:[%s166 + $0x500] sm:$0xff]
      %v336 = vld [vmem:[%s166 + $0x508] sm:$0xff]
      %v337 = vld [vmem:[%s166 + $0x510] sm:$0xff]
      %v338 = vld [vmem:[%s166 + $0x518] sm:$0xff]
      %v339 = vld [vmem:[%s166 + $0x520] sm:$0xff]
      %v340 = vld [vmem:[%s166 + $0x528] sm:$0xff]
      %v341 = vld [vmem:[%s166 + $0x530] sm:$0xff]
      %v342 = vld [vmem:[%s166 + $0x538] sm:$0xff]
      %v343 = vld [vmem:[%s166 + $0x540] sm:$0xff]
      %v344 = vld [vmem:[%s166 + $0x548] sm:$0xff]
      %v345 = vld [vmem:[%s166 + $0x550] sm:$0xff]
      %v346 = vld [vmem:[%s166 + $0x558] sm:$0xff]
      %v347 = vld [vmem:[%s166 + $0x560] sm:$0xff]
      %v348 = vld [vmem:[%s166 + $0x568] sm:$0xff]
      %v349 = vld [vmem:[%s166 + $0x570] sm:$0xff]
      %v350 = vld [vmem:[%s166 + $0x578] sm:$0xff]
      %v351 = vld [vmem:[%s166 + $0x580] sm:$0xff]
      %v352 = vld [vmem:[%s166 + $0x588] sm:$0xff]
      %v353 = vld [vmem:[%s166 + $0x590] sm:$0xff]
      %v354 = vld [vmem:[%s166 + $0x598] sm:$0xff]
      %v355 = vld [vmem:[%s166 + $0x5a0] sm:$0xff]
      %v356 = vld [vmem:[%s166 + $0x5a8] sm:$0xff]
      %v357 = vld [vmem:[%s166 + $0x5b0] sm:$0xff]
      %v358 = vld [vmem:[%s166 + $0x5b8] sm:$0xff]
      %v359 = vld [vmem:[%s166 + $0x5c0] sm:$0xff]
      %v360 = vld [vmem:[%s166 + $0x5c8] sm:$0xff]
      %v361 = vld [vmem:[%s166 + $0x5d0] sm:$0xff]
      %v362 = vld [vmem:[%s166 + $0x5d8] sm:$0xff]
      %v363 = vld [vmem:[%s166 + $0x5e0] sm:$0xff]
      %v364 = vld [vmem:[%s166 + $0x5e8] sm:$0xff]
      %v365 = vld [vmem:[%s166 + $0x5f0] sm:$0xff]
      %v366 = vld [vmem:[%s166 + $0x5f8] sm:$0xff]
      %v367 = vld [vmem:[%s166 + $0x600] sm:$0xff]
      %v368 = vld [vmem:[%s166 + $0x608] sm:$0xff]
      %v369 = vld [vmem:[%s166 + $0x610] sm:$0xff]
      %v370 = vld [vmem:[%s166 + $0x618] sm:$0xff]
      %v371 = vld [vmem:[%s166 + $0x620] sm:$0xff]
      %v372 = vld [vmem:[%s166 + $0x628] sm:$0xff]
      %v373 = vld [vmem:[%s166 + $0x630] sm:$0xff]
      %v374 = vld [vmem:[%s166 + $0x638] sm:$0xff]
      %v375 = vld [vmem:[%s166 + $0x640] sm:$0xff]
      %v376 = vld [vmem:[%s166 + $0x648] sm:$0xff]
      %v377 = vld [vmem:[%s166 + $0x650] sm:$0xff]
      %v378 = vld [vmem:[%s166 + $0x658] sm:$0xff]
      %v379 = vld [vmem:[%s166 + $0x660] sm:$0xff]
      %v380 = vld [vmem:[%s166 + $0x668] sm:$0xff]
      %v381 = vld [vmem:[%s166 + $0x670] sm:$0xff]
      %v382 = vld [vmem:[%s166 + $0x678] sm:$0xff]
      %v383 = vld [vmem:[%s166 + $0x680] sm:$0xff]
      %v384 = vld [vmem:[%s166 + $0x688] sm:$0xff]
      %v385 = vld [vmem:[%s166 + $0x690] sm:$0xff]
      %v386 = vld [vmem:[%s166 + $0x698] sm:$0xff]
      %v387 = vld [vmem:[%s166 + $0x6a0] sm:$0xff]
      %v388 = vld [vmem:[%s166 + $0x6a8] sm:$0xff]
      %v389 = vld [vmem:[%s166 + $0x6b0] sm:$0xff]
      %v390 = vld [vmem:[%s166 + $0x6b8] sm:$0xff]
      %v391 = vld [vmem:[%s166 + $0x6c0] sm:$0xff]
      %v392 = vld [vmem:[%s166 + $0x6c8] sm:$0xff]
      %v393 = vld [vmem:[%s166 + $0x6d0] sm:$0xff]
      %v394 = vld [vmem:[%s166 + $0x6d8] sm:$0xff]
      %v395 = vld [vmem:[%s166 + $0x6e0] sm:$0xff]
      %v396 = vld [vmem:[%s166 + $0x6e8] sm:$0xff]
      %v397 = vld [vmem:[%s166 + $0x6f0] sm:$0xff]
      %v398 = vld [vmem:[%s166 + $0x6f8] sm:$0xff]
      %v399 = vld [vmem:[%s166 + $0x700] sm:$0xff]
      %v400 = vld [vmem:[%s166 + $0x708] sm:$0xff]
      %v401 = vld [vmem:[%s166 + $0x710] sm:$0xff]
      %v402 = vld [vmem:[%s166 + $0x718] sm:$0xff]
      %v403 = vld [vmem:[%s166 + $0x720] sm:$0xff]
      %v404 = vld [vmem:[%s166 + $0x728] sm:$0xff]
      %v405 = vld [vmem:[%s166 + $0x730] sm:$0xff]
      %v406 = vld [vmem:[%s166 + $0x738] sm:$0xff]
      %v407 = vld [vmem:[%s166 + $0x740] sm:$0xff]
      %v408 = vld [vmem:[%s166 + $0x748] sm:$0xff]
      %v409 = vld [vmem:[%s166 + $0x750] sm:$0xff]
      %v410 = vld [vmem:[%s166 + $0x758] sm:$0xff]
      %v411 = vld [vmem:[%s166 + $0x760] sm:$0xff]
      %v412 = vld [vmem:[%s166 + $0x768] sm:$0xff]
      %v413 = vld [vmem:[%s166 + $0x770] sm:$0xff]
      %v414 = vld [vmem:[%s166 + $0x778] sm:$0xff]
      %v415 = vld [vmem:[%s166 + $0x780] sm:$0xff]
      %v416 = vld [vmem:[%s166 + $0x788] sm:$0xff]
      %v417 = vld [vmem:[%s166 + $0x790] sm:$0xff]
      %v418 = vld [vmem:[%s166 + $0x798] sm:$0xff]
      %v419 = vld [vmem:[%s166 + $0x7a0] sm:$0xff]
      %v420 = vld [vmem:[%s166 + $0x7a8] sm:$0xff]
      %v421 = vld [vmem:[%s166 + $0x7b0] sm:$0xff]
      %v422 = vld [vmem:[%s166 + $0x7b8] sm:$0xff]
      %v423 = vld [vmem:[%s166 + $0x7c0] sm:$0xff]
      %v424 = vld [vmem:[%s166 + $0x7c8] sm:$0xff]
      %v425 = vld [vmem:[%s166 + $0x7d0] sm:$0xff]
      %v426 = vld [vmem:[%s166 + $0x7d8] sm:$0xff]
      %v427 = vld [vmem:[%s166 + $0x7e0] sm:$0xff]
      %v428 = vld [vmem:[%s166 + $0x7e8] sm:$0xff]
      %v429 = vld [vmem:[%s166 + $0x7f0] sm:$0xff]
      %v430 = vld [vmem:[%s166 + $0x7f8] sm:$0xff]
      %v431 = vpack.c.bf16 %v176, %v175
      %v432 = vpack.c.bf16 %v178, %v177
      %v433 = vpack.c.bf16 %v180, %v179
      %v434 = vpack.c.bf16 %v182, %v181
      %v435 = vpack.c.bf16 %v184, %v183
      %v436 = vpack.c.bf16 %v186, %v185
      %v437 = vpack.c.bf16 %v188, %v187
      %v438 = vpack.c.bf16 %v190, %v189
      %v439 = vpack.c.bf16 %v192, %v191
      %v440 = vpack.c.bf16 %v194, %v193
      %v441 = vpack.c.bf16 %v196, %v195
      %v442 = vpack.c.bf16 %v198, %v197
      %v443 = vpack.c.bf16 %v200, %v199
      %v444 = vpack.c.bf16 %v202, %v201
      %v445 = vpack.c.bf16 %v204, %v203
      %v446 = vpack.c.bf16 %v206, %v205
      %v447 = vpack.c.bf16 %v208, %v207
      %v448 = vpack.c.bf16 %v210, %v209
      %v449 = vpack.c.bf16 %v212, %v211
      %v450 = vpack.c.bf16 %v214, %v213
      %v451 = vpack.c.bf16 %v216, %v215
      %v452 = vpack.c.bf16 %v218, %v217
      %v453 = vpack.c.bf16 %v220, %v219
      %v454 = vpack.c.bf16 %v222, %v221
      %v455 = vpack.c.bf16 %v224, %v223
      %v456 = vpack.c.bf16 %v226, %v225
      %v457 = vpack.c.bf16 %v228, %v227
      %v458 = vpack.c.bf16 %v230, %v229
      %v459 = vpack.c.bf16 %v232, %v231
      %v460 = vpack.c.bf16 %v234, %v233
      %v461 = vpack.c.bf16 %v236, %v235
      %v462 = vpack.c.bf16 %v238, %v237
      %v463 = vpack.c.bf16 %v240, %v239
      %v464 = vpack.c.bf16 %v242, %v241
      %v465 = vpack.c.bf16 %v244, %v243
      %v466 = vpack.c.bf16 %v246, %v245
      %v467 = vpack.c.bf16 %v248, %v247
      %v468 = vpack.c.bf16 %v250, %v249
      %v469 = vpack.c.bf16 %v252, %v251
      %v470 = vpack.c.bf16 %v254, %v253
      %v471 = vpack.c.bf16 %v256, %v255
      %v472 = vpack.c.bf16 %v258, %v257
      %v473 = vpack.c.bf16 %v260, %v259
      %v474 = vpack.c.bf16 %v262, %v261
      %v475 = vpack.c.bf16 %v264, %v263
      %v476 = vpack.c.bf16 %v266, %v265
      %v477 = vpack.c.bf16 %v268, %v267
      %v478 = vpack.c.bf16 %v270, %v269
      %v479 = vpack.c.bf16 %v272, %v271
      %v480 = vpack.c.bf16 %v274, %v273
      %v481 = vpack.c.bf16 %v276, %v275
      %v482 = vpack.c.bf16 %v278, %v277
      %v483 = vpack.c.bf16 %v280, %v279
      %v484 = vpack.c.bf16 %v282, %v281
      %v485 = vpack.c.bf16 %v284, %v283
      %v486 = vpack.c.bf16 %v286, %v285
      %v487 = vpack.c.bf16 %v288, %v287
      %v488 = vpack.c.bf16 %v290, %v289
      %v489 = vpack.c.bf16 %v292, %v291
      %v490 = vpack.c.bf16 %v294, %v293
      %v491 = vpack.c.bf16 %v296, %v295
      %v492 = vpack.c.bf16 %v298, %v297
      %v493 = vpack.c.bf16 %v300, %v299
      %v494 = vpack.c.bf16 %v302, %v301
      %v495 = vpack.c.bf16 %v304, %v303
      %v496 = vpack.c.bf16 %v306, %v305
      %v497 = vpack.c.bf16 %v308, %v307
      %v498 = vpack.c.bf16 %v310, %v309
      %v499 = vpack.c.bf16 %v312, %v311
      %v500 = vpack.c.bf16 %v314, %v313
      %v501 = vpack.c.bf16 %v316, %v315
      %v502 = vpack.c.bf16 %v318, %v317
      %v503 = vpack.c.bf16 %v320, %v319
      %v504 = vpack.c.bf16 %v322, %v321
      %v505 = vpack.c.bf16 %v324, %v323
      %v506 = vpack.c.bf16 %v326, %v325
      %v507 = vpack.c.bf16 %v328, %v327
      %v508 = vpack.c.bf16 %v330, %v329
      %v509 = vpack.c.bf16 %v332, %v331
      %v510 = vpack.c.bf16 %v334, %v333
      %v511 = vpack.c.bf16 %v336, %v335
      %v512 = vpack.c.bf16 %v338, %v337
      %v513 = vpack.c.bf16 %v340, %v339
      %v514 = vpack.c.bf16 %v342, %v341
      %v515 = vpack.c.bf16 %v344, %v343
      %v516 = vpack.c.bf16 %v346, %v345
      %v517 = vpack.c.bf16 %v348, %v347
      %v518 = vpack.c.bf16 %v350, %v349
      %v519 = vpack.c.bf16 %v352, %v351
      %v520 = vpack.c.bf16 %v354, %v353
      %v521 = vpack.c.bf16 %v356, %v355
      %v522 = vpack.c.bf16 %v358, %v357
      %v523 = vpack.c.bf16 %v360, %v359
      %v524 = vpack.c.bf16 %v362, %v361
      %v525 = vpack.c.bf16 %v364, %v363
      %v526 = vpack.c.bf16 %v366, %v365
      %v527 = vpack.c.bf16 %v368, %v367
      %v528 = vpack.c.bf16 %v370, %v369
      %v529 = vpack.c.bf16 %v372, %v371
      %v530 = vpack.c.bf16 %v374, %v373
      %v531 = vpack.c.bf16 %v376, %v375
      %v532 = vpack.c.bf16 %v378, %v377
      %v533 = vpack.c.bf16 %v380, %v379
      %v534 = vpack.c.bf16 %v382, %v381
      %v535 = vpack.c.bf16 %v384, %v383
      %v536 = vpack.c.bf16 %v386, %v385
      %v537 = vpack.c.bf16 %v388, %v387
      %v538 = vpack.c.bf16 %v390, %v389
      %v539 = vpack.c.bf16 %v392, %v391
      %v540 = vpack.c.bf16 %v394, %v393
      %v541 = vpack.c.bf16 %v396, %v395
      %v542 = vpack.c.bf16 %v398, %v397
      %v543 = vpack.c.bf16 %v400, %v399
      %v544 = vpack.c.bf16 %v402, %v401
      %v545 = vpack.c.bf16 %v404, %v403
      %v546 = vpack.c.bf16 %v406, %v405
      %v547 = vpack.c.bf16 %v408, %v407
      %v548 = vpack.c.bf16 %v410, %v409
      %v549 = vpack.c.bf16 %v412, %v411
      %v550 = vpack.c.bf16 %v414, %v413
      %v551 = vpack.c.bf16 %v416, %v415
      %v552 = vpack.c.bf16 %v418, %v417
      %v553 = vpack.c.bf16 %v420, %v419
      %v554 = vpack.c.bf16 %v422, %v421
      %v555 = vpack.c.bf16 %v424, %v423
      %v556 = vpack.c.bf16 %v426, %v425
      %v557 = vpack.c.bf16 %v428, %v427
      %v558 = vpack.c.bf16 %v430, %v429
      %v559 = vld [vmem:[%s1] sm:$0xff]
      %v560 = vld [vmem:[%s1 + $0x8] sm:$0xff]
      %v561 = vpack.c.bf16 %v560, %v559
      %v562 = vld [vmem:[%s2] sm:$0x1]
      %v564 = vlaneseq
      %v565 = vshrl.u32 %v564, 7
      %v566 = vsub.s32 0, %v565
      %v567 = vrot.slane %v562, %v566
      %vm569 = vcmask 130048
      %v571 = vsel %vm569, %v431, 0
      %v574 = vsel %vm569, %v432, 0
      %v577 = vsel %vm569, %v433, 0
      %v580 = vsel %vm569, %v434, 0
      %v583 = vsel %vm569, %v435, 0
      %v586 = vsel %vm569, %v436, 0
      %v589 = vsel %vm569, %v437, 0
      %v592 = vsel %vm569, %v438, 0
      %v595 = vsel %vm569, %v439, 0
      %v598 = vsel %vm569, %v440, 0
      %v601 = vsel %vm569, %v441, 0
      %v604 = vsel %vm569, %v442, 0
      %v607 = vsel %vm569, %v443, 0
      %v610 = vsel %vm569, %v444, 0
      %v613 = vsel %vm569, %v445, 0
      %v616 = vsel %vm569, %v446, 0
      %v619 = vsel %vm569, %v447, 0
      %v622 = vsel %vm569, %v448, 0
      %v625 = vsel %vm569, %v449, 0
      %v628 = vsel %vm569, %v450, 0
      %v631 = vsel %vm569, %v451, 0
      %v634 = vsel %vm569, %v452, 0
      %v637 = vsel %vm569, %v453, 0
      %v640 = vsel %vm569, %v454, 0
      %v643 = vsel %vm569, %v455, 0
      %v646 = vsel %vm569, %v456, 0
      %v649 = vsel %vm569, %v457, 0
      %v652 = vsel %vm569, %v458, 0
      %v655 = vsel %vm569, %v459, 0
      %v658 = vsel %vm569, %v460, 0
      %v661 = vsel %vm569, %v461, 0
      %v664 = vsel %vm569, %v462, 0
      %v667 = vsel %vm569, %v463, 0
      %v670 = vsel %vm569, %v464, 0
      %v673 = vsel %vm569, %v465, 0
      %v676 = vsel %vm569, %v466, 0
      %v679 = vsel %vm569, %v467, 0
      %v682 = vsel %vm569, %v468, 0
      %v685 = vsel %vm569, %v469, 0
      %v688 = vsel %vm569, %v470, 0
      %v691 = vsel %vm569, %v471, 0
      %v694 = vsel %vm569, %v472, 0
      %v697 = vsel %vm569, %v473, 0
      %v700 = vsel %vm569, %v474, 0
      %v703 = vsel %vm569, %v475, 0
      %v706 = vsel %vm569, %v476, 0
      %v709 = vsel %vm569, %v477, 0
      %v712 = vsel %vm569, %v478, 0
      %v715 = vsel %vm569, %v479, 0
      %v718 = vsel %vm569, %v480, 0
      %v721 = vsel %vm569, %v481, 0
      %v724 = vsel %vm569, %v482, 0
      %v727 = vsel %vm569, %v483, 0
      %v730 = vsel %vm569, %v484, 0
      %v733 = vsel %vm569, %v485, 0
      %v736 = vsel %vm569, %v486, 0
      %v739 = vsel %vm569, %v487, 0
      %v742 = vsel %vm569, %v488, 0
      %v745 = vsel %vm569, %v489, 0
      %v748 = vsel %vm569, %v490, 0
      %v751 = vsel %vm569, %v491, 0
      %v754 = vsel %vm569, %v492, 0
      %v757 = vsel %vm569, %v493, 0
      %v760 = vsel %vm569, %v494, 0
      %v763 = vsel %vm569, %v495, 0
      %v766 = vsel %vm569, %v496, 0
      %v769 = vsel %vm569, %v497, 0
      %v772 = vsel %vm569, %v498, 0
      %v775 = vsel %vm569, %v499, 0
      %v778 = vsel %vm569, %v500, 0
      %v781 = vsel %vm569, %v501, 0
      %v784 = vsel %vm569, %v502, 0
      %v787 = vsel %vm569, %v503, 0
      %v790 = vsel %vm569, %v504, 0
      %v793 = vsel %vm569, %v505, 0
      %v796 = vsel %vm569, %v506, 0
      %v799 = vsel %vm569, %v507, 0
      %v802 = vsel %vm569, %v508, 0
      %v805 = vsel %vm569, %v509, 0
      %v808 = vsel %vm569, %v510, 0
      %v811 = vsel %vm569, %v511, 0
      %v814 = vsel %vm569, %v512, 0
      %v817 = vsel %vm569, %v513, 0
      %v820 = vsel %vm569, %v514, 0
      %v823 = vsel %vm569, %v515, 0
      %v826 = vsel %vm569, %v516, 0
      %v829 = vsel %vm569, %v517, 0
      %v832 = vsel %vm569, %v518, 0
      %v835 = vsel %vm569, %v519, 0
      %v838 = vsel %vm569, %v520, 0
      %v841 = vsel %vm569, %v521, 0
      %v844 = vsel %vm569, %v522, 0
      %v847 = vsel %vm569, %v523, 0
      %v850 = vsel %vm569, %v524, 0
      %v853 = vsel %vm569, %v525, 0
      %v856 = vsel %vm569, %v526, 0
      %v859 = vsel %vm569, %v527, 0
      %v862 = vsel %vm569, %v528, 0
      %v865 = vsel %vm569, %v529, 0
      %v868 = vsel %vm569, %v530, 0
      %v871 = vsel %vm569, %v531, 0
      %v874 = vsel %vm569, %v532, 0
      %v877 = vsel %vm569, %v533, 0
      %v880 = vsel %vm569, %v534, 0
      %v883 = vsel %vm569, %v535, 0
      %v886 = vsel %vm569, %v536, 0
      %v889 = vsel %vm569, %v537, 0
      %v892 = vsel %vm569, %v538, 0
      %v895 = vsel %vm569, %v539, 0
      %v898 = vsel %vm569, %v540, 0
      %v901 = vsel %vm569, %v541, 0
      %v904 = vsel %vm569, %v542, 0
      %v907 = vsel %vm569, %v543, 0
      %v910 = vsel %vm569, %v544, 0
      %v913 = vsel %vm569, %v545, 0
      %v916 = vsel %vm569, %v546, 0
      %v919 = vsel %vm569, %v547, 0
      %v922 = vsel %vm569, %v548, 0
      %v925 = vsel %vm569, %v549, 0
      %v928 = vsel %vm569, %v550, 0
      %v931 = vsel %vm569, %v551, 0
      %v934 = vsel %vm569, %v552, 0
      %v937 = vsel %vm569, %v553, 0
      %v940 = vsel %vm569, %v554, 0
      %v943 = vsel %vm569, %v555, 0
      %v946 = vsel %vm569, %v556, 0
      %v949 = vsel %vm569, %v557, 0
      %v952 = vsel %vm569, %v558, 0
      %954 = vmatprep.subr.bf16.mxu0 0
      %955 = vmatpush1.bf16.msra.mxu0 %v561
      %956 = vmatprep.subr.bf16.mxu0 0
      %957 = vmatpush1.bf16.msra.mxu0 0
      %958 = vmatprep.subr.bf16.mxu0 0
      %959 = vmatpush1.bf16.msra.mxu0 0
      %960 = vmatprep.subr.bf16.mxu0 0
      %961 = vmatpush1.bf16.msra.mxu0 0
      %962 = vmatprep.subr.bf16.mxu0 0
      %963 = vmatpush1.bf16.msra.mxu0 0
      %964 = vmatprep.subr.bf16.mxu0 0
      %965 = vmatpush1.bf16.msra.mxu0 0
      %966 = vmatprep.subr.bf16.mxu0 0
      %967 = vmatpush1.bf16.msra.mxu0 0
      %968 = vmatprep.subr.bf16.mxu0 0
      %969 = vmatpush1.bf16.msra.mxu0 0
      %970 = vmatprep.subr.bf16.mxu0 0
      %971 = vmatpush1.bf16.msra.mxu0 0
      %972 = vmatprep.subr.bf16.mxu0 0
      %973 = vmatpush1.bf16.msra.mxu0 0
      %974 = vmatprep.subr.bf16.mxu0 0
      %975 = vmatpush1.bf16.msra.mxu0 0
      %976 = vmatprep.subr.bf16.mxu0 0
      %977 = vmatpush1.bf16.msra.mxu0 0
      %978 = vmatprep.subr.bf16.mxu0 0
      %979 = vmatpush1.bf16.msra.mxu0 0
      %980 = vmatprep.subr.bf16.mxu0 0
      %981 = vmatpush1.bf16.msra.mxu0 0
      %982 = vmatprep.subr.bf16.mxu0 0
      %983 = vmatpush1.bf16.msra.mxu0 0
      %984 = vmatprep.subr.bf16.mxu0 0
      %985 = vmatpush1.bf16.msra.mxu0 0
      %986 = vmatprep.mubr.bf16.mxu0 0
      %987 = vmatmul.mubr.bf16.gmra.mrb[0].mxu0 %v571
      %v988 = vpop.f32.mrb[0].mxu0
      %v989 = vadd.f32 %v567, %v988
      %v990 = vpop.f32.mrb[0].mxu0
      %v991 = vpop.f32.mrb[0].mxu0
      %v992 = vadd.f32 %v567, %v991
      %v993 = vpop.f32.mrb[0].mxu0
      %994 = vmatprep.mubr.bf16.mxu0 0
      %995 = vmatmul.mubr.bf16.gmra.mrb[0].mxu0 %v574
      %v996 = vpop.f32.mrb[0].mxu0
      %v997 = vadd.f32 %v567, %v996
      %v998 = vpop.f32.mrb[0].mxu0
      %v999 = vpop.f32.mrb[0].mxu0
      %v1000 = vadd.f32 %v567, %v999
      %v1001 = vpop.f32.mrb[0].mxu0
      %1002 = vmatprep.mubr.bf16.mxu0 0
      %1003 = vmatmul.mubr.bf16.gmra.mrb[0].mxu0 %v577
      %v1004 = vpop.f32.mrb[0].mxu0
      %v1005 = vadd.f32 %v567, %v1004
      %v1006 = vpop.f32.mrb[0].mxu0
      %v1007 = vpop.f32.mrb[0].mxu0
      %v1008 = vadd.f32 %v567, %v1007
      %v1009 = vpop.f32.mrb[0].mxu0
      %1010 = vmatprep.mubr.bf16.mxu0 0
      %1011 = vmatmul.mubr.bf16.gmra.mrb[0].mxu0 %v580
      %v1012 = vpop.f32.mrb[0].mxu0
      %v1013 = vadd.f32 %v567, %v1012
      %v1014 = vpop.f32.mrb[0].mxu0
      %v1015 = vpop.f32.mrb[0].mxu0
      %v1016 = vadd.f32 %v567, %v1015
      %v1017 = vpop.f32.mrb[0].mxu0
      %1018 = vmatprep.mubr.bf16.mxu0 0
      %1019 = vmatmul.mubr.bf16.gmra.mrb[0].mxu0 %v583
      %v1020 = vpop.f32.mrb[0].mxu0
      %v1021 = vadd.f32 %v567, %v1020
      %v1022 = vpop.f32.mrb[0].mxu0
      %v1023 = vpop.f32.mrb[0].mxu0
      %v1024 = vadd.f32 %v567, %v1023
      %v1025 = vpop.f32.mrb[0].mxu0
      %1026 = vmatprep.mubr.bf16.mxu0 0
      %1027 = vmatmul.mubr.bf16.gmra.mrb[0].mxu0 %v586
      %v1028 = vpop.f32.mrb[0].mxu0
      %v1029 = vadd.f32 %v567, %v1028
      %v1030 = vpop.f32.mrb[0].mxu0
      %v1031 = vpop.f32.mrb[0].mxu0
      %v1032 = vadd.f32 %v567, %v1031
      %v1033 = vpop.f32.mrb[0].mxu0
      %1034 = vmatprep.mubr.bf16.mxu0 0
      %1035 = vmatmul.mubr.bf16.gmra.mrb[0].mxu0 %v589
      %v1036 = vpop.f32.mrb[0].mxu0
      %v1037 = vadd.f32 %v567, %v1036
      %v1038 = vpop.f32.mrb[0].mxu0
      %v1039 = vpop.f32.mrb[0].mxu0
      %v1040 = vadd.f32 %v567, %v1039
      %v1041 = vpop.f32.mrb[0].mxu0
      %1042 = vmatprep.mubr.bf16.mxu0 0
      %1043 = vmatmul.mubr.bf16.gmra.mrb[0].mxu0 %v592
      %v1044 = vpop.f32.mrb[0].mxu0
      %v1045 = vadd.f32 %v567, %v1044
      %v1046 = vpop.f32.mrb[0].mxu0
      %v1047 = vpop.f32.mrb[0].mxu0
      %v1048 = vadd.f32 %v567, %v1047
      %v1049 = vpop.f32.mrb[0].mxu0
      %1050 = vmatprep.mubr.bf16.mxu0 0
      %1051 = vmatmul.mubr.bf16.gmra.mrb[0].mxu0 %v595
      %v1052 = vpop.f32.mrb[0].mxu0
      %v1053 = vadd.f32 %v567, %v1052
      %v1054 = vpop.f32.mrb[0].mxu0
      %v1055 = vpop.f32.mrb[0].mxu0
      %v1056 = vadd.f32 %v567, %v1055
      %v1057 = vpop.f32.mrb[0].mxu0
      %1058 = vmatprep.mubr.bf16.mxu0 0
      %1059 = vmatmul.mubr.bf16.gmra.mrb[0].mxu0 %v598
      %v1060 = vpop.f32.mrb[0].mxu0
      %v1061 = vadd.f32 %v567, %v1060
      %v1062 = vpop.f32.mrb[0].mxu0
      %v1063 = vpop.f32.mrb[0].mxu0
      %v1064 = vadd.f32 %v567, %v1063
      %v1065 = vpop.f32.mrb[0].mxu0
      %1066 = vmatprep.mubr.bf16.mxu0 0
      %1067 = vmatmul.mubr.bf16.gmra.mrb[0].mxu0 %v601
      %v1068 = vpop.f32.mrb[0].mxu0
      %v1069 = vadd.f32 %v567, %v1068
      %v1070 = vpop.f32.mrb[0].mxu0
      %v1071 = vpop.f32.mrb[0].mxu0
      %v1072 = vadd.f32 %v567, %v1071
      %v1073 = vpop.f32.mrb[0].mxu0
      %1074 = vmatprep.mubr.bf16.mxu0 0
      %1075 = vmatmul.mubr.bf16.gmra.mrb[0].mxu0 %v604
      %v1076 = vpop.f32.mrb[0].mxu0
      %v1077 = vadd.f32 %v567, %v1076
      %v1078 = vpop.f32.mrb[0].mxu0
      %v1079 = vpop.f32.mrb[0].mxu0
      %v1080 = vadd.f32 %v567, %v1079
      %v1081 = vpop.f32.mrb[0].mxu0
      %1082 = vmatprep.mubr.bf16.mxu0 0
      %1083 = vmatmul.mubr.bf16.gmra.mrb[0].mxu0 %v607
      %v1084 = vpop.f32.mrb[0].mxu0
      %v1085 = vadd.f32 %v567, %v1084
      %v1086 = vpop.f32.mrb[0].mxu0
      %v1087 = vpop.f32.mrb[0].mxu0
      %v1088 = vadd.f32 %v567, %v1087
      %v1089 = vpop.f32.mrb[0].mxu0
      %1090 = vmatprep.mubr.bf16.mxu0 0
      %1091 = vmatmul.mubr.bf16.gmra.mrb[0].mxu0 %v610
      %v1092 = vpop.f32.mrb[0].mxu0
      %v1093 = vadd.f32 %v567, %v1092
      %v1094 = vpop.f32.mrb[0].mxu0
      %v1095 = vpop.f32.mrb[0].mxu0
      %v1096 = vadd.f32 %v567, %v1095
      %v1097 = vpop.f32.mrb[0].mxu0
      %1098 = vmatprep.mubr.bf16.mxu0 0
      %1099 = vmatmul.mubr.bf16.gmra.mrb[0].mxu0 %v613
      %v1100 = vpop.f32.mrb[0].mxu0
      %v1101 = vadd.f32 %v567, %v1100
      %v1102 = vpop.f32.mrb[0].mxu0
      %v1103 = vpop.f32.mrb[0].mxu0
      %v1104 = vadd.f32 %v567, %v1103
      %v1105 = vpop.f32.mrb[0].mxu0
      %1106 = vmatprep.mubr.bf16.mxu0 0
      %1107 = vmatmul.mubr.bf16.gmra.mrb[0].mxu0 %v616
      %v1108 = vpop.f32.mrb[0].mxu0
      %v1109 = vadd.f32 %v567, %v1108
      %v1110 = vpop.f32.mrb[0].mxu0
      %v1111 = vpop.f32.mrb[0].mxu0
      %v1112 = vadd.f32 %v567, %v1111
      %v1113 = vpop.f32.mrb[0].mxu0
      %1114 = vmatprep.mubr.bf16.mxu0 0
      %1115 = vmatmul.mubr.bf16.gmra.mrb[0].mxu0 %v619
      %v1116 = vpop.f32.mrb[0].mxu0
      %v1117 = vadd.f32 %v567, %v1116
      %v1118 = vpop.f32.mrb[0].mxu0
      %v1119 = vpop.f32.mrb[0].mxu0
      %v1120 = vadd.f32 %v567, %v1119
      %v1121 = vpop.f32.mrb[0].mxu0
      %1122 = vmatprep.mubr.bf16.mxu0 0
      %1123 = vmatmul.mubr.bf16.gmra.mrb[0].mxu0 %v622
      %v1124 = vpop.f32.mrb[0].mxu0
      %v1125 = vadd.f32 %v567, %v1124
      %v1126 = vpop.f32.mrb[0].mxu0
      %v1127 = vpop.f32.mrb[0].mxu0
      %v1128 = vadd.f32 %v567, %v1127
      %v1129 = vpop.f32.mrb[0].mxu0
      %1130 = vmatprep.mubr.bf16.mxu0 0
      %1131 = vmatmul.mubr.bf16.gmra.mrb[0].mxu0 %v625
      %v1132 = vpop.f32.mrb[0].mxu0
      %v1133 = vadd.f32 %v567, %v1132
      %v1134 = vpop.f32.mrb[0].mxu0
      %v1135 = vpop.f32.mrb[0].mxu0
      %v1136 = vadd.f32 %v567, %v1135
      %v1137 = vpop.f32.mrb[0].mxu0
      %1138 = vmatprep.mubr.bf16.mxu0 0
      %1139 = vmatmul.mubr.bf16.gmra.mrb[0].mxu0 %v628
      %v1140 = vpop.f32.mrb[0].mxu0
      %v1141 = vadd.f32 %v567, %v1140
      %v1142 = vpop.f32.mrb[0].mxu0
      %v1143 = vpop.f32.mrb[0].mxu0
      %v1144 = vadd.f32 %v567, %v1143
      %v1145 = vpop.f32.mrb[0].mxu0
      %1146 = vmatprep.mubr.bf16.mxu0 0
      %1147 = vmatmul.mubr.bf16.gmra.mrb[0].mxu0 %v631
      %v1148 = vpop.f32.mrb[0].mxu0
      %v1149 = vadd.f32 %v567, %v1148
      %v1150 = vpop.f32.mrb[0].mxu0
      %v1151 = vpop.f32.mrb[0].mxu0
      %v1152 = vadd.f32 %v567, %v1151
      %v1153 = vpop.f32.mrb[0].mxu0
      %1154 = vmatprep.mubr.bf16.mxu0 0
      %1155 = vmatmul.mubr.bf16.gmra.mrb[0].mxu0 %v634
      %v1156 = vpop.f32.mrb[0].mxu0
      %v1157 = vadd.f32 %v567, %v1156
      %v1158 = vpop.f32.mrb[0].mxu0
      %v1159 = vpop.f32.mrb[0].mxu0
      %v1160 = vadd.f32 %v567, %v1159
      %v1161 = vpop.f32.mrb[0].mxu0
      %1162 = vmatprep.mubr.bf16.mxu0 0
      %1163 = vmatmul.mubr.bf16.gmra.mrb[0].mxu0 %v637
      %v1164 = vpop.f32.mrb[0].mxu0
      %v1165 = vadd.f32 %v567, %v1164
      %v1166 = vpop.f32.mrb[0].mxu0
      %v1167 = vpop.f32.mrb[0].mxu0
      %v1168 = vadd.f32 %v567, %v1167
      %v1169 = vpop.f32.mrb[0].mxu0
      %1170 = vmatprep.mubr.bf16.mxu0 0
      %1171 = vmatmul.mubr.bf16.gmra.mrb[0].mxu0 %v640
      %v1172 = vpop.f32.mrb[0].mxu0
      %v1173 = vadd.f32 %v567, %v1172
      %v1174 = vpop.f32.mrb[0].mxu0
      %v1175 = vpop.f32.mrb[0].mxu0
      %v1176 = vadd.f32 %v567, %v1175
      %v1177 = vpop.f32.mrb[0].mxu0
      %1178 = vmatprep.mubr.bf16.mxu0 0
      %1179 = vmatmul.mubr.bf16.gmra.mrb[0].mxu0 %v643
      %v1180 = vpop.f32.mrb[0].mxu0
      %v1181 = vadd.f32 %v567, %v1180
      %v1182 = vpop.f32.mrb[0].mxu0
      %v1183 = vpop.f32.mrb[0].mxu0
      %v1184 = vadd.f32 %v567, %v1183
      %v1185 = vpop.f32.mrb[0].mxu0
      %1186 = vmatprep.mubr.bf16.mxu0 0
      %1187 = vmatmul.mubr.bf16.gmra.mrb[0].mxu0 %v646
      %v1188 = vpop.f32.mrb[0].mxu0
      %v1189 = vadd.f32 %v567, %v1188
      %v1190 = vpop.f32.mrb[0].mxu0
      %v1191 = vpop.f32.mrb[0].mxu0
      %v1192 = vadd.f32 %v567, %v1191
      %v1193 = vpop.f32.mrb[0].mxu0
      %1194 = vmatprep.mubr.bf16.mxu0 0
      %1195 = vmatmul.mubr.bf16.gmra.mrb[0].mxu0 %v649
      %v1196 = vpop.f32.mrb[0].mxu0
      %v1197 = vadd.f32 %v567, %v1196
      %v1198 = vpop.f32.mrb[0].mxu0
      %v1199 = vpop.f32.mrb[0].mxu0
      %v1200 = vadd.f32 %v567, %v1199
      %v1201 = vpop.f32.mrb[0].mxu0
      %1202 = vmatprep.mubr.bf16.mxu0 0
      %1203 = vmatmul.mubr.bf16.gmra.mrb[0].mxu0 %v652
      %v1204 = vpop.f32.mrb[0].mxu0
      %v1205 = vadd.f32 %v567, %v1204
      %v1206 = vpop.f32.mrb[0].mxu0
      %v1207 = vpop.f32.mrb[0].mxu0
      %v1208 = vadd.f32 %v567, %v1207
      %v1209 = vpop.f32.mrb[0].mxu0
      %1210 = vmatprep.mubr.bf16.mxu0 0
      %1211 = vmatmul.mubr.bf16.gmra.mrb[0].mxu0 %v655
      %v1212 = vpop.f32.mrb[0].mxu0
      %v1213 = vadd.f32 %v567, %v1212
      %v1214 = vpop.f32.mrb[0].mxu0
      %v1215 = vpop.f32.mrb[0].mxu0
      %v1216 = vadd.f32 %v567, %v1215
      %v1217 = vpop.f32.mrb[0].mxu0
      %1218 = vmatprep.mubr.bf16.mxu0 0
      %1219 = vmatmul.mubr.bf16.gmra.mrb[0].mxu0 %v658
      %v1220 = vpop.f32.mrb[0].mxu0
      %v1221 = vadd.f32 %v567, %v1220
      %v1222 = vpop.f32.mrb[0].mxu0
      %v1223 = vpop.f32.mrb[0].mxu0
      %v1224 = vadd.f32 %v567, %v1223
      %v1225 = vpop.f32.mrb[0].mxu0
      %1226 = vmatprep.mubr.bf16.mxu0 0
      %1227 = vmatmul.mubr.bf16.gmra.mrb[0].mxu0 %v661
      %v1228 = vpop.f32.mrb[0].mxu0
      %v1229 = vadd.f32 %v567, %v1228
      %v1230 = vpop.f32.mrb[0].mxu0
      %v1231 = vpop.f32.mrb[0].mxu0
      %v1232 = vadd.f32 %v567, %v1231
      %v1233 = vpop.f32.mrb[0].mxu0
      %1234 = vmatprep.mubr.bf16.mxu0 0
      %1235 = vmatmul.mubr.bf16.gmra.mrb[0].mxu0 %v664
      %v1236 = vpop.f32.mrb[0].mxu0
      %v1237 = vadd.f32 %v567, %v1236
      %v1238 = vpop.f32.mrb[0].mxu0
      %v1239 = vpop.f32.mrb[0].mxu0
      %v1240 = vadd.f32 %v567, %v1239
      %v1241 = vpop.f32.mrb[0].mxu0
      %1242 = vmatprep.mubr.bf16.mxu0 0
      %1243 = vmatmul.mubr.bf16.gmra.mrb[0].mxu0 %v667
      %v1244 = vpop.f32.mrb[0].mxu0
      %v1245 = vadd.f32 %v567, %v1244
      %v1246 = vpop.f32.mrb[0].mxu0
      %v1247 = vpop.f32.mrb[0].mxu0
      %v1248 = vadd.f32 %v567, %v1247
      %v1249 = vpop.f32.mrb[0].mxu0
      %1250 = vmatprep.mubr.bf16.mxu0 0
      %1251 = vmatmul.mubr.bf16.gmra.mrb[0].mxu0 %v670
      %v1252 = vpop.f32.mrb[0].mxu0
      %v1253 = vadd.f32 %v567, %v1252
      %v1254 = vpop.f32.mrb[0].mxu0
      %v1255 = vpop.f32.mrb[0].mxu0
      %v1256 = vadd.f32 %v567, %v1255
      %v1257 = vpop.f32.mrb[0].mxu0
      %1258 = vmatprep.mubr.bf16.mxu0 0
      %1259 = vmatmul.mubr.bf16.gmra.mrb[0].mxu0 %v673
      %v1260 = vpop.f32.mrb[0].mxu0
      %v1261 = vadd.f32 %v567, %v1260
      %v1262 = vpop.f32.mrb[0].mxu0
      %v1263 = vpop.f32.mrb[0].mxu0
      %v1264 = vadd.f32 %v567, %v1263
      %v1265 = vpop.f32.mrb[0].mxu0
      %1266 = vmatprep.mubr.bf16.mxu0 0
      %1267 = vmatmul.mubr.bf16.gmra.mrb[0].mxu0 %v676
      %v1268 = vpop.f32.mrb[0].mxu0
      %v1269 = vadd.f32 %v567, %v1268
      %v1270 = vpop.f32.mrb[0].mxu0
      %v1271 = vpop.f32.mrb[0].mxu0
      %v1272 = vadd.f32 %v567, %v1271
      %v1273 = vpop.f32.mrb[0].mxu0
      %1274 = vmatprep.mubr.bf16.mxu0 0
      %1275 = vmatmul.mubr.bf16.gmra.mrb[0].mxu0 %v679
      %v1276 = vpop.f32.mrb[0].mxu0
      %v1277 = vadd.f32 %v567, %v1276
      %v1278 = vpop.f32.mrb[0].mxu0
      %v1279 = vpop.f32.mrb[0].mxu0
      %v1280 = vadd.f32 %v567, %v1279
      %v1281 = vpop.f32.mrb[0].mxu0
      %1282 = vmatprep.mubr.bf16.mxu0 0
      %1283 = vmatmul.mubr.bf16.gmra.mrb[0].mxu0 %v682
      %v1284 = vpop.f32.mrb[0].mxu0
      %v1285 = vadd.f32 %v567, %v1284
      %v1286 = vpop.f32.mrb[0].mxu0
      %v1287 = vpop.f32.mrb[0].mxu0
      %v1288 = vadd.f32 %v567, %v1287
      %v1289 = vpop.f32.mrb[0].mxu0
      %1290 = vmatprep.mubr.bf16.mxu0 0
      %1291 = vmatmul.mubr.bf16.gmra.mrb[0].mxu0 %v685
      %v1292 = vpop.f32.mrb[0].mxu0
      %v1293 = vadd.f32 %v567, %v1292
      %v1294 = vpop.f32.mrb[0].mxu0
      %v1295 = vpop.f32.mrb[0].mxu0
      %v1296 = vadd.f32 %v567, %v1295
      %v1297 = vpop.f32.mrb[0].mxu0
      %1298 = vmatprep.mubr.bf16.mxu0 0
      %1299 = vmatmul.mubr.bf16.gmra.mrb[0].mxu0 %v688
      %v1300 = vpop.f32.mrb[0].mxu0
      %v1301 = vadd.f32 %v567, %v1300
      %v1302 = vpop.f32.mrb[0].mxu0
      %v1303 = vpop.f32.mrb[0].mxu0
      %v1304 = vadd.f32 %v567, %v1303
      %v1305 = vpop.f32.mrb[0].mxu0
      %1306 = vmatprep.mubr.bf16.mxu0 0
      %1307 = vmatmul.mubr.bf16.gmra.mrb[0].mxu0 %v691
      %v1308 = vpop.f32.mrb[0].mxu0
      %v1309 = vadd.f32 %v567, %v1308
      %v1310 = vpop.f32.mrb[0].mxu0
      %v1311 = vpop.f32.mrb[0].mxu0
      %v1312 = vadd.f32 %v567, %v1311
      %v1313 = vpop.f32.mrb[0].mxu0
      %1314 = vmatprep.mubr.bf16.mxu0 0
      %1315 = vmatmul.mubr.bf16.gmra.mrb[0].mxu0 %v694
      %v1316 = vpop.f32.mrb[0].mxu0
      %v1317 = vadd.f32 %v567, %v1316
      %v1318 = vpop.f32.mrb[0].mxu0
      %v1319 = vpop.f32.mrb[0].mxu0
      %v1320 = vadd.f32 %v567, %v1319
      %v1321 = vpop.f32.mrb[0].mxu0
      %1322 = vmatprep.mubr.bf16.mxu0 0
      %1323 = vmatmul.mubr.bf16.gmra.mrb[0].mxu0 %v697
      %v1324 = vpop.f32.mrb[0].mxu0
      %v1325 = vadd.f32 %v567, %v1324
      %v1326 = vpop.f32.mrb[0].mxu0
      %v1327 = vpop.f32.mrb[0].mxu0
      %v1328 = vadd.f32 %v567, %v1327
      %v1329 = vpop.f32.mrb[0].mxu0
      %1330 = vmatprep.mubr.bf16.mxu0 0
      %1331 = vmatmul.mubr.bf16.gmra.mrb[0].mxu0 %v700
      %v1332 = vpop.f32.mrb[0].mxu0
      %v1333 = vadd.f32 %v567, %v1332
      %v1334 = vpop.f32.mrb[0].mxu0
      %v1335 = vpop.f32.mrb[0].mxu0
      %v1336 = vadd.f32 %v567, %v1335
      %v1337 = vpop.f32.mrb[0].mxu0
      %1338 = vmatprep.mubr.bf16.mxu0 0
      %1339 = vmatmul.mubr.bf16.gmra.mrb[0].mxu0 %v703
      %v1340 = vpop.f32.mrb[0].mxu0
      %v1341 = vadd.f32 %v567, %v1340
      %v1342 = vpop.f32.mrb[0].mxu0
      %v1343 = vpop.f32.mrb[0].mxu0
      %v1344 = vadd.f32 %v567, %v1343
      %v1345 = vpop.f32.mrb[0].mxu0
      %1346 = vmatprep.mubr.bf16.mxu0 0
      %1347 = vmatmul.mubr.bf16.gmra.mrb[0].mxu0 %v706
      %v1348 = vpop.f32.mrb[0].mxu0
      %v1349 = vadd.f32 %v567, %v1348
      %v1350 = vpop.f32.mrb[0].mxu0
      %v1351 = vpop.f32.mrb[0].mxu0
      %v1352 = vadd.f32 %v567, %v1351
      %v1353 = vpop.f32.mrb[0].mxu0
      %1354 = vmatprep.mubr.bf16.mxu0 0
      %1355 = vmatmul.mubr.bf16.gmra.mrb[0].mxu0 %v709
      %v1356 = vpop.f32.mrb[0].mxu0
      %v1357 = vadd.f32 %v567, %v1356
      %v1358 = vpop.f32.mrb[0].mxu0
      %v1359 = vpop.f32.mrb[0].mxu0
      %v1360 = vadd.f32 %v567, %v1359
      %v1361 = vpop.f32.mrb[0].mxu0
      %1362 = vmatprep.mubr.bf16.mxu0 0
      %1363 = vmatmul.mubr.bf16.gmra.mrb[0].mxu0 %v712
      %v1364 = vpop.f32.mrb[0].mxu0
      %v1365 = vadd.f32 %v567, %v1364
      %v1366 = vpop.f32.mrb[0].mxu0
      %v1367 = vpop.f32.mrb[0].mxu0
      %v1368 = vadd.f32 %v567, %v1367
      %v1369 = vpop.f32.mrb[0].mxu0
      %1370 = vmatprep.mubr.bf16.mxu0 0
      %1371 = vmatmul.mubr.bf16.gmra.mrb[0].mxu0 %v715
      %v1372 = vpop.f32.mrb[0].mxu0
      %v1373 = vadd.f32 %v567, %v1372
      %v1374 = vpop.f32.mrb[0].mxu0
      %v1375 = vpop.f32.mrb[0].mxu0
      %v1376 = vadd.f32 %v567, %v1375
      %v1377 = vpop.f32.mrb[0].mxu0
      %1378 = vmatprep.mubr.bf16.mxu0 0
      %1379 = vmatmul.mubr.bf16.gmra.mrb[0].mxu0 %v718
      %v1380 = vpop.f32.mrb[0].mxu0
      %v1381 = vadd.f32 %v567, %v1380
      %v1382 = vpop.f32.mrb[0].mxu0
      %v1383 = vpop.f32.mrb[0].mxu0
      %v1384 = vadd.f32 %v567, %v1383
      %v1385 = vpop.f32.mrb[0].mxu0
      %1386 = vmatprep.mubr.bf16.mxu0 0
      %1387 = vmatmul.mubr.bf16.gmra.mrb[0].mxu0 %v721
      %v1388 = vpop.f32.mrb[0].mxu0
      %v1389 = vadd.f32 %v567, %v1388
      %v1390 = vpop.f32.mrb[0].mxu0
      %v1391 = vpop.f32.mrb[0].mxu0
      %v1392 = vadd.f32 %v567, %v1391
      %v1393 = vpop.f32.mrb[0].mxu0
      %1394 = vmatprep.mubr.bf16.mxu0 0
      %1395 = vmatmul.mubr.bf16.gmra.mrb[0].mxu0 %v724
      %v1396 = vpop.f32.mrb[0].mxu0
      %v1397 = vadd.f32 %v567, %v1396
      %v1398 = vpop.f32.mrb[0].mxu0
      %v1399 = vpop.f32.mrb[0].mxu0
      %v1400 = vadd.f32 %v567, %v1399
      %v1401 = vpop.f32.mrb[0].mxu0
      %1402 = vmatprep.mubr.bf16.mxu0 0
      %1403 = vmatmul.mubr.bf16.gmra.mrb[0].mxu0 %v727
      %v1404 = vpop.f32.mrb[0].mxu0
      %v1405 = vadd.f32 %v567, %v1404
      %v1406 = vpop.f32.mrb[0].mxu0
      %v1407 = vpop.f32.mrb[0].mxu0
      %v1408 = vadd.f32 %v567, %v1407
      %v1409 = vpop.f32.mrb[0].mxu0
      %1410 = vmatprep.mubr.bf16.mxu0 0
      %1411 = vmatmul.mubr.bf16.gmra.mrb[0].mxu0 %v730
      %v1412 = vpop.f32.mrb[0].mxu0
      %v1413 = vadd.f32 %v567, %v1412
      %v1414 = vpop.f32.mrb[0].mxu0
      %v1415 = vpop.f32.mrb[0].mxu0
      %v1416 = vadd.f32 %v567, %v1415
      %v1417 = vpop.f32.mrb[0].mxu0
      %1418 = vmatprep.mubr.bf16.mxu0 0
      %1419 = vmatmul.mubr.bf16.gmra.mrb[0].mxu0 %v733
      %v1420 = vpop.f32.mrb[0].mxu0
      %v1421 = vadd.f32 %v567, %v1420
      %v1422 = vpop.f32.mrb[0].mxu0
      %v1423 = vpop.f32.mrb[0].mxu0
      %v1424 = vadd.f32 %v567, %v1423
      %v1425 = vpop.f32.mrb[0].mxu0
      %1426 = vmatprep.mubr.bf16.mxu0 0
      %1427 = vmatmul.mubr.bf16.gmra.mrb[0].mxu0 %v736
      %v1428 = vpop.f32.mrb[0].mxu0
      %v1429 = vadd.f32 %v567, %v1428
      %v1430 = vpop.f32.mrb[0].mxu0
      %v1431 = vpop.f32.mrb[0].mxu0
      %v1432 = vadd.f32 %v567, %v1431
      %v1433 = vpop.f32.mrb[0].mxu0
      %1434 = vmatprep.mubr.bf16.mxu0 0
      %1435 = vmatmul.mubr.bf16.gmra.mrb[0].mxu0 %v739
      %v1436 = vpop.f32.mrb[0].mxu0
      %v1437 = vadd.f32 %v567, %v1436
      %v1438 = vpop.f32.mrb[0].mxu0
      %v1439 = vpop.f32.mrb[0].mxu0
      %v1440 = vadd.f32 %v567, %v1439
      %v1441 = vpop.f32.mrb[0].mxu0
      %1442 = vmatprep.mubr.bf16.mxu0 0
      %1443 = vmatmul.mubr.bf16.gmra.mrb[0].mxu0 %v742
      %v1444 = vpop.f32.mrb[0].mxu0
      %v1445 = vadd.f32 %v567, %v1444
      %v1446 = vpop.f32.mrb[0].mxu0
      %v1447 = vpop.f32.mrb[0].mxu0
      %v1448 = vadd.f32 %v567, %v1447
      %v1449 = vpop.f32.mrb[0].mxu0
      %1450 = vmatprep.mubr.bf16.mxu0 0
      %1451 = vmatmul.mubr.bf16.gmra.mrb[0].mxu0 %v745
      %v1452 = vpop.f32.mrb[0].mxu0
      %v1453 = vadd.f32 %v567, %v1452
      %v1454 = vpop.f32.mrb[0].mxu0
      %v1455 = vpop.f32.mrb[0].mxu0
      %v1456 = vadd.f32 %v567, %v1455
      %v1457 = vpop.f32.mrb[0].mxu0
      %1458 = vmatprep.mubr.bf16.mxu0 0
      %1459 = vmatmul.mubr.bf16.gmra.mrb[0].mxu0 %v748
      %v1460 = vpop.f32.mrb[0].mxu0
      %v1461 = vadd.f32 %v567, %v1460
      %v1462 = vpop.f32.mrb[0].mxu0
      %v1463 = vpop.f32.mrb[0].mxu0
      %v1464 = vadd.f32 %v567, %v1463
      %v1465 = vpop.f32.mrb[0].mxu0
      %1466 = vmatprep.mubr.bf16.mxu0 0
      %1467 = vmatmul.mubr.bf16.gmra.mrb[0].mxu0 %v751
      %v1468 = vpop.f32.mrb[0].mxu0
      %v1469 = vadd.f32 %v567, %v1468
      %v1470 = vpop.f32.mrb[0].mxu0
      %v1471 = vpop.f32.mrb[0].mxu0
      %v1472 = vadd.f32 %v567, %v1471
      %v1473 = vpop.f32.mrb[0].mxu0
      %1474 = vmatprep.mubr.bf16.mxu0 0
      %1475 = vmatmul.mubr.bf16.gmra.mrb[0].mxu0 %v754
      %v1476 = vpop.f32.mrb[0].mxu0
      %v1477 = vadd.f32 %v567, %v1476
      %v1478 = vpop.f32.mrb[0].mxu0
      %v1479 = vpop.f32.mrb[0].mxu0
      %v1480 = vadd.f32 %v567, %v1479
      %v1481 = vpop.f32.mrb[0].mxu0
      %1482 = vmatprep.mubr.bf16.mxu0 0
      %1483 = vmatmul.mubr.bf16.gmra.mrb[0].mxu0 %v757
      %v1484 = vpop.f32.mrb[0].mxu0
      %v1485 = vadd.f32 %v567, %v1484
      %v1486 = vpop.f32.mrb[0].mxu0
      %v1487 = vpop.f32.mrb[0].mxu0
      %v1488 = vadd.f32 %v567, %v1487
      %v1489 = vpop.f32.mrb[0].mxu0
      %1490 = vmatprep.mubr.bf16.mxu0 0
      %1491 = vmatmul.mubr.bf16.gmra.mrb[0].mxu0 %v760
      %v1492 = vpop.f32.mrb[0].mxu0
      %v1493 = vadd.f32 %v567, %v1492
      %v1494 = vpop.f32.mrb[0].mxu0
      %v1495 = vpop.f32.mrb[0].mxu0
      %v1496 = vadd.f32 %v567, %v1495
      %v1497 = vpop.f32.mrb[0].mxu0
      %1498 = vmatprep.mubr.bf16.mxu0 0
      %1499 = vmatmul.mubr.bf16.gmra.mrb[0].mxu0 %v763
      %v1500 = vpop.f32.mrb[0].mxu0
      %v1501 = vadd.f32 %v567, %v1500
      %v1502 = vpop.f32.mrb[0].mxu0
      %v1503 = vpop.f32.mrb[0].mxu0
      %v1504 = vadd.f32 %v567, %v1503
      %v1505 = vpop.f32.mrb[0].mxu0
      %1506 = vmatprep.mubr.bf16.mxu0 0
      %1507 = vmatmul.mubr.bf16.gmra.mrb[0].mxu0 %v766
      %v1508 = vpop.f32.mrb[0].mxu0
      %v1509 = vadd.f32 %v567, %v1508
      %v1510 = vpop.f32.mrb[0].mxu0
      %v1511 = vpop.f32.mrb[0].mxu0
      %v1512 = vadd.f32 %v567, %v1511
      %v1513 = vpop.f32.mrb[0].mxu0
      %1514 = vmatprep.mubr.bf16.mxu0 0
      %1515 = vmatmul.mubr.bf16.gmra.mrb[0].mxu0 %v769
      %v1516 = vpop.f32.mrb[0].mxu0
      %v1517 = vadd.f32 %v567, %v1516
      %v1518 = vpop.f32.mrb[0].mxu0
      %v1519 = vpop.f32.mrb[0].mxu0
      %v1520 = vadd.f32 %v567, %v1519
      %v1521 = vpop.f32.mrb[0].mxu0
      %1522 = vmatprep.mubr.bf16.mxu0 0
      %1523 = vmatmul.mubr.bf16.gmra.mrb[0].mxu0 %v772
      %v1524 = vpop.f32.mrb[0].mxu0
      %v1525 = vadd.f32 %v567, %v1524
      %v1526 = vpop.f32.mrb[0].mxu0
      %v1527 = vpop.f32.mrb[0].mxu0
      %v1528 = vadd.f32 %v567, %v1527
      %v1529 = vpop.f32.mrb[0].mxu0
      %1530 = vmatprep.mubr.bf16.mxu0 0
      %1531 = vmatmul.mubr.bf16.gmra.mrb[0].mxu0 %v775
      %v1532 = vpop.f32.mrb[0].mxu0
      %v1533 = vadd.f32 %v567, %v1532
      %v1534 = vpop.f32.mrb[0].mxu0
      %v1535 = vpop.f32.mrb[0].mxu0
      %v1536 = vadd.f32 %v567, %v1535
      %v1537 = vpop.f32.mrb[0].mxu0
      %1538 = vmatprep.mubr.bf16.mxu0 0
      %1539 = vmatmul.mubr.bf16.gmra.mrb[0].mxu0 %v778
      %v1540 = vpop.f32.mrb[0].mxu0
      %v1541 = vadd.f32 %v567, %v1540
      %v1542 = vpop.f32.mrb[0].mxu0
      %v1543 = vpop.f32.mrb[0].mxu0
      %v1544 = vadd.f32 %v567, %v1543
      %v1545 = vpop.f32.mrb[0].mxu0
      %1546 = vmatprep.mubr.bf16.mxu0 0
      %1547 = vmatmul.mubr.bf16.gmra.mrb[0].mxu0 %v781
      %v1548 = vpop.f32.mrb[0].mxu0
      %v1549 = vadd.f32 %v567, %v1548
      %v1550 = vpop.f32.mrb[0].mxu0
      %v1551 = vpop.f32.mrb[0].mxu0
      %v1552 = vadd.f32 %v567, %v1551
      %v1553 = vpop.f32.mrb[0].mxu0
      %1554 = vmatprep.mubr.bf16.mxu0 0
      %1555 = vmatmul.mubr.bf16.gmra.mrb[0].mxu0 %v784
      %v1556 = vpop.f32.mrb[0].mxu0
      %v1557 = vadd.f32 %v567, %v1556
      %v1558 = vpop.f32.mrb[0].mxu0
      %v1559 = vpop.f32.mrb[0].mxu0
      %v1560 = vadd.f32 %v567, %v1559
      %v1561 = vpop.f32.mrb[0].mxu0
      %1562 = vmatprep.mubr.bf16.mxu0 0
      %1563 = vmatmul.mubr.bf16.gmra.mrb[0].mxu0 %v787
      %v1564 = vpop.f32.mrb[0].mxu0
      %v1565 = vadd.f32 %v567, %v1564
      %v1566 = vpop.f32.mrb[0].mxu0
      %v1567 = vpop.f32.mrb[0].mxu0
      %v1568 = vadd.f32 %v567, %v1567
      %v1569 = vpop.f32.mrb[0].mxu0
      %1570 = vmatprep.mubr.bf16.mxu0 0
      %1571 = vmatmul.mubr.bf16.gmra.mrb[0].mxu0 %v790
      %v1572 = vpop.f32.mrb[0].mxu0
      %v1573 = vadd.f32 %v567, %v1572
      %v1574 = vpop.f32.mrb[0].mxu0
      %v1575 = vpop.f32.mrb[0].mxu0
      %v1576 = vadd.f32 %v567, %v1575
      %v1577 = vpop.f32.mrb[0].mxu0
      %1578 = vmatprep.mubr.bf16.mxu0 0
      %1579 = vmatmul.mubr.bf16.gmra.mrb[0].mxu0 %v793
      %v1580 = vpop.f32.mrb[0].mxu0
      %v1581 = vadd.f32 %v567, %v1580
      %v1582 = vpop.f32.mrb[0].mxu0
      %v1583 = vpop.f32.mrb[0].mxu0
      %v1584 = vadd.f32 %v567, %v1583
      %v1585 = vpop.f32.mrb[0].mxu0
      %1586 = vmatprep.mubr.bf16.mxu0 0
      %1587 = vmatmul.mubr.bf16.gmra.mrb[0].mxu0 %v796
      %v1588 = vpop.f32.mrb[0].mxu0
      %v1589 = vadd.f32 %v567, %v1588
      %v1590 = vpop.f32.mrb[0].mxu0
      %v1591 = vpop.f32.mrb[0].mxu0
      %v1592 = vadd.f32 %v567, %v1591
      %v1593 = vpop.f32.mrb[0].mxu0
      %1594 = vmatprep.mubr.bf16.mxu0 0
      %1595 = vmatmul.mubr.bf16.gmra.mrb[0].mxu0 %v799
      %v1596 = vpop.f32.mrb[0].mxu0
      %v1597 = vadd.f32 %v567, %v1596
      %v1598 = vpop.f32.mrb[0].mxu0
      %v1599 = vpop.f32.mrb[0].mxu0
      %v1600 = vadd.f32 %v567, %v1599
      %v1601 = vpop.f32.mrb[0].mxu0
      %1602 = vmatprep.mubr.bf16.mxu0 0
      %1603 = vmatmul.mubr.bf16.gmra.mrb[0].mxu0 %v802
      %v1604 = vpop.f32.mrb[0].mxu0
      %v1605 = vadd.f32 %v567, %v1604
      %v1606 = vpop.f32.mrb[0].mxu0
      %v1607 = vpop.f32.mrb[0].mxu0
      %v1608 = vadd.f32 %v567, %v1607
      %v1609 = vpop.f32.mrb[0].mxu0
      %1610 = vmatprep.mubr.bf16.mxu0 0
      %1611 = vmatmul.mubr.bf16.gmra.mrb[0].mxu0 %v805
      %v1612 = vpop.f32.mrb[0].mxu0
      %v1613 = vadd.f32 %v567, %v1612
      %v1614 = vpop.f32.mrb[0].mxu0
      %v1615 = vpop.f32.mrb[0].mxu0
      %v1616 = vadd.f32 %v567, %v1615
      %v1617 = vpop.f32.mrb[0].mxu0
      %1618 = vmatprep.mubr.bf16.mxu0 0
      %1619 = vmatmul.mubr.bf16.gmra.mrb[0].mxu0 %v808
      %v1620 = vpop.f32.mrb[0].mxu0
      %v1621 = vadd.f32 %v567, %v1620
      %v1622 = vpop.f32.mrb[0].mxu0
      %v1623 = vpop.f32.mrb[0].mxu0
      %v1624 = vadd.f32 %v567, %v1623
      %v1625 = vpop.f32.mrb[0].mxu0
      %1626 = vmatprep.mubr.bf16.mxu0 0
      %1627 = vmatmul.mubr.bf16.gmra.mrb[0].mxu0 %v811
      %v1628 = vpop.f32.mrb[0].mxu0
      %v1629 = vadd.f32 %v567, %v1628
      %v1630 = vpop.f32.mrb[0].mxu0
      %v1631 = vpop.f32.mrb[0].mxu0
      %v1632 = vadd.f32 %v567, %v1631
      %v1633 = vpop.f32.mrb[0].mxu0
      %1634 = vmatprep.mubr.bf16.mxu0 0
      %1635 = vmatmul.mubr.bf16.gmra.mrb[0].mxu0 %v814
      %v1636 = vpop.f32.mrb[0].mxu0
      %v1637 = vadd.f32 %v567, %v1636
      %v1638 = vpop.f32.mrb[0].mxu0
      %v1639 = vpop.f32.mrb[0].mxu0
      %v1640 = vadd.f32 %v567, %v1639
      %v1641 = vpop.f32.mrb[0].mxu0
      %1642 = vmatprep.mubr.bf16.mxu0 0
      %1643 = vmatmul.mubr.bf16.gmra.mrb[0].mxu0 %v817
      %v1644 = vpop.f32.mrb[0].mxu0
      %v1645 = vadd.f32 %v567, %v1644
      %v1646 = vpop.f32.mrb[0].mxu0
      %v1647 = vpop.f32.mrb[0].mxu0
      %v1648 = vadd.f32 %v567, %v1647
      %v1649 = vpop.f32.mrb[0].mxu0
      %1650 = vmatprep.mubr.bf16.mxu0 0
      %1651 = vmatmul.mubr.bf16.gmra.mrb[0].mxu0 %v820
      %v1652 = vpop.f32.mrb[0].mxu0
      %v1653 = vadd.f32 %v567, %v1652
      %v1654 = vpop.f32.mrb[0].mxu0
      %v1655 = vpop.f32.mrb[0].mxu0
      %v1656 = vadd.f32 %v567, %v1655
      %v1657 = vpop.f32.mrb[0].mxu0
      %1658 = vmatprep.mubr.bf16.mxu0 0
      %1659 = vmatmul.mubr.bf16.gmra.mrb[0].mxu0 %v823
      %v1660 = vpop.f32.mrb[0].mxu0
      %v1661 = vadd.f32 %v567, %v1660
      %v1662 = vpop.f32.mrb[0].mxu0
      %v1663 = vpop.f32.mrb[0].mxu0
      %v1664 = vadd.f32 %v567, %v1663
      %v1665 = vpop.f32.mrb[0].mxu0
      %1666 = vmatprep.mubr.bf16.mxu0 0
      %1667 = vmatmul.mubr.bf16.gmra.mrb[0].mxu0 %v826
      %v1668 = vpop.f32.mrb[0].mxu0
      %v1669 = vadd.f32 %v567, %v1668
      %v1670 = vpop.f32.mrb[0].mxu0
      %v1671 = vpop.f32.mrb[0].mxu0
      %v1672 = vadd.f32 %v567, %v1671
      %v1673 = vpop.f32.mrb[0].mxu0
      %1674 = vmatprep.mubr.bf16.mxu0 0
      %1675 = vmatmul.mubr.bf16.gmra.mrb[0].mxu0 %v829
      %v1676 = vpop.f32.mrb[0].mxu0
      %v1677 = vadd.f32 %v567, %v1676
      %v1678 = vpop.f32.mrb[0].mxu0
      %v1679 = vpop.f32.mrb[0].mxu0
      %v1680 = vadd.f32 %v567, %v1679
      %v1681 = vpop.f32.mrb[0].mxu0
      %1682 = vmatprep.mubr.bf16.mxu0 0
      %1683 = vmatmul.mubr.bf16.gmra.mrb[0].mxu0 %v832
      %v1684 = vpop.f32.mrb[0].mxu0
      %v1685 = vadd.f32 %v567, %v1684
      %v1686 = vpop.f32.mrb[0].mxu0
      %v1687 = vpop.f32.mrb[0].mxu0
      %v1688 = vadd.f32 %v567, %v1687
      %v1689 = vpop.f32.mrb[0].mxu0
      %1690 = vmatprep.mubr.bf16.mxu0 0
      %1691 = vmatmul.mubr.bf16.gmra.mrb[0].mxu0 %v835
      %v1692 = vpop.f32.mrb[0].mxu0
      %v1693 = vadd.f32 %v567, %v1692
      %v1694 = vpop.f32.mrb[0].mxu0
      %v1695 = vpop.f32.mrb[0].mxu0
      %v1696 = vadd.f32 %v567, %v1695
      %v1697 = vpop.f32.mrb[0].mxu0
      %1698 = vmatprep.mubr.bf16.mxu0 0
      %1699 = vmatmul.mubr.bf16.gmra.mrb[0].mxu0 %v838
      %v1700 = vpop.f32.mrb[0].mxu0
      %v1701 = vadd.f32 %v567, %v1700
      %v1702 = vpop.f32.mrb[0].mxu0
      %v1703 = vpop.f32.mrb[0].mxu0
      %v1704 = vadd.f32 %v567, %v1703
      %v1705 = vpop.f32.mrb[0].mxu0
      %1706 = vmatprep.mubr.bf16.mxu0 0
      %1707 = vmatmul.mubr.bf16.gmra.mrb[0].mxu0 %v841
      %v1708 = vpop.f32.mrb[0].mxu0
      %v1709 = vadd.f32 %v567, %v1708
      %v1710 = vpop.f32.mrb[0].mxu0
      %v1711 = vpop.f32.mrb[0].mxu0
      %v1712 = vadd.f32 %v567, %v1711
      %v1713 = vpop.f32.mrb[0].mxu0
      %1714 = vmatprep.mubr.bf16.mxu0 0
      %1715 = vmatmul.mubr.bf16.gmra.mrb[0].mxu0 %v844
      %v1716 = vpop.f32.mrb[0].mxu0
      %v1717 = vadd.f32 %v567, %v1716
      %v1718 = vpop.f32.mrb[0].mxu0
      %v1719 = vpop.f32.mrb[0].mxu0
      %v1720 = vadd.f32 %v567, %v1719
      %v1721 = vpop.f32.mrb[0].mxu0
      %1722 = vmatprep.mubr.bf16.mxu0 0
      %1723 = vmatmul.mubr.bf16.gmra.mrb[0].mxu0 %v847
      %v1724 = vpop.f32.mrb[0].mxu0
      %v1725 = vadd.f32 %v567, %v1724
      %v1726 = vpop.f32.mrb[0].mxu0
      %v1727 = vpop.f32.mrb[0].mxu0
      %v1728 = vadd.f32 %v567, %v1727
      %v1729 = vpop.f32.mrb[0].mxu0
      %1730 = vmatprep.mubr.bf16.mxu0 0
      %1731 = vmatmul.mubr.bf16.gmra.mrb[0].mxu0 %v850
      %v1732 = vpop.f32.mrb[0].mxu0
      %v1733 = vadd.f32 %v567, %v1732
      %v1734 = vpop.f32.mrb[0].mxu0
      %v1735 = vpop.f32.mrb[0].mxu0
      %v1736 = vadd.f32 %v567, %v1735
      %v1737 = vpop.f32.mrb[0].mxu0
      %1738 = vmatprep.mubr.bf16.mxu0 0
      %1739 = vmatmul.mubr.bf16.gmra.mrb[0].mxu0 %v853
      %v1740 = vpop.f32.mrb[0].mxu0
      %v1741 = vadd.f32 %v567, %v1740
      %v1742 = vpop.f32.mrb[0].mxu0
      %v1743 = vpop.f32.mrb[0].mxu0
      %v1744 = vadd.f32 %v567, %v1743
      %v1745 = vpop.f32.mrb[0].mxu0
      %1746 = vmatprep.mubr.bf16.mxu0 0
      %1747 = vmatmul.mubr.bf16.gmra.mrb[0].mxu0 %v856
      %v1748 = vpop.f32.mrb[0].mxu0
      %v1749 = vadd.f32 %v567, %v1748
      %v1750 = vpop.f32.mrb[0].mxu0
      %v1751 = vpop.f32.mrb[0].mxu0
      %v1752 = vadd.f32 %v567, %v1751
      %v1753 = vpop.f32.mrb[0].mxu0
      %1754 = vmatprep.mubr.bf16.mxu0 0
      %1755 = vmatmul.mubr.bf16.gmra.mrb[0].mxu0 %v859
      %v1756 = vpop.f32.mrb[0].mxu0
      %v1757 = vadd.f32 %v567, %v1756
      %v1758 = vpop.f32.mrb[0].mxu0
      %v1759 = vpop.f32.mrb[0].mxu0
      %v1760 = vadd.f32 %v567, %v1759
      %v1761 = vpop.f32.mrb[0].mxu0
      %1762 = vmatprep.mubr.bf16.mxu0 0
      %1763 = vmatmul.mubr.bf16.gmra.mrb[0].mxu0 %v862
      %v1764 = vpop.f32.mrb[0].mxu0
      %v1765 = vadd.f32 %v567, %v1764
      %v1766 = vpop.f32.mrb[0].mxu0
      %v1767 = vpop.f32.mrb[0].mxu0
      %v1768 = vadd.f32 %v567, %v1767
      %v1769 = vpop.f32.mrb[0].mxu0
      %1770 = vmatprep.mubr.bf16.mxu0 0
      %1771 = vmatmul.mubr.bf16.gmra.mrb[0].mxu0 %v865
      %v1772 = vpop.f32.mrb[0].mxu0
      %v1773 = vadd.f32 %v567, %v1772
      %v1774 = vpop.f32.mrb[0].mxu0
      %v1775 = vpop.f32.mrb[0].mxu0
      %v1776 = vadd.f32 %v567, %v1775
      %v1777 = vpop.f32.mrb[0].mxu0
      %1778 = vmatprep.mubr.bf16.mxu0 0
      %1779 = vmatmul.mubr.bf16.gmra.mrb[0].mxu0 %v868
      %v1780 = vpop.f32.mrb[0].mxu0
      %v1781 = vadd.f32 %v567, %v1780
      %v1782 = vpop.f32.mrb[0].mxu0
      %v1783 = vpop.f32.mrb[0].mxu0
      %v1784 = vadd.f32 %v567, %v1783
      %v1785 = vpop.f32.mrb[0].mxu0
      %1786 = vmatprep.mubr.bf16.mxu0 0
      %1787 = vmatmul.mubr.bf16.gmra.mrb[0].mxu0 %v871
      %v1788 = vpop.f32.mrb[0].mxu0
      %v1789 = vadd.f32 %v567, %v1788
      %v1790 = vpop.f32.mrb[0].mxu0
      %v1791 = vpop.f32.mrb[0].mxu0
      %v1792 = vadd.f32 %v567, %v1791
      %v1793 = vpop.f32.mrb[0].mxu0
      %1794 = vmatprep.mubr.bf16.mxu0 0
      %1795 = vmatmul.mubr.bf16.gmra.mrb[0].mxu0 %v874
      %v1796 = vpop.f32.mrb[0].mxu0
      %v1797 = vadd.f32 %v567, %v1796
      %v1798 = vpop.f32.mrb[0].mxu0
      %v1799 = vpop.f32.mrb[0].mxu0
      %v1800 = vadd.f32 %v567, %v1799
      %v1801 = vpop.f32.mrb[0].mxu0
      %1802 = vmatprep.mubr.bf16.mxu0 0
      %1803 = vmatmul.mubr.bf16.gmra.mrb[0].mxu0 %v877
      %v1804 = vpop.f32.mrb[0].mxu0
      %v1805 = vadd.f32 %v567, %v1804
      %v1806 = vpop.f32.mrb[0].mxu0
      %v1807 = vpop.f32.mrb[0].mxu0
      %v1808 = vadd.f32 %v567, %v1807
      %v1809 = vpop.f32.mrb[0].mxu0
      %1810 = vmatprep.mubr.bf16.mxu0 0
      %1811 = vmatmul.mubr.bf16.gmra.mrb[0].mxu0 %v880
      %v1812 = vpop.f32.mrb[0].mxu0
      %v1813 = vadd.f32 %v567, %v1812
      %v1814 = vpop.f32.mrb[0].mxu0
      %v1815 = vpop.f32.mrb[0].mxu0
      %v1816 = vadd.f32 %v567, %v1815
      %v1817 = vpop.f32.mrb[0].mxu0
      %1818 = vmatprep.mubr.bf16.mxu0 0
      %1819 = vmatmul.mubr.bf16.gmra.mrb[0].mxu0 %v883
      %v1820 = vpop.f32.mrb[0].mxu0
      %v1821 = vadd.f32 %v567, %v1820
      %v1822 = vpop.f32.mrb[0].mxu0
      %v1823 = vpop.f32.mrb[0].mxu0
      %v1824 = vadd.f32 %v567, %v1823
      %v1825 = vpop.f32.mrb[0].mxu0
      %1826 = vmatprep.mubr.bf16.mxu0 0
      %1827 = vmatmul.mubr.bf16.gmra.mrb[0].mxu0 %v886
      %v1828 = vpop.f32.mrb[0].mxu0
      %v1829 = vadd.f32 %v567, %v1828
      %v1830 = vpop.f32.mrb[0].mxu0
      %v1831 = vpop.f32.mrb[0].mxu0
      %v1832 = vadd.f32 %v567, %v1831
      %v1833 = vpop.f32.mrb[0].mxu0
      %1834 = vmatprep.mubr.bf16.mxu0 0
      %1835 = vmatmul.mubr.bf16.gmra.mrb[0].mxu0 %v889
      %v1836 = vpop.f32.mrb[0].mxu0
      %v1837 = vadd.f32 %v567, %v1836
      %v1838 = vpop.f32.mrb[0].mxu0
      %v1839 = vpop.f32.mrb[0].mxu0
      %v1840 = vadd.f32 %v567, %v1839
      %v1841 = vpop.f32.mrb[0].mxu0
      %1842 = vmatprep.mubr.bf16.mxu0 0
      %1843 = vmatmul.mubr.bf16.gmra.mrb[0].mxu0 %v892
      %v1844 = vpop.f32.mrb[0].mxu0
      %v1845 = vadd.f32 %v567, %v1844
      %v1846 = vpop.f32.mrb[0].mxu0
      %v1847 = vpop.f32.mrb[0].mxu0
      %v1848 = vadd.f32 %v567, %v1847
      %v1849 = vpop.f32.mrb[0].mxu0
      %1850 = vmatprep.mubr.bf16.mxu0 0
      %1851 = vmatmul.mubr.bf16.gmra.mrb[0].mxu0 %v895
      %v1852 = vpop.f32.mrb[0].mxu0
      %v1853 = vadd.f32 %v567, %v1852
      %v1854 = vpop.f32.mrb[0].mxu0
      %v1855 = vpop.f32.mrb[0].mxu0
      %v1856 = vadd.f32 %v567, %v1855
      %v1857 = vpop.f32.mrb[0].mxu0
      %1858 = vmatprep.mubr.bf16.mxu0 0
      %1859 = vmatmul.mubr.bf16.gmra.mrb[0].mxu0 %v898
      %v1860 = vpop.f32.mrb[0].mxu0
      %v1861 = vadd.f32 %v567, %v1860
      %v1862 = vpop.f32.mrb[0].mxu0
      %v1863 = vpop.f32.mrb[0].mxu0
      %v1864 = vadd.f32 %v567, %v1863
      %v1865 = vpop.f32.mrb[0].mxu0
      %1866 = vmatprep.mubr.bf16.mxu0 0
      %1867 = vmatmul.mubr.bf16.gmra.mrb[0].mxu0 %v901
      %v1868 = vpop.f32.mrb[0].mxu0
      %v1869 = vadd.f32 %v567, %v1868
      %v1870 = vpop.f32.mrb[0].mxu0
      %v1871 = vpop.f32.mrb[0].mxu0
      %v1872 = vadd.f32 %v567, %v1871
      %v1873 = vpop.f32.mrb[0].mxu0
      %1874 = vmatprep.mubr.bf16.mxu0 0
      %1875 = vmatmul.mubr.bf16.gmra.mrb[0].mxu0 %v904
      %v1876 = vpop.f32.mrb[0].mxu0
      %v1877 = vadd.f32 %v567, %v1876
      %v1878 = vpop.f32.mrb[0].mxu0
      %v1879 = vpop.f32.mrb[0].mxu0
      %v1880 = vadd.f32 %v567, %v1879
      %v1881 = vpop.f32.mrb[0].mxu0
      %1882 = vmatprep.mubr.bf16.mxu0 0
      %1883 = vmatmul.mubr.bf16.gmra.mrb[0].mxu0 %v907
      %v1884 = vpop.f32.mrb[0].mxu0
      %v1885 = vadd.f32 %v567, %v1884
      %v1886 = vpop.f32.mrb[0].mxu0
      %v1887 = vpop.f32.mrb[0].mxu0
      %v1888 = vadd.f32 %v567, %v1887
      %v1889 = vpop.f32.mrb[0].mxu0
      %1890 = vmatprep.mubr.bf16.mxu0 0
      %1891 = vmatmul.mubr.bf16.gmra.mrb[0].mxu0 %v910
      %v1892 = vpop.f32.mrb[0].mxu0
      %v1893 = vadd.f32 %v567, %v1892
      %v1894 = vpop.f32.mrb[0].mxu0
      %v1895 = vpop.f32.mrb[0].mxu0
      %v1896 = vadd.f32 %v567, %v1895
      %v1897 = vpop.f32.mrb[0].mxu0
      %1898 = vmatprep.mubr.bf16.mxu0 0
      %1899 = vmatmul.mubr.bf16.gmra.mrb[0].mxu0 %v913
      %v1900 = vpop.f32.mrb[0].mxu0
      %v1901 = vadd.f32 %v567, %v1900
      %v1902 = vpop.f32.mrb[0].mxu0
      %v1903 = vpop.f32.mrb[0].mxu0
      %v1904 = vadd.f32 %v567, %v1903
      %v1905 = vpop.f32.mrb[0].mxu0
      %1906 = vmatprep.mubr.bf16.mxu0 0
      %1907 = vmatmul.mubr.bf16.gmra.mrb[0].mxu0 %v916
      %v1908 = vpop.f32.mrb[0].mxu0
      %v1909 = vadd.f32 %v567, %v1908
      %v1910 = vpop.f32.mrb[0].mxu0
      %v1911 = vpop.f32.mrb[0].mxu0
      %v1912 = vadd.f32 %v567, %v1911
      %v1913 = vpop.f32.mrb[0].mxu0
      %1914 = vmatprep.mubr.bf16.mxu0 0
      %1915 = vmatmul.mubr.bf16.gmra.mrb[0].mxu0 %v919
      %v1916 = vpop.f32.mrb[0].mxu0
      %v1917 = vadd.f32 %v567, %v1916
      %v1918 = vpop.f32.mrb[0].mxu0
      %v1919 = vpop.f32.mrb[0].mxu0
      %v1920 = vadd.f32 %v567, %v1919
      %v1921 = vpop.f32.mrb[0].mxu0
      %1922 = vmatprep.mubr.bf16.mxu0 0
      %1923 = vmatmul.mubr.bf16.gmra.mrb[0].mxu0 %v922
      %v1924 = vpop.f32.mrb[0].mxu0
      %v1925 = vadd.f32 %v567, %v1924
      %v1926 = vpop.f32.mrb[0].mxu0
      %v1927 = vpop.f32.mrb[0].mxu0
      %v1928 = vadd.f32 %v567, %v1927
      %v1929 = vpop.f32.mrb[0].mxu0
      %1930 = vmatprep.mubr.bf16.mxu0 0
      %1931 = vmatmul.mubr.bf16.gmra.mrb[0].mxu0 %v925
      %v1932 = vpop.f32.mrb[0].mxu0
      %v1933 = vadd.f32 %v567, %v1932
      %v1934 = vpop.f32.mrb[0].mxu0
      %v1935 = vpop.f32.mrb[0].mxu0
      %v1936 = vadd.f32 %v567, %v1935
      %v1937 = vpop.f32.mrb[0].mxu0
      %1938 = vmatprep.mubr.bf16.mxu0 0
      %1939 = vmatmul.mubr.bf16.gmra.mrb[0].mxu0 %v928
      %v1940 = vpop.f32.mrb[0].mxu0
      %v1941 = vadd.f32 %v567, %v1940
      %v1942 = vpop.f32.mrb[0].mxu0
      %v1943 = vpop.f32.mrb[0].mxu0
      %v1944 = vadd.f32 %v567, %v1943
      %v1945 = vpop.f32.mrb[0].mxu0
      %1946 = vmatprep.mubr.bf16.mxu0 0
      %1947 = vmatmul.mubr.bf16.gmra.mrb[0].mxu0 %v931
      %v1948 = vpop.f32.mrb[0].mxu0
      %v1949 = vadd.f32 %v567, %v1948
      %v1950 = vpop.f32.mrb[0].mxu0
      %v1951 = vpop.f32.mrb[0].mxu0
      %v1952 = vadd.f32 %v567, %v1951
      %v1953 = vpop.f32.mrb[0].mxu0
      %1954 = vmatprep.mubr.bf16.mxu0 0
      %1955 = vmatmul.mubr.bf16.gmra.mrb[0].mxu0 %v934
      %v1956 = vpop.f32.mrb[0].mxu0
      %v1957 = vadd.f32 %v567, %v1956
      %v1958 = vpop.f32.mrb[0].mxu0
      %v1959 = vpop.f32.mrb[0].mxu0
      %v1960 = vadd.f32 %v567, %v1959
      %v1961 = vpop.f32.mrb[0].mxu0
      %1962 = vmatprep.mubr.bf16.mxu0 0
      %1963 = vmatmul.mubr.bf16.gmra.mrb[0].mxu0 %v937
      %v1964 = vpop.f32.mrb[0].mxu0
      %v1965 = vadd.f32 %v567, %v1964
      %v1966 = vpop.f32.mrb[0].mxu0
      %v1967 = vpop.f32.mrb[0].mxu0
      %v1968 = vadd.f32 %v567, %v1967
      %v1969 = vpop.f32.mrb[0].mxu0
      %1970 = vmatprep.mubr.bf16.mxu0 0
      %1971 = vmatmul.mubr.bf16.gmra.mrb[0].mxu0 %v940
      %v1972 = vpop.f32.mrb[0].mxu0
      %v1973 = vadd.f32 %v567, %v1972
      %v1974 = vpop.f32.mrb[0].mxu0
      %v1975 = vpop.f32.mrb[0].mxu0
      %v1976 = vadd.f32 %v567, %v1975
      %v1977 = vpop.f32.mrb[0].mxu0
      %1978 = vmatprep.mubr.bf16.mxu0 0
      %1979 = vmatmul.mubr.bf16.gmra.mrb[0].mxu0 %v943
      %v1980 = vpop.f32.mrb[0].mxu0
      %v1981 = vadd.f32 %v567, %v1980
      %v1982 = vpop.f32.mrb[0].mxu0
      %v1983 = vpop.f32.mrb[0].mxu0
      %v1984 = vadd.f32 %v567, %v1983
      %v1985 = vpop.f32.mrb[0].mxu0
      %1986 = vmatprep.mubr.bf16.mxu0 0
      %1987 = vmatmul.mubr.bf16.gmra.mrb[0].mxu0 %v946
      %v1988 = vpop.f32.mrb[0].mxu0
      %v1989 = vadd.f32 %v567, %v1988
      %v1990 = vpop.f32.mrb[0].mxu0
      %v1991 = vpop.f32.mrb[0].mxu0
      %v1992 = vadd.f32 %v567, %v1991
      %v1993 = vpop.f32.mrb[0].mxu0
      %1994 = vmatprep.mubr.bf16.mxu0 0
      %1995 = vmatmul.mubr.bf16.gmra.mrb[0].mxu0 %v949
      %v1996 = vpop.f32.mrb[0].mxu0
      %v1997 = vadd.f32 %v567, %v1996
      %v1998 = vpop.f32.mrb[0].mxu0
      %v1999 = vpop.f32.mrb[0].mxu0
      %v2000 = vadd.f32 %v567, %v1999
      %v2001 = vpop.f32.mrb[0].mxu0
      %2002 = vmatprep.mubr.bf16.mxu0 0
      %2003 = vmatmul.mubr.bf16.gmra.mrb[0].mxu0 %v952
      %v2004 = vpop.f32.mrb[0].mxu0
      %v2005 = vadd.f32 %v567, %v2004
      %v2006 = vpop.f32.mrb[0].mxu0
      %v2007 = vpop.f32.mrb[0].mxu0
      %v2008 = vadd.f32 %v567, %v2007
      %v2009 = vpop.f32.mrb[0].mxu0
      %2010 = vdwg.mxu0
      %v2011 = vmax.f32 %v989, 0.0
      %v2012 = vmax.f32 %v992, 0.0
      %v2013 = vmax.f32 %v997, 0.0
      %v2014 = vmax.f32 %v1000, 0.0
      %v2015 = vmax.f32 %v1005, 0.0
      %v2016 = vmax.f32 %v1008, 0.0
      %v2017 = vmax.f32 %v1013, 0.0
      %v2018 = vmax.f32 %v1016, 0.0
      %v2019 = vmax.f32 %v1021, 0.0
      %v2020 = vmax.f32 %v1024, 0.0
      %v2021 = vmax.f32 %v1029, 0.0
      %v2022 = vmax.f32 %v1032, 0.0
      %v2023 = vmax.f32 %v1037, 0.0
      %v2024 = vmax.f32 %v1040, 0.0
      %v2025 = vmax.f32 %v1045, 0.0
      %v2026 = vmax.f32 %v1048, 0.0
      %v2027 = vmax.f32 %v1053, 0.0
      %v2028 = vmax.f32 %v1056, 0.0
      %v2029 = vmax.f32 %v1061, 0.0
      %v2030 = vmax.f32 %v1064, 0.0
      %v2031 = vmax.f32 %v1069, 0.0
      %v2032 = vmax.f32 %v1072, 0.0
      %v2033 = vmax.f32 %v1077, 0.0
      %v2034 = vmax.f32 %v1080, 0.0
      %v2035 = vmax.f32 %v1085, 0.0
      %v2036 = vmax.f32 %v1088, 0.0
      %v2037 = vmax.f32 %v1093, 0.0
      %v2038 = vmax.f32 %v1096, 0.0
      %v2039 = vmax.f32 %v1101, 0.0
      %v2040 = vmax.f32 %v1104, 0.0
      %v2041 = vmax.f32 %v1109, 0.0
      %v2042 = vmax.f32 %v1112, 0.0
      %v2043 = vmax.f32 %v1117, 0.0
      %v2044 = vmax.f32 %v1120, 0.0
      %v2045 = vmax.f32 %v1125, 0.0
      %v2046 = vmax.f32 %v1128, 0.0
      %v2047 = vmax.f32 %v1133, 0.0
      %v2048 = vmax.f32 %v1136, 0.0
      %v2049 = vmax.f32 %v1141, 0.0
      %v2050 = vmax.f32 %v1144, 0.0
      %v2051 = vmax.f32 %v1149, 0.0
      %v2052 = vmax.f32 %v1152, 0.0
      %v2053 = vmax.f32 %v1157, 0.0
      %v2054 = vmax.f32 %v1160, 0.0
      %v2055 = vmax.f32 %v1165, 0.0
      %v2056 = vmax.f32 %v1168, 0.0
      %v2057 = vmax.f32 %v1173, 0.0
      %v2058 = vmax.f32 %v1176, 0.0
      %v2059 = vmax.f32 %v1181, 0.0
      %v2060 = vmax.f32 %v1184, 0.0
      %v2061 = vmax.f32 %v1189, 0.0
      %v2062 = vmax.f32 %v1192, 0.0
      %v2063 = vmax.f32 %v1197, 0.0
      %v2064 = vmax.f32 %v1200, 0.0
      %v2065 = vmax.f32 %v1205, 0.0
      %v2066 = vmax.f32 %v1208, 0.0
      %v2067 = vmax.f32 %v1213, 0.0
      %v2068 = vmax.f32 %v1216, 0.0
      %v2069 = vmax.f32 %v1221, 0.0
      %v2070 = vmax.f32 %v1224, 0.0
      %v2071 = vmax.f32 %v1229, 0.0
      %v2072 = vmax.f32 %v1232, 0.0
      %v2073 = vmax.f32 %v1237, 0.0
      %v2074 = vmax.f32 %v1240, 0.0
      %v2075 = vmax.f32 %v1245, 0.0
      %v2076 = vmax.f32 %v1248, 0.0
      %v2077 = vmax.f32 %v1253, 0.0
      %v2078 = vmax.f32 %v1256, 0.0
      %v2079 = vmax.f32 %v1261, 0.0
      %v2080 = vmax.f32 %v1264, 0.0
      %v2081 = vmax.f32 %v1269, 0.0
      %v2082 = vmax.f32 %v1272, 0.0
      %v2083 = vmax.f32 %v1277, 0.0
      %v2084 = vmax.f32 %v1280, 0.0
      %v2085 = vmax.f32 %v1285, 0.0
      %v2086 = vmax.f32 %v1288, 0.0
      %v2087 = vmax.f32 %v1293, 0.0
      %v2088 = vmax.f32 %v1296, 0.0
      %v2089 = vmax.f32 %v1301, 0.0
      %v2090 = vmax.f32 %v1304, 0.0
      %v2091 = vmax.f32 %v1309, 0.0
      %v2092 = vmax.f32 %v1312, 0.0
      %v2093 = vmax.f32 %v1317, 0.0
      %v2094 = vmax.f32 %v1320, 0.0
      %v2095 = vmax.f32 %v1325, 0.0
      %v2096 = vmax.f32 %v1328, 0.0
      %v2097 = vmax.f32 %v1333, 0.0
      %v2098 = vmax.f32 %v1336, 0.0
      %v2099 = vmax.f32 %v1341, 0.0
      %v2100 = vmax.f32 %v1344, 0.0
      %v2101 = vmax.f32 %v1349, 0.0
      %v2102 = vmax.f32 %v1352, 0.0
      %v2103 = vmax.f32 %v1357, 0.0
      %v2104 = vmax.f32 %v1360, 0.0
      %v2105 = vmax.f32 %v1365, 0.0
      %v2106 = vmax.f32 %v1368, 0.0
      %v2107 = vmax.f32 %v1373, 0.0
      %v2108 = vmax.f32 %v1376, 0.0
      %v2109 = vmax.f32 %v1381, 0.0
      %v2110 = vmax.f32 %v1384, 0.0
      %v2111 = vmax.f32 %v1389, 0.0
      %v2112 = vmax.f32 %v1392, 0.0
      %v2113 = vmax.f32 %v1397, 0.0
      %v2114 = vmax.f32 %v1400, 0.0
      %v2115 = vmax.f32 %v1405, 0.0
      %v2116 = vmax.f32 %v1408, 0.0
      %v2117 = vmax.f32 %v1413, 0.0
      %v2118 = vmax.f32 %v1416, 0.0
      %v2119 = vmax.f32 %v1421, 0.0
      %v2120 = vmax.f32 %v1424, 0.0
      %v2121 = vmax.f32 %v1429, 0.0
      %v2122 = vmax.f32 %v1432, 0.0
      %v2123 = vmax.f32 %v1437, 0.0
      %v2124 = vmax.f32 %v1440, 0.0
      %v2125 = vmax.f32 %v1445, 0.0
      %v2126 = vmax.f32 %v1448, 0.0
      %v2127 = vmax.f32 %v1453, 0.0
      %v2128 = vmax.f32 %v1456, 0.0
      %v2129 = vmax.f32 %v1461, 0.0
      %v2130 = vmax.f32 %v1464, 0.0
      %v2131 = vmax.f32 %v1469, 0.0
      %v2132 = vmax.f32 %v1472, 0.0
      %v2133 = vmax.f32 %v1477, 0.0
      %v2134 = vmax.f32 %v1480, 0.0
      %v2135 = vmax.f32 %v1485, 0.0
      %v2136 = vmax.f32 %v1488, 0.0
      %v2137 = vmax.f32 %v1493, 0.0
      %v2138 = vmax.f32 %v1496, 0.0
      %v2139 = vmax.f32 %v1501, 0.0
      %v2140 = vmax.f32 %v1504, 0.0
      %v2141 = vmax.f32 %v1509, 0.0
      %v2142 = vmax.f32 %v1512, 0.0
      %v2143 = vmax.f32 %v1517, 0.0
      %v2144 = vmax.f32 %v1520, 0.0
      %v2145 = vmax.f32 %v1525, 0.0
      %v2146 = vmax.f32 %v1528, 0.0
      %v2147 = vmax.f32 %v1533, 0.0
      %v2148 = vmax.f32 %v1536, 0.0
      %v2149 = vmax.f32 %v1541, 0.0
      %v2150 = vmax.f32 %v1544, 0.0
      %v2151 = vmax.f32 %v1549, 0.0
      %v2152 = vmax.f32 %v1552, 0.0
      %v2153 = vmax.f32 %v1557, 0.0
      %v2154 = vmax.f32 %v1560, 0.0
      %v2155 = vmax.f32 %v1565, 0.0
      %v2156 = vmax.f32 %v1568, 0.0
      %v2157 = vmax.f32 %v1573, 0.0
      %v2158 = vmax.f32 %v1576, 0.0
      %v2159 = vmax.f32 %v1581, 0.0
      %v2160 = vmax.f32 %v1584, 0.0
      %v2161 = vmax.f32 %v1589, 0.0
      %v2162 = vmax.f32 %v1592, 0.0
      %v2163 = vmax.f32 %v1597, 0.0
      %v2164 = vmax.f32 %v1600, 0.0
      %v2165 = vmax.f32 %v1605, 0.0
      %v2166 = vmax.f32 %v1608, 0.0
      %v2167 = vmax.f32 %v1613, 0.0
      %v2168 = vmax.f32 %v1616, 0.0
      %v2169 = vmax.f32 %v1621, 0.0
      %v2170 = vmax.f32 %v1624, 0.0
      %v2171 = vmax.f32 %v1629, 0.0
      %v2172 = vmax.f32 %v1632, 0.0
      %v2173 = vmax.f32 %v1637, 0.0
      %v2174 = vmax.f32 %v1640, 0.0
      %v2175 = vmax.f32 %v1645, 0.0
      %v2176 = vmax.f32 %v1648, 0.0
      %v2177 = vmax.f32 %v1653, 0.0
      %v2178 = vmax.f32 %v1656, 0.0
      %v2179 = vmax.f32 %v1661, 0.0
      %v2180 = vmax.f32 %v1664, 0.0
      %v2181 = vmax.f32 %v1669, 0.0
      %v2182 = vmax.f32 %v1672, 0.0
      %v2183 = vmax.f32 %v1677, 0.0
      %v2184 = vmax.f32 %v1680, 0.0
      %v2185 = vmax.f32 %v1685, 0.0
      %v2186 = vmax.f32 %v1688, 0.0
      %v2187 = vmax.f32 %v1693, 0.0
      %v2188 = vmax.f32 %v1696, 0.0
      %v2189 = vmax.f32 %v1701, 0.0
      %v2190 = vmax.f32 %v1704, 0.0
      %v2191 = vmax.f32 %v1709, 0.0
      %v2192 = vmax.f32 %v1712, 0.0
      %v2193 = vmax.f32 %v1717, 0.0
      %v2194 = vmax.f32 %v1720, 0.0
      %v2195 = vmax.f32 %v1725, 0.0
      %v2196 = vmax.f32 %v1728, 0.0
      %v2197 = vmax.f32 %v1733, 0.0
      %v2198 = vmax.f32 %v1736, 0.0
      %v2199 = vmax.f32 %v1741, 0.0
      %v2200 = vmax.f32 %v1744, 0.0
      %v2201 = vmax.f32 %v1749, 0.0
      %v2202 = vmax.f32 %v1752, 0.0
      %v2203 = vmax.f32 %v1757, 0.0
      %v2204 = vmax.f32 %v1760, 0.0
      %v2205 = vmax.f32 %v1765, 0.0
      %v2206 = vmax.f32 %v1768, 0.0
      %v2207 = vmax.f32 %v1773, 0.0
      %v2208 = vmax.f32 %v1776, 0.0
      %v2209 = vmax.f32 %v1781, 0.0
      %v2210 = vmax.f32 %v1784, 0.0
      %v2211 = vmax.f32 %v1789, 0.0
      %v2212 = vmax.f32 %v1792, 0.0
      %v2213 = vmax.f32 %v1797, 0.0
      %v2214 = vmax.f32 %v1800, 0.0
      %v2215 = vmax.f32 %v1805, 0.0
      %v2216 = vmax.f32 %v1808, 0.0
      %v2217 = vmax.f32 %v1813, 0.0
      %v2218 = vmax.f32 %v1816, 0.0
      %v2219 = vmax.f32 %v1821, 0.0
      %v2220 = vmax.f32 %v1824, 0.0
      %v2221 = vmax.f32 %v1829, 0.0
      %v2222 = vmax.f32 %v1832, 0.0
      %v2223 = vmax.f32 %v1837, 0.0
      %v2224 = vmax.f32 %v1840, 0.0
      %v2225 = vmax.f32 %v1845, 0.0
      %v2226 = vmax.f32 %v1848, 0.0
      %v2227 = vmax.f32 %v1853, 0.0
      %v2228 = vmax.f32 %v1856, 0.0
      %v2229 = vmax.f32 %v1861, 0.0
      %v2230 = vmax.f32 %v1864, 0.0
      %v2231 = vmax.f32 %v1869, 0.0
      %v2232 = vmax.f32 %v1872, 0.0
      %v2233 = vmax.f32 %v1877, 0.0
      %v2234 = vmax.f32 %v1880, 0.0
      %v2235 = vmax.f32 %v1885, 0.0
      %v2236 = vmax.f32 %v1888, 0.0
      %v2237 = vmax.f32 %v1893, 0.0
      %v2238 = vmax.f32 %v1896, 0.0
      %v2239 = vmax.f32 %v1901, 0.0
      %v2240 = vmax.f32 %v1904, 0.0
      %v2241 = vmax.f32 %v1909, 0.0
      %v2242 = vmax.f32 %v1912, 0.0
      %v2243 = vmax.f32 %v1917, 0.0
      %v2244 = vmax.f32 %v1920, 0.0
      %v2245 = vmax.f32 %v1925, 0.0
      %v2246 = vmax.f32 %v1928, 0.0
      %v2247 = vmax.f32 %v1933, 0.0
      %v2248 = vmax.f32 %v1936, 0.0
      %v2249 = vmax.f32 %v1941, 0.0
      %v2250 = vmax.f32 %v1944, 0.0
      %v2251 = vmax.f32 %v1949, 0.0
      %v2252 = vmax.f32 %v1952, 0.0
      %v2253 = vmax.f32 %v1957, 0.0
      %v2254 = vmax.f32 %v1960, 0.0
      %v2255 = vmax.f32 %v1965, 0.0
      %v2256 = vmax.f32 %v1968, 0.0
      %v2257 = vmax.f32 %v1973, 0.0
      %v2258 = vmax.f32 %v1976, 0.0
      %v2259 = vmax.f32 %v1981, 0.0
      %v2260 = vmax.f32 %v1984, 0.0
      %v2261 = vmax.f32 %v1989, 0.0
      %v2262 = vmax.f32 %v1992, 0.0
      %v2263 = vmax.f32 %v1997, 0.0
      %v2264 = vmax.f32 %v2000, 0.0
      %v2265 = vmax.f32 %v2005, 0.0
      %v2266 = vmax.f32 %v2008, 0.0
      %vm2267 = vcmask 261120
      %2268 = vst.msk [vmem:[%s172] sm:$0xff] %vm2267, %v2011
      %2269 = vst.msk [vmem:[%s172 + $0x8] sm:$0xff] %vm2267, %v2012
      %2270 = vst.msk [vmem:[%s172 + $0x10] sm:$0xff] %vm2267, %v2013
      %2271 = vst.msk [vmem:[%s172 + $0x18] sm:$0xff] %vm2267, %v2014
      %2272 = vst.msk [vmem:[%s172 + $0x20] sm:$0xff] %vm2267, %v2015
      %2273 = vst.msk [vmem:[%s172 + $0x28] sm:$0xff] %vm2267, %v2016
      %2274 = vst.msk [vmem:[%s172 + $0x30] sm:$0xff] %vm2267, %v2017
      %2275 = vst.msk [vmem:[%s172 + $0x38] sm:$0xff] %vm2267, %v2018
      %2276 = vst.msk [vmem:[%s172 + $0x40] sm:$0xff] %vm2267, %v2019
      %2277 = vst.msk [vmem:[%s172 + $0x48] sm:$0xff] %vm2267, %v2020
      %2278 = vst.msk [vmem:[%s172 + $0x50] sm:$0xff] %vm2267, %v2021
      %2279 = vst.msk [vmem:[%s172 + $0x58] sm:$0xff] %vm2267, %v2022
      %2280 = vst.msk [vmem:[%s172 + $0x60] sm:$0xff] %vm2267, %v2023
      %2281 = vst.msk [vmem:[%s172 + $0x68] sm:$0xff] %vm2267, %v2024
      %2282 = vst.msk [vmem:[%s172 + $0x70] sm:$0xff] %vm2267, %v2025
      %2283 = vst.msk [vmem:[%s172 + $0x78] sm:$0xff] %vm2267, %v2026
      %2284 = vst.msk [vmem:[%s172 + $0x80] sm:$0xff] %vm2267, %v2027
      %2285 = vst.msk [vmem:[%s172 + $0x88] sm:$0xff] %vm2267, %v2028
      %2286 = vst.msk [vmem:[%s172 + $0x90] sm:$0xff] %vm2267, %v2029
      %2287 = vst.msk [vmem:[%s172 + $0x98] sm:$0xff] %vm2267, %v2030
      %2288 = vst.msk [vmem:[%s172 + $0xa0] sm:$0xff] %vm2267, %v2031
      %2289 = vst.msk [vmem:[%s172 + $0xa8] sm:$0xff] %vm2267, %v2032
      %2290 = vst.msk [vmem:[%s172 + $0xb0] sm:$0xff] %vm2267, %v2033
      %2291 = vst.msk [vmem:[%s172 + $0xb8] sm:$0xff] %vm2267, %v2034
      %2292 = vst.msk [vmem:[%s172 + $0xc0] sm:$0xff] %vm2267, %v2035
      %2293 = vst.msk [vmem:[%s172 + $0xc8] sm:$0xff] %vm2267, %v2036
      %2294 = vst.msk [vmem:[%s172 + $0xd0] sm:$0xff] %vm2267, %v2037
      %2295 = vst.msk [vmem:[%s172 + $0xd8] sm:$0xff] %vm2267, %v2038
      %2296 = vst.msk [vmem:[%s172 + $0xe0] sm:$0xff] %vm2267, %v2039
      %2297 = vst.msk [vmem:[%s172 + $0xe8] sm:$0xff] %vm2267, %v2040
      %2298 = vst.msk [vmem:[%s172 + $0xf0] sm:$0xff] %vm2267, %v2041
      %2299 = vst.msk [vmem:[%s172 + $0xf8] sm:$0xff] %vm2267, %v2042
      %2300 = vst.msk [vmem:[%s172 + $0x100] sm:$0xff] %vm2267, %v2043
      %2301 = vst.msk [vmem:[%s172 + $0x108] sm:$0xff] %vm2267, %v2044
      %2302 = vst.msk [vmem:[%s172 + $0x110] sm:$0xff] %vm2267, %v2045
      %2303 = vst.msk [vmem:[%s172 + $0x118] sm:$0xff] %vm2267, %v2046
      %2304 = vst.msk [vmem:[%s172 + $0x120] sm:$0xff] %vm2267, %v2047
      %2305 = vst.msk [vmem:[%s172 + $0x128] sm:$0xff] %vm2267, %v2048
      %2306 = vst.msk [vmem:[%s172 + $0x130] sm:$0xff] %vm2267, %v2049
      %2307 = vst.msk [vmem:[%s172 + $0x138] sm:$0xff] %vm2267, %v2050
      %2308 = vst.msk [vmem:[%s172 + $0x140] sm:$0xff] %vm2267, %v2051
      %2309 = vst.msk [vmem:[%s172 + $0x148] sm:$0xff] %vm2267, %v2052
      %2310 = vst.msk [vmem:[%s172 + $0x150] sm:$0xff] %vm2267, %v2053
      %2311 = vst.msk [vmem:[%s172 + $0x158] sm:$0xff] %vm2267, %v2054
      %2312 = vst.msk [vmem:[%s172 + $0x160] sm:$0xff] %vm2267, %v2055
      %2313 = vst.msk [vmem:[%s172 + $0x168] sm:$0xff] %vm2267, %v2056
      %2314 = vst.msk [vmem:[%s172 + $0x170] sm:$0xff] %vm2267, %v2057
      %2315 = vst.msk [vmem:[%s172 + $0x178] sm:$0xff] %vm2267, %v2058
      %2316 = vst.msk [vmem:[%s172 + $0x180] sm:$0xff] %vm2267, %v2059
      %2317 = vst.msk [vmem:[%s172 + $0x188] sm:$0xff] %vm2267, %v2060
      %2318 = vst.msk [vmem:[%s172 + $0x190] sm:$0xff] %vm2267, %v2061
      %2319 = vst.msk [vmem:[%s172 + $0x198] sm:$0xff] %vm2267, %v2062
      %2320 = vst.msk [vmem:[%s172 + $0x1a0] sm:$0xff] %vm2267, %v2063
      %2321 = vst.msk [vmem:[%s172 + $0x1a8] sm:$0xff] %vm2267, %v2064
      %2322 = vst.msk [vmem:[%s172 + $0x1b0] sm:$0xff] %vm2267, %v2065
      %2323 = vst.msk [vmem:[%s172 + $0x1b8] sm:$0xff] %vm2267, %v2066
      %2324 = vst.msk [vmem:[%s172 + $0x1c0] sm:$0xff] %vm2267, %v2067
      %2325 = vst.msk [vmem:[%s172 + $0x1c8] sm:$0xff] %vm2267, %v2068
      %2326 = vst.msk [vmem:[%s172 + $0x1d0] sm:$0xff] %vm2267, %v2069
      %2327 = vst.msk [vmem:[%s172 + $0x1d8] sm:$0xff] %vm2267, %v2070
      %2328 = vst.msk [vmem:[%s172 + $0x1e0] sm:$0xff] %vm2267, %v2071
      %2329 = vst.msk [vmem:[%s172 + $0x1e8] sm:$0xff] %vm2267, %v2072
      %2330 = vst.msk [vmem:[%s172 + $0x1f0] sm:$0xff] %vm2267, %v2073
      %2331 = vst.msk [vmem:[%s172 + $0x1f8] sm:$0xff] %vm2267, %v2074
      %2332 = vst.msk [vmem:[%s172 + $0x200] sm:$0xff] %vm2267, %v2075
      %2333 = vst.msk [vmem:[%s172 + $0x208] sm:$0xff] %vm2267, %v2076
      %2334 = vst.msk [vmem:[%s172 + $0x210] sm:$0xff] %vm2267, %v2077
      %2335 = vst.msk [vmem:[%s172 + $0x218] sm:$0xff] %vm2267, %v2078
      %2336 = vst.msk [vmem:[%s172 + $0x220] sm:$0xff] %vm2267, %v2079
      %2337 = vst.msk [vmem:[%s172 + $0x228] sm:$0xff] %vm2267, %v2080
      %2338 = vst.msk [vmem:[%s172 + $0x230] sm:$0xff] %vm2267, %v2081
      %2339 = vst.msk [vmem:[%s172 + $0x238] sm:$0xff] %vm2267, %v2082
      %2340 = vst.msk [vmem:[%s172 + $0x240] sm:$0xff] %vm2267, %v2083
      %2341 = vst.msk [vmem:[%s172 + $0x248] sm:$0xff] %vm2267, %v2084
      %2342 = vst.msk [vmem:[%s172 + $0x250] sm:$0xff] %vm2267, %v2085
      %2343 = vst.msk [vmem:[%s172 + $0x258] sm:$0xff] %vm2267, %v2086
      %2344 = vst.msk [vmem:[%s172 + $0x260] sm:$0xff] %vm2267, %v2087
      %2345 = vst.msk [vmem:[%s172 + $0x268] sm:$0xff] %vm2267, %v2088
      %2346 = vst.msk [vmem:[%s172 + $0x270] sm:$0xff] %vm2267, %v2089
      %2347 = vst.msk [vmem:[%s172 + $0x278] sm:$0xff] %vm2267, %v2090
      %2348 = vst.msk [vmem:[%s172 + $0x280] sm:$0xff] %vm2267, %v2091
      %2349 = vst.msk [vmem:[%s172 + $0x288] sm:$0xff] %vm2267, %v2092
      %2350 = vst.msk [vmem:[%s172 + $0x290] sm:$0xff] %vm2267, %v2093
      %2351 = vst.msk [vmem:[%s172 + $0x298] sm:$0xff] %vm2267, %v2094
      %2352 = vst.msk [vmem:[%s172 + $0x2a0] sm:$0xff] %vm2267, %v2095
      %2353 = vst.msk [vmem:[%s172 + $0x2a8] sm:$0xff] %vm2267, %v2096
      %2354 = vst.msk [vmem:[%s172 + $0x2b0] sm:$0xff] %vm2267, %v2097
      %2355 = vst.msk [vmem:[%s172 + $0x2b8] sm:$0xff] %vm2267, %v2098
      %2356 = vst.msk [vmem:[%s172 + $0x2c0] sm:$0xff] %vm2267, %v2099
      %2357 = vst.msk [vmem:[%s172 + $0x2c8] sm:$0xff] %vm2267, %v2100
      %2358 = vst.msk [vmem:[%s172 + $0x2d0] sm:$0xff] %vm2267, %v2101
      %2359 = vst.msk [vmem:[%s172 + $0x2d8] sm:$0xff] %vm2267, %v2102
      %2360 = vst.msk [vmem:[%s172 + $0x2e0] sm:$0xff] %vm2267, %v2103
      %2361 = vst.msk [vmem:[%s172 + $0x2e8] sm:$0xff] %vm2267, %v2104
      %2362 = vst.msk [vmem:[%s172 + $0x2f0] sm:$0xff] %vm2267, %v2105
      %2363 = vst.msk [vmem:[%s172 + $0x2f8] sm:$0xff] %vm2267, %v2106
      %2364 = vst.msk [vmem:[%s172 + $0x300] sm:$0xff] %vm2267, %v2107
      %2365 = vst.msk [vmem:[%s172 + $0x308] sm:$0xff] %vm2267, %v2108
      %2366 = vst.msk [vmem:[%s172 + $0x310] sm:$0xff] %vm2267, %v2109
      %2367 = vst.msk [vmem:[%s172 + $0x318] sm:$0xff] %vm2267, %v2110
      %2368 = vst.msk [vmem:[%s172 + $0x320] sm:$0xff] %vm2267, %v2111
      %2369 = vst.msk [vmem:[%s172 + $0x328] sm:$0xff] %vm2267, %v2112
      %2370 = vst.msk [vmem:[%s172 + $0x330] sm:$0xff] %vm2267, %v2113
      %2371 = vst.msk [vmem:[%s172 + $0x338] sm:$0xff] %vm2267, %v2114
      %2372 = vst.msk [vmem:[%s172 + $0x340] sm:$0xff] %vm2267, %v2115
      %2373 = vst.msk [vmem:[%s172 + $0x348] sm:$0xff] %vm2267, %v2116
      %2374 = vst.msk [vmem:[%s172 + $0x350] sm:$0xff] %vm2267, %v2117
      %2375 = vst.msk [vmem:[%s172 + $0x358] sm:$0xff] %vm2267, %v2118
      %2376 = vst.msk [vmem:[%s172 + $0x360] sm:$0xff] %vm2267, %v2119
      %2377 = vst.msk [vmem:[%s172 + $0x368] sm:$0xff] %vm2267, %v2120
      %2378 = vst.msk [vmem:[%s172 + $0x370] sm:$0xff] %vm2267, %v2121
      %2379 = vst.msk [vmem:[%s172 + $0x378] sm:$0xff] %vm2267, %v2122
      %2380 = vst.msk [vmem:[%s172 + $0x380] sm:$0xff] %vm2267, %v2123
      %2381 = vst.msk [vmem:[%s172 + $0x388] sm:$0xff] %vm2267, %v2124
      %2382 = vst.msk [vmem:[%s172 + $0x390] sm:$0xff] %vm2267, %v2125
      %2383 = vst.msk [vmem:[%s172 + $0x398] sm:$0xff] %vm2267, %v2126
      %2384 = vst.msk [vmem:[%s172 + $0x3a0] sm:$0xff] %vm2267, %v2127
      %2385 = vst.msk [vmem:[%s172 + $0x3a8] sm:$0xff] %vm2267, %v2128
      %2386 = vst.msk [vmem:[%s172 + $0x3b0] sm:$0xff] %vm2267, %v2129
      %2387 = vst.msk [vmem:[%s172 + $0x3b8] sm:$0xff] %vm2267, %v2130
      %2388 = vst.msk [vmem:[%s172 + $0x3c0] sm:$0xff] %vm2267, %v2131
      %2389 = vst.msk [vmem:[%s172 + $0x3c8] sm:$0xff] %vm2267, %v2132
      %2390 = vst.msk [vmem:[%s172 + $0x3d0] sm:$0xff] %vm2267, %v2133
      %2391 = vst.msk [vmem:[%s172 + $0x3d8] sm:$0xff] %vm2267, %v2134
      %2392 = vst.msk [vmem:[%s172 + $0x3e0] sm:$0xff] %vm2267, %v2135
      %2393 = vst.msk [vmem:[%s172 + $0x3e8] sm:$0xff] %vm2267, %v2136
      %2394 = vst.msk [vmem:[%s172 + $0x3f0] sm:$0xff] %vm2267, %v2137
      %2395 = vst.msk [vmem:[%s172 + $0x3f8] sm:$0xff] %vm2267, %v2138
      %2396 = vst.msk [vmem:[%s172 + $0x400] sm:$0xff] %vm2267, %v2139
      %2397 = vst.msk [vmem:[%s172 + $0x408] sm:$0xff] %vm2267, %v2140
      %2398 = vst.msk [vmem:[%s172 + $0x410] sm:$0xff] %vm2267, %v2141
      %2399 = vst.msk [vmem:[%s172 + $0x418] sm:$0xff] %vm2267, %v2142
      %2400 = vst.msk [vmem:[%s172 + $0x420] sm:$0xff] %vm2267, %v2143
      %2401 = vst.msk [vmem:[%s172 + $0x428] sm:$0xff] %vm2267, %v2144
      %2402 = vst.msk [vmem:[%s172 + $0x430] sm:$0xff] %vm2267, %v2145
      %2403 = vst.msk [vmem:[%s172 + $0x438] sm:$0xff] %vm2267, %v2146
      %2404 = vst.msk [vmem:[%s172 + $0x440] sm:$0xff] %vm2267, %v2147
      %2405 = vst.msk [vmem:[%s172 + $0x448] sm:$0xff] %vm2267, %v2148
      %2406 = vst.msk [vmem:[%s172 + $0x450] sm:$0xff] %vm2267, %v2149
      %2407 = vst.msk [vmem:[%s172 + $0x458] sm:$0xff] %vm2267, %v2150
      %2408 = vst.msk [vmem:[%s172 + $0x460] sm:$0xff] %vm2267, %v2151
      %2409 = vst.msk [vmem:[%s172 + $0x468] sm:$0xff] %vm2267, %v2152
      %2410 = vst.msk [vmem:[%s172 + $0x470] sm:$0xff] %vm2267, %v2153
      %2411 = vst.msk [vmem:[%s172 + $0x478] sm:$0xff] %vm2267, %v2154
      %2412 = vst.msk [vmem:[%s172 + $0x480] sm:$0xff] %vm2267, %v2155
      %2413 = vst.msk [vmem:[%s172 + $0x488] sm:$0xff] %vm2267, %v2156
      %2414 = vst.msk [vmem:[%s172 + $0x490] sm:$0xff] %vm2267, %v2157
      %2415 = vst.msk [vmem:[%s172 + $0x498] sm:$0xff] %vm2267, %v2158
      %2416 = vst.msk [vmem:[%s172 + $0x4a0] sm:$0xff] %vm2267, %v2159
      %2417 = vst.msk [vmem:[%s172 + $0x4a8] sm:$0xff] %vm2267, %v2160
      %2418 = vst.msk [vmem:[%s172 + $0x4b0] sm:$0xff] %vm2267, %v2161
      %2419 = vst.msk [vmem:[%s172 + $0x4b8] sm:$0xff] %vm2267, %v2162
      %2420 = vst.msk [vmem:[%s172 + $0x4c0] sm:$0xff] %vm2267, %v2163
      %2421 = vst.msk [vmem:[%s172 + $0x4c8] sm:$0xff] %vm2267, %v2164
      %2422 = vst.msk [vmem:[%s172 + $0x4d0] sm:$0xff] %vm2267, %v2165
      %2423 = vst.msk [vmem:[%s172 + $0x4d8] sm:$0xff] %vm2267, %v2166
      %2424 = vst.msk [vmem:[%s172 + $0x4e0] sm:$0xff] %vm2267, %v2167
      %2425 = vst.msk [vmem:[%s172 + $0x4e8] sm:$0xff] %vm2267, %v2168
      %2426 = vst.msk [vmem:[%s172 + $0x4f0] sm:$0xff] %vm2267, %v2169
      %2427 = vst.msk [vmem:[%s172 + $0x4f8] sm:$0xff] %vm2267, %v2170
      %2428 = vst.msk [vmem:[%s172 + $0x500] sm:$0xff] %vm2267, %v2171
      %2429 = vst.msk [vmem:[%s172 + $0x508] sm:$0xff] %vm2267, %v2172
      %2430 = vst.msk [vmem:[%s172 + $0x510] sm:$0xff] %vm2267, %v2173
      %2431 = vst.msk [vmem:[%s172 + $0x518] sm:$0xff] %vm2267, %v2174
      %2432 = vst.msk [vmem:[%s172 + $0x520] sm:$0xff] %vm2267, %v2175
      %2433 = vst.msk [vmem:[%s172 + $0x528] sm:$0xff] %vm2267, %v2176
      %2434 = vst.msk [vmem:[%s172 + $0x530] sm:$0xff] %vm2267, %v2177
      %2435 = vst.msk [vmem:[%s172 + $0x538] sm:$0xff] %vm2267, %v2178
      %2436 = vst.msk [vmem:[%s172 + $0x540] sm:$0xff] %vm2267, %v2179
      %2437 = vst.msk [vmem:[%s172 + $0x548] sm:$0xff] %vm2267, %v2180
      %2438 = vst.msk [vmem:[%s172 + $0x550] sm:$0xff] %vm2267, %v2181
      %2439 = vst.msk [vmem:[%s172 + $0x558] sm:$0xff] %vm2267, %v2182
      %2440 = vst.msk [vmem:[%s172 + $0x560] sm:$0xff] %vm2267, %v2183
      %2441 = vst.msk [vmem:[%s172 + $0x568] sm:$0xff] %vm2267, %v2184
      %2442 = vst.msk [vmem:[%s172 + $0x570] sm:$0xff] %vm2267, %v2185
      %2443 = vst.msk [vmem:[%s172 + $0x578] sm:$0xff] %vm2267, %v2186
      %2444 = vst.msk [vmem:[%s172 + $0x580] sm:$0xff] %vm2267, %v2187
      %2445 = vst.msk [vmem:[%s172 + $0x588] sm:$0xff] %vm2267, %v2188
      %2446 = vst.msk [vmem:[%s172 + $0x590] sm:$0xff] %vm2267, %v2189
      %2447 = vst.msk [vmem:[%s172 + $0x598] sm:$0xff] %vm2267, %v2190
      %2448 = vst.msk [vmem:[%s172 + $0x5a0] sm:$0xff] %vm2267, %v2191
      %2449 = vst.msk [vmem:[%s172 + $0x5a8] sm:$0xff] %vm2267, %v2192
      %2450 = vst.msk [vmem:[%s172 + $0x5b0] sm:$0xff] %vm2267, %v2193
      %2451 = vst.msk [vmem:[%s172 + $0x5b8] sm:$0xff] %vm2267, %v2194
      %2452 = vst.msk [vmem:[%s172 + $0x5c0] sm:$0xff] %vm2267, %v2195
      %2453 = vst.msk [vmem:[%s172 + $0x5c8] sm:$0xff] %vm2267, %v2196
      %2454 = vst.msk [vmem:[%s172 + $0x5d0] sm:$0xff] %vm2267, %v2197
      %2455 = vst.msk [vmem:[%s172 + $0x5d8] sm:$0xff] %vm2267, %v2198
      %2456 = vst.msk [vmem:[%s172 + $0x5e0] sm:$0xff] %vm2267, %v2199
      %2457 = vst.msk [vmem:[%s172 + $0x5e8] sm:$0xff] %vm2267, %v2200
      %2458 = vst.msk [vmem:[%s172 + $0x5f0] sm:$0xff] %vm2267, %v2201
      %2459 = vst.msk [vmem:[%s172 + $0x5f8] sm:$0xff] %vm2267, %v2202
      %2460 = vst.msk [vmem:[%s172 + $0x600] sm:$0xff] %vm2267, %v2203
      %2461 = vst.msk [vmem:[%s172 + $0x608] sm:$0xff] %vm2267, %v2204
      %2462 = vst.msk [vmem:[%s172 + $0x610] sm:$0xff] %vm2267, %v2205
      %2463 = vst.msk [vmem:[%s172 + $0x618] sm:$0xff] %vm2267, %v2206
      %2464 = vst.msk [vmem:[%s172 + $0x620] sm:$0xff] %vm2267, %v2207
      %2465 = vst.msk [vmem:[%s172 + $0x628] sm:$0xff] %vm2267, %v2208
      %2466 = vst.msk [vmem:[%s172 + $0x630] sm:$0xff] %vm2267, %v2209
      %2467 = vst.msk [vmem:[%s172 + $0x638] sm:$0xff] %vm2267, %v2210
      %2468 = vst.msk [vmem:[%s172 + $0x640] sm:$0xff] %vm2267, %v2211
      %2469 = vst.msk [vmem:[%s172 + $0x648] sm:$0xff] %vm2267, %v2212
      %2470 = vst.msk [vmem:[%s172 + $0x650] sm:$0xff] %vm2267, %v2213
      %2471 = vst.msk [vmem:[%s172 + $0x658] sm:$0xff] %vm2267, %v2214
      %2472 = vst.msk [vmem:[%s172 + $0x660] sm:$0xff] %vm2267, %v2215
      %2473 = vst.msk [vmem:[%s172 + $0x668] sm:$0xff] %vm2267, %v2216
      %2474 = vst.msk [vmem:[%s172 + $0x670] sm:$0xff] %vm2267, %v2217
      %2475 = vst.msk [vmem:[%s172 + $0x678] sm:$0xff] %vm2267, %v2218
      %2476 = vst.msk [vmem:[%s172 + $0x680] sm:$0xff] %vm2267, %v2219
      %2477 = vst.msk [vmem:[%s172 + $0x688] sm:$0xff] %vm2267, %v2220
      %2478 = vst.msk [vmem:[%s172 + $0x690] sm:$0xff] %vm2267, %v2221
      %2479 = vst.msk [vmem:[%s172 + $0x698] sm:$0xff] %vm2267, %v2222
      %2480 = vst.msk [vmem:[%s172 + $0x6a0] sm:$0xff] %vm2267, %v2223
      %2481 = vst.msk [vmem:[%s172 + $0x6a8] sm:$0xff] %vm2267, %v2224
      %2482 = vst.msk [vmem:[%s172 + $0x6b0] sm:$0xff] %vm2267, %v2225
      %2483 = vst.msk [vmem:[%s172 + $0x6b8] sm:$0xff] %vm2267, %v2226
      %2484 = vst.msk [vmem:[%s172 + $0x6c0] sm:$0xff] %vm2267, %v2227
      %2485 = vst.msk [vmem:[%s172 + $0x6c8] sm:$0xff] %vm2267, %v2228
      %2486 = vst.msk [vmem:[%s172 + $0x6d0] sm:$0xff] %vm2267, %v2229
      %2487 = vst.msk [vmem:[%s172 + $0x6d8] sm:$0xff] %vm2267, %v2230
      %2488 = vst.msk [vmem:[%s172 + $0x6e0] sm:$0xff] %vm2267, %v2231
      %2489 = vst.msk [vmem:[%s172 + $0x6e8] sm:$0xff] %vm2267, %v2232
      %2490 = vst.msk [vmem:[%s172 + $0x6f0] sm:$0xff] %vm2267, %v2233
      %2491 = vst.msk [vmem:[%s172 + $0x6f8] sm:$0xff] %vm2267, %v2234
      %2492 = vst.msk [vmem:[%s172 + $0x700] sm:$0xff] %vm2267, %v2235
      %2493 = vst.msk [vmem:[%s172 + $0x708] sm:$0xff] %vm2267, %v2236
      %2494 = vst.msk [vmem:[%s172 + $0x710] sm:$0xff] %vm2267, %v2237
      %2495 = vst.msk [vmem:[%s172 + $0x718] sm:$0xff] %vm2267, %v2238
      %2496 = vst.msk [vmem:[%s172 + $0x720] sm:$0xff] %vm2267, %v2239
      %2497 = vst.msk [vmem:[%s172 + $0x728] sm:$0xff] %vm2267, %v2240
      %2498 = vst.msk [vmem:[%s172 + $0x730] sm:$0xff] %vm2267, %v2241
      %2499 = vst.msk [vmem:[%s172 + $0x738] sm:$0xff] %vm2267, %v2242
      %2500 = vst.msk [vmem:[%s172 + $0x740] sm:$0xff] %vm2267, %v2243
      %2501 = vst.msk [vmem:[%s172 + $0x748] sm:$0xff] %vm2267, %v2244
      %2502 = vst.msk [vmem:[%s172 + $0x750] sm:$0xff] %vm2267, %v2245
      %2503 = vst.msk [vmem:[%s172 + $0x758] sm:$0xff] %vm2267, %v2246
      %2504 = vst.msk [vmem:[%s172 + $0x760] sm:$0xff] %vm2267, %v2247
      %2505 = vst.msk [vmem:[%s172 + $0x768] sm:$0xff] %vm2267, %v2248
      %2506 = vst.msk [vmem:[%s172 + $0x770] sm:$0xff] %vm2267, %v2249
      %2507 = vst.msk [vmem:[%s172 + $0x778] sm:$0xff] %vm2267, %v2250
      %2508 = vst.msk [vmem:[%s172 + $0x780] sm:$0xff] %vm2267, %v2251
      %2509 = vst.msk [vmem:[%s172 + $0x788] sm:$0xff] %vm2267, %v2252
      %2510 = vst.msk [vmem:[%s172 + $0x790] sm:$0xff] %vm2267, %v2253
      %2511 = vst.msk [vmem:[%s172 + $0x798] sm:$0xff] %vm2267, %v2254
      %2512 = vst.msk [vmem:[%s172 + $0x7a0] sm:$0xff] %vm2267, %v2255
      %2513 = vst.msk [vmem:[%s172 + $0x7a8] sm:$0xff] %vm2267, %v2256
      %2514 = vst.msk [vmem:[%s172 + $0x7b0] sm:$0xff] %vm2267, %v2257
      %2515 = vst.msk [vmem:[%s172 + $0x7b8] sm:$0xff] %vm2267, %v2258
      %2516 = vst.msk [vmem:[%s172 + $0x7c0] sm:$0xff] %vm2267, %v2259
      %2517 = vst.msk [vmem:[%s172 + $0x7c8] sm:$0xff] %vm2267, %v2260
      %2518 = vst.msk [vmem:[%s172 + $0x7d0] sm:$0xff] %vm2267, %v2261
      %2519 = vst.msk [vmem:[%s172 + $0x7d8] sm:$0xff] %vm2267, %v2262
      %2520 = vst.msk [vmem:[%s172 + $0x7e0] sm:$0xff] %vm2267, %v2263
      %2521 = vst.msk [vmem:[%s172 + $0x7e8] sm:$0xff] %vm2267, %v2264
      %2522 = vst.msk [vmem:[%s172 + $0x7f0] sm:$0xff] %vm2267, %v2265
      %2523 = vst.msk [vmem:[%s172 + $0x7f8] sm:$0xff] %vm2267, %v2266
      %s2524 = smul.u32 256, %s14
      %p2525 = scmp.lt.s32.totalorder %s2524, 511
      %s2526 = scalar_select %p2525, %s2524, 511
      %s2527 = smul.addr %s2526, 8
      %s2528 = scalar_lea.vmem %s3, %s2527
      // Predicated region
      $region33: #{esbn_trans_forward.4} parent=31 // pred_check
        %p2529 = pneg %p100
      $region34: #{esbn_trans_forward.4} parent=31 // pred_check_branch
        %2531 = sbr.rel (%p2529) target = $region36
      $region35: #{esbn_trans_forward.4} parent=31 // pred_region
        %s2532 = smul.u32 256, %s14
      $region36: #{esbn_trans_forward.4} parent=31 // pred_fallthru
        _
    $region32: #{esbn_trans_forward.4} parent=5 // pred_fallthru
      _
    %p2533 = scmp.le.s32.totalorder 2, %s9
    // Predicated region
    $region37: #{esbn_trans_forward.4} parent=5 // pred_check
      %p2534 = pneg %p2533
    $region38: #{esbn_trans_forward.4} parent=5 // pred_check_branch
      %2536 = sbr.rel (%p2534) target = $region40
    $region39: #{esbn_trans_forward.4} parent=5 // pred_region
      %s2537 = ssub.s32 %s9, 2
      // Predicated region
      $region41: #{esbn_trans_forward.4} parent=39 // pred_check
        %p2538 = pneg %p106
      $region42: #{esbn_trans_forward.4} parent=39 // pred_check_branch
        %2540 = sbr.rel (%p2538) target = $region44
      $region43: #{esbn_trans_forward.4} parent=39 // pred_region
        %s2541 = smul.u32 256, %s15
        %p2542 = scmp.lt.s32.totalorder %s2541, 511
        %s2543 = scalar_select %p2542, %s2541, 511
        %s2544 = smul.addr %s2543, 8
        %s2545 = scalar_lea.vmem %s3, %s2544
      $region44: #{esbn_trans_forward.4} parent=39 // pred_fallthru
        _
    $region40: #{esbn_trans_forward.4} parent=5 // pred_fallthru
      _
  $region6: #{esbn_trans_forward.4} parent=0 // loop_footer
    %s13 = sadd.s32 1, %s9
  $region7: #{esbn_trans_forward.4} parent=0 // loop_footer_branch
    %8 = sbr.rel target = $region3
  $region8: #{esbn_trans_forward.4} parent=0 // loop_exit
    _

// kernel: esbn_trans_forward.5
$region0: #{esbn_trans_forward.5}
  #allocation0 [shape = 'u32[]', space=smem, size = 0x4, offset = 0x4, fixed_abs, tag = 'smem constant byte address 0x4 - core index']
  #allocation1 [shape = 'u32[144,128]{1,0:T(1,128)}', space=vmem, size = 0x12000, scoped, tag = 'internal scratch']
  %s0 = inlined_call_operand.vmem [shape: f32[1024,512], index: 0, kind: input, shape index: {}]
  %s1 = inlined_call_operand.vmem [shape: f32[512,32], index: 1, kind: input, shape index: {}]
  %s2 = inlined_call_operand.vmem [shape: f32[1,32], index: 2, kind: input, shape index: {}]
  %s3 = inlined_call_operand.vmem [shape: f32[1024,32], index: 3, kind: output, shape index: {}]
  %s4 = sld [smem:[#allocation0]]
  $region22: #{esbn_trans_forward.5} parent=0
    _
  %s6 = ssub.s32 1, %s4
  %s7 = scalar_select 0, %s6, %s4
  // Predicated region
  $region2: #{esbn_trans_forward.5} parent=0 // pred_check
    _
  $region3: #{esbn_trans_forward.5} parent=0 // pred_check_branch
    %9 = sbr.rel (0) target = $region5
  $region4: #{esbn_trans_forward.5} parent=0 // pred_region
    _
  $region5: #{esbn_trans_forward.5} parent=0 // pred_fallthru
    _
  // Predicated region
  $region6: #{esbn_trans_forward.5} parent=0 // pred_check
    _
  $region7: #{esbn_trans_forward.5} parent=0 // pred_check_branch
    %11 = sbr.rel (0) target = $region9
  $region8: #{esbn_trans_forward.5} parent=0 // pred_region
    _
  $region9: #{esbn_trans_forward.5} parent=0 // pred_fallthru
    _
  // Predicated region
  $region10: #{esbn_trans_forward.5} parent=0 // pred_check
    _
  $region11: #{esbn_trans_forward.5} parent=0 // pred_check_branch
    %13 = sbr.rel (0) target = $region13
  $region12: #{esbn_trans_forward.5} parent=0 // pred_region
    _
  $region13: #{esbn_trans_forward.5} parent=0 // pred_fallthru
    _
  %v15 = vld [vmem:[%s0] sm:$0xff]
  %v16 = vld [vmem:[%s0 + $0x8] sm:$0xff]
  %v17 = vld [vmem:[%s0 + $0x10] sm:$0xff]
  %v18 = vld [vmem:[%s0 + $0x18] sm:$0xff]
  %v19 = vld [vmem:[%s0 + $0x20] sm:$0xff]
  %v20 = vld [vmem:[%s0 + $0x28] sm:$0xff]
  %v21 = vld [vmem:[%s0 + $0x30] sm:$0xff]
  %v22 = vld [vmem:[%s0 + $0x38] sm:$0xff]
  %v23 = vld [vmem:[%s0 + $0x40] sm:$0xff]
  %v24 = vld [vmem:[%s0 + $0x48] sm:$0xff]
  %v25 = vld [vmem:[%s0 + $0x50] sm:$0xff]
  %v26 = vld [vmem:[%s0 + $0x58] sm:$0xff]
  %v27 = vld [vmem:[%s0 + $0x60] sm:$0xff]
  %v28 = vld [vmem:[%s0 + $0x68] sm:$0xff]
  %v29 = vld [vmem:[%s0 + $0x70] sm:$0xff]
  %v30 = vld [vmem:[%s0 + $0x78] sm:$0xff]
  %v31 = vld [vmem:[%s0 + $0x80] sm:$0xff]
  %v32 = vld [vmem:[%s0 + $0x88] sm:$0xff]
  %v33 = vld [vmem:[%s0 + $0x90] sm:$0xff]
  %v34 = vld [vmem:[%s0 + $0x98] sm:$0xff]
  %v35 = vld [vmem:[%s0 + $0xa0] sm:$0xff]
  %v36 = vld [vmem:[%s0 + $0xa8] sm:$0xff]
  %v37 = vld [vmem:[%s0 + $0xb0] sm:$0xff]
  %v38 = vld [vmem:[%s0 + $0xb8] sm:$0xff]
  %v39 = vld [vmem:[%s0 + $0xc0] sm:$0xff]
  %v40 = vld [vmem:[%s0 + $0xc8] sm:$0xff]
  %v41 = vld [vmem:[%s0 + $0xd0] sm:$0xff]
  %v42 = vld [vmem:[%s0 + $0xd8] sm:$0xff]
  %v43 = vld [vmem:[%s0 + $0xe0] sm:$0xff]
  %v44 = vld [vmem:[%s0 + $0xe8] sm:$0xff]
  %v45 = vld [vmem:[%s0 + $0xf0] sm:$0xff]
  %v46 = vld [vmem:[%s0 + $0xf8] sm:$0xff]
  %v47 = vld [vmem:[%s0 + $0x100] sm:$0xff]
  %v48 = vld [vmem:[%s0 + $0x108] sm:$0xff]
  %v49 = vld [vmem:[%s0 + $0x110] sm:$0xff]
  %v50 = vld [vmem:[%s0 + $0x118] sm:$0xff]
  %v51 = vld [vmem:[%s0 + $0x120] sm:$0xff]
  %v52 = vld [vmem:[%s0 + $0x128] sm:$0xff]
  %v53 = vld [vmem:[%s0 + $0x130] sm:$0xff]
  %v54 = vld [vmem:[%s0 + $0x138] sm:$0xff]
  %v55 = vld [vmem:[%s0 + $0x140] sm:$0xff]
  %v56 = vld [vmem:[%s0 + $0x148] sm:$0xff]
  %v57 = vld [vmem:[%s0 + $0x150] sm:$0xff]
  %v58 = vld [vmem:[%s0 + $0x158] sm:$0xff]
  %v59 = vld [vmem:[%s0 + $0x160] sm:$0xff]
  %v60 = vld [vmem:[%s0 + $0x168] sm:$0xff]
  %v61 = vld [vmem:[%s0 + $0x170] sm:$0xff]
  %v62 = vld [vmem:[%s0 + $0x178] sm:$0xff]
  %v63 = vld [vmem:[%s0 + $0x180] sm:$0xff]
  %v64 = vld [vmem:[%s0 + $0x188] sm:$0xff]
  %v65 = vld [vmem:[%s0 + $0x190] sm:$0xff]
  %v66 = vld [vmem:[%s0 + $0x198] sm:$0xff]
  %v67 = vld [vmem:[%s0 + $0x1a0] sm:$0xff]
  %v68 = vld [vmem:[%s0 + $0x1a8] sm:$0xff]
  %v69 = vld [vmem:[%s0 + $0x1b0] sm:$0xff]
  %v70 = vld [vmem:[%s0 + $0x1b8] sm:$0xff]
  %v71 = vld [vmem:[%s0 + $0x1c0] sm:$0xff]
  %v72 = vld [vmem:[%s0 + $0x1c8] sm:$0xff]
  %v73 = vld [vmem:[%s0 + $0x1d0] sm:$0xff]
  %v74 = vld [vmem:[%s0 + $0x1d8] sm:$0xff]
  %v75 = vld [vmem:[%s0 + $0x1e0] sm:$0xff]
  %v76 = vld [vmem:[%s0 + $0x1e8] sm:$0xff]
  %v77 = vld [vmem:[%s0 + $0x1f0] sm:$0xff]
  %v78 = vld [vmem:[%s0 + $0x1f8] sm:$0xff]
  %v79 = vld [vmem:[%s0 + $0x200] sm:$0xff]
  %v80 = vld [vmem:[%s0 + $0x208] sm:$0xff]
  %v81 = vld [vmem:[%s0 + $0x210] sm:$0xff]
  %v82 = vld [vmem:[%s0 + $0x218] sm:$0xff]
  %v83 = vld [vmem:[%s0 + $0x220] sm:$0xff]
  %v84 = vld [vmem:[%s0 + $0x228] sm:$0xff]
  %v85 = vld [vmem:[%s0 + $0x230] sm:$0xff]
  %v86 = vld [vmem:[%s0 + $0x238] sm:$0xff]
  %v87 = vld [vmem:[%s0 + $0x240] sm:$0xff]
  %v88 = vld [vmem:[%s0 + $0x248] sm:$0xff]
  %v89 = vld [vmem:[%s0 + $0x250] sm:$0xff]
  %v90 = vld [vmem:[%s0 + $0x258] sm:$0xff]
  %v91 = vld [vmem:[%s0 + $0x260] sm:$0xff]
  %v92 = vld [vmem:[%s0 + $0x268] sm:$0xff]
  %v93 = vld [vmem:[%s0 + $0x270] sm:$0xff]
  %v94 = vld [vmem:[%s0 + $0x278] sm:$0xff]
  %v95 = vld [vmem:[%s0 + $0x280] sm:$0xff]
  %v96 = vld [vmem:[%s0 + $0x288] sm:$0xff]
  %v97 = vld [vmem:[%s0 + $0x290] sm:$0xff]
  %v98 = vld [vmem:[%s0 + $0x298] sm:$0xff]
  %v99 = vld [vmem:[%s0 + $0x2a0] sm:$0xff]
  %v100 = vld [vmem:[%s0 + $0x2a8] sm:$0xff]
  %v101 = vld [vmem:[%s0 + $0x2b0] sm:$0xff]
  %v102 = vld [vmem:[%s0 + $0x2b8] sm:$0xff]
  %v103 = vld [vmem:[%s0 + $0x2c0] sm:$0xff]
  %v104 = vld [vmem:[%s0 + $0x2c8] sm:$0xff]
  %v105 = vld [vmem:[%s0 + $0x2d0] sm:$0xff]
  %v106 = vld [vmem:[%s0 + $0x2d8] sm:$0xff]
  %v107 = vld [vmem:[%s0 + $0x2e0] sm:$0xff]
  %v108 = vld [vmem:[%s0 + $0x2e8] sm:$0xff]
  %v109 = vld [vmem:[%s0 + $0x2f0] sm:$0xff]
  %v110 = vld [vmem:[%s0 + $0x2f8] sm:$0xff]
  %v111 = vld [vmem:[%s0 + $0x300] sm:$0xff]
  %v112 = vld [vmem:[%s0 + $0x308] sm:$0xff]
  %v113 = vld [vmem:[%s0 + $0x310] sm:$0xff]
  %v114 = vld [vmem:[%s0 + $0x318] sm:$0xff]
  %v115 = vld [vmem:[%s0 + $0x320] sm:$0xff]
  %v116 = vld [vmem:[%s0 + $0x328] sm:$0xff]
  %v117 = vld [vmem:[%s0 + $0x330] sm:$0xff]
  %v118 = vld [vmem:[%s0 + $0x338] sm:$0xff]
  %v119 = vld [vmem:[%s0 + $0x340] sm:$0xff]
  %v120 = vld [vmem:[%s0 + $0x348] sm:$0xff]
  %v121 = vld [vmem:[%s0 + $0x350] sm:$0xff]
  %v122 = vld [vmem:[%s0 + $0x358] sm:$0xff]
  %v123 = vld [vmem:[%s0 + $0x360] sm:$0xff]
  %v124 = vld [vmem:[%s0 + $0x368] sm:$0xff]
  %v125 = vld [vmem:[%s0 + $0x370] sm:$0xff]
  %v126 = vld [vmem:[%s0 + $0x378] sm:$0xff]
  %v127 = vld [vmem:[%s0 + $0x380] sm:$0xff]
  %v128 = vld [vmem:[%s0 + $0x388] sm:$0xff]
  %v129 = vld [vmem:[%s0 + $0x390] sm:$0xff]
  %v130 = vld [vmem:[%s0 + $0x398] sm:$0xff]
  %v131 = vld [vmem:[%s0 + $0x3a0] sm:$0xff]
  %v132 = vld [vmem:[%s0 + $0x3a8] sm:$0xff]
  %v133 = vld [vmem:[%s0 + $0x3b0] sm:$0xff]
  %v134 = vld [vmem:[%s0 + $0x3b8] sm:$0xff]
  %v135 = vld [vmem:[%s0 + $0x3c0] sm:$0xff]
  %v136 = vld [vmem:[%s0 + $0x3c8] sm:$0xff]
  %v137 = vld [vmem:[%s0 + $0x3d0] sm:$0xff]
  %v138 = vld [vmem:[%s0 + $0x3d8] sm:$0xff]
  %v139 = vld [vmem:[%s0 + $0x3e0] sm:$0xff]
  %v140 = vld [vmem:[%s0 + $0x3e8] sm:$0xff]
  %v141 = vld [vmem:[%s0 + $0x3f0] sm:$0xff]
  %v142 = vld [vmem:[%s0 + $0x3f8] sm:$0xff]
  %v143 = vld [vmem:[%s0 + $0x400] sm:$0xff]
  %v144 = vld [vmem:[%s0 + $0x408] sm:$0xff]
  %v145 = vld [vmem:[%s0 + $0x410] sm:$0xff]
  %v146 = vld [vmem:[%s0 + $0x418] sm:$0xff]
  %v147 = vld [vmem:[%s0 + $0x420] sm:$0xff]
  %v148 = vld [vmem:[%s0 + $0x428] sm:$0xff]
  %v149 = vld [vmem:[%s0 + $0x430] sm:$0xff]
  %v150 = vld [vmem:[%s0 + $0x438] sm:$0xff]
  %v151 = vld [vmem:[%s0 + $0x440] sm:$0xff]
  %v152 = vld [vmem:[%s0 + $0x448] sm:$0xff]
  %v153 = vld [vmem:[%s0 + $0x450] sm:$0xff]
  %v154 = vld [vmem:[%s0 + $0x458] sm:$0xff]
  %v155 = vld [vmem:[%s0 + $0x460] sm:$0xff]
  %v156 = vld [vmem:[%s0 + $0x468] sm:$0xff]
  %v157 = vld [vmem:[%s0 + $0x470] sm:$0xff]
  %v158 = vld [vmem:[%s0 + $0x478] sm:$0xff]
  %v159 = vld [vmem:[%s0 + $0x480] sm:$0xff]
  %v160 = vld [vmem:[%s0 + $0x488] sm:$0xff]
  %v161 = vld [vmem:[%s0 + $0x490] sm:$0xff]
  %v162 = vld [vmem:[%s0 + $0x498] sm:$0xff]
  %v163 = vld [vmem:[%s0 + $0x4a0] sm:$0xff]
  %v164 = vld [vmem:[%s0 + $0x4a8] sm:$0xff]
  %v165 = vld [vmem:[%s0 + $0x4b0] sm:$0xff]
  %v166 = vld [vmem:[%s0 + $0x4b8] sm:$0xff]
  %v167 = vld [vmem:[%s0 + $0x4c0] sm:$0xff]
  %v168 = vld [vmem:[%s0 + $0x4c8] sm:$0xff]
  %v169 = vld [vmem:[%s0 + $0x4d0] sm:$0xff]
  %v170 = vld [vmem:[%s0 + $0x4d8] sm:$0xff]
  %v171 = vld [vmem:[%s0 + $0x4e0] sm:$0xff]
  %v172 = vld [vmem:[%s0 + $0x4e8] sm:$0xff]
  %v173 = vld [vmem:[%s0 + $0x4f0] sm:$0xff]
  %v174 = vld [vmem:[%s0 + $0x4f8] sm:$0xff]
  %v175 = vld [vmem:[%s0 + $0x500] sm:$0xff]
  %v176 = vld [vmem:[%s0 + $0x508] sm:$0xff]
  %v177 = vld [vmem:[%s0 + $0x510] sm:$0xff]
  %v178 = vld [vmem:[%s0 + $0x518] sm:$0xff]
  %v179 = vld [vmem:[%s0 + $0x520] sm:$0xff]
  %v180 = vld [vmem:[%s0 + $0x528] sm:$0xff]
  %v181 = vld [vmem:[%s0 + $0x530] sm:$0xff]
  %v182 = vld [vmem:[%s0 + $0x538] sm:$0xff]
  %v183 = vld [vmem:[%s0 + $0x540] sm:$0xff]
  %v184 = vld [vmem:[%s0 + $0x548] sm:$0xff]
  %v185 = vld [vmem:[%s0 + $0x550] sm:$0xff]
  %v186 = vld [vmem:[%s0 + $0x558] sm:$0xff]
  %v187 = vld [vmem:[%s0 + $0x560] sm:$0xff]
  %v188 = vld [vmem:[%s0 + $0x568] sm:$0xff]
  %v189 = vld [vmem:[%s0 + $0x570] sm:$0xff]
  %v190 = vld [vmem:[%s0 + $0x578] sm:$0xff]
  %v191 = vld [vmem:[%s0 + $0x580] sm:$0xff]
  %v192 = vld [vmem:[%s0 + $0x588] sm:$0xff]
  %v193 = vld [vmem:[%s0 + $0x590] sm:$0xff]
  %v194 = vld [vmem:[%s0 + $0x598] sm:$0xff]
  %v195 = vld [vmem:[%s0 + $0x5a0] sm:$0xff]
  %v196 = vld [vmem:[%s0 + $0x5a8] sm:$0xff]
  %v197 = vld [vmem:[%s0 + $0x5b0] sm:$0xff]
  %v198 = vld [vmem:[%s0 + $0x5b8] sm:$0xff]
  %v199 = vld [vmem:[%s0 + $0x5c0] sm:$0xff]
  %v200 = vld [vmem:[%s0 + $0x5c8] sm:$0xff]
  %v201 = vld [vmem:[%s0 + $0x5d0] sm:$0xff]
  %v202 = vld [vmem:[%s0 + $0x5d8] sm:$0xff]
  %v203 = vld [vmem:[%s0 + $0x5e0] sm:$0xff]
  %v204 = vld [vmem:[%s0 + $0x5e8] sm:$0xff]
  %v205 = vld [vmem:[%s0 + $0x5f0] sm:$0xff]
  %v206 = vld [vmem:[%s0 + $0x5f8] sm:$0xff]
  %v207 = vld [vmem:[%s0 + $0x600] sm:$0xff]
  %v208 = vld [vmem:[%s0 + $0x608] sm:$0xff]
  %v209 = vld [vmem:[%s0 + $0x610] sm:$0xff]
  %v210 = vld [vmem:[%s0 + $0x618] sm:$0xff]
  %v211 = vld [vmem:[%s0 + $0x620] sm:$0xff]
  %v212 = vld [vmem:[%s0 + $0x628] sm:$0xff]
  %v213 = vld [vmem:[%s0 + $0x630] sm:$0xff]
  %v214 = vld [vmem:[%s0 + $0x638] sm:$0xff]
  %v215 = vld [vmem:[%s0 + $0x640] sm:$0xff]
  %v216 = vld [vmem:[%s0 + $0x648] sm:$0xff]
  %v217 = vld [vmem:[%s0 + $0x650] sm:$0xff]
  %v218 = vld [vmem:[%s0 + $0x658] sm:$0xff]
  %v219 = vld [vmem:[%s0 + $0x660] sm:$0xff]
  %v220 = vld [vmem:[%s0 + $0x668] sm:$0xff]
  %v221 = vld [vmem:[%s0 + $0x670] sm:$0xff]
  %v222 = vld [vmem:[%s0 + $0x678] sm:$0xff]
  %v223 = vld [vmem:[%s0 + $0x680] sm:$0xff]
  %v224 = vld [vmem:[%s0 + $0x688] sm:$0xff]
  %v225 = vld [vmem:[%s0 + $0x690] sm:$0xff]
  %v226 = vld [vmem:[%s0 + $0x698] sm:$0xff]
  %v227 = vld [vmem:[%s0 + $0x6a0] sm:$0xff]
  %v228 = vld [vmem:[%s0 + $0x6a8] sm:$0xff]
  %v229 = vld [vmem:[%s0 + $0x6b0] sm:$0xff]
  %v230 = vld [vmem:[%s0 + $0x6b8] sm:$0xff]
  %v231 = vld [vmem:[%s0 + $0x6c0] sm:$0xff]
  %v232 = vld [vmem:[%s0 + $0x6c8] sm:$0xff]
  %v233 = vld [vmem:[%s0 + $0x6d0] sm:$0xff]
  %v234 = vld [vmem:[%s0 + $0x6d8] sm:$0xff]
  %v235 = vld [vmem:[%s0 + $0x6e0] sm:$0xff]
  %v236 = vld [vmem:[%s0 + $0x6e8] sm:$0xff]
  %v237 = vld [vmem:[%s0 + $0x6f0] sm:$0xff]
  %v238 = vld [vmem:[%s0 + $0x6f8] sm:$0xff]
  %v239 = vld [vmem:[%s0 + $0x700] sm:$0xff]
  %v240 = vld [vmem:[%s0 + $0x708] sm:$0xff]
  %v241 = vld [vmem:[%s0 + $0x710] sm:$0xff]
  %v242 = vld [vmem:[%s0 + $0x718] sm:$0xff]
  %v243 = vld [vmem:[%s0 + $0x720] sm:$0xff]
  %v244 = vld [vmem:[%s0 + $0x728] sm:$0xff]
  %v245 = vld [vmem:[%s0 + $0x730] sm:$0xff]
  %v246 = vld [vmem:[%s0 + $0x738] sm:$0xff]
  %v247 = vld [vmem:[%s0 + $0x740] sm:$0xff]
  %v248 = vld [vmem:[%s0 + $0x748] sm:$0xff]
  %v249 = vld [vmem:[%s0 + $0x750] sm:$0xff]
  %v250 = vld [vmem:[%s0 + $0x758] sm:$0xff]
  %v251 = vld [vmem:[%s0 + $0x760] sm:$0xff]
  %v252 = vld [vmem:[%s0 + $0x768] sm:$0xff]
  %v253 = vld [vmem:[%s0 + $0x770] sm:$0xff]
  %v254 = vld [vmem:[%s0 + $0x778] sm:$0xff]
  %v255 = vld [vmem:[%s0 + $0x780] sm:$0xff]
  %v256 = vld [vmem:[%s0 + $0x788] sm:$0xff]
  %v257 = vld [vmem:[%s0 + $0x790] sm:$0xff]
  %v258 = vld [vmem:[%s0 + $0x798] sm:$0xff]
  %v259 = vld [vmem:[%s0 + $0x7a0] sm:$0xff]
  %v260 = vld [vmem:[%s0 + $0x7a8] sm:$0xff]
  %v261 = vld [vmem:[%s0 + $0x7b0] sm:$0xff]
  %v262 = vld [vmem:[%s0 + $0x7b8] sm:$0xff]
  %v263 = vld [vmem:[%s0 + $0x7c0] sm:$0xff]
  %v264 = vld [vmem:[%s0 + $0x7c8] sm:$0xff]
  %v265 = vld [vmem:[%s0 + $0x7d0] sm:$0xff]
  %v266 = vld [vmem:[%s0 + $0x7d8] sm:$0xff]
  %v267 = vld [vmem:[%s0 + $0x7e0] sm:$0xff]
  %v268 = vld [vmem:[%s0 + $0x7e8] sm:$0xff]
  %v269 = vld [vmem:[%s0 + $0x7f0] sm:$0xff]
  %v270 = vld [vmem:[%s0 + $0x7f8] sm:$0xff]
  %v271 = vld [vmem:[%s0 + $0x800] sm:$0xff]
  %v272 = vld [vmem:[%s0 + $0x808] sm:$0xff]
  %v273 = vld [vmem:[%s0 + $0x810] sm:$0xff]
  %v274 = vld [vmem:[%s0 + $0x818] sm:$0xff]
  %v275 = vld [vmem:[%s0 + $0x820] sm:$0xff]
  %v276 = vld [vmem:[%s0 + $0x828] sm:$0xff]
  %v277 = vld [vmem:[%s0 + $0x830] sm:$0xff]
  %v278 = vld [vmem:[%s0 + $0x838] sm:$0xff]
  %v279 = vld [vmem:[%s0 + $0x840] sm:$0xff]
  %v280 = vld [vmem:[%s0 + $0x848] sm:$0xff]
  %v281 = vld [vmem:[%s0 + $0x850] sm:$0xff]
  %v282 = vld [vmem:[%s0 + $0x858] sm:$0xff]
  %v283 = vld [vmem:[%s0 + $0x860] sm:$0xff]
  %v284 = vld [vmem:[%s0 + $0x868] sm:$0xff]
  %v285 = vld [vmem:[%s0 + $0x870] sm:$0xff]
  %v286 = vld [vmem:[%s0 + $0x878] sm:$0xff]
  %v287 = vld [vmem:[%s0 + $0x880] sm:$0xff]
  %v288 = vld [vmem:[%s0 + $0x888] sm:$0xff]
  %v289 = vld [vmem:[%s0 + $0x890] sm:$0xff]
  %v290 = vld [vmem:[%s0 + $0x898] sm:$0xff]
  %v291 = vld [vmem:[%s0 + $0x8a0] sm:$0xff]
  %v292 = vld [vmem:[%s0 + $0x8a8] sm:$0xff]
  %v293 = vld [vmem:[%s0 + $0x8b0] sm:$0xff]
  %v294 = vld [vmem:[%s0 + $0x8b8] sm:$0xff]
  %v295 = vld [vmem:[%s0 + $0x8c0] sm:$0xff]
  %v296 = vld [vmem:[%s0 + $0x8c8] sm:$0xff]
  %v297 = vld [vmem:[%s0 + $0x8d0] sm:$0xff]
  %v298 = vld [vmem:[%s0 + $0x8d8] sm:$0xff]
  %v299 = vld [vmem:[%s0 + $0x8e0] sm:$0xff]
  %v300 = vld [vmem:[%s0 + $0x8e8] sm:$0xff]
  %v301 = vld [vmem:[%s0 + $0x8f0] sm:$0xff]
  %v302 = vld [vmem:[%s0 + $0x8f8] sm:$0xff]
  %v303 = vld [vmem:[%s0 + $0x900] sm:$0xff]
  %v304 = vld [vmem:[%s0 + $0x908] sm:$0xff]
  %v305 = vld [vmem:[%s0 + $0x910] sm:$0xff]
  %v306 = vld [vmem:[%s0 + $0x918] sm:$0xff]
  %v307 = vld [vmem:[%s0 + $0x920] sm:$0xff]
  %v308 = vld [vmem:[%s0 + $0x928] sm:$0xff]
  %v309 = vld [vmem:[%s0 + $0x930] sm:$0xff]
  %v310 = vld [vmem:[%s0 + $0x938] sm:$0xff]
  %v311 = vld [vmem:[%s0 + $0x940] sm:$0xff]
  %v312 = vld [vmem:[%s0 + $0x948] sm:$0xff]
  %v313 = vld [vmem:[%s0 + $0x950] sm:$0xff]
  %v314 = vld [vmem:[%s0 + $0x958] sm:$0xff]
  %v315 = vld [vmem:[%s0 + $0x960] sm:$0xff]
  %v316 = vld [vmem:[%s0 + $0x968] sm:$0xff]
  %v317 = vld [vmem:[%s0 + $0x970] sm:$0xff]
  %v318 = vld [vmem:[%s0 + $0x978] sm:$0xff]
  %v319 = vld [vmem:[%s0 + $0x980] sm:$0xff]
  %v320 = vld [vmem:[%s0 + $0x988] sm:$0xff]
  %v321 = vld [vmem:[%s0 + $0x990] sm:$0xff]
  %v322 = vld [vmem:[%s0 + $0x998] sm:$0xff]
  %v323 = vld [vmem:[%s0 + $0x9a0] sm:$0xff]
  %v324 = vld [vmem:[%s0 + $0x9a8] sm:$0xff]
  %v325 = vld [vmem:[%s0 + $0x9b0] sm:$0xff]
  %v326 = vld [vmem:[%s0 + $0x9b8] sm:$0xff]
  %v327 = vld [vmem:[%s0 + $0x9c0] sm:$0xff]
  %v328 = vld [vmem:[%s0 + $0x9c8] sm:$0xff]
  %v329 = vld [vmem:[%s0 + $0x9d0] sm:$0xff]
  %v330 = vld [vmem:[%s0 + $0x9d8] sm:$0xff]
  %v331 = vld [vmem:[%s0 + $0x9e0] sm:$0xff]
  %v332 = vld [vmem:[%s0 + $0x9e8] sm:$0xff]
  %v333 = vld [vmem:[%s0 + $0x9f0] sm:$0xff]
  %v334 = vld [vmem:[%s0 + $0x9f8] sm:$0xff]
  %v335 = vld [vmem:[%s0 + $0xa00] sm:$0xff]
  %v336 = vld [vmem:[%s0 + $0xa08] sm:$0xff]
  %v337 = vld [vmem:[%s0 + $0xa10] sm:$0xff]
  %v338 = vld [vmem:[%s0 + $0xa18] sm:$0xff]
  %v339 = vld [vmem:[%s0 + $0xa20] sm:$0xff]
  %v340 = vld [vmem:[%s0 + $0xa28] sm:$0xff]
  %v341 = vld [vmem:[%s0 + $0xa30] sm:$0xff]
  %v342 = vld [vmem:[%s0 + $0xa38] sm:$0xff]
  %v343 = vld [vmem:[%s0 + $0xa40] sm:$0xff]
  %v344 = vld [vmem:[%s0 + $0xa48] sm:$0xff]
  %v345 = vld [vmem:[%s0 + $0xa50] sm:$0xff]
  %v346 = vld [vmem:[%s0 + $0xa58] sm:$0xff]
  %v347 = vld [vmem:[%s0 + $0xa60] sm:$0xff]
  %v348 = vld [vmem:[%s0 + $0xa68] sm:$0xff]
  %v349 = vld [vmem:[%s0 + $0xa70] sm:$0xff]
  %v350 = vld [vmem:[%s0 + $0xa78] sm:$0xff]
  %v351 = vld [vmem:[%s0 + $0xa80] sm:$0xff]
  %v352 = vld [vmem:[%s0 + $0xa88] sm:$0xff]
  %v353 = vld [vmem:[%s0 + $0xa90] sm:$0xff]
  %v354 = vld [vmem:[%s0 + $0xa98] sm:$0xff]
  %v355 = vld [vmem:[%s0 + $0xaa0] sm:$0xff]
  %v356 = vld [vmem:[%s0 + $0xaa8] sm:$0xff]
  %v357 = vld [vmem:[%s0 + $0xab0] sm:$0xff]
  %v358 = vld [vmem:[%s0 + $0xab8] sm:$0xff]
  %v359 = vld [vmem:[%s0 + $0xac0] sm:$0xff]
  %v360 = vld [vmem:[%s0 + $0xac8] sm:$0xff]
  %v361 = vld [vmem:[%s0 + $0xad0] sm:$0xff]
  %v362 = vld [vmem:[%s0 + $0xad8] sm:$0xff]
  %v363 = vld [vmem:[%s0 + $0xae0] sm:$0xff]
  %v364 = vld [vmem:[%s0 + $0xae8] sm:$0xff]
  %v365 = vld [vmem:[%s0 + $0xaf0] sm:$0xff]
  %v366 = vld [vmem:[%s0 + $0xaf8] sm:$0xff]
  %v367 = vld [vmem:[%s0 + $0xb00] sm:$0xff]
  %v368 = vld [vmem:[%s0 + $0xb08] sm:$0xff]
  %v369 = vld [vmem:[%s0 + $0xb10] sm:$0xff]
  %v370 = vld [vmem:[%s0 + $0xb18] sm:$0xff]
  %v371 = vld [vmem:[%s0 + $0xb20] sm:$0xff]
  %v372 = vld [vmem:[%s0 + $0xb28] sm:$0xff]
  %v373 = vld [vmem:[%s0 + $0xb30] sm:$0xff]
  %v374 = vld [vmem:[%s0 + $0xb38] sm:$0xff]
  %v375 = vld [vmem:[%s0 + $0xb40] sm:$0xff]
  %v376 = vld [vmem:[%s0 + $0xb48] sm:$0xff]
  %v377 = vld [vmem:[%s0 + $0xb50] sm:$0xff]
  %v378 = vld [vmem:[%s0 + $0xb58] sm:$0xff]
  %v379 = vld [vmem:[%s0 + $0xb60] sm:$0xff]
  %v380 = vld [vmem:[%s0 + $0xb68] sm:$0xff]
  %v381 = vld [vmem:[%s0 + $0xb70] sm:$0xff]
  %v382 = vld [vmem:[%s0 + $0xb78] sm:$0xff]
  %v383 = vld [vmem:[%s0 + $0xb80] sm:$0xff]
  %v384 = vld [vmem:[%s0 + $0xb88] sm:$0xff]
  %v385 = vld [vmem:[%s0 + $0xb90] sm:$0xff]
  %v386 = vld [vmem:[%s0 + $0xb98] sm:$0xff]
  %v387 = vld [vmem:[%s0 + $0xba0] sm:$0xff]
  %v388 = vld [vmem:[%s0 + $0xba8] sm:$0xff]
  %v389 = vld [vmem:[%s0 + $0xbb0] sm:$0xff]
  %v390 = vld [vmem:[%s0 + $0xbb8] sm:$0xff]
  %v391 = vld [vmem:[%s0 + $0xbc0] sm:$0xff]
  %v392 = vld [vmem:[%s0 + $0xbc8] sm:$0xff]
  %v393 = vld [vmem:[%s0 + $0xbd0] sm:$0xff]
  %v394 = vld [vmem:[%s0 + $0xbd8] sm:$0xff]
  %v395 = vld [vmem:[%s0 + $0xbe0] sm:$0xff]
  %v396 = vld [vmem:[%s0 + $0xbe8] sm:$0xff]
  %v397 = vld [vmem:[%s0 + $0xbf0] sm:$0xff]
  %v398 = vld [vmem:[%s0 + $0xbf8] sm:$0xff]
  %v399 = vld [vmem:[%s0 + $0xc00] sm:$0xff]
  %v400 = vld [vmem:[%s0 + $0xc08] sm:$0xff]
  %v401 = vld [vmem:[%s0 + $0xc10] sm:$0xff]
  %v402 = vld [vmem:[%s0 + $0xc18] sm:$0xff]
  %v403 = vld [vmem:[%s0 + $0xc20] sm:$0xff]
  %v404 = vld [vmem:[%s0 + $0xc28] sm:$0xff]
  %v405 = vld [vmem:[%s0 + $0xc30] sm:$0xff]
  %v406 = vld [vmem:[%s0 + $0xc38] sm:$0xff]
  %v407 = vld [vmem:[%s0 + $0xc40] sm:$0xff]
  %v408 = vld [vmem:[%s0 + $0xc48] sm:$0xff]
  %v409 = vld [vmem:[%s0 + $0xc50] sm:$0xff]
  %v410 = vld [vmem:[%s0 + $0xc58] sm:$0xff]
  %v411 = vld [vmem:[%s0 + $0xc60] sm:$0xff]
  %v412 = vld [vmem:[%s0 + $0xc68] sm:$0xff]
  %v413 = vld [vmem:[%s0 + $0xc70] sm:$0xff]
  %v414 = vld [vmem:[%s0 + $0xc78] sm:$0xff]
  %v415 = vld [vmem:[%s0 + $0xc80] sm:$0xff]
  %v416 = vld [vmem:[%s0 + $0xc88] sm:$0xff]
  %v417 = vld [vmem:[%s0 + $0xc90] sm:$0xff]
  %v418 = vld [vmem:[%s0 + $0xc98] sm:$0xff]
  %v419 = vld [vmem:[%s0 + $0xca0] sm:$0xff]
  %v420 = vld [vmem:[%s0 + $0xca8] sm:$0xff]
  %v421 = vld [vmem:[%s0 + $0xcb0] sm:$0xff]
  %v422 = vld [vmem:[%s0 + $0xcb8] sm:$0xff]
  %v423 = vld [vmem:[%s0 + $0xcc0] sm:$0xff]
  %v424 = vld [vmem:[%s0 + $0xcc8] sm:$0xff]
  %v425 = vld [vmem:[%s0 + $0xcd0] sm:$0xff]
  %v426 = vld [vmem:[%s0 + $0xcd8] sm:$0xff]
  %v427 = vld [vmem:[%s0 + $0xce0] sm:$0xff]
  %v428 = vld [vmem:[%s0 + $0xce8] sm:$0xff]
  %v429 = vld [vmem:[%s0 + $0xcf0] sm:$0xff]
  %v430 = vld [vmem:[%s0 + $0xcf8] sm:$0xff]
  %v431 = vld [vmem:[%s0 + $0xd00] sm:$0xff]
  %v432 = vld [vmem:[%s0 + $0xd08] sm:$0xff]
  %v433 = vld [vmem:[%s0 + $0xd10] sm:$0xff]
  %v434 = vld [vmem:[%s0 + $0xd18] sm:$0xff]
  %v435 = vld [vmem:[%s0 + $0xd20] sm:$0xff]
  %v436 = vld [vmem:[%s0 + $0xd28] sm:$0xff]
  %v437 = vld [vmem:[%s0 + $0xd30] sm:$0xff]
  %v438 = vld [vmem:[%s0 + $0xd38] sm:$0xff]
  %v439 = vld [vmem:[%s0 + $0xd40] sm:$0xff]
  %v440 = vld [vmem:[%s0 + $0xd48] sm:$0xff]
  %v441 = vld [vmem:[%s0 + $0xd50] sm:$0xff]
  %v442 = vld [vmem:[%s0 + $0xd58] sm:$0xff]
  %v443 = vld [vmem:[%s0 + $0xd60] sm:$0xff]
  %v444 = vld [vmem:[%s0 + $0xd68] sm:$0xff]
  %v445 = vld [vmem:[%s0 + $0xd70] sm:$0xff]
  %v446 = vld [vmem:[%s0 + $0xd78] sm:$0xff]
  %v447 = vld [vmem:[%s0 + $0xd80] sm:$0xff]
  %v448 = vld [vmem:[%s0 + $0xd88] sm:$0xff]
  %v449 = vld [vmem:[%s0 + $0xd90] sm:$0xff]
  %v450 = vld [vmem:[%s0 + $0xd98] sm:$0xff]
  %v451 = vld [vmem:[%s0 + $0xda0] sm:$0xff]
  %v452 = vld [vmem:[%s0 + $0xda8] sm:$0xff]
  %v453 = vld [vmem:[%s0 + $0xdb0] sm:$0xff]
  %v454 = vld [vmem:[%s0 + $0xdb8] sm:$0xff]
  %v455 = vld [vmem:[%s0 + $0xdc0] sm:$0xff]
  %v456 = vld [vmem:[%s0 + $0xdc8] sm:$0xff]
  %v457 = vld [vmem:[%s0 + $0xdd0] sm:$0xff]
  %v458 = vld [vmem:[%s0 + $0xdd8] sm:$0xff]
  %v459 = vld [vmem:[%s0 + $0xde0] sm:$0xff]
  %v460 = vld [vmem:[%s0 + $0xde8] sm:$0xff]
  %v461 = vld [vmem:[%s0 + $0xdf0] sm:$0xff]
  %v462 = vld [vmem:[%s0 + $0xdf8] sm:$0xff]
  %v463 = vld [vmem:[%s0 + $0xe00] sm:$0xff]
  %v464 = vld [vmem:[%s0 + $0xe08] sm:$0xff]
  %v465 = vld [vmem:[%s0 + $0xe10] sm:$0xff]
  %v466 = vld [vmem:[%s0 + $0xe18] sm:$0xff]
  %v467 = vld [vmem:[%s0 + $0xe20] sm:$0xff]
  %v468 = vld [vmem:[%s0 + $0xe28] sm:$0xff]
  %v469 = vld [vmem:[%s0 + $0xe30] sm:$0xff]
  %v470 = vld [vmem:[%s0 + $0xe38] sm:$0xff]
  %v471 = vld [vmem:[%s0 + $0xe40] sm:$0xff]
  %v472 = vld [vmem:[%s0 + $0xe48] sm:$0xff]
  %v473 = vld [vmem:[%s0 + $0xe50] sm:$0xff]
  %v474 = vld [vmem:[%s0 + $0xe58] sm:$0xff]
  %v475 = vld [vmem:[%s0 + $0xe60] sm:$0xff]
  %v476 = vld [vmem:[%s0 + $0xe68] sm:$0xff]
  %v477 = vld [vmem:[%s0 + $0xe70] sm:$0xff]
  %v478 = vld [vmem:[%s0 + $0xe78] sm:$0xff]
  %v479 = vld [vmem:[%s0 + $0xe80] sm:$0xff]
  %v480 = vld [vmem:[%s0 + $0xe88] sm:$0xff]
  %v481 = vld [vmem:[%s0 + $0xe90] sm:$0xff]
  %v482 = vld [vmem:[%s0 + $0xe98] sm:$0xff]
  %v483 = vld [vmem:[%s0 + $0xea0] sm:$0xff]
  %v484 = vld [vmem:[%s0 + $0xea8] sm:$0xff]
  %v485 = vld [vmem:[%s0 + $0xeb0] sm:$0xff]
  %v486 = vld [vmem:[%s0 + $0xeb8] sm:$0xff]
  %v487 = vld [vmem:[%s0 + $0xec0] sm:$0xff]
  %v488 = vld [vmem:[%s0 + $0xec8] sm:$0xff]
  %v489 = vld [vmem:[%s0 + $0xed0] sm:$0xff]
  %v490 = vld [vmem:[%s0 + $0xed8] sm:$0xff]
  %v491 = vld [vmem:[%s0 + $0xee0] sm:$0xff]
  %v492 = vld [vmem:[%s0 + $0xee8] sm:$0xff]
  %v493 = vld [vmem:[%s0 + $0xef0] sm:$0xff]
  %v494 = vld [vmem:[%s0 + $0xef8] sm:$0xff]
  %v495 = vld [vmem:[%s0 + $0xf00] sm:$0xff]
  %v496 = vld [vmem:[%s0 + $0xf08] sm:$0xff]
  %v497 = vld [vmem:[%s0 + $0xf10] sm:$0xff]
  %v498 = vld [vmem:[%s0 + $0xf18] sm:$0xff]
  %v499 = vld [vmem:[%s0 + $0xf20] sm:$0xff]
  %v500 = vld [vmem:[%s0 + $0xf28] sm:$0xff]
  %v501 = vld [vmem:[%s0 + $0xf30] sm:$0xff]
  %v502 = vld [vmem:[%s0 + $0xf38] sm:$0xff]
  %v503 = vld [vmem:[%s0 + $0xf40] sm:$0xff]
  %v504 = vld [vmem:[%s0 + $0xf48] sm:$0xff]
  %v505 = vld [vmem:[%s0 + $0xf50] sm:$0xff]
  %v506 = vld [vmem:[%s0 + $0xf58] sm:$0xff]
  %v507 = vld [vmem:[%s0 + $0xf60] sm:$0xff]
  %v508 = vld [vmem:[%s0 + $0xf68] sm:$0xff]
  %v509 = vld [vmem:[%s0 + $0xf70] sm:$0xff]
  %v510 = vld [vmem:[%s0 + $0xf78] sm:$0xff]
  %v511 = vld [vmem:[%s0 + $0xf80] sm:$0xff]
  %v512 = vld [vmem:[%s0 + $0xf88] sm:$0xff]
  %v513 = vld [vmem:[%s0 + $0xf90] sm:$0xff]
  %v514 = vld [vmem:[%s0 + $0xf98] sm:$0xff]
  %v515 = vld [vmem:[%s0 + $0xfa0] sm:$0xff]
  %v516 = vld [vmem:[%s0 + $0xfa8] sm:$0xff]
  %v517 = vld [vmem:[%s0 + $0xfb0] sm:$0xff]
  %v518 = vld [vmem:[%s0 + $0xfb8] sm:$0xff]
  %v519 = vld [vmem:[%s0 + $0xfc0] sm:$0xff]
  %v520 = vld [vmem:[%s0 + $0xfc8] sm:$0xff]
  %v521 = vld [vmem:[%s0 + $0xfd0] sm:$0xff]
  %v522 = vld [vmem:[%s0 + $0xfd8] sm:$0xff]
  %v523 = vld [vmem:[%s0 + $0xfe0] sm:$0xff]
  %v524 = vld [vmem:[%s0 + $0xfe8] sm:$0xff]
  %v525 = vld [vmem:[%s0 + $0xff0] sm:$0xff]
  %v526 = vld [vmem:[%s0 + $0xff8] sm:$0xff]
  %v527 = vpack.c.bf16 %v19, %v15
  %v528 = vpack.c.bf16 %v20, %v16
  %v529 = vpack.c.bf16 %v21, %v17
  %v530 = vpack.c.bf16 %v22, %v18
  %v531 = vpack.c.bf16 %v27, %v23
  %v532 = vpack.c.bf16 %v28, %v24
  %v533 = vpack.c.bf16 %v29, %v25
  %v534 = vpack.c.bf16 %v30, %v26
  %v535 = vpack.c.bf16 %v35, %v31
  %v536 = vpack.c.bf16 %v36, %v32
  %v537 = vpack.c.bf16 %v37, %v33
  %v538 = vpack.c.bf16 %v38, %v34
  %v539 = vpack.c.bf16 %v43, %v39
  %v540 = vpack.c.bf16 %v44, %v40
  %v541 = vpack.c.bf16 %v45, %v41
  %v542 = vpack.c.bf16 %v46, %v42
  %v543 = vpack.c.bf16 %v51, %v47
  %v544 = vpack.c.bf16 %v52, %v48
  %v545 = vpack.c.bf16 %v53, %v49
  %v546 = vpack.c.bf16 %v54, %v50
  %v547 = vpack.c.bf16 %v59, %v55
  %v548 = vpack.c.bf16 %v60, %v56
  %v549 = vpack.c.bf16 %v61, %v57
  %v550 = vpack.c.bf16 %v62, %v58
  %v551 = vpack.c.bf16 %v67, %v63
  %v552 = vpack.c.bf16 %v68, %v64
  %v553 = vpack.c.bf16 %v69, %v65
  %v554 = vpack.c.bf16 %v70, %v66
  %v555 = vpack.c.bf16 %v75, %v71
  %v556 = vpack.c.bf16 %v76, %v72
  %v557 = vpack.c.bf16 %v77, %v73
  %v558 = vpack.c.bf16 %v78, %v74
  %v559 = vpack.c.bf16 %v83, %v79
  %v560 = vpack.c.bf16 %v84, %v80
  %v561 = vpack.c.bf16 %v85, %v81
  %v562 = vpack.c.bf16 %v86, %v82
  %v563 = vpack.c.bf16 %v91, %v87
  %v564 = vpack.c.bf16 %v92, %v88
  %v565 = vpack.c.bf16 %v93, %v89
  %v566 = vpack.c.bf16 %v94, %v90
  %v567 = vpack.c.bf16 %v99, %v95
  %v568 = vpack.c.bf16 %v100, %v96
  %v569 = vpack.c.bf16 %v101, %v97
  %v570 = vpack.c.bf16 %v102, %v98
  %v571 = vpack.c.bf16 %v107, %v103
  %v572 = vpack.c.bf16 %v108, %v104
  %v573 = vpack.c.bf16 %v109, %v105
  %v574 = vpack.c.bf16 %v110, %v106
  %v575 = vpack.c.bf16 %v115, %v111
  %v576 = vpack.c.bf16 %v116, %v112
  %v577 = vpack.c.bf16 %v117, %v113
  %v578 = vpack.c.bf16 %v118, %v114
  %v579 = vpack.c.bf16 %v123, %v119
  %v580 = vpack.c.bf16 %v124, %v120
  %v581 = vpack.c.bf16 %v125, %v121
  %v582 = vpack.c.bf16 %v126, %v122
  %v583 = vpack.c.bf16 %v131, %v127
  %v584 = vpack.c.bf16 %v132, %v128
  %v585 = vpack.c.bf16 %v133, %v129
  %v586 = vpack.c.bf16 %v134, %v130
  %v587 = vpack.c.bf16 %v139, %v135
  %v588 = vpack.c.bf16 %v140, %v136
  %v589 = vpack.c.bf16 %v141, %v137
  %v590 = vpack.c.bf16 %v142, %v138
  %v591 = vpack.c.bf16 %v147, %v143
  %v592 = vpack.c.bf16 %v148, %v144
  %v593 = vpack.c.bf16 %v149, %v145
  %v594 = vpack.c.bf16 %v150, %v146
  %v595 = vpack.c.bf16 %v155, %v151
  %v596 = vpack.c.bf16 %v156, %v152
  %v597 = vpack.c.bf16 %v157, %v153
  %v598 = vpack.c.bf16 %v158, %v154
  %v599 = vpack.c.bf16 %v163, %v159
  %v600 = vpack.c.bf16 %v164, %v160
  %v601 = vpack.c.bf16 %v165, %v161
  %v602 = vpack.c.bf16 %v166, %v162
  %v603 = vpack.c.bf16 %v171, %v167
  %v604 = vpack.c.bf16 %v172, %v168
  %v605 = vpack.c.bf16 %v173, %v169
  %v606 = vpack.c.bf16 %v174, %v170
  %v607 = vpack.c.bf16 %v179, %v175
  %v608 = vpack.c.bf16 %v180, %v176
  %v609 = vpack.c.bf16 %v181, %v177
  %v610 = vpack.c.bf16 %v182, %v178
  %v611 = vpack.c.bf16 %v187, %v183
  %v612 = vpack.c.bf16 %v188, %v184
  %v613 = vpack.c.bf16 %v189, %v185
  %v614 = vpack.c.bf16 %v190, %v186
  %v615 = vpack.c.bf16 %v195, %v191
  %v616 = vpack.c.bf16 %v196, %v192
  %v617 = vpack.c.bf16 %v197, %v193
  %v618 = vpack.c.bf16 %v198, %v194
  %v619 = vpack.c.bf16 %v203, %v199
  %v620 = vpack.c.bf16 %v204, %v200
  %v621 = vpack.c.bf16 %v205, %v201
  %v622 = vpack.c.bf16 %v206, %v202
  %v623 = vpack.c.bf16 %v211, %v207
  %v624 = vpack.c.bf16 %v212, %v208
  %v625 = vpack.c.bf16 %v213, %v209
  %v626 = vpack.c.bf16 %v214, %v210
  %v627 = vpack.c.bf16 %v219, %v215
  %v628 = vpack.c.bf16 %v220, %v216
  %v629 = vpack.c.bf16 %v221, %v217
  %v630 = vpack.c.bf16 %v222, %v218
  %v631 = vpack.c.bf16 %v227, %v223
  %v632 = vpack.c.bf16 %v228, %v224
  %v633 = vpack.c.bf16 %v229, %v225
  %v634 = vpack.c.bf16 %v230, %v226
  %v635 = vpack.c.bf16 %v235, %v231
  %v636 = vpack.c.bf16 %v236, %v232
  %v637 = vpack.c.bf16 %v237, %v233
  %v638 = vpack.c.bf16 %v238, %v234
  %v639 = vpack.c.bf16 %v243, %v239
  %v640 = vpack.c.bf16 %v244, %v240
  %v641 = vpack.c.bf16 %v245, %v241
  %v642 = vpack.c.bf16 %v246, %v242
  %v643 = vpack.c.bf16 %v251, %v247
  %v644 = vpack.c.bf16 %v252, %v248
  %v645 = vpack.c.bf16 %v253, %v249
  %v646 = vpack.c.bf16 %v254, %v250
  %v647 = vpack.c.bf16 %v259, %v255
  %v648 = vpack.c.bf16 %v260, %v256
  %v649 = vpack.c.bf16 %v261, %v257
  %v650 = vpack.c.bf16 %v262, %v258
  %v651 = vpack.c.bf16 %v267, %v263
  %v652 = vpack.c.bf16 %v268, %v264
  %v653 = vpack.c.bf16 %v269, %v265
  %v654 = vpack.c.bf16 %v270, %v266
  %v655 = vpack.c.bf16 %v275, %v271
  %v656 = vpack.c.bf16 %v276, %v272
  %v657 = vpack.c.bf16 %v277, %v273
  %v658 = vpack.c.bf16 %v278, %v274
  %v659 = vpack.c.bf16 %v283, %v279
  %v660 = vpack.c.bf16 %v284, %v280
  %v661 = vpack.c.bf16 %v285, %v281
  %v662 = vpack.c.bf16 %v286, %v282
  %v663 = vpack.c.bf16 %v291, %v287
  %v664 = vpack.c.bf16 %v292, %v288
  %v665 = vpack.c.bf16 %v293, %v289
  %v666 = vpack.c.bf16 %v294, %v290
  %v667 = vpack.c.bf16 %v299, %v295
  %v668 = vpack.c.bf16 %v300, %v296
  %v669 = vpack.c.bf16 %v301, %v297
  %v670 = vpack.c.bf16 %v302, %v298
  %v671 = vpack.c.bf16 %v307, %v303
  %v672 = vpack.c.bf16 %v308, %v304
  %v673 = vpack.c.bf16 %v309, %v305
  %v674 = vpack.c.bf16 %v310, %v306
  %v675 = vpack.c.bf16 %v315, %v311
  %v676 = vpack.c.bf16 %v316, %v312
  %v677 = vpack.c.bf16 %v317, %v313
  %v678 = vpack.c.bf16 %v318, %v314
  %v679 = vpack.c.bf16 %v323, %v319
  %v680 = vpack.c.bf16 %v324, %v320
  %v681 = vpack.c.bf16 %v325, %v321
  %v682 = vpack.c.bf16 %v326, %v322
  %v683 = vpack.c.bf16 %v331, %v327
  %v684 = vpack.c.bf16 %v332, %v328
  %v685 = vpack.c.bf16 %v333, %v329
  %v686 = vpack.c.bf16 %v334, %v330
  %v687 = vpack.c.bf16 %v339, %v335
  %v688 = vpack.c.bf16 %v340, %v336
  %v689 = vpack.c.bf16 %v341, %v337
  %v690 = vpack.c.bf16 %v342, %v338
  %v691 = vpack.c.bf16 %v347, %v343
  %v692 = vpack.c.bf16 %v348, %v344
  %v693 = vpack.c.bf16 %v349, %v345
  %v694 = vpack.c.bf16 %v350, %v346
  %v695 = vpack.c.bf16 %v355, %v351
  %v696 = vpack.c.bf16 %v356, %v352
  %v697 = vpack.c.bf16 %v357, %v353
  %v698 = vpack.c.bf16 %v358, %v354
  %v699 = vpack.c.bf16 %v363, %v359
  %v700 = vpack.c.bf16 %v364, %v360
  %v701 = vpack.c.bf16 %v365, %v361
  %v702 = vpack.c.bf16 %v366, %v362
  %v703 = vpack.c.bf16 %v371, %v367
  %v704 = vpack.c.bf16 %v372, %v368
  %v705 = vpack.c.bf16 %v373, %v369
  %v706 = vpack.c.bf16 %v374, %v370
  %v707 = vpack.c.bf16 %v379, %v375
  %v708 = vpack.c.bf16 %v380, %v376
  %v709 = vpack.c.bf16 %v381, %v377
  %v710 = vpack.c.bf16 %v382, %v378
  %v711 = vpack.c.bf16 %v387, %v383
  %v712 = vpack.c.bf16 %v388, %v384
  %v713 = vpack.c.bf16 %v389, %v385
  %v714 = vpack.c.bf16 %v390, %v386
  %v715 = vpack.c.bf16 %v395, %v391
  %v716 = vpack.c.bf16 %v396, %v392
  %v717 = vpack.c.bf16 %v397, %v393
  %v718 = vpack.c.bf16 %v398, %v394
  %v719 = vpack.c.bf16 %v403, %v399
  %v720 = vpack.c.bf16 %v404, %v400
  %v721 = vpack.c.bf16 %v405, %v401
  %v722 = vpack.c.bf16 %v406, %v402
  %v723 = vpack.c.bf16 %v411, %v407
  %v724 = vpack.c.bf16 %v412, %v408
  %v725 = vpack.c.bf16 %v413, %v409
  %v726 = vpack.c.bf16 %v414, %v410
  %v727 = vpack.c.bf16 %v419, %v415
  %v728 = vpack.c.bf16 %v420, %v416
  %v729 = vpack.c.bf16 %v421, %v417
  %v730 = vpack.c.bf16 %v422, %v418
  %v731 = vpack.c.bf16 %v427, %v423
  %v732 = vpack.c.bf16 %v428, %v424
  %v733 = vpack.c.bf16 %v429, %v425
  %v734 = vpack.c.bf16 %v430, %v426
  %v735 = vpack.c.bf16 %v435, %v431
  %v736 = vpack.c.bf16 %v436, %v432
  %v737 = vpack.c.bf16 %v437, %v433
  %v738 = vpack.c.bf16 %v438, %v434
  %v739 = vpack.c.bf16 %v443, %v439
  %v740 = vpack.c.bf16 %v444, %v440
  %v741 = vpack.c.bf16 %v445, %v441
  %v742 = vpack.c.bf16 %v446, %v442
  %v743 = vpack.c.bf16 %v451, %v447
  %v744 = vpack.c.bf16 %v452, %v448
  %v745 = vpack.c.bf16 %v453, %v449
  %v746 = vpack.c.bf16 %v454, %v450
  %v747 = vpack.c.bf16 %v459, %v455
  %v748 = vpack.c.bf16 %v460, %v456
  %v749 = vpack.c.bf16 %v461, %v457
  %v750 = vpack.c.bf16 %v462, %v458
  %v751 = vpack.c.bf16 %v467, %v463
  %v752 = vpack.c.bf16 %v468, %v464
  %v753 = vpack.c.bf16 %v469, %v465
  %v754 = vpack.c.bf16 %v470, %v466
  %v755 = vpack.c.bf16 %v475, %v471
  %v756 = vpack.c.bf16 %v476, %v472
  %v757 = vpack.c.bf16 %v477, %v473
  %v758 = vpack.c.bf16 %v478, %v474
  %v759 = vpack.c.bf16 %v483, %v479
  %v760 = vpack.c.bf16 %v484, %v480
  %v761 = vpack.c.bf16 %v485, %v481
  %v762 = vpack.c.bf16 %v486, %v482
  %v763 = vpack.c.bf16 %v491, %v487
  %v764 = vpack.c.bf16 %v492, %v488
  %v765 = vpack.c.bf16 %v493, %v489
  %v766 = vpack.c.bf16 %v494, %v490
  %v767 = vpack.c.bf16 %v499, %v495
  %v768 = vpack.c.bf16 %v500, %v496
  %v769 = vpack.c.bf16 %v501, %v497
  %v770 = vpack.c.bf16 %v502, %v498
  %v771 = vpack.c.bf16 %v507, %v503
  %v772 = vpack.c.bf16 %v508, %v504
  %v773 = vpack.c.bf16 %v509, %v505
  %v774 = vpack.c.bf16 %v510, %v506
  %v775 = vpack.c.bf16 %v515, %v511
  %v776 = vpack.c.bf16 %v516, %v512
  %v777 = vpack.c.bf16 %v517, %v513
  %v778 = vpack.c.bf16 %v518, %v514
  %v779 = vpack.c.bf16 %v523, %v519
  %v780 = vpack.c.bf16 %v524, %v520
  %v781 = vpack.c.bf16 %v525, %v521
  %v782 = vpack.c.bf16 %v526, %v522
  %v783 = vld [vmem:[%s1] sm:$0xff]
  %v784 = vld [vmem:[%s1 + $0x8] sm:$0xff]
  %v785 = vld [vmem:[%s1 + $0x10] sm:$0xff]
  %v786 = vld [vmem:[%s1 + $0x18] sm:$0xff]
  %v787 = vld [vmem:[%s1 + $0x20] sm:$0xff]
  %v788 = vld [vmem:[%s1 + $0x28] sm:$0xff]
  %v789 = vld [vmem:[%s1 + $0x30] sm:$0xff]
  %v790 = vld [vmem:[%s1 + $0x38] sm:$0xff]
  %v791 = vld [vmem:[%s1 + $0x40] sm:$0xff]
  %v792 = vld [vmem:[%s1 + $0x48] sm:$0xff]
  %v793 = vld [vmem:[%s1 + $0x50] sm:$0xff]
  %v794 = vld [vmem:[%s1 + $0x58] sm:$0xff]
  %v795 = vld [vmem:[%s1 + $0x60] sm:$0xff]
  %v796 = vld [vmem:[%s1 + $0x68] sm:$0xff]
  %v797 = vld [vmem:[%s1 + $0x70] sm:$0xff]
  %v798 = vld [vmem:[%s1 + $0x78] sm:$0xff]
  %v799 = vld [vmem:[%s1 + $0x80] sm:$0xff]
  %v800 = vld [vmem:[%s1 + $0x88] sm:$0xff]
  %v801 = vld [vmem:[%s1 + $0x90] sm:$0xff]
  %v802 = vld [vmem:[%s1 + $0x98] sm:$0xff]
  %v803 = vld [vmem:[%s1 + $0xa0] sm:$0xff]
  %v804 = vld [vmem:[%s1 + $0xa8] sm:$0xff]
  %v805 = vld [vmem:[%s1 + $0xb0] sm:$0xff]
  %v806 = vld [vmem:[%s1 + $0xb8] sm:$0xff]
  %v807 = vld [vmem:[%s1 + $0xc0] sm:$0xff]
  %v808 = vld [vmem:[%s1 + $0xc8] sm:$0xff]
  %v809 = vld [vmem:[%s1 + $0xd0] sm:$0xff]
  %v810 = vld [vmem:[%s1 + $0xd8] sm:$0xff]
  %v811 = vld [vmem:[%s1 + $0xe0] sm:$0xff]
  %v812 = vld [vmem:[%s1 + $0xe8] sm:$0xff]
  %v813 = vld [vmem:[%s1 + $0xf0] sm:$0xff]
  %v814 = vld [vmem:[%s1 + $0xf8] sm:$0xff]
  %v815 = vld [vmem:[%s1 + $0x100] sm:$0xff]
  %v816 = vld [vmem:[%s1 + $0x108] sm:$0xff]
  %v817 = vld [vmem:[%s1 + $0x110] sm:$0xff]
  %v818 = vld [vmem:[%s1 + $0x118] sm:$0xff]
  %v819 = vld [vmem:[%s1 + $0x120] sm:$0xff]
  %v820 = vld [vmem:[%s1 + $0x128] sm:$0xff]
  %v821 = vld [vmem:[%s1 + $0x130] sm:$0xff]
  %v822 = vld [vmem:[%s1 + $0x138] sm:$0xff]
  %v823 = vld [vmem:[%s1 + $0x140] sm:$0xff]
  %v824 = vld [vmem:[%s1 + $0x148] sm:$0xff]
  %v825 = vld [vmem:[%s1 + $0x150] sm:$0xff]
  %v826 = vld [vmem:[%s1 + $0x158] sm:$0xff]
  %v827 = vld [vmem:[%s1 + $0x160] sm:$0xff]
  %v828 = vld [vmem:[%s1 + $0x168] sm:$0xff]
  %v829 = vld [vmem:[%s1 + $0x170] sm:$0xff]
  %v830 = vld [vmem:[%s1 + $0x178] sm:$0xff]
  %v831 = vld [vmem:[%s1 + $0x180] sm:$0xff]
  %v832 = vld [vmem:[%s1 + $0x188] sm:$0xff]
  %v833 = vld [vmem:[%s1 + $0x190] sm:$0xff]
  %v834 = vld [vmem:[%s1 + $0x198] sm:$0xff]
  %v835 = vld [vmem:[%s1 + $0x1a0] sm:$0xff]
  %v836 = vld [vmem:[%s1 + $0x1a8] sm:$0xff]
  %v837 = vld [vmem:[%s1 + $0x1b0] sm:$0xff]
  %v838 = vld [vmem:[%s1 + $0x1b8] sm:$0xff]
  %v839 = vld [vmem:[%s1 + $0x1c0] sm:$0xff]
  %v840 = vld [vmem:[%s1 + $0x1c8] sm:$0xff]
  %v841 = vld [vmem:[%s1 + $0x1d0] sm:$0xff]
  %v842 = vld [vmem:[%s1 + $0x1d8] sm:$0xff]
  %v843 = vld [vmem:[%s1 + $0x1e0] sm:$0xff]
  %v844 = vld [vmem:[%s1 + $0x1e8] sm:$0xff]
  %v845 = vld [vmem:[%s1 + $0x1f0] sm:$0xff]
  %v846 = vld [vmem:[%s1 + $0x1f8] sm:$0xff]
  %v847 = vpack.c.bf16 %v784, %v783
  %v848 = vpack.c.bf16 %v786, %v785
  %v849 = vpack.c.bf16 %v788, %v787
  %v850 = vpack.c.bf16 %v790, %v789
  %v851 = vpack.c.bf16 %v792, %v791
  %v852 = vpack.c.bf16 %v794, %v793
  %v853 = vpack.c.bf16 %v796, %v795
  %v854 = vpack.c.bf16 %v798, %v797
  %v855 = vpack.c.bf16 %v800, %v799
  %v856 = vpack.c.bf16 %v802, %v801
  %v857 = vpack.c.bf16 %v804, %v803
  %v858 = vpack.c.bf16 %v806, %v805
  %v859 = vpack.c.bf16 %v808, %v807
  %v860 = vpack.c.bf16 %v810, %v809
  %v861 = vpack.c.bf16 %v812, %v811
  %v862 = vpack.c.bf16 %v814, %v813
  %v863 = vpack.c.bf16 %v816, %v815
  %v864 = vpack.c.bf16 %v818, %v817
  %v865 = vpack.c.bf16 %v820, %v819
  %v866 = vpack.c.bf16 %v822, %v821
  %v867 = vpack.c.bf16 %v824, %v823
  %v868 = vpack.c.bf16 %v826, %v825
  %v869 = vpack.c.bf16 %v828, %v827
  %v870 = vpack.c.bf16 %v830, %v829
  %v871 = vpack.c.bf16 %v832, %v831
  %v872 = vpack.c.bf16 %v834, %v833
  %v873 = vpack.c.bf16 %v836, %v835
  %v874 = vpack.c.bf16 %v838, %v837
  %v875 = vpack.c.bf16 %v840, %v839
  %v876 = vpack.c.bf16 %v842, %v841
  %v877 = vpack.c.bf16 %v844, %v843
  %v878 = vpack.c.bf16 %v846, %v845
  %v879 = vld [vmem:[%s2] sm:$0x1]
  %v881 = vlaneseq
  %v882 = vshrl.u32 %v881, 7
  %v883 = vsub.s32 0, %v882
  %v884 = vrot.slane %v879, %v883
  %886 = vmatprep.subr.bf16.mxu0 0
  %887 = vmatpush1.bf16.msra.mxu0 %v847
  %888 = vmatprep.subr.bf16.mxu0 0
  %889 = vmatpush1.bf16.msra.mxu0 %v848
  %890 = vmatprep.subr.bf16.mxu0 0
  %891 = vmatpush1.bf16.msra.mxu0 %v849
  %892 = vmatprep.subr.bf16.mxu0 0
  %893 = vmatpush1.bf16.msra.mxu0 %v850
  %894 = vmatprep.subr.bf16.mxu0 0
  %895 = vmatpush1.bf16.msra.mxu0 %v851
  %896 = vmatprep.subr.bf16.mxu0 0
  %897 = vmatpush1.bf16.msra.mxu0 %v852
  %898 = vmatprep.subr.bf16.mxu0 0
  %899 = vmatpush1.bf16.msra.mxu0 %v853
  %900 = vmatprep.subr.bf16.mxu0 0
  %901 = vmatpush1.bf16.msra.mxu0 %v854
  %902 = vmatprep.subr.bf16.mxu0 0
  %903 = vmatpush1.bf16.msra.mxu0 %v855
  %904 = vmatprep.subr.bf16.mxu0 0
  %905 = vmatpush1.bf16.msra.mxu0 %v856
  %906 = vmatprep.subr.bf16.mxu0 0
  %907 = vmatpush1.bf16.msra.mxu0 %v857
  %908 = vmatprep.subr.bf16.mxu0 0
  %909 = vmatpush1.bf16.msra.mxu0 %v858
  %910 = vmatprep.subr.bf16.mxu0 0
  %911 = vmatpush1.bf16.msra.mxu0 %v859
  %912 = vmatprep.subr.bf16.mxu0 0
  %913 = vmatpush1.bf16.msra.mxu0 %v860
  %914 = vmatprep.subr.bf16.mxu0 0
  %915 = vmatpush1.bf16.msra.mxu0 %v861
  %916 = vmatprep.subr.bf16.mxu0 0
  %917 = vmatpush1.bf16.msra.mxu0 %v862
  %918 = vmatprep.mubr.bf16.mxu0 %v528
  %919 = vmatmul.mubr.bf16.gmra.mrb[0].mxu0 %v527
  %v920 = vpop.f32.mrb[0].mxu0
  %v921 = vadd.f32 %v884, %v920
  %v922 = vpop.f32.mrb[0].mxu0
  %v923 = vpop.f32.mrb[0].mxu0
  %v924 = vadd.f32 %v884, %v923
  %v925 = vpop.f32.mrb[0].mxu0
  %926 = vmatprep.mubr.bf16.mxu0 %v532
  %927 = vmatmul.mubr.bf16.gmra.mrb[0].mxu0 %v531
  %v928 = vpop.f32.mrb[0].mxu0
  %v929 = vadd.f32 %v884, %v928
  %v930 = vpop.f32.mrb[0].mxu0
  %v931 = vpop.f32.mrb[0].mxu0
  %v932 = vadd.f32 %v884, %v931
  %v933 = vpop.f32.mrb[0].mxu0
  %934 = vmatprep.mubr.bf16.mxu0 %v536
  %935 = vmatmul.mubr.bf16.gmra.mrb[0].mxu0 %v535
  %v936 = vpop.f32.mrb[0].mxu0
  %v937 = vadd.f32 %v884, %v936
  %v938 = vpop.f32.mrb[0].mxu0
  %v939 = vpop.f32.mrb[0].mxu0
  %v940 = vadd.f32 %v884, %v939
  %v941 = vpop.f32.mrb[0].mxu0
  %942 = vmatprep.mubr.bf16.mxu0 %v540
  %943 = vmatmul.mubr.bf16.gmra.mrb[0].mxu0 %v539
  %v944 = vpop.f32.mrb[0].mxu0
  %v945 = vadd.f32 %v884, %v944
  %v946 = vpop.f32.mrb[0].mxu0
  %v947 = vpop.f32.mrb[0].mxu0
  %v948 = vadd.f32 %v884, %v947
  %v949 = vpop.f32.mrb[0].mxu0
  %950 = vmatprep.mubr.bf16.mxu0 %v544
  %951 = vmatmul.mubr.bf16.gmra.mrb[0].mxu0 %v543
  %v952 = vpop.f32.mrb[0].mxu0
  %v953 = vadd.f32 %v884, %v952
  %v954 = vpop.f32.mrb[0].mxu0
  %v955 = vpop.f32.mrb[0].mxu0
  %v956 = vadd.f32 %v884, %v955
  %v957 = vpop.f32.mrb[0].mxu0
  %958 = vmatprep.mubr.bf16.mxu0 %v548
  %959 = vmatmul.mubr.bf16.gmra.mrb[0].mxu0 %v547
  %v960 = vpop.f32.mrb[0].mxu0
  %v961 = vadd.f32 %v884, %v960
  %v962 = vpop.f32.mrb[0].mxu0
  %v963 = vpop.f32.mrb[0].mxu0
  %v964 = vadd.f32 %v884, %v963
  %v965 = vpop.f32.mrb[0].mxu0
  %966 = vmatprep.mubr.bf16.mxu0 %v552
  %967 = vmatmul.mubr.bf16.gmra.mrb[0].mxu0 %v551
  %v968 = vpop.f32.mrb[0].mxu0
  %v969 = vadd.f32 %v884, %v968
  %v970 = vpop.f32.mrb[0].mxu0
  %v971 = vpop.f32.mrb[0].mxu0
  %v972 = vadd.f32 %v884, %v971
  %v973 = vpop.f32.mrb[0].mxu0
  %974 = vmatprep.mubr.bf16.mxu0 %v556
  %975 = vmatmul.mubr.bf16.gmra.mrb[0].mxu0 %v555
  %v976 = vpop.f32.mrb[0].mxu0
  %v977 = vadd.f32 %v884, %v976
  %v978 = vpop.f32.mrb[0].mxu0
  %v979 = vpop.f32.mrb[0].mxu0
  %v980 = vadd.f32 %v884, %v979
  %v981 = vpop.f32.mrb[0].mxu0
  %982 = vmatprep.mubr.bf16.mxu0 %v560
  %983 = vmatmul.mubr.bf16.gmra.mrb[0].mxu0 %v559
  %v984 = vpop.f32.mrb[0].mxu0
  %v985 = vadd.f32 %v884, %v984
  %v986 = vpop.f32.mrb[0].mxu0
  %v987 = vpop.f32.mrb[0].mxu0
  %v988 = vadd.f32 %v884, %v987
  %v989 = vpop.f32.mrb[0].mxu0
  %990 = vmatprep.mubr.bf16.mxu0 %v564
  %991 = vmatmul.mubr.bf16.gmra.mrb[0].mxu0 %v563
  %v992 = vpop.f32.mrb[0].mxu0
  %v993 = vadd.f32 %v884, %v992
  %v994 = vpop.f32.mrb[0].mxu0
  %v995 = vpop.f32.mrb[0].mxu0
  %v996 = vadd.f32 %v884, %v995
  %v997 = vpop.f32.mrb[0].mxu0
  %998 = vmatprep.mubr.bf16.mxu0 %v568
  %999 = vmatmul.mubr.bf16.gmra.mrb[0].mxu0 %v567
  %v1000 = vpop.f32.mrb[0].mxu0
  %v1001 = vadd.f32 %v884, %v1000
  %v1002 = vpop.f32.mrb[0].mxu0
  %v1003 = vpop.f32.mrb[0].mxu0
  %v1004 = vadd.f32 %v884, %v1003
  %v1005 = vpop.f32.mrb[0].mxu0
  %1006 = vmatprep.mubr.bf16.mxu0 %v572
  %1007 = vmatmul.mubr.bf16.gmra.mrb[0].mxu0 %v571
  %v1008 = vpop.f32.mrb[0].mxu0
  %v1009 = vadd.f32 %v884, %v1008
  %v1010 = vpop.f32.mrb[0].mxu0
  %v1011 = vpop.f32.mrb[0].mxu0
  %v1012 = vadd.f32 %v884, %v1011
  %v1013 = vpop.f32.mrb[0].mxu0
  %1014 = vmatprep.mubr.bf16.mxu0 %v576
  %1015 = vmatmul.mubr.bf16.gmra.mrb[0].mxu0 %v575
  %v1016 = vpop.f32.mrb[0].mxu0
  %v1017 = vadd.f32 %v884, %v1016
  %v1018 = vpop.f32.mrb[0].mxu0
  %v1019 = vpop.f32.mrb[0].mxu0
  %v1020 = vadd.f32 %v884, %v1019
  %v1021 = vpop.f32.mrb[0].mxu0
  %1022 = vmatprep.mubr.bf16.mxu0 %v580
  %1023 = vmatmul.mubr.bf16.gmra.mrb[0].mxu0 %v579
  %v1024 = vpop.f32.mrb[0].mxu0
  %v1025 = vadd.f32 %v884, %v1024
  %v1026 = vpop.f32.mrb[0].mxu0
  %v1027 = vpop.f32.mrb[0].mxu0
  %v1028 = vadd.f32 %v884, %v1027
  %v1029 = vpop.f32.mrb[0].mxu0
  %1030 = vmatprep.mubr.bf16.mxu0 %v584
  %1031 = vmatmul.mubr.bf16.gmra.mrb[0].mxu0 %v583
  %v1032 = vpop.f32.mrb[0].mxu0
  %v1033 = vadd.f32 %v884, %v1032
  %v1034 = vpop.f32.mrb[0].mxu0
  %v1035 = vpop.f32.mrb[0].mxu0
  %v1036 = vadd.f32 %v884, %v1035
  %v1037 = vpop.f32.mrb[0].mxu0
  %1038 = vmatprep.mubr.bf16.mxu0 %v588
  %1039 = vmatmul.mubr.bf16.gmra.mrb[0].mxu0 %v587
  %v1040 = vpop.f32.mrb[0].mxu0
  %v1041 = vadd.f32 %v884, %v1040
  %v1042 = vpop.f32.mrb[0].mxu0
  %v1043 = vpop.f32.mrb[0].mxu0
  %v1044 = vadd.f32 %v884, %v1043
  %v1045 = vpop.f32.mrb[0].mxu0
  %1046 = vmatprep.mubr.bf16.mxu0 %v592
  %1047 = vmatmul.mubr.bf16.gmra.mrb[0].mxu0 %v591
  %v1048 = vpop.f32.mrb[0].mxu0
  %v1049 = vadd.f32 %v884, %v1048
  %v1050 = vpop.f32.mrb[0].mxu0
  %v1051 = vpop.f32.mrb[0].mxu0
  %v1052 = vadd.f32 %v884, %v1051
  %v1053 = vpop.f32.mrb[0].mxu0
  %1054 = vmatprep.mubr.bf16.mxu0 %v596
  %1055 = vmatmul.mubr.bf16.gmra.mrb[0].mxu0 %v595
  %v1056 = vpop.f32.mrb[0].mxu0
  %v1057 = vadd.f32 %v884, %v1056
  %v1058 = vpop.f32.mrb[0].mxu0
  %v1059 = vpop.f32.mrb[0].mxu0
  %v1060 = vadd.f32 %v884, %v1059
  %v1061 = vpop.f32.mrb[0].mxu0
  %1062 = vmatprep.mubr.bf16.mxu0 %v600
  %1063 = vmatmul.mubr.bf16.gmra.mrb[0].mxu0 %v599
  %v1064 = vpop.f32.mrb[0].mxu0
  %v1065 = vadd.f32 %v884, %v1064
  %v1066 = vpop.f32.mrb[0].mxu0
  %v1067 = vpop.f32.mrb[0].mxu0
  %v1068 = vadd.f32 %v884, %v1067
  %v1069 = vpop.f32.mrb[0].mxu0
  %1070 = vmatprep.mubr.bf16.mxu0 %v604
  %1071 = vmatmul.mubr.bf16.gmra.mrb[0].mxu0 %v603
  %v1072 = vpop.f32.mrb[0].mxu0
  %v1073 = vadd.f32 %v884, %v1072
  %v1074 = vpop.f32.mrb[0].mxu0
  %v1075 = vpop.f32.mrb[0].mxu0
  %v1076 = vadd.f32 %v884, %v1075
  %v1077 = vpop.f32.mrb[0].mxu0
  %1078 = vmatprep.mubr.bf16.mxu0 %v608
  %1079 = vmatmul.mubr.bf16.gmra.mrb[0].mxu0 %v607
  %v1080 = vpop.f32.mrb[0].mxu0
  %v1081 = vadd.f32 %v884, %v1080
  %v1082 = vpop.f32.mrb[0].mxu0
  %v1083 = vpop.f32.mrb[0].mxu0
  %v1084 = vadd.f32 %v884, %v1083
  %v1085 = vpop.f32.mrb[0].mxu0
  %1086 = vmatprep.mubr.bf16.mxu0 %v612
  %1087 = vmatmul.mubr.bf16.gmra.mrb[0].mxu0 %v611
  %v1088 = vpop.f32.mrb[0].mxu0
  %v1089 = vadd.f32 %v884, %v1088
  %v1090 = vpop.f32.mrb[0].mxu0
  %v1091 = vpop.f32.mrb[0].mxu0
  %v1092 = vadd.f32 %v884, %v1091
  %v1093 = vpop.f32.mrb[0].mxu0
  %1094 = vmatprep.mubr.bf16.mxu0 %v616
  %1095 = vmatmul.mubr.bf16.gmra.mrb[0].mxu0 %v615
  %v1096 = vpop.f32.mrb[0].mxu0
  %v1097 = vadd.f32 %v884, %v1096
  %v1098 = vpop.f32.mrb[0].mxu0
  %v1099 = vpop.f32.mrb[0].mxu0
  %v1100 = vadd.f32 %v884, %v1099
  %v1101 = vpop.f32.mrb[0].mxu0
  %1102 = vmatprep.mubr.bf16.mxu0 %v620
  %1103 = vmatmul.mubr.bf16.gmra.mrb[0].mxu0 %v619
  %v1104 = vpop.f32.mrb[0].mxu0
  %v1105 = vadd.f32 %v884, %v1104
  %v1106 = vpop.f32.mrb[0].mxu0
  %v1107 = vpop.f32.mrb[0].mxu0
  %v1108 = vadd.f32 %v884, %v1107
  %v1109 = vpop.f32.mrb[0].mxu0
  %1110 = vmatprep.mubr.bf16.mxu0 %v624
  %1111 = vmatmul.mubr.bf16.gmra.mrb[0].mxu0 %v623
  %v1112 = vpop.f32.mrb[0].mxu0
  %v1113 = vadd.f32 %v884, %v1112
  %v1114 = vpop.f32.mrb[0].mxu0
  %v1115 = vpop.f32.mrb[0].mxu0
  %v1116 = vadd.f32 %v884, %v1115
  %v1117 = vpop.f32.mrb[0].mxu0
  %1118 = vmatprep.mubr.bf16.mxu0 %v628
  %1119 = vmatmul.mubr.bf16.gmra.mrb[0].mxu0 %v627
  %v1120 = vpop.f32.mrb[0].mxu0
  %v1121 = vadd.f32 %v884, %v1120
  %v1122 = vpop.f32.mrb[0].mxu0
  %v1123 = vpop.f32.mrb[0].mxu0
  %v1124 = vadd.f32 %v884, %v1123
  %v1125 = vpop.f32.mrb[0].mxu0
  %1126 = vmatprep.mubr.bf16.mxu0 %v632
  %1127 = vmatmul.mubr.bf16.gmra.mrb[0].mxu0 %v631
  %v1128 = vpop.f32.mrb[0].mxu0
  %v1129 = vadd.f32 %v884, %v1128
  %v1130 = vpop.f32.mrb[0].mxu0
  %v1131 = vpop.f32.mrb[0].mxu0
  %v1132 = vadd.f32 %v884, %v1131
  %v1133 = vpop.f32.mrb[0].mxu0
  %1134 = vmatprep.mubr.bf16.mxu0 %v636
  %1135 = vmatmul.mubr.bf16.gmra.mrb[0].mxu0 %v635
  %v1136 = vpop.f32.mrb[0].mxu0
  %v1137 = vadd.f32 %v884, %v1136
  %v1138 = vpop.f32.mrb[0].mxu0
  %v1139 = vpop.f32.mrb[0].mxu0
  %v1140 = vadd.f32 %v884, %v1139
  %v1141 = vpop.f32.mrb[0].mxu0
  %1142 = vmatprep.mubr.bf16.mxu0 %v640
  %1143 = vmatmul.mubr.bf16.gmra.mrb[0].mxu0 %v639
  %v1144 = vpop.f32.mrb[0].mxu0
  %v1145 = vadd.f32 %v884, %v1144
  %v1146 = vpop.f32.mrb[0].mxu0
  %v1147 = vpop.f32.mrb[0].mxu0
  %v1148 = vadd.f32 %v884, %v1147
  %v1149 = vpop.f32.mrb[0].mxu0
  %1150 = vmatprep.mubr.bf16.mxu0 %v644
  %1151 = vmatmul.mubr.bf16.gmra.mrb[0].mxu0 %v643
  %v1152 = vpop.f32.mrb[0].mxu0
  %v1153 = vadd.f32 %v884, %v1152
  %v1154 = vpop.f32.mrb[0].mxu0
  %v1155 = vpop.f32.mrb[0].mxu0
  %v1156 = vadd.f32 %v884, %v1155
  %v1157 = vpop.f32.mrb[0].mxu0
  %1158 = vmatprep.mubr.bf16.mxu0 %v648
  %1159 = vmatmul.mubr.bf16.gmra.mrb[0].mxu0 %v647
  %v1160 = vpop.f32.mrb[0].mxu0
  %v1161 = vadd.f32 %v884, %v1160
  %v1162 = vpop.f32.mrb[0].mxu0
  %v1163 = vpop.f32.mrb[0].mxu0
  %v1164 = vadd.f32 %v884, %v1163
  %v1165 = vpop.f32.mrb[0].mxu0
  %1166 = vmatprep.mubr.bf16.mxu0 %v652
  %1167 = vmatmul.mubr.bf16.gmra.mrb[0].mxu0 %v651
  %v1168 = vpop.f32.mrb[0].mxu0
  %v1169 = vadd.f32 %v884, %v1168
  %v1170 = vpop.f32.mrb[0].mxu0
  %v1171 = vpop.f32.mrb[0].mxu0
  %v1172 = vadd.f32 %v884, %v1171
  %v1173 = vpop.f32.mrb[0].mxu0
  %1174 = vmatprep.mubr.bf16.mxu0 %v656
  %1175 = vmatmul.mubr.bf16.gmra.mrb[0].mxu0 %v655
  %v1176 = vpop.f32.mrb[0].mxu0
  %v1177 = vadd.f32 %v884, %v1176
  %v1178 = vpop.f32.mrb[0].mxu0
  %v1179 = vpop.f32.mrb[0].mxu0
  %v1180 = vadd.f32 %v884, %v1179
  %v1181 = vpop.f32.mrb[0].mxu0
  %1182 = vmatprep.mubr.bf16.mxu0 %v660
  %1183 = vmatmul.mubr.bf16.gmra.mrb[0].mxu0 %v659
  %v1184 = vpop.f32.mrb[0].mxu0
  %v1185 = vadd.f32 %v884, %v1184
  %v1186 = vpop.f32.mrb[0].mxu0
  %v1187 = vpop.f32.mrb[0].mxu0
  %v1188 = vadd.f32 %v884, %v1187
  %v1189 = vpop.f32.mrb[0].mxu0
  %1190 = vmatprep.mubr.bf16.mxu0 %v664
  %1191 = vmatmul.mubr.bf16.gmra.mrb[0].mxu0 %v663
  %v1192 = vpop.f32.mrb[0].mxu0
  %v1193 = vadd.f32 %v884, %v1192
  %v1194 = vpop.f32.mrb[0].mxu0
  %v1195 = vpop.f32.mrb[0].mxu0
  %v1196 = vadd.f32 %v884, %v1195
  %v1197 = vpop.f32.mrb[0].mxu0
  %1198 = vmatprep.mubr.bf16.mxu0 %v668
  %1199 = vmatmul.mubr.bf16.gmra.mrb[0].mxu0 %v667
  %v1200 = vpop.f32.mrb[0].mxu0
  %v1201 = vadd.f32 %v884, %v1200
  %v1202 = vpop.f32.mrb[0].mxu0
  %v1203 = vpop.f32.mrb[0].mxu0
  %v1204 = vadd.f32 %v884, %v1203
  %v1205 = vpop.f32.mrb[0].mxu0
  %1206 = vmatprep.mubr.bf16.mxu0 %v672
  %1207 = vmatmul.mubr.bf16.gmra.mrb[0].mxu0 %v671
  %v1208 = vpop.f32.mrb[0].mxu0
  %v1209 = vadd.f32 %v884, %v1208
  %v1210 = vpop.f32.mrb[0].mxu0
  %v1211 = vpop.f32.mrb[0].mxu0
  %v1212 = vadd.f32 %v884, %v1211
  %v1213 = vpop.f32.mrb[0].mxu0
  %1214 = vmatprep.mubr.bf16.mxu0 %v676
  %1215 = vmatmul.mubr.bf16.gmra.mrb[0].mxu0 %v675
  %v1216 = vpop.f32.mrb[0].mxu0
  %v1217 = vadd.f32 %v884, %v1216
  %v1218 = vpop.f32.mrb[0].mxu0
  %v1219 = vpop.f32.mrb[0].mxu0
  %v1220 = vadd.f32 %v884, %v1219
  %v1221 = vpop.f32.mrb[0].mxu0
  %1222 = vmatprep.mubr.bf16.mxu0 %v680
  %1223 = vmatmul.mubr.bf16.gmra.mrb[0].mxu0 %v679
  %v1224 = vpop.f32.mrb[0].mxu0
  %v1225 = vadd.f32 %v884, %v1224
  %v1226 = vpop.f32.mrb[0].mxu0
  %v1227 = vpop.f32.mrb[0].mxu0
  %v1228 = vadd.f32 %v884, %v1227
  %v1229 = vpop.f32.mrb[0].mxu0
  %1230 = vmatprep.mubr.bf16.mxu0 %v684
  %1231 = vmatmul.mubr.bf16.gmra.mrb[0].mxu0 %v683
  %v1232 = vpop.f32.mrb[0].mxu0
  %v1233 = vadd.f32 %v884, %v1232
  %v1234 = vpop.f32.mrb[0].mxu0
  %v1235 = vpop.f32.mrb[0].mxu0
  %v1236 = vadd.f32 %v884, %v1235
  %v1237 = vpop.f32.mrb[0].mxu0
  %1238 = vmatprep.mubr.bf16.mxu0 %v688
  %1239 = vmatmul.mubr.bf16.gmra.mrb[0].mxu0 %v687
  %v1240 = vpop.f32.mrb[0].mxu0
  %v1241 = vadd.f32 %v884, %v1240
  %v1242 = vpop.f32.mrb[0].mxu0
  %v1243 = vpop.f32.mrb[0].mxu0
  %v1244 = vadd.f32 %v884, %v1243
  %v1245 = vpop.f32.mrb[0].mxu0
  %1246 = vmatprep.mubr.bf16.mxu0 %v692
  %1247 = vmatmul.mubr.bf16.gmra.mrb[0].mxu0 %v691
  %v1248 = vpop.f32.mrb[0].mxu0
  %v1249 = vadd.f32 %v884, %v1248
  %v1250 = vpop.f32.mrb[0].mxu0
  %v1251 = vpop.f32.mrb[0].mxu0
  %v1252 = vadd.f32 %v884, %v1251
  %v1253 = vpop.f32.mrb[0].mxu0
  %1254 = vmatprep.mubr.bf16.mxu0 %v696
  %1255 = vmatmul.mubr.bf16.gmra.mrb[0].mxu0 %v695
  %v1256 = vpop.f32.mrb[0].mxu0
  %v1257 = vadd.f32 %v884, %v1256
  %v1258 = vpop.f32.mrb[0].mxu0
  %v1259 = vpop.f32.mrb[0].mxu0
  %v1260 = vadd.f32 %v884, %v1259
  %v1261 = vpop.f32.mrb[0].mxu0
  %1262 = vmatprep.mubr.bf16.mxu0 %v700
  %1263 = vmatmul.mubr.bf16.gmra.mrb[0].mxu0 %v699
  %v1264 = vpop.f32.mrb[0].mxu0
  %v1265 = vadd.f32 %v884, %v1264
  %v1266 = vpop.f32.mrb[0].mxu0
  %v1267 = vpop.f32.mrb[0].mxu0
  %v1268 = vadd.f32 %v884, %v1267
  %v1269 = vpop.f32.mrb[0].mxu0
  %1270 = vmatprep.mubr.bf16.mxu0 %v704
  %1271 = vmatmul.mubr.bf16.gmra.mrb[0].mxu0 %v703
  %v1272 = vpop.f32.mrb[0].mxu0
  %v1273 = vadd.f32 %v884, %v1272
  %v1274 = vpop.f32.mrb[0].mxu0
  %v1275 = vpop.f32.mrb[0].mxu0
  %v1276 = vadd.f32 %v884, %v1275
  %v1277 = vpop.f32.mrb[0].mxu0
  %1278 = vmatprep.mubr.bf16.mxu0 %v708
  %1279 = vmatmul.mubr.bf16.gmra.mrb[0].mxu0 %v707
  %v1280 = vpop.f32.mrb[0].mxu0
  %v1281 = vadd.f32 %v884, %v1280
  %v1282 = vpop.f32.mrb[0].mxu0
  %v1283 = vpop.f32.mrb[0].mxu0
  %v1284 = vadd.f32 %v884, %v1283
  %v1285 = vpop.f32.mrb[0].mxu0
  %1286 = vmatprep.mubr.bf16.mxu0 %v712
  %1287 = vmatmul.mubr.bf16.gmra.mrb[0].mxu0 %v711
  %v1288 = vpop.f32.mrb[0].mxu0
  %v1289 = vadd.f32 %v884, %v1288
  %v1290 = vpop.f32.mrb[0].mxu0
  %v1291 = vpop.f32.mrb[0].mxu0
  %v1292 = vadd.f32 %v884, %v1291
  %v1293 = vpop.f32.mrb[0].mxu0
  %1294 = vmatprep.mubr.bf16.mxu0 %v716
  %1295 = vmatmul.mubr.bf16.gmra.mrb[0].mxu0 %v715
  %v1296 = vpop.f32.mrb[0].mxu0
  %v1297 = vadd.f32 %v884, %v1296
  %v1298 = vpop.f32.mrb[0].mxu0
  %v1299 = vpop.f32.mrb[0].mxu0
  %v1300 = vadd.f32 %v884, %v1299
  %v1301 = vpop.f32.mrb[0].mxu0
  %1302 = vmatprep.mubr.bf16.mxu0 %v720
  %1303 = vmatmul.mubr.bf16.gmra.mrb[0].mxu0 %v719
  %v1304 = vpop.f32.mrb[0].mxu0
  %v1305 = vadd.f32 %v884, %v1304
  %v1306 = vpop.f32.mrb[0].mxu0
  %v1307 = vpop.f32.mrb[0].mxu0
  %v1308 = vadd.f32 %v884, %v1307
  %v1309 = vpop.f32.mrb[0].mxu0
  %1310 = vmatprep.mubr.bf16.mxu0 %v724
  %1311 = vmatmul.mubr.bf16.gmra.mrb[0].mxu0 %v723
  %v1312 = vpop.f32.mrb[0].mxu0
  %v1313 = vadd.f32 %v884, %v1312
  %v1314 = vpop.f32.mrb[0].mxu0
  %v1315 = vpop.f32.mrb[0].mxu0
  %v1316 = vadd.f32 %v884, %v1315
  %v1317 = vpop.f32.mrb[0].mxu0
  %1318 = vmatprep.mubr.bf16.mxu0 %v728
  %1319 = vmatmul.mubr.bf16.gmra.mrb[0].mxu0 %v727
  %v1320 = vpop.f32.mrb[0].mxu0
  %v1321 = vadd.f32 %v884, %v1320
  %v1322 = vpop.f32.mrb[0].mxu0
  %v1323 = vpop.f32.mrb[0].mxu0
  %v1324 = vadd.f32 %v884, %v1323
  %v1325 = vpop.f32.mrb[0].mxu0
  %1326 = vmatprep.mubr.bf16.mxu0 %v732
  %1327 = vmatmul.mubr.bf16.gmra.mrb[0].mxu0 %v731
  %v1328 = vpop.f32.mrb[0].mxu0
  %v1329 = vadd.f32 %v884, %v1328
  %v1330 = vpop.f32.mrb[0].mxu0
  %v1331 = vpop.f32.mrb[0].mxu0
  %v1332 = vadd.f32 %v884, %v1331
  %v1333 = vpop.f32.mrb[0].mxu0
  %1334 = vmatprep.mubr.bf16.mxu0 %v736
  %1335 = vmatmul.mubr.bf16.gmra.mrb[0].mxu0 %v735
  %v1336 = vpop.f32.mrb[0].mxu0
  %v1337 = vadd.f32 %v884, %v1336
  %v1338 = vpop.f32.mrb[0].mxu0
  %v1339 = vpop.f32.mrb[0].mxu0
  %v1340 = vadd.f32 %v884, %v1339
  %v1341 = vpop.f32.mrb[0].mxu0
  %1342 = vmatprep.mubr.bf16.mxu0 %v740
  %1343 = vmatmul.mubr.bf16.gmra.mrb[0].mxu0 %v739
  %v1344 = vpop.f32.mrb[0].mxu0
  %v1345 = vadd.f32 %v884, %v1344
  %v1346 = vpop.f32.mrb[0].mxu0
  %v1347 = vpop.f32.mrb[0].mxu0
  %v1348 = vadd.f32 %v884, %v1347
  %v1349 = vpop.f32.mrb[0].mxu0
  %1350 = vmatprep.mubr.bf16.mxu0 %v744
  %1351 = vmatmul.mubr.bf16.gmra.mrb[0].mxu0 %v743
  %v1352 = vpop.f32.mrb[0].mxu0
  %v1353 = vadd.f32 %v884, %v1352
  %v1354 = vpop.f32.mrb[0].mxu0
  %v1355 = vpop.f32.mrb[0].mxu0
  %v1356 = vadd.f32 %v884, %v1355
  %v1357 = vpop.f32.mrb[0].mxu0
  %1358 = vmatprep.mubr.bf16.mxu0 %v748
  %1359 = vmatmul.mubr.bf16.gmra.mrb[0].mxu0 %v747
  %v1360 = vpop.f32.mrb[0].mxu0
  %v1361 = vadd.f32 %v884, %v1360
  %v1362 = vpop.f32.mrb[0].mxu0
  %v1363 = vpop.f32.mrb[0].mxu0
  %v1364 = vadd.f32 %v884, %v1363
  %v1365 = vpop.f32.mrb[0].mxu0
  %1366 = vmatprep.mubr.bf16.mxu0 %v752
  %1367 = vmatmul.mubr.bf16.gmra.mrb[0].mxu0 %v751
  %v1368 = vpop.f32.mrb[0].mxu0
  %v1369 = vadd.f32 %v884, %v1368
  %v1370 = vpop.f32.mrb[0].mxu0
  %v1371 = vpop.f32.mrb[0].mxu0
  %v1372 = vadd.f32 %v884, %v1371
  %v1373 = vpop.f32.mrb[0].mxu0
  %1374 = vmatprep.mubr.bf16.mxu0 %v756
  %1375 = vmatmul.mubr.bf16.gmra.mrb[0].mxu0 %v755
  %v1376 = vpop.f32.mrb[0].mxu0
  %v1377 = vadd.f32 %v884, %v1376
  %v1378 = vpop.f32.mrb[0].mxu0
  %v1379 = vpop.f32.mrb[0].mxu0
  %v1380 = vadd.f32 %v884, %v1379
  %v1381 = vpop.f32.mrb[0].mxu0
  %1382 = vmatprep.mubr.bf16.mxu0 %v760
  %1383 = vmatmul.mubr.bf16.gmra.mrb[0].mxu0 %v759
  %v1384 = vpop.f32.mrb[0].mxu0
  %v1385 = vadd.f32 %v884, %v1384
  %v1386 = vpop.f32.mrb[0].mxu0
  %v1387 = vpop.f32.mrb[0].mxu0
  %v1388 = vadd.f32 %v884, %v1387
  %v1389 = vpop.f32.mrb[0].mxu0
  %1390 = vmatprep.mubr.bf16.mxu0 %v764
  %1391 = vmatmul.mubr.bf16.gmra.mrb[0].mxu0 %v763
  %v1392 = vpop.f32.mrb[0].mxu0
  %v1393 = vadd.f32 %v884, %v1392
  %v1394 = vpop.f32.mrb[0].mxu0
  %v1395 = vpop.f32.mrb[0].mxu0
  %v1396 = vadd.f32 %v884, %v1395
  %v1397 = vpop.f32.mrb[0].mxu0
  %1398 = vmatprep.mubr.bf16.mxu0 %v768
  %1399 = vmatmul.mubr.bf16.gmra.mrb[0].mxu0 %v767
  %v1400 = vpop.f32.mrb[0].mxu0
  %v1401 = vadd.f32 %v884, %v1400
  %v1402 = vpop.f32.mrb[0].mxu0
  %v1403 = vpop.f32.mrb[0].mxu0
  %v1404 = vadd.f32 %v884, %v1403
  %v1405 = vpop.f32.mrb[0].mxu0
  %1406 = vmatprep.mubr.bf16.mxu0 %v772
  %1407 = vmatmul.mubr.bf16.gmra.mrb[0].mxu0 %v771
  %v1408 = vpop.f32.mrb[0].mxu0
  %v1409 = vadd.f32 %v884, %v1408
  %v1410 = vpop.f32.mrb[0].mxu0
  %v1411 = vpop.f32.mrb[0].mxu0
  %v1412 = vadd.f32 %v884, %v1411
  %v1413 = vpop.f32.mrb[0].mxu0
  %1414 = vmatprep.mubr.bf16.mxu0 %v776
  %1415 = vmatmul.mubr.bf16.gmra.mrb[0].mxu0 %v775
  %v1416 = vpop.f32.mrb[0].mxu0
  %v1417 = vadd.f32 %v884, %v1416
  %v1418 = vpop.f32.mrb[0].mxu0
  %v1419 = vpop.f32.mrb[0].mxu0
  %v1420 = vadd.f32 %v884, %v1419
  %v1421 = vpop.f32.mrb[0].mxu0
  %1422 = vmatprep.mubr.bf16.mxu0 %v780
  %1423 = vmatmul.mubr.bf16.gmra.mrb[0].mxu0 %v779
  %v1424 = vpop.f32.mrb[0].mxu0
  %v1425 = vadd.f32 %v884, %v1424
  %v1426 = vpop.f32.mrb[0].mxu0
  %v1427 = vpop.f32.mrb[0].mxu0
  %v1428 = vadd.f32 %v884, %v1427
  %v1429 = vpop.f32.mrb[0].mxu0
  %1430 = vdwg.mxu0
  %1431 = vmatprep.subr.bf16.mxu0 0
  %1432 = vmatpush1.bf16.msra.mxu0 %v863
  %1433 = vmatprep.subr.bf16.mxu0 0
  %1434 = vmatpush1.bf16.msra.mxu0 %v864
  %1435 = vmatprep.subr.bf16.mxu0 0
  %1436 = vmatpush1.bf16.msra.mxu0 %v865
  %1437 = vmatprep.subr.bf16.mxu0 0
  %1438 = vmatpush1.bf16.msra.mxu0 %v866
  %1439 = vmatprep.subr.bf16.mxu0 0
  %1440 = vmatpush1.bf16.msra.mxu0 %v867
  %1441 = vmatprep.subr.bf16.mxu0 0
  %1442 = vmatpush1.bf16.msra.mxu0 %v868
  %1443 = vmatprep.subr.bf16.mxu0 0
  %1444 = vmatpush1.bf16.msra.mxu0 %v869
  %1445 = vmatprep.subr.bf16.mxu0 0
  %1446 = vmatpush1.bf16.msra.mxu0 %v870
  %1447 = vmatprep.subr.bf16.mxu0 0
  %1448 = vmatpush1.bf16.msra.mxu0 %v871
  %1449 = vmatprep.subr.bf16.mxu0 0
  %1450 = vmatpush1.bf16.msra.mxu0 %v872
  %1451 = vmatprep.subr.bf16.mxu0 0
  %1452 = vmatpush1.bf16.msra.mxu0 %v873
  %1453 = vmatprep.subr.bf16.mxu0 0
  %1454 = vmatpush1.bf16.msra.mxu0 %v874
  %1455 = vmatprep.subr.bf16.mxu0 0
  %1456 = vmatpush1.bf16.msra.mxu0 %v875
  %1457 = vmatprep.subr.bf16.mxu0 0
  %1458 = vmatpush1.bf16.msra.mxu0 %v876
  %1459 = vmatprep.subr.bf16.mxu0 0
  %1460 = vmatpush1.bf16.msra.mxu0 %v877
  %1461 = vmatprep.subr.bf16.mxu0 0
  %1462 = vmatpush1.bf16.msra.mxu0 %v878
  %1463 = vmatprep.mubr.bf16.mxu0 %v530
  %1464 = vmatmul.mubr.bf16.gmra.mrb[0].mxu0 %v529
  %v1465 = vpop.f32.mrb[0].mxu0
  %v1466 = vadd.f32 %v921, %v1465
  %v1467 = vpop.f32.mrb[0].mxu0
  %v1468 = vpop.f32.mrb[0].mxu0
  %v1469 = vadd.f32 %v924, %v1468
  %v1470 = vpop.f32.mrb[0].mxu0
  %1471 = vmatprep.mubr.bf16.mxu0 %v534
  %1472 = vmatmul.mubr.bf16.gmra.mrb[0].mxu0 %v533
  %v1473 = vpop.f32.mrb[0].mxu0
  %v1474 = vadd.f32 %v929, %v1473
  %v1475 = vpop.f32.mrb[0].mxu0
  %v1476 = vpop.f32.mrb[0].mxu0
  %v1477 = vadd.f32 %v932, %v1476
  %v1478 = vpop.f32.mrb[0].mxu0
  %1479 = vmatprep.mubr.bf16.mxu0 %v538
  %1480 = vmatmul.mubr.bf16.gmra.mrb[0].mxu0 %v537
  %v1481 = vpop.f32.mrb[0].mxu0
  %v1482 = vadd.f32 %v937, %v1481
  %v1483 = vpop.f32.mrb[0].mxu0
  %v1484 = vpop.f32.mrb[0].mxu0
  %v1485 = vadd.f32 %v940, %v1484
  %v1486 = vpop.f32.mrb[0].mxu0
  %1487 = vmatprep.mubr.bf16.mxu0 %v542
  %1488 = vmatmul.mubr.bf16.gmra.mrb[0].mxu0 %v541
  %v1489 = vpop.f32.mrb[0].mxu0
  %v1490 = vadd.f32 %v945, %v1489
  %v1491 = vpop.f32.mrb[0].mxu0
  %v1492 = vpop.f32.mrb[0].mxu0
  %v1493 = vadd.f32 %v948, %v1492
  %v1494 = vpop.f32.mrb[0].mxu0
  %1495 = vmatprep.mubr.bf16.mxu0 %v546
  %1496 = vmatmul.mubr.bf16.gmra.mrb[0].mxu0 %v545
  %v1497 = vpop.f32.mrb[0].mxu0
  %v1498 = vadd.f32 %v953, %v1497
  %v1499 = vpop.f32.mrb[0].mxu0
  %v1500 = vpop.f32.mrb[0].mxu0
  %v1501 = vadd.f32 %v956, %v1500
  %v1502 = vpop.f32.mrb[0].mxu0
  %1503 = vmatprep.mubr.bf16.mxu0 %v550
  %1504 = vmatmul.mubr.bf16.gmra.mrb[0].mxu0 %v549
  %v1505 = vpop.f32.mrb[0].mxu0
  %v1506 = vadd.f32 %v961, %v1505
  %v1507 = vpop.f32.mrb[0].mxu0
  %v1508 = vpop.f32.mrb[0].mxu0
  %v1509 = vadd.f32 %v964, %v1508
  %v1510 = vpop.f32.mrb[0].mxu0
  %1511 = vmatprep.mubr.bf16.mxu0 %v554
  %1512 = vmatmul.mubr.bf16.gmra.mrb[0].mxu0 %v553
  %v1513 = vpop.f32.mrb[0].mxu0
  %v1514 = vadd.f32 %v969, %v1513
  %v1515 = vpop.f32.mrb[0].mxu0
  %v1516 = vpop.f32.mrb[0].mxu0
  %v1517 = vadd.f32 %v972, %v1516
  %v1518 = vpop.f32.mrb[0].mxu0
  %1519 = vmatprep.mubr.bf16.mxu0 %v558
  %1520 = vmatmul.mubr.bf16.gmra.mrb[0].mxu0 %v557
  %v1521 = vpop.f32.mrb[0].mxu0
  %v1522 = vadd.f32 %v977, %v1521
  %v1523 = vpop.f32.mrb[0].mxu0
  %v1524 = vpop.f32.mrb[0].mxu0
  %v1525 = vadd.f32 %v980, %v1524
  %v1526 = vpop.f32.mrb[0].mxu0
  %1527 = vmatprep.mubr.bf16.mxu0 %v562
  %1528 = vmatmul.mubr.bf16.gmra.mrb[0].mxu0 %v561
  %v1529 = vpop.f32.mrb[0].mxu0
  %v1530 = vadd.f32 %v985, %v1529
  %v1531 = vpop.f32.mrb[0].mxu0
  %v1532 = vpop.f32.mrb[0].mxu0
  %v1533 = vadd.f32 %v988, %v1532
  %v1534 = vpop.f32.mrb[0].mxu0
  %1535 = vmatprep.mubr.bf16.mxu0 %v566
  %1536 = vmatmul.mubr.bf16.gmra.mrb[0].mxu0 %v565
  %v1537 = vpop.f32.mrb[0].mxu0
  %v1538 = vadd.f32 %v993, %v1537
  %v1539 = vpop.f32.mrb[0].mxu0
  %v1540 = vpop.f32.mrb[0].mxu0
  %v1541 = vadd.f32 %v996, %v1540
  %v1542 = vpop.f32.mrb[0].mxu0
  %1543 = vmatprep.mubr.bf16.mxu0 %v570
  %1544 = vmatmul.mubr.bf16.gmra.mrb[0].mxu0 %v569
  %v1545 = vpop.f32.mrb[0].mxu0
  %v1546 = vadd.f32 %v1001, %v1545
  %v1547 = vpop.f32.mrb[0].mxu0
  %v1548 = vpop.f32.mrb[0].mxu0
  %v1549 = vadd.f32 %v1004, %v1548
  %v1550 = vpop.f32.mrb[0].mxu0
  %1551 = vmatprep.mubr.bf16.mxu0 %v574
  %1552 = vmatmul.mubr.bf16.gmra.mrb[0].mxu0 %v573
  %v1553 = vpop.f32.mrb[0].mxu0
  %v1554 = vadd.f32 %v1009, %v1553
  %v1555 = vpop.f32.mrb[0].mxu0
  %v1556 = vpop.f32.mrb[0].mxu0
  %v1557 = vadd.f32 %v1012, %v1556
  %v1558 = vpop.f32.mrb[0].mxu0
  %1559 = vmatprep.mubr.bf16.mxu0 %v578
  %1560 = vmatmul.mubr.bf16.gmra.mrb[0].mxu0 %v577
  %v1561 = vpop.f32.mrb[0].mxu0
  %v1562 = vadd.f32 %v1017, %v1561
  %v1563 = vpop.f32.mrb[0].mxu0
  %v1564 = vpop.f32.mrb[0].mxu0
  %v1565 = vadd.f32 %v1020, %v1564
  %v1566 = vpop.f32.mrb[0].mxu0
  %1567 = vmatprep.mubr.bf16.mxu0 %v582
  %1568 = vmatmul.mubr.bf16.gmra.mrb[0].mxu0 %v581
  %v1569 = vpop.f32.mrb[0].mxu0
  %v1570 = vadd.f32 %v1025, %v1569
  %v1571 = vpop.f32.mrb[0].mxu0
  %v1572 = vpop.f32.mrb[0].mxu0
  %v1573 = vadd.f32 %v1028, %v1572
  %v1574 = vpop.f32.mrb[0].mxu0
  %1575 = vmatprep.mubr.bf16.mxu0 %v586
  %1576 = vmatmul.mubr.bf16.gmra.mrb[0].mxu0 %v585
  %v1577 = vpop.f32.mrb[0].mxu0
  %v1578 = vadd.f32 %v1033, %v1577
  %v1579 = vpop.f32.mrb[0].mxu0
  %v1580 = vpop.f32.mrb[0].mxu0
  %v1581 = vadd.f32 %v1036, %v1580
  %v1582 = vpop.f32.mrb[0].mxu0
  %1583 = vmatprep.mubr.bf16.mxu0 %v590
  %1584 = vmatmul.mubr.bf16.gmra.mrb[0].mxu0 %v589
  %v1585 = vpop.f32.mrb[0].mxu0
  %v1586 = vadd.f32 %v1041, %v1585
  %v1587 = vpop.f32.mrb[0].mxu0
  %v1588 = vpop.f32.mrb[0].mxu0
  %v1589 = vadd.f32 %v1044, %v1588
  %v1590 = vpop.f32.mrb[0].mxu0
  %1591 = vmatprep.mubr.bf16.mxu0 %v594
  %1592 = vmatmul.mubr.bf16.gmra.mrb[0].mxu0 %v593
  %v1593 = vpop.f32.mrb[0].mxu0
  %v1594 = vadd.f32 %v1049, %v1593
  %v1595 = vpop.f32.mrb[0].mxu0
  %v1596 = vpop.f32.mrb[0].mxu0
  %v1597 = vadd.f32 %v1052, %v1596
  %v1598 = vpop.f32.mrb[0].mxu0
  %1599 = vmatprep.mubr.bf16.mxu0 %v598
  %1600 = vmatmul.mubr.bf16.gmra.mrb[0].mxu0 %v597
  %v1601 = vpop.f32.mrb[0].mxu0
  %v1602 = vadd.f32 %v1057, %v1601
  %v1603 = vpop.f32.mrb[0].mxu0
  %v1604 = vpop.f32.mrb[0].mxu0
  %v1605 = vadd.f32 %v1060, %v1604
  %v1606 = vpop.f32.mrb[0].mxu0
  %1607 = vmatprep.mubr.bf16.mxu0 %v602
  %1608 = vmatmul.mubr.bf16.gmra.mrb[0].mxu0 %v601
  %v1609 = vpop.f32.mrb[0].mxu0
  %v1610 = vadd.f32 %v1065, %v1609
  %v1611 = vpop.f32.mrb[0].mxu0
  %v1612 = vpop.f32.mrb[0].mxu0
  %v1613 = vadd.f32 %v1068, %v1612
  %v1614 = vpop.f32.mrb[0].mxu0
  %1615 = vmatprep.mubr.bf16.mxu0 %v606
  %1616 = vmatmul.mubr.bf16.gmra.mrb[0].mxu0 %v605
  %v1617 = vpop.f32.mrb[0].mxu0
  %v1618 = vadd.f32 %v1073, %v1617
  %v1619 = vpop.f32.mrb[0].mxu0
  %v1620 = vpop.f32.mrb[0].mxu0
  %v1621 = vadd.f32 %v1076, %v1620
  %v1622 = vpop.f32.mrb[0].mxu0
  %1623 = vmatprep.mubr.bf16.mxu0 %v610
  %1624 = vmatmul.mubr.bf16.gmra.mrb[0].mxu0 %v609
  %v1625 = vpop.f32.mrb[0].mxu0
  %v1626 = vadd.f32 %v1081, %v1625
  %v1627 = vpop.f32.mrb[0].mxu0
  %v1628 = vpop.f32.mrb[0].mxu0
  %v1629 = vadd.f32 %v1084, %v1628
  %v1630 = vpop.f32.mrb[0].mxu0
  %1631 = vmatprep.mubr.bf16.mxu0 %v614
  %1632 = vmatmul.mubr.bf16.gmra.mrb[0].mxu0 %v613
  %v1633 = vpop.f32.mrb[0].mxu0
  %v1634 = vadd.f32 %v1089, %v1633
  %v1635 = vpop.f32.mrb[0].mxu0
  %v1636 = vpop.f32.mrb[0].mxu0
  %v1637 = vadd.f32 %v1092, %v1636
  %v1638 = vpop.f32.mrb[0].mxu0
  %1639 = vmatprep.mubr.bf16.mxu0 %v618
  %1640 = vmatmul.mubr.bf16.gmra.mrb[0].mxu0 %v617
  %v1641 = vpop.f32.mrb[0].mxu0
  %v1642 = vadd.f32 %v1097, %v1641
  %v1643 = vpop.f32.mrb[0].mxu0
  %v1644 = vpop.f32.mrb[0].mxu0
  %v1645 = vadd.f32 %v1100, %v1644
  %v1646 = vpop.f32.mrb[0].mxu0
  %1647 = vmatprep.mubr.bf16.mxu0 %v622
  %1648 = vmatmul.mubr.bf16.gmra.mrb[0].mxu0 %v621
  %v1649 = vpop.f32.mrb[0].mxu0
  %v1650 = vadd.f32 %v1105, %v1649
  %v1651 = vpop.f32.mrb[0].mxu0
  %v1652 = vpop.f32.mrb[0].mxu0
  %v1653 = vadd.f32 %v1108, %v1652
  %v1654 = vpop.f32.mrb[0].mxu0
  %1655 = vmatprep.mubr.bf16.mxu0 %v626
  %1656 = vmatmul.mubr.bf16.gmra.mrb[0].mxu0 %v625
  %v1657 = vpop.f32.mrb[0].mxu0
  %v1658 = vadd.f32 %v1113, %v1657
  %v1659 = vpop.f32.mrb[0].mxu0
  %v1660 = vpop.f32.mrb[0].mxu0
  %v1661 = vadd.f32 %v1116, %v1660
  %v1662 = vpop.f32.mrb[0].mxu0
  %1663 = vmatprep.mubr.bf16.mxu0 %v630
  %1664 = vmatmul.mubr.bf16.gmra.mrb[0].mxu0 %v629
  %v1665 = vpop.f32.mrb[0].mxu0
  %v1666 = vadd.f32 %v1121, %v1665
  %v1667 = vpop.f32.mrb[0].mxu0
  %v1668 = vpop.f32.mrb[0].mxu0
  %v1669 = vadd.f32 %v1124, %v1668
  %v1670 = vpop.f32.mrb[0].mxu0
  %1671 = vmatprep.mubr.bf16.mxu0 %v634
  %1672 = vmatmul.mubr.bf16.gmra.mrb[0].mxu0 %v633
  %v1673 = vpop.f32.mrb[0].mxu0
  %v1674 = vadd.f32 %v1129, %v1673
  %v1675 = vpop.f32.mrb[0].mxu0
  %v1676 = vpop.f32.mrb[0].mxu0
  %v1677 = vadd.f32 %v1132, %v1676
  %v1678 = vpop.f32.mrb[0].mxu0
  %1679 = vmatprep.mubr.bf16.mxu0 %v638
  %1680 = vmatmul.mubr.bf16.gmra.mrb[0].mxu0 %v637
  %v1681 = vpop.f32.mrb[0].mxu0
  %v1682 = vadd.f32 %v1137, %v1681
  %v1683 = vpop.f32.mrb[0].mxu0
  %v1684 = vpop.f32.mrb[0].mxu0
  %v1685 = vadd.f32 %v1140, %v1684
  %v1686 = vpop.f32.mrb[0].mxu0
  %1687 = vmatprep.mubr.bf16.mxu0 %v642
  %1688 = vmatmul.mubr.bf16.gmra.mrb[0].mxu0 %v641
  %v1689 = vpop.f32.mrb[0].mxu0
  %v1690 = vadd.f32 %v1145, %v1689
  %v1691 = vpop.f32.mrb[0].mxu0
  %v1692 = vpop.f32.mrb[0].mxu0
  %v1693 = vadd.f32 %v1148, %v1692
  %v1694 = vpop.f32.mrb[0].mxu0
  %1695 = vmatprep.mubr.bf16.mxu0 %v646
  %1696 = vmatmul.mubr.bf16.gmra.mrb[0].mxu0 %v645
  %v1697 = vpop.f32.mrb[0].mxu0
  %v1698 = vadd.f32 %v1153, %v1697
  %v1699 = vpop.f32.mrb[0].mxu0
  %v1700 = vpop.f32.mrb[0].mxu0
  %v1701 = vadd.f32 %v1156, %v1700
  %v1702 = vpop.f32.mrb[0].mxu0
  %1703 = vmatprep.mubr.bf16.mxu0 %v650
  %1704 = vmatmul.mubr.bf16.gmra.mrb[0].mxu0 %v649
  %v1705 = vpop.f32.mrb[0].mxu0
  %v1706 = vadd.f32 %v1161, %v1705
  %v1707 = vpop.f32.mrb[0].mxu0
  %v1708 = vpop.f32.mrb[0].mxu0
  %v1709 = vadd.f32 %v1164, %v1708
  %v1710 = vpop.f32.mrb[0].mxu0
  %1711 = vmatprep.mubr.bf16.mxu0 %v654
  %1712 = vmatmul.mubr.bf16.gmra.mrb[0].mxu0 %v653
  %v1713 = vpop.f32.mrb[0].mxu0
  %v1714 = vadd.f32 %v1169, %v1713
  %v1715 = vpop.f32.mrb[0].mxu0
  %v1716 = vpop.f32.mrb[0].mxu0
  %v1717 = vadd.f32 %v1172, %v1716
  %v1718 = vpop.f32.mrb[0].mxu0
  %1719 = vmatprep.mubr.bf16.mxu0 %v658
  %1720 = vmatmul.mubr.bf16.gmra.mrb[0].mxu0 %v657
  %v1721 = vpop.f32.mrb[0].mxu0
  %v1722 = vadd.f32 %v1177, %v1721
  %v1723 = vpop.f32.mrb[0].mxu0
  %v1724 = vpop.f32.mrb[0].mxu0
  %v1725 = vadd.f32 %v1180, %v1724
  %v1726 = vpop.f32.mrb[0].mxu0
  %1727 = vmatprep.mubr.bf16.mxu0 %v662
  %1728 = vmatmul.mubr.bf16.gmra.mrb[0].mxu0 %v661
  %v1729 = vpop.f32.mrb[0].mxu0
  %v1730 = vadd.f32 %v1185, %v1729
  %v1731 = vpop.f32.mrb[0].mxu0
  %v1732 = vpop.f32.mrb[0].mxu0
  %v1733 = vadd.f32 %v1188, %v1732
  %v1734 = vpop.f32.mrb[0].mxu0
  %1735 = vmatprep.mubr.bf16.mxu0 %v666
  %1736 = vmatmul.mubr.bf16.gmra.mrb[0].mxu0 %v665
  %v1737 = vpop.f32.mrb[0].mxu0
  %v1738 = vadd.f32 %v1193, %v1737
  %v1739 = vpop.f32.mrb[0].mxu0
  %v1740 = vpop.f32.mrb[0].mxu0
  %v1741 = vadd.f32 %v1196, %v1740
  %v1742 = vpop.f32.mrb[0].mxu0
  %1743 = vmatprep.mubr.bf16.mxu0 %v670
  %1744 = vmatmul.mubr.bf16.gmra.mrb[0].mxu0 %v669
  %v1745 = vpop.f32.mrb[0].mxu0
  %v1746 = vadd.f32 %v1201, %v1745
  %v1747 = vpop.f32.mrb[0].mxu0
  %v1748 = vpop.f32.mrb[0].mxu0
  %v1749 = vadd.f32 %v1204, %v1748
  %v1750 = vpop.f32.mrb[0].mxu0
  %1751 = vmatprep.mubr.bf16.mxu0 %v674
  %1752 = vmatmul.mubr.bf16.gmra.mrb[0].mxu0 %v673
  %v1753 = vpop.f32.mrb[0].mxu0
  %v1754 = vadd.f32 %v1209, %v1753
  %v1755 = vpop.f32.mrb[0].mxu0
  %v1756 = vpop.f32.mrb[0].mxu0
  %v1757 = vadd.f32 %v1212, %v1756
  %v1758 = vpop.f32.mrb[0].mxu0
  %1759 = vmatprep.mubr.bf16.mxu0 %v678
  %1760 = vmatmul.mubr.bf16.gmra.mrb[0].mxu0 %v677
  %v1761 = vpop.f32.mrb[0].mxu0
  %v1762 = vadd.f32 %v1217, %v1761
  %v1763 = vpop.f32.mrb[0].mxu0
  %v1764 = vpop.f32.mrb[0].mxu0
  %v1765 = vadd.f32 %v1220, %v1764
  %v1766 = vpop.f32.mrb[0].mxu0
  %1767 = vmatprep.mubr.bf16.mxu0 %v682
  %1768 = vmatmul.mubr.bf16.gmra.mrb[0].mxu0 %v681
  %v1769 = vpop.f32.mrb[0].mxu0
  %v1770 = vadd.f32 %v1225, %v1769
  %v1771 = vpop.f32.mrb[0].mxu0
  %v1772 = vpop.f32.mrb[0].mxu0
  %v1773 = vadd.f32 %v1228, %v1772
  %v1774 = vpop.f32.mrb[0].mxu0
  %1775 = vmatprep.mubr.bf16.mxu0 %v686
  %1776 = vmatmul.mubr.bf16.gmra.mrb[0].mxu0 %v685
  %v1777 = vpop.f32.mrb[0].mxu0
  %v1778 = vadd.f32 %v1233, %v1777
  %v1779 = vpop.f32.mrb[0].mxu0
  %v1780 = vpop.f32.mrb[0].mxu0
  %v1781 = vadd.f32 %v1236, %v1780
  %v1782 = vpop.f32.mrb[0].mxu0
  %1783 = vmatprep.mubr.bf16.mxu0 %v690
  %1784 = vmatmul.mubr.bf16.gmra.mrb[0].mxu0 %v689
  %v1785 = vpop.f32.mrb[0].mxu0
  %v1786 = vadd.f32 %v1241, %v1785
  %v1787 = vpop.f32.mrb[0].mxu0
  %v1788 = vpop.f32.mrb[0].mxu0
  %v1789 = vadd.f32 %v1244, %v1788
  %v1790 = vpop.f32.mrb[0].mxu0
  %1791 = vmatprep.mubr.bf16.mxu0 %v694
  %1792 = vmatmul.mubr.bf16.gmra.mrb[0].mxu0 %v693
  %v1793 = vpop.f32.mrb[0].mxu0
  %v1794 = vadd.f32 %v1249, %v1793
  %v1795 = vpop.f32.mrb[0].mxu0
  %v1796 = vpop.f32.mrb[0].mxu0
  %v1797 = vadd.f32 %v1252, %v1796
  %v1798 = vpop.f32.mrb[0].mxu0
  %1799 = vmatprep.mubr.bf16.mxu0 %v698
  %1800 = vmatmul.mubr.bf16.gmra.mrb[0].mxu0 %v697
  %v1801 = vpop.f32.mrb[0].mxu0
  %v1802 = vadd.f32 %v1257, %v1801
  %v1803 = vpop.f32.mrb[0].mxu0
  %v1804 = vpop.f32.mrb[0].mxu0
  %v1805 = vadd.f32 %v1260, %v1804
  %v1806 = vpop.f32.mrb[0].mxu0
  %1807 = vmatprep.mubr.bf16.mxu0 %v702
  %1808 = vmatmul.mubr.bf16.gmra.mrb[0].mxu0 %v701
  %v1809 = vpop.f32.mrb[0].mxu0
  %v1810 = vadd.f32 %v1265, %v1809
  %v1811 = vpop.f32.mrb[0].mxu0
  %v1812 = vpop.f32.mrb[0].mxu0
  %v1813 = vadd.f32 %v1268, %v1812
  %v1814 = vpop.f32.mrb[0].mxu0
  %1815 = vmatprep.mubr.bf16.mxu0 %v706
  %1816 = vmatmul.mubr.bf16.gmra.mrb[0].mxu0 %v705
  %v1817 = vpop.f32.mrb[0].mxu0
  %v1818 = vadd.f32 %v1273, %v1817
  %v1819 = vpop.f32.mrb[0].mxu0
  %v1820 = vpop.f32.mrb[0].mxu0
  %v1821 = vadd.f32 %v1276, %v1820
  %v1822 = vpop.f32.mrb[0].mxu0
  %1823 = vmatprep.mubr.bf16.mxu0 %v710
  %1824 = vmatmul.mubr.bf16.gmra.mrb[0].mxu0 %v709
  %v1825 = vpop.f32.mrb[0].mxu0
  %v1826 = vadd.f32 %v1281, %v1825
  %v1827 = vpop.f32.mrb[0].mxu0
  %v1828 = vpop.f32.mrb[0].mxu0
  %v1829 = vadd.f32 %v1284, %v1828
  %v1830 = vpop.f32.mrb[0].mxu0
  %1831 = vmatprep.mubr.bf16.mxu0 %v714
  %1832 = vmatmul.mubr.bf16.gmra.mrb[0].mxu0 %v713
  %v1833 = vpop.f32.mrb[0].mxu0
  %v1834 = vadd.f32 %v1289, %v1833
  %v1835 = vpop.f32.mrb[0].mxu0
  %v1836 = vpop.f32.mrb[0].mxu0
  %v1837 = vadd.f32 %v1292, %v1836
  %v1838 = vpop.f32.mrb[0].mxu0
  %1839 = vmatprep.mubr.bf16.mxu0 %v718
  %1840 = vmatmul.mubr.bf16.gmra.mrb[0].mxu0 %v717
  %v1841 = vpop.f32.mrb[0].mxu0
  %v1842 = vadd.f32 %v1297, %v1841
  %v1843 = vpop.f32.mrb[0].mxu0
  %v1844 = vpop.f32.mrb[0].mxu0
  %v1845 = vadd.f32 %v1300, %v1844
  %v1846 = vpop.f32.mrb[0].mxu0
  %1847 = vmatprep.mubr.bf16.mxu0 %v722
  %1848 = vmatmul.mubr.bf16.gmra.mrb[0].mxu0 %v721
  %v1849 = vpop.f32.mrb[0].mxu0
  %v1850 = vadd.f32 %v1305, %v1849
  %v1851 = vpop.f32.mrb[0].mxu0
  %v1852 = vpop.f32.mrb[0].mxu0
  %v1853 = vadd.f32 %v1308, %v1852
  %v1854 = vpop.f32.mrb[0].mxu0
  %1855 = vmatprep.mubr.bf16.mxu0 %v726
  %1856 = vmatmul.mubr.bf16.gmra.mrb[0].mxu0 %v725
  %v1857 = vpop.f32.mrb[0].mxu0
  %v1858 = vadd.f32 %v1313, %v1857
  %v1859 = vpop.f32.mrb[0].mxu0
  %v1860 = vpop.f32.mrb[0].mxu0
  %v1861 = vadd.f32 %v1316, %v1860
  %v1862 = vpop.f32.mrb[0].mxu0
  %1863 = vmatprep.mubr.bf16.mxu0 %v730
  %1864 = vmatmul.mubr.bf16.gmra.mrb[0].mxu0 %v729
  %v1865 = vpop.f32.mrb[0].mxu0
  %v1866 = vadd.f32 %v1321, %v1865
  %v1867 = vpop.f32.mrb[0].mxu0
  %v1868 = vpop.f32.mrb[0].mxu0
  %v1869 = vadd.f32 %v1324, %v1868
  %v1870 = vpop.f32.mrb[0].mxu0
  %1871 = vmatprep.mubr.bf16.mxu0 %v734
  %1872 = vmatmul.mubr.bf16.gmra.mrb[0].mxu0 %v733
  %v1873 = vpop.f32.mrb[0].mxu0
  %v1874 = vadd.f32 %v1329, %v1873
  %v1875 = vpop.f32.mrb[0].mxu0
  %v1876 = vpop.f32.mrb[0].mxu0
  %v1877 = vadd.f32 %v1332, %v1876
  %v1878 = vpop.f32.mrb[0].mxu0
  %1879 = vmatprep.mubr.bf16.mxu0 %v738
  %1880 = vmatmul.mubr.bf16.gmra.mrb[0].mxu0 %v737
  %v1881 = vpop.f32.mrb[0].mxu0
  %v1882 = vadd.f32 %v1337, %v1881
  %v1883 = vpop.f32.mrb[0].mxu0
  %v1884 = vpop.f32.mrb[0].mxu0
  %v1885 = vadd.f32 %v1340, %v1884
  %v1886 = vpop.f32.mrb[0].mxu0
  %1887 = vmatprep.mubr.bf16.mxu0 %v742
  %1888 = vmatmul.mubr.bf16.gmra.mrb[0].mxu0 %v741
  %v1889 = vpop.f32.mrb[0].mxu0
  %v1890 = vadd.f32 %v1345, %v1889
  %v1891 = vpop.f32.mrb[0].mxu0
  %v1892 = vpop.f32.mrb[0].mxu0
  %v1893 = vadd.f32 %v1348, %v1892
  %v1894 = vpop.f32.mrb[0].mxu0
  %1895 = vmatprep.mubr.bf16.mxu0 %v746
  %1896 = vmatmul.mubr.bf16.gmra.mrb[0].mxu0 %v745
  %v1897 = vpop.f32.mrb[0].mxu0
  %v1898 = vadd.f32 %v1353, %v1897
  %v1899 = vpop.f32.mrb[0].mxu0
  %v1900 = vpop.f32.mrb[0].mxu0
  %v1901 = vadd.f32 %v1356, %v1900
  %v1902 = vpop.f32.mrb[0].mxu0
  %1903 = vmatprep.mubr.bf16.mxu0 %v750
  %1904 = vmatmul.mubr.bf16.gmra.mrb[0].mxu0 %v749
  %v1905 = vpop.f32.mrb[0].mxu0
  %v1906 = vadd.f32 %v1361, %v1905
  %v1907 = vpop.f32.mrb[0].mxu0
  %v1908 = vpop.f32.mrb[0].mxu0
  %v1909 = vadd.f32 %v1364, %v1908
  %v1910 = vpop.f32.mrb[0].mxu0
  %1911 = vmatprep.mubr.bf16.mxu0 %v754
  %1912 = vmatmul.mubr.bf16.gmra.mrb[0].mxu0 %v753
  %v1913 = vpop.f32.mrb[0].mxu0
  %v1914 = vadd.f32 %v1369, %v1913
  %v1915 = vpop.f32.mrb[0].mxu0
  %v1916 = vpop.f32.mrb[0].mxu0
  %v1917 = vadd.f32 %v1372, %v1916
  %v1918 = vpop.f32.mrb[0].mxu0
  %1919 = vmatprep.mubr.bf16.mxu0 %v758
  %1920 = vmatmul.mubr.bf16.gmra.mrb[0].mxu0 %v757
  %v1921 = vpop.f32.mrb[0].mxu0
  %v1922 = vadd.f32 %v1377, %v1921
  %v1923 = vpop.f32.mrb[0].mxu0
  %v1924 = vpop.f32.mrb[0].mxu0
  %v1925 = vadd.f32 %v1380, %v1924
  %v1926 = vpop.f32.mrb[0].mxu0
  %1927 = vmatprep.mubr.bf16.mxu0 %v762
  %1928 = vmatmul.mubr.bf16.gmra.mrb[0].mxu0 %v761
  %v1929 = vpop.f32.mrb[0].mxu0
  %v1930 = vadd.f32 %v1385, %v1929
  %v1931 = vpop.f32.mrb[0].mxu0
  %v1932 = vpop.f32.mrb[0].mxu0
  %v1933 = vadd.f32 %v1388, %v1932
  %v1934 = vpop.f32.mrb[0].mxu0
  %1935 = vmatprep.mubr.bf16.mxu0 %v766
  %1936 = vmatmul.mubr.bf16.gmra.mrb[0].mxu0 %v765
  %v1937 = vpop.f32.mrb[0].mxu0
  %v1938 = vadd.f32 %v1393, %v1937
  %v1939 = vpop.f32.mrb[0].mxu0
  %v1940 = vpop.f32.mrb[0].mxu0
  %v1941 = vadd.f32 %v1396, %v1940
  %v1942 = vpop.f32.mrb[0].mxu0
  %1943 = vmatprep.mubr.bf16.mxu0 %v770
  %1944 = vmatmul.mubr.bf16.gmra.mrb[0].mxu0 %v769
  %v1945 = vpop.f32.mrb[0].mxu0
  %v1946 = vadd.f32 %v1401, %v1945
  %v1947 = vpop.f32.mrb[0].mxu0
  %v1948 = vpop.f32.mrb[0].mxu0
  %v1949 = vadd.f32 %v1404, %v1948
  %v1950 = vpop.f32.mrb[0].mxu0
  %1951 = vmatprep.mubr.bf16.mxu0 %v774
  %1952 = vmatmul.mubr.bf16.gmra.mrb[0].mxu0 %v773
  %v1953 = vpop.f32.mrb[0].mxu0
  %v1954 = vadd.f32 %v1409, %v1953
  %v1955 = vpop.f32.mrb[0].mxu0
  %v1956 = vpop.f32.mrb[0].mxu0
  %v1957 = vadd.f32 %v1412, %v1956
  %v1958 = vpop.f32.mrb[0].mxu0
  %1959 = vmatprep.mubr.bf16.mxu0 %v778
  %1960 = vmatmul.mubr.bf16.gmra.mrb[0].mxu0 %v777
  %v1961 = vpop.f32.mrb[0].mxu0
  %v1962 = vadd.f32 %v1417, %v1961
  %v1963 = vpop.f32.mrb[0].mxu0
  %v1964 = vpop.f32.mrb[0].mxu0
  %v1965 = vadd.f32 %v1420, %v1964
  %v1966 = vpop.f32.mrb[0].mxu0
  %1967 = vmatprep.mubr.bf16.mxu0 %v782
  %1968 = vmatmul.mubr.bf16.gmra.mrb[0].mxu0 %v781
  %v1969 = vpop.f32.mrb[0].mxu0
  %v1970 = vadd.f32 %v1425, %v1969
  %v1971 = vpop.f32.mrb[0].mxu0
  %v1972 = vpop.f32.mrb[0].mxu0
  %v1973 = vadd.f32 %v1428, %v1972
  %v1974 = vpop.f32.mrb[0].mxu0
  %1975 = vdwg.mxu0
  %v1976 = vmax.f32 %v1466, 0.0
  %v1977 = vmax.f32 %v1469, 0.0
  %v1978 = vmax.f32 %v1474, 0.0
  %v1979 = vmax.f32 %v1477, 0.0
  %v1980 = vmax.f32 %v1482, 0.0
  %v1981 = vmax.f32 %v1485, 0.0
  %v1982 = vmax.f32 %v1490, 0.0
  %v1983 = vmax.f32 %v1493, 0.0
  %v1984 = vmax.f32 %v1498, 0.0
  %v1985 = vmax.f32 %v1501, 0.0
  %v1986 = vmax.f32 %v1506, 0.0
  %v1987 = vmax.f32 %v1509, 0.0
  %v1988 = vmax.f32 %v1514, 0.0
  %v1989 = vmax.f32 %v1517, 0.0
  %v1990 = vmax.f32 %v1522, 0.0
  %v1991 = vmax.f32 %v1525, 0.0
  %v1992 = vmax.f32 %v1530, 0.0
  %v1993 = vmax.f32 %v1533, 0.0
  %v1994 = vmax.f32 %v1538, 0.0
  %v1995 = vmax.f32 %v1541, 0.0
  %v1996 = vmax.f32 %v1546, 0.0
  %v1997 = vmax.f32 %v1549, 0.0
  %v1998 = vmax.f32 %v1554, 0.0
  %v1999 = vmax.f32 %v1557, 0.0
  %v2000 = vmax.f32 %v1562, 0.0
  %v2001 = vmax.f32 %v1565, 0.0
  %v2002 = vmax.f32 %v1570, 0.0
  %v2003 = vmax.f32 %v1573, 0.0
  %v2004 = vmax.f32 %v1578, 0.0
  %v2005 = vmax.f32 %v1581, 0.0
  %v2006 = vmax.f32 %v1586, 0.0
  %v2007 = vmax.f32 %v1589, 0.0
  %v2008 = vmax.f32 %v1594, 0.0
  %v2009 = vmax.f32 %v1597, 0.0
  %v2010 = vmax.f32 %v1602, 0.0
  %v2011 = vmax.f32 %v1605, 0.0
  %v2012 = vmax.f32 %v1610, 0.0
  %v2013 = vmax.f32 %v1613, 0.0
  %v2014 = vmax.f32 %v1618, 0.0
  %v2015 = vmax.f32 %v1621, 0.0
  %v2016 = vmax.f32 %v1626, 0.0
  %v2017 = vmax.f32 %v1629, 0.0
  %v2018 = vmax.f32 %v1634, 0.0
  %v2019 = vmax.f32 %v1637, 0.0
  %v2020 = vmax.f32 %v1642, 0.0
  %v2021 = vmax.f32 %v1645, 0.0
  %v2022 = vmax.f32 %v1650, 0.0
  %v2023 = vmax.f32 %v1653, 0.0
  %v2024 = vmax.f32 %v1658, 0.0
  %v2025 = vmax.f32 %v1661, 0.0
  %v2026 = vmax.f32 %v1666, 0.0
  %v2027 = vmax.f32 %v1669, 0.0
  %v2028 = vmax.f32 %v1674, 0.0
  %v2029 = vmax.f32 %v1677, 0.0
  %v2030 = vmax.f32 %v1682, 0.0
  %v2031 = vmax.f32 %v1685, 0.0
  %v2032 = vmax.f32 %v1690, 0.0
  %v2033 = vmax.f32 %v1693, 0.0
  %v2034 = vmax.f32 %v1698, 0.0
  %v2035 = vmax.f32 %v1701, 0.0
  %v2036 = vmax.f32 %v1706, 0.0
  %v2037 = vmax.f32 %v1709, 0.0
  %v2038 = vmax.f32 %v1714, 0.0
  %v2039 = vmax.f32 %v1717, 0.0
  %v2040 = vmax.f32 %v1722, 0.0
  %v2041 = vmax.f32 %v1725, 0.0
  %v2042 = vmax.f32 %v1730, 0.0
  %v2043 = vmax.f32 %v1733, 0.0
  %v2044 = vmax.f32 %v1738, 0.0
  %v2045 = vmax.f32 %v1741, 0.0
  %v2046 = vmax.f32 %v1746, 0.0
  %v2047 = vmax.f32 %v1749, 0.0
  %v2048 = vmax.f32 %v1754, 0.0
  %v2049 = vmax.f32 %v1757, 0.0
  %v2050 = vmax.f32 %v1762, 0.0
  %v2051 = vmax.f32 %v1765, 0.0
  %v2052 = vmax.f32 %v1770, 0.0
  %v2053 = vmax.f32 %v1773, 0.0
  %v2054 = vmax.f32 %v1778, 0.0
  %v2055 = vmax.f32 %v1781, 0.0
  %v2056 = vmax.f32 %v1786, 0.0
  %v2057 = vmax.f32 %v1789, 0.0
  %v2058 = vmax.f32 %v1794, 0.0
  %v2059 = vmax.f32 %v1797, 0.0
  %v2060 = vmax.f32 %v1802, 0.0
  %v2061 = vmax.f32 %v1805, 0.0
  %v2062 = vmax.f32 %v1810, 0.0
  %v2063 = vmax.f32 %v1813, 0.0
  %v2064 = vmax.f32 %v1818, 0.0
  %v2065 = vmax.f32 %v1821, 0.0
  %v2066 = vmax.f32 %v1826, 0.0
  %v2067 = vmax.f32 %v1829, 0.0
  %v2068 = vmax.f32 %v1834, 0.0
  %v2069 = vmax.f32 %v1837, 0.0
  %v2070 = vmax.f32 %v1842, 0.0
  %v2071 = vmax.f32 %v1845, 0.0
  %v2072 = vmax.f32 %v1850, 0.0
  %v2073 = vmax.f32 %v1853, 0.0
  %v2074 = vmax.f32 %v1858, 0.0
  %v2075 = vmax.f32 %v1861, 0.0
  %v2076 = vmax.f32 %v1866, 0.0
  %v2077 = vmax.f32 %v1869, 0.0
  %v2078 = vmax.f32 %v1874, 0.0
  %v2079 = vmax.f32 %v1877, 0.0
  %v2080 = vmax.f32 %v1882, 0.0
  %v2081 = vmax.f32 %v1885, 0.0
  %v2082 = vmax.f32 %v1890, 0.0
  %v2083 = vmax.f32 %v1893, 0.0
  %v2084 = vmax.f32 %v1898, 0.0
  %v2085 = vmax.f32 %v1901, 0.0
  %v2086 = vmax.f32 %v1906, 0.0
  %v2087 = vmax.f32 %v1909, 0.0
  %v2088 = vmax.f32 %v1914, 0.0
  %v2089 = vmax.f32 %v1917, 0.0
  %v2090 = vmax.f32 %v1922, 0.0
  %v2091 = vmax.f32 %v1925, 0.0
  %v2092 = vmax.f32 %v1930, 0.0
  %v2093 = vmax.f32 %v1933, 0.0
  %v2094 = vmax.f32 %v1938, 0.0
  %v2095 = vmax.f32 %v1941, 0.0
  %v2096 = vmax.f32 %v1946, 0.0
  %v2097 = vmax.f32 %v1949, 0.0
  %v2098 = vmax.f32 %v1954, 0.0
  %v2099 = vmax.f32 %v1957, 0.0
  %v2100 = vmax.f32 %v1962, 0.0
  %v2101 = vmax.f32 %v1965, 0.0
  %v2102 = vmax.f32 %v1970, 0.0
  %v2103 = vmax.f32 %v1973, 0.0
  %vm2104 = vcmask 261120
  %2105 = vst.msk [vmem:[%s3] sm:$0xff] %vm2104, %v1976
  %2106 = vst.msk [vmem:[%s3 + $0x8] sm:$0xff] %vm2104, %v1977
  %2107 = vst.msk [vmem:[%s3 + $0x10] sm:$0xff] %vm2104, %v1978
  %2108 = vst.msk [vmem:[%s3 + $0x18] sm:$0xff] %vm2104, %v1979
  %2109 = vst.msk [vmem:[%s3 + $0x20] sm:$0xff] %vm2104, %v1980
  %2110 = vst.msk [vmem:[%s3 + $0x28] sm:$0xff] %vm2104, %v1981
  %2111 = vst.msk [vmem:[%s3 + $0x30] sm:$0xff] %vm2104, %v1982
  %2112 = vst.msk [vmem:[%s3 + $0x38] sm:$0xff] %vm2104, %v1983
  %2113 = vst.msk [vmem:[%s3 + $0x40] sm:$0xff] %vm2104, %v1984
  %2114 = vst.msk [vmem:[%s3 + $0x48] sm:$0xff] %vm2104, %v1985
  %2115 = vst.msk [vmem:[%s3 + $0x50] sm:$0xff] %vm2104, %v1986
  %2116 = vst.msk [vmem:[%s3 + $0x58] sm:$0xff] %vm2104, %v1987
  %2117 = vst.msk [vmem:[%s3 + $0x60] sm:$0xff] %vm2104, %v1988
  %2118 = vst.msk [vmem:[%s3 + $0x68] sm:$0xff] %vm2104, %v1989
  %2119 = vst.msk [vmem:[%s3 + $0x70] sm:$0xff] %vm2104, %v1990
  %2120 = vst.msk [vmem:[%s3 + $0x78] sm:$0xff] %vm2104, %v1991
  %2121 = vst.msk [vmem:[%s3 + $0x80] sm:$0xff] %vm2104, %v1992
  %2122 = vst.msk [vmem:[%s3 + $0x88] sm:$0xff] %vm2104, %v1993
  %2123 = vst.msk [vmem:[%s3 + $0x90] sm:$0xff] %vm2104, %v1994
  %2124 = vst.msk [vmem:[%s3 + $0x98] sm:$0xff] %vm2104, %v1995
  %2125 = vst.msk [vmem:[%s3 + $0xa0] sm:$0xff] %vm2104, %v1996
  %2126 = vst.msk [vmem:[%s3 + $0xa8] sm:$0xff] %vm2104, %v1997
  %2127 = vst.msk [vmem:[%s3 + $0xb0] sm:$0xff] %vm2104, %v1998
  %2128 = vst.msk [vmem:[%s3 + $0xb8] sm:$0xff] %vm2104, %v1999
  %2129 = vst.msk [vmem:[%s3 + $0xc0] sm:$0xff] %vm2104, %v2000
  %2130 = vst.msk [vmem:[%s3 + $0xc8] sm:$0xff] %vm2104, %v2001
  %2131 = vst.msk [vmem:[%s3 + $0xd0] sm:$0xff] %vm2104, %v2002
  %2132 = vst.msk [vmem:[%s3 + $0xd8] sm:$0xff] %vm2104, %v2003
  %2133 = vst.msk [vmem:[%s3 + $0xe0] sm:$0xff] %vm2104, %v2004
  %2134 = vst.msk [vmem:[%s3 + $0xe8] sm:$0xff] %vm2104, %v2005
  %2135 = vst.msk [vmem:[%s3 + $0xf0] sm:$0xff] %vm2104, %v2006
  %2136 = vst.msk [vmem:[%s3 + $0xf8] sm:$0xff] %vm2104, %v2007
  %2137 = vst.msk [vmem:[%s3 + $0x100] sm:$0xff] %vm2104, %v2008
  %2138 = vst.msk [vmem:[%s3 + $0x108] sm:$0xff] %vm2104, %v2009
  %2139 = vst.msk [vmem:[%s3 + $0x110] sm:$0xff] %vm2104, %v2010
  %2140 = vst.msk [vmem:[%s3 + $0x118] sm:$0xff] %vm2104, %v2011
  %2141 = vst.msk [vmem:[%s3 + $0x120] sm:$0xff] %vm2104, %v2012
  %2142 = vst.msk [vmem:[%s3 + $0x128] sm:$0xff] %vm2104, %v2013
  %2143 = vst.msk [vmem:[%s3 + $0x130] sm:$0xff] %vm2104, %v2014
  %2144 = vst.msk [vmem:[%s3 + $0x138] sm:$0xff] %vm2104, %v2015
  %2145 = vst.msk [vmem:[%s3 + $0x140] sm:$0xff] %vm2104, %v2016
  %2146 = vst.msk [vmem:[%s3 + $0x148] sm:$0xff] %vm2104, %v2017
  %2147 = vst.msk [vmem:[%s3 + $0x150] sm:$0xff] %vm2104, %v2018
  %2148 = vst.msk [vmem:[%s3 + $0x158] sm:$0xff] %vm2104, %v2019
  %2149 = vst.msk [vmem:[%s3 + $0x160] sm:$0xff] %vm2104, %v2020
  %2150 = vst.msk [vmem:[%s3 + $0x168] sm:$0xff] %vm2104, %v2021
  %2151 = vst.msk [vmem:[%s3 + $0x170] sm:$0xff] %vm2104, %v2022
  %2152 = vst.msk [vmem:[%s3 + $0x178] sm:$0xff] %vm2104, %v2023
  %2153 = vst.msk [vmem:[%s3 + $0x180] sm:$0xff] %vm2104, %v2024
  %2154 = vst.msk [vmem:[%s3 + $0x188] sm:$0xff] %vm2104, %v2025
  %2155 = vst.msk [vmem:[%s3 + $0x190] sm:$0xff] %vm2104, %v2026
  %2156 = vst.msk [vmem:[%s3 + $0x198] sm:$0xff] %vm2104, %v2027
  %2157 = vst.msk [vmem:[%s3 + $0x1a0] sm:$0xff] %vm2104, %v2028
  %2158 = vst.msk [vmem:[%s3 + $0x1a8] sm:$0xff] %vm2104, %v2029
  %2159 = vst.msk [vmem:[%s3 + $0x1b0] sm:$0xff] %vm2104, %v2030
  %2160 = vst.msk [vmem:[%s3 + $0x1b8] sm:$0xff] %vm2104, %v2031
  %2161 = vst.msk [vmem:[%s3 + $0x1c0] sm:$0xff] %vm2104, %v2032
  %2162 = vst.msk [vmem:[%s3 + $0x1c8] sm:$0xff] %vm2104, %v2033
  %2163 = vst.msk [vmem:[%s3 + $0x1d0] sm:$0xff] %vm2104, %v2034
  %2164 = vst.msk [vmem:[%s3 + $0x1d8] sm:$0xff] %vm2104, %v2035
  %2165 = vst.msk [vmem:[%s3 + $0x1e0] sm:$0xff] %vm2104, %v2036
  %2166 = vst.msk [vmem:[%s3 + $0x1e8] sm:$0xff] %vm2104, %v2037
  %2167 = vst.msk [vmem:[%s3 + $0x1f0] sm:$0xff] %vm2104, %v2038
  %2168 = vst.msk [vmem:[%s3 + $0x1f8] sm:$0xff] %vm2104, %v2039
  %2169 = vst.msk [vmem:[%s3 + $0x200] sm:$0xff] %vm2104, %v2040
  %2170 = vst.msk [vmem:[%s3 + $0x208] sm:$0xff] %vm2104, %v2041
  %2171 = vst.msk [vmem:[%s3 + $0x210] sm:$0xff] %vm2104, %v2042
  %2172 = vst.msk [vmem:[%s3 + $0x218] sm:$0xff] %vm2104, %v2043
  %2173 = vst.msk [vmem:[%s3 + $0x220] sm:$0xff] %vm2104, %v2044
  %2174 = vst.msk [vmem:[%s3 + $0x228] sm:$0xff] %vm2104, %v2045
  %2175 = vst.msk [vmem:[%s3 + $0x230] sm:$0xff] %vm2104, %v2046
  %2176 = vst.msk [vmem:[%s3 + $0x238] sm:$0xff] %vm2104, %v2047
  %2177 = vst.msk [vmem:[%s3 + $0x240] sm:$0xff] %vm2104, %v2048
  %2178 = vst.msk [vmem:[%s3 + $0x248] sm:$0xff] %vm2104, %v2049
  %2179 = vst.msk [vmem:[%s3 + $0x250] sm:$0xff] %vm2104, %v2050
  %2180 = vst.msk [vmem:[%s3 + $0x258] sm:$0xff] %vm2104, %v2051
  %2181 = vst.msk [vmem:[%s3 + $0x260] sm:$0xff] %vm2104, %v2052
  %2182 = vst.msk [vmem:[%s3 + $0x268] sm:$0xff] %vm2104, %v2053
  %2183 = vst.msk [vmem:[%s3 + $0x270] sm:$0xff] %vm2104, %v2054
  %2184 = vst.msk [vmem:[%s3 + $0x278] sm:$0xff] %vm2104, %v2055
  %2185 = vst.msk [vmem:[%s3 + $0x280] sm:$0xff] %vm2104, %v2056
  %2186 = vst.msk [vmem:[%s3 + $0x288] sm:$0xff] %vm2104, %v2057
  %2187 = vst.msk [vmem:[%s3 + $0x290] sm:$0xff] %vm2104, %v2058
  %2188 = vst.msk [vmem:[%s3 + $0x298] sm:$0xff] %vm2104, %v2059
  %2189 = vst.msk [vmem:[%s3 + $0x2a0] sm:$0xff] %vm2104, %v2060
  %2190 = vst.msk [vmem:[%s3 + $0x2a8] sm:$0xff] %vm2104, %v2061
  %2191 = vst.msk [vmem:[%s3 + $0x2b0] sm:$0xff] %vm2104, %v2062
  %2192 = vst.msk [vmem:[%s3 + $0x2b8] sm:$0xff] %vm2104, %v2063
  %2193 = vst.msk [vmem:[%s3 + $0x2c0] sm:$0xff] %vm2104, %v2064
  %2194 = vst.msk [vmem:[%s3 + $0x2c8] sm:$0xff] %vm2104, %v2065
  %2195 = vst.msk [vmem:[%s3 + $0x2d0] sm:$0xff] %vm2104, %v2066
  %2196 = vst.msk [vmem:[%s3 + $0x2d8] sm:$0xff] %vm2104, %v2067
  %2197 = vst.msk [vmem:[%s3 + $0x2e0] sm:$0xff] %vm2104, %v2068
  %2198 = vst.msk [vmem:[%s3 + $0x2e8] sm:$0xff] %vm2104, %v2069
  %2199 = vst.msk [vmem:[%s3 + $0x2f0] sm:$0xff] %vm2104, %v2070
  %2200 = vst.msk [vmem:[%s3 + $0x2f8] sm:$0xff] %vm2104, %v2071
  %2201 = vst.msk [vmem:[%s3 + $0x300] sm:$0xff] %vm2104, %v2072
  %2202 = vst.msk [vmem:[%s3 + $0x308] sm:$0xff] %vm2104, %v2073
  %2203 = vst.msk [vmem:[%s3 + $0x310] sm:$0xff] %vm2104, %v2074
  %2204 = vst.msk [vmem:[%s3 + $0x318] sm:$0xff] %vm2104, %v2075
  %2205 = vst.msk [vmem:[%s3 + $0x320] sm:$0xff] %vm2104, %v2076
  %2206 = vst.msk [vmem:[%s3 + $0x328] sm:$0xff] %vm2104, %v2077
  %2207 = vst.msk [vmem:[%s3 + $0x330] sm:$0xff] %vm2104, %v2078
  %2208 = vst.msk [vmem:[%s3 + $0x338] sm:$0xff] %vm2104, %v2079
  %2209 = vst.msk [vmem:[%s3 + $0x340] sm:$0xff] %vm2104, %v2080
  %2210 = vst.msk [vmem:[%s3 + $0x348] sm:$0xff] %vm2104, %v2081
  %2211 = vst.msk [vmem:[%s3 + $0x350] sm:$0xff] %vm2104, %v2082
  %2212 = vst.msk [vmem:[%s3 + $0x358] sm:$0xff] %vm2104, %v2083
  %2213 = vst.msk [vmem:[%s3 + $0x360] sm:$0xff] %vm2104, %v2084
  %2214 = vst.msk [vmem:[%s3 + $0x368] sm:$0xff] %vm2104, %v2085
  %2215 = vst.msk [vmem:[%s3 + $0x370] sm:$0xff] %vm2104, %v2086
  %2216 = vst.msk [vmem:[%s3 + $0x378] sm:$0xff] %vm2104, %v2087
  %2217 = vst.msk [vmem:[%s3 + $0x380] sm:$0xff] %vm2104, %v2088
  %2218 = vst.msk [vmem:[%s3 + $0x388] sm:$0xff] %vm2104, %v2089
  %2219 = vst.msk [vmem:[%s3 + $0x390] sm:$0xff] %vm2104, %v2090
  %2220 = vst.msk [vmem:[%s3 + $0x398] sm:$0xff] %vm2104, %v2091
  %2221 = vst.msk [vmem:[%s3 + $0x3a0] sm:$0xff] %vm2104, %v2092
  %2222 = vst.msk [vmem:[%s3 + $0x3a8] sm:$0xff] %vm2104, %v2093
  %2223 = vst.msk [vmem:[%s3 + $0x3b0] sm:$0xff] %vm2104, %v2094
  %2224 = vst.msk [vmem:[%s3 + $0x3b8] sm:$0xff] %vm2104, %v2095
  %2225 = vst.msk [vmem:[%s3 + $0x3c0] sm:$0xff] %vm2104, %v2096
  %2226 = vst.msk [vmem:[%s3 + $0x3c8] sm:$0xff] %vm2104, %v2097
  %2227 = vst.msk [vmem:[%s3 + $0x3d0] sm:$0xff] %vm2104, %v2098
  %2228 = vst.msk [vmem:[%s3 + $0x3d8] sm:$0xff] %vm2104, %v2099
  %2229 = vst.msk [vmem:[%s3 + $0x3e0] sm:$0xff] %vm2104, %v2100
  %2230 = vst.msk [vmem:[%s3 + $0x3e8] sm:$0xff] %vm2104, %v2101
  %2231 = vst.msk [vmem:[%s3 + $0x3f0] sm:$0xff] %vm2104, %v2102
  %2232 = vst.msk [vmem:[%s3 + $0x3f8] sm:$0xff] %vm2104, %v2103
  // Predicated region
  $region14: #{esbn_trans_forward.5} parent=0 // pred_check
    _
  $region15: #{esbn_trans_forward.5} parent=0 // pred_check_branch
    %2234 = sbr.rel (0) target = $region17
  $region16: #{esbn_trans_forward.5} parent=0 // pred_region
    _
  $region17: #{esbn_trans_forward.5} parent=0 // pred_fallthru
    _
  // Predicated region
  $region18: #{esbn_trans_forward.5} parent=0 // pred_check
    _
  $region19: #{esbn_trans_forward.5} parent=0 // pred_check_branch
    %2236 = sbr.rel (0) target = $region21
  $region20: #{esbn_trans_forward.5} parent=0 // pred_region
    _
  $region21: #{esbn_trans_forward.5} parent=0 // pred_fallthru
    _

// kernel: esbn_trans_forward.6
$region0: #{esbn_trans_forward.6}
  #allocation0 [shape = 'u32[]', space=smem, size = 0x4, offset = 0x4, fixed_abs, tag = 'smem constant byte address 0x4 - core index']
  #allocation1 [shape = 'u32[144,128]{1,0:T(1,128)}', space=vmem, size = 0x12000, scoped, tag = 'internal scratch']
  %s0 = inlined_call_operand.vmem [shape: f32[256,512], index: 0, kind: input, shape index: {}]
  %s1 = inlined_call_operand.vmem [shape: f32[512,32], index: 1, kind: input, shape index: {}]
  %s2 = inlined_call_operand.vmem [shape: f32[1,32], index: 2, kind: input, shape index: {}]
  %s3 = inlined_call_operand.vmem [shape: f32[256,32], index: 3, kind: output, shape index: {}]
  %s4 = sld [smem:[#allocation0]]
  $region22: #{esbn_trans_forward.6} parent=0
    _
  %s6 = ssub.s32 1, %s4
  %s7 = scalar_select 0, %s6, %s4
  // Predicated region
  $region2: #{esbn_trans_forward.6} parent=0 // pred_check
    _
  $region3: #{esbn_trans_forward.6} parent=0 // pred_check_branch
    %9 = sbr.rel (0) target = $region5
  $region4: #{esbn_trans_forward.6} parent=0 // pred_region
    _
  $region5: #{esbn_trans_forward.6} parent=0 // pred_fallthru
    _
  // Predicated region
  $region6: #{esbn_trans_forward.6} parent=0 // pred_check
    _
  $region7: #{esbn_trans_forward.6} parent=0 // pred_check_branch
    %11 = sbr.rel (0) target = $region9
  $region8: #{esbn_trans_forward.6} parent=0 // pred_region
    _
  $region9: #{esbn_trans_forward.6} parent=0 // pred_fallthru
    _
  // Predicated region
  $region10: #{esbn_trans_forward.6} parent=0 // pred_check
    _
  $region11: #{esbn_trans_forward.6} parent=0 // pred_check_branch
    %13 = sbr.rel (0) target = $region13
  $region12: #{esbn_trans_forward.6} parent=0 // pred_region
    _
  $region13: #{esbn_trans_forward.6} parent=0 // pred_fallthru
    _
  %v15 = vld [vmem:[%s0] sm:$0xff]
  %v16 = vld [vmem:[%s0 + $0x8] sm:$0xff]
  %v17 = vld [vmem:[%s0 + $0x10] sm:$0xff]
  %v18 = vld [vmem:[%s0 + $0x18] sm:$0xff]
  %v19 = vld [vmem:[%s0 + $0x20] sm:$0xff]
  %v20 = vld [vmem:[%s0 + $0x28] sm:$0xff]
  %v21 = vld [vmem:[%s0 + $0x30] sm:$0xff]
  %v22 = vld [vmem:[%s0 + $0x38] sm:$0xff]
  %v23 = vld [vmem:[%s0 + $0x40] sm:$0xff]
  %v24 = vld [vmem:[%s0 + $0x48] sm:$0xff]
  %v25 = vld [vmem:[%s0 + $0x50] sm:$0xff]
  %v26 = vld [vmem:[%s0 + $0x58] sm:$0xff]
  %v27 = vld [vmem:[%s0 + $0x60] sm:$0xff]
  %v28 = vld [vmem:[%s0 + $0x68] sm:$0xff]
  %v29 = vld [vmem:[%s0 + $0x70] sm:$0xff]
  %v30 = vld [vmem:[%s0 + $0x78] sm:$0xff]
  %v31 = vld [vmem:[%s0 + $0x80] sm:$0xff]
  %v32 = vld [vmem:[%s0 + $0x88] sm:$0xff]
  %v33 = vld [vmem:[%s0 + $0x90] sm:$0xff]
  %v34 = vld [vmem:[%s0 + $0x98] sm:$0xff]
  %v35 = vld [vmem:[%s0 + $0xa0] sm:$0xff]
  %v36 = vld [vmem:[%s0 + $0xa8] sm:$0xff]
  %v37 = vld [vmem:[%s0 + $0xb0] sm:$0xff]
  %v38 = vld [vmem:[%s0 + $0xb8] sm:$0xff]
  %v39 = vld [vmem:[%s0 + $0xc0] sm:$0xff]
  %v40 = vld [vmem:[%s0 + $0xc8] sm:$0xff]
  %v41 = vld [vmem:[%s0 + $0xd0] sm:$0xff]
  %v42 = vld [vmem:[%s0 + $0xd8] sm:$0xff]
  %v43 = vld [vmem:[%s0 + $0xe0] sm:$0xff]
  %v44 = vld [vmem:[%s0 + $0xe8] sm:$0xff]
  %v45 = vld [vmem:[%s0 + $0xf0] sm:$0xff]
  %v46 = vld [vmem:[%s0 + $0xf8] sm:$0xff]
  %v47 = vld [vmem:[%s0 + $0x100] sm:$0xff]
  %v48 = vld [vmem:[%s0 + $0x108] sm:$0xff]
  %v49 = vld [vmem:[%s0 + $0x110] sm:$0xff]
  %v50 = vld [vmem:[%s0 + $0x118] sm:$0xff]
  %v51 = vld [vmem:[%s0 + $0x120] sm:$0xff]
  %v52 = vld [vmem:[%s0 + $0x128] sm:$0xff]
  %v53 = vld [vmem:[%s0 + $0x130] sm:$0xff]
  %v54 = vld [vmem:[%s0 + $0x138] sm:$0xff]
  %v55 = vld [vmem:[%s0 + $0x140] sm:$0xff]
  %v56 = vld [vmem:[%s0 + $0x148] sm:$0xff]
  %v57 = vld [vmem:[%s0 + $0x150] sm:$0xff]
  %v58 = vld [vmem:[%s0 + $0x158] sm:$0xff]
  %v59 = vld [vmem:[%s0 + $0x160] sm:$0xff]
  %v60 = vld [vmem:[%s0 + $0x168] sm:$0xff]
  %v61 = vld [vmem:[%s0 + $0x170] sm:$0xff]
  %v62 = vld [vmem:[%s0 + $0x178] sm:$0xff]
  %v63 = vld [vmem:[%s0 + $0x180] sm:$0xff]
  %v64 = vld [vmem:[%s0 + $0x188] sm:$0xff]
  %v65 = vld [vmem:[%s0 + $0x190] sm:$0xff]
  %v66 = vld [vmem:[%s0 + $0x198] sm:$0xff]
  %v67 = vld [vmem:[%s0 + $0x1a0] sm:$0xff]
  %v68 = vld [vmem:[%s0 + $0x1a8] sm:$0xff]
  %v69 = vld [vmem:[%s0 + $0x1b0] sm:$0xff]
  %v70 = vld [vmem:[%s0 + $0x1b8] sm:$0xff]
  %v71 = vld [vmem:[%s0 + $0x1c0] sm:$0xff]
  %v72 = vld [vmem:[%s0 + $0x1c8] sm:$0xff]
  %v73 = vld [vmem:[%s0 + $0x1d0] sm:$0xff]
  %v74 = vld [vmem:[%s0 + $0x1d8] sm:$0xff]
  %v75 = vld [vmem:[%s0 + $0x1e0] sm:$0xff]
  %v76 = vld [vmem:[%s0 + $0x1e8] sm:$0xff]
  %v77 = vld [vmem:[%s0 + $0x1f0] sm:$0xff]
  %v78 = vld [vmem:[%s0 + $0x1f8] sm:$0xff]
  %v79 = vld [vmem:[%s0 + $0x200] sm:$0xff]
  %v80 = vld [vmem:[%s0 + $0x208] sm:$0xff]
  %v81 = vld [vmem:[%s0 + $0x210] sm:$0xff]
  %v82 = vld [vmem:[%s0 + $0x218] sm:$0xff]
  %v83 = vld [vmem:[%s0 + $0x220] sm:$0xff]
  %v84 = vld [vmem:[%s0 + $0x228] sm:$0xff]
  %v85 = vld [vmem:[%s0 + $0x230] sm:$0xff]
  %v86 = vld [vmem:[%s0 + $0x238] sm:$0xff]
  %v87 = vld [vmem:[%s0 + $0x240] sm:$0xff]
  %v88 = vld [vmem:[%s0 + $0x248] sm:$0xff]
  %v89 = vld [vmem:[%s0 + $0x250] sm:$0xff]
  %v90 = vld [vmem:[%s0 + $0x258] sm:$0xff]
  %v91 = vld [vmem:[%s0 + $0x260] sm:$0xff]
  %v92 = vld [vmem:[%s0 + $0x268] sm:$0xff]
  %v93 = vld [vmem:[%s0 + $0x270] sm:$0xff]
  %v94 = vld [vmem:[%s0 + $0x278] sm:$0xff]
  %v95 = vld [vmem:[%s0 + $0x280] sm:$0xff]
  %v96 = vld [vmem:[%s0 + $0x288] sm:$0xff]
  %v97 = vld [vmem:[%s0 + $0x290] sm:$0xff]
  %v98 = vld [vmem:[%s0 + $0x298] sm:$0xff]
  %v99 = vld [vmem:[%s0 + $0x2a0] sm:$0xff]
  %v100 = vld [vmem:[%s0 + $0x2a8] sm:$0xff]
  %v101 = vld [vmem:[%s0 + $0x2b0] sm:$0xff]
  %v102 = vld [vmem:[%s0 + $0x2b8] sm:$0xff]
  %v103 = vld [vmem:[%s0 + $0x2c0] sm:$0xff]
  %v104 = vld [vmem:[%s0 + $0x2c8] sm:$0xff]
  %v105 = vld [vmem:[%s0 + $0x2d0] sm:$0xff]
  %v106 = vld [vmem:[%s0 + $0x2d8] sm:$0xff]
  %v107 = vld [vmem:[%s0 + $0x2e0] sm:$0xff]
  %v108 = vld [vmem:[%s0 + $0x2e8] sm:$0xff]
  %v109 = vld [vmem:[%s0 + $0x2f0] sm:$0xff]
  %v110 = vld [vmem:[%s0 + $0x2f8] sm:$0xff]
  %v111 = vld [vmem:[%s0 + $0x300] sm:$0xff]
  %v112 = vld [vmem:[%s0 + $0x308] sm:$0xff]
  %v113 = vld [vmem:[%s0 + $0x310] sm:$0xff]
  %v114 = vld [vmem:[%s0 + $0x318] sm:$0xff]
  %v115 = vld [vmem:[%s0 + $0x320] sm:$0xff]
  %v116 = vld [vmem:[%s0 + $0x328] sm:$0xff]
  %v117 = vld [vmem:[%s0 + $0x330] sm:$0xff]
  %v118 = vld [vmem:[%s0 + $0x338] sm:$0xff]
  %v119 = vld [vmem:[%s0 + $0x340] sm:$0xff]
  %v120 = vld [vmem:[%s0 + $0x348] sm:$0xff]
  %v121 = vld [vmem:[%s0 + $0x350] sm:$0xff]
  %v122 = vld [vmem:[%s0 + $0x358] sm:$0xff]
  %v123 = vld [vmem:[%s0 + $0x360] sm:$0xff]
  %v124 = vld [vmem:[%s0 + $0x368] sm:$0xff]
  %v125 = vld [vmem:[%s0 + $0x370] sm:$0xff]
  %v126 = vld [vmem:[%s0 + $0x378] sm:$0xff]
  %v127 = vld [vmem:[%s0 + $0x380] sm:$0xff]
  %v128 = vld [vmem:[%s0 + $0x388] sm:$0xff]
  %v129 = vld [vmem:[%s0 + $0x390] sm:$0xff]
  %v130 = vld [vmem:[%s0 + $0x398] sm:$0xff]
  %v131 = vld [vmem:[%s0 + $0x3a0] sm:$0xff]
  %v132 = vld [vmem:[%s0 + $0x3a8] sm:$0xff]
  %v133 = vld [vmem:[%s0 + $0x3b0] sm:$0xff]
  %v134 = vld [vmem:[%s0 + $0x3b8] sm:$0xff]
  %v135 = vld [vmem:[%s0 + $0x3c0] sm:$0xff]
  %v136 = vld [vmem:[%s0 + $0x3c8] sm:$0xff]
  %v137 = vld [vmem:[%s0 + $0x3d0] sm:$0xff]
  %v138 = vld [vmem:[%s0 + $0x3d8] sm:$0xff]
  %v139 = vld [vmem:[%s0 + $0x3e0] sm:$0xff]
  %v140 = vld [vmem:[%s0 + $0x3e8] sm:$0xff]
  %v141 = vld [vmem:[%s0 + $0x3f0] sm:$0xff]
  %v142 = vld [vmem:[%s0 + $0x3f8] sm:$0xff]
  %v143 = vpack.c.bf16 %v19, %v15
  %v144 = vpack.c.bf16 %v20, %v16
  %v145 = vpack.c.bf16 %v21, %v17
  %v146 = vpack.c.bf16 %v22, %v18
  %v147 = vpack.c.bf16 %v27, %v23
  %v148 = vpack.c.bf16 %v28, %v24
  %v149 = vpack.c.bf16 %v29, %v25
  %v150 = vpack.c.bf16 %v30, %v26
  %v151 = vpack.c.bf16 %v35, %v31
  %v152 = vpack.c.bf16 %v36, %v32
  %v153 = vpack.c.bf16 %v37, %v33
  %v154 = vpack.c.bf16 %v38, %v34
  %v155 = vpack.c.bf16 %v43, %v39
  %v156 = vpack.c.bf16 %v44, %v40
  %v157 = vpack.c.bf16 %v45, %v41
  %v158 = vpack.c.bf16 %v46, %v42
  %v159 = vpack.c.bf16 %v51, %v47
  %v160 = vpack.c.bf16 %v52, %v48
  %v161 = vpack.c.bf16 %v53, %v49
  %v162 = vpack.c.bf16 %v54, %v50
  %v163 = vpack.c.bf16 %v59, %v55
  %v164 = vpack.c.bf16 %v60, %v56
  %v165 = vpack.c.bf16 %v61, %v57
  %v166 = vpack.c.bf16 %v62, %v58
  %v167 = vpack.c.bf16 %v67, %v63
  %v168 = vpack.c.bf16 %v68, %v64
  %v169 = vpack.c.bf16 %v69, %v65
  %v170 = vpack.c.bf16 %v70, %v66
  %v171 = vpack.c.bf16 %v75, %v71
  %v172 = vpack.c.bf16 %v76, %v72
  %v173 = vpack.c.bf16 %v77, %v73
  %v174 = vpack.c.bf16 %v78, %v74
  %v175 = vpack.c.bf16 %v83, %v79
  %v176 = vpack.c.bf16 %v84, %v80
  %v177 = vpack.c.bf16 %v85, %v81
  %v178 = vpack.c.bf16 %v86, %v82
  %v179 = vpack.c.bf16 %v91, %v87
  %v180 = vpack.c.bf16 %v92, %v88
  %v181 = vpack.c.bf16 %v93, %v89
  %v182 = vpack.c.bf16 %v94, %v90
  %v183 = vpack.c.bf16 %v99, %v95
  %v184 = vpack.c.bf16 %v100, %v96
  %v185 = vpack.c.bf16 %v101, %v97
  %v186 = vpack.c.bf16 %v102, %v98
  %v187 = vpack.c.bf16 %v107, %v103
  %v188 = vpack.c.bf16 %v108, %v104
  %v189 = vpack.c.bf16 %v109, %v105
  %v190 = vpack.c.bf16 %v110, %v106
  %v191 = vpack.c.bf16 %v115, %v111
  %v192 = vpack.c.bf16 %v116, %v112
  %v193 = vpack.c.bf16 %v117, %v113
  %v194 = vpack.c.bf16 %v118, %v114
  %v195 = vpack.c.bf16 %v123, %v119
  %v196 = vpack.c.bf16 %v124, %v120
  %v197 = vpack.c.bf16 %v125, %v121
  %v198 = vpack.c.bf16 %v126, %v122
  %v199 = vpack.c.bf16 %v131, %v127
  %v200 = vpack.c.bf16 %v132, %v128
  %v201 = vpack.c.bf16 %v133, %v129
  %v202 = vpack.c.bf16 %v134, %v130
  %v203 = vpack.c.bf16 %v139, %v135
  %v204 = vpack.c.bf16 %v140, %v136
  %v205 = vpack.c.bf16 %v141, %v137
  %v206 = vpack.c.bf16 %v142, %v138
  %v207 = vld [vmem:[%s1] sm:$0xff]
  %v208 = vld [vmem:[%s1 + $0x8] sm:$0xff]
  %v209 = vld [vmem:[%s1 + $0x10] sm:$0xff]
  %v210 = vld [vmem:[%s1 + $0x18] sm:$0xff]
  %v211 = vld [vmem:[%s1 + $0x20] sm:$0xff]
  %v212 = vld [vmem:[%s1 + $0x28] sm:$0xff]
  %v213 = vld [vmem:[%s1 + $0x30] sm:$0xff]
  %v214 = vld [vmem:[%s1 + $0x38] sm:$0xff]
  %v215 = vld [vmem:[%s1 + $0x40] sm:$0xff]
  %v216 = vld [vmem:[%s1 + $0x48] sm:$0xff]
  %v217 = vld [vmem:[%s1 + $0x50] sm:$0xff]
  %v218 = vld [vmem:[%s1 + $0x58] sm:$0xff]
  %v219 = vld [vmem:[%s1 + $0x60] sm:$0xff]
  %v220 = vld [vmem:[%s1 + $0x68] sm:$0xff]
  %v221 = vld [vmem:[%s1 + $0x70] sm:$0xff]
  %v222 = vld [vmem:[%s1 + $0x78] sm:$0xff]
  %v223 = vld [vmem:[%s1 + $0x80] sm:$0xff]
  %v224 = vld [vmem:[%s1 + $0x88] sm:$0xff]
  %v225 = vld [vmem:[%s1 + $0x90] sm:$0xff]
  %v226 = vld [vmem:[%s1 + $0x98] sm:$0xff]
  %v227 = vld [vmem:[%s1 + $0xa0] sm:$0xff]
  %v228 = vld [vmem:[%s1 + $0xa8] sm:$0xff]
  %v229 = vld [vmem:[%s1 + $0xb0] sm:$0xff]
  %v230 = vld [vmem:[%s1 + $0xb8] sm:$0xff]
  %v231 = vld [vmem:[%s1 + $0xc0] sm:$0xff]
  %v232 = vld [vmem:[%s1 + $0xc8] sm:$0xff]
  %v233 = vld [vmem:[%s1 + $0xd0] sm:$0xff]
  %v234 = vld [vmem:[%s1 + $0xd8] sm:$0xff]
  %v235 = vld [vmem:[%s1 + $0xe0] sm:$0xff]
  %v236 = vld [vmem:[%s1 + $0xe8] sm:$0xff]
  %v237 = vld [vmem:[%s1 + $0xf0] sm:$0xff]
  %v238 = vld [vmem:[%s1 + $0xf8] sm:$0xff]
  %v239 = vld [vmem:[%s1 + $0x100] sm:$0xff]
  %v240 = vld [vmem:[%s1 + $0x108] sm:$0xff]
  %v241 = vld [vmem:[%s1 + $0x110] sm:$0xff]
  %v242 = vld [vmem:[%s1 + $0x118] sm:$0xff]
  %v243 = vld [vmem:[%s1 + $0x120] sm:$0xff]
  %v244 = vld [vmem:[%s1 + $0x128] sm:$0xff]
  %v245 = vld [vmem:[%s1 + $0x130] sm:$0xff]
  %v246 = vld [vmem:[%s1 + $0x138] sm:$0xff]
  %v247 = vld [vmem:[%s1 + $0x140] sm:$0xff]
  %v248 = vld [vmem:[%s1 + $0x148] sm:$0xff]
  %v249 = vld [vmem:[%s1 + $0x150] sm:$0xff]
  %v250 = vld [vmem:[%s1 + $0x158] sm:$0xff]
  %v251 = vld [vmem:[%s1 + $0x160] sm:$0xff]
  %v252 = vld [vmem:[%s1 + $0x168] sm:$0xff]
  %v253 = vld [vmem:[%s1 + $0x170] sm:$0xff]
  %v254 = vld [vmem:[%s1 + $0x178] sm:$0xff]
  %v255 = vld [vmem:[%s1 + $0x180] sm:$0xff]
  %v256 = vld [vmem:[%s1 + $0x188] sm:$0xff]
  %v257 = vld [vmem:[%s1 + $0x190] sm:$0xff]
  %v258 = vld [vmem:[%s1 + $0x198] sm:$0xff]
  %v259 = vld [vmem:[%s1 + $0x1a0] sm:$0xff]
  %v260 = vld [vmem:[%s1 + $0x1a8] sm:$0xff]
  %v261 = vld [vmem:[%s1 + $0x1b0] sm:$0xff]
  %v262 = vld [vmem:[%s1 + $0x1b8] sm:$0xff]
  %v263 = vld [vmem:[%s1 + $0x1c0] sm:$0xff]
  %v264 = vld [vmem:[%s1 + $0x1c8] sm:$0xff]
  %v265 = vld [vmem:[%s1 + $0x1d0] sm:$0xff]
  %v266 = vld [vmem:[%s1 + $0x1d8] sm:$0xff]
  %v267 = vld [vmem:[%s1 + $0x1e0] sm:$0xff]
  %v268 = vld [vmem:[%s1 + $0x1e8] sm:$0xff]
  %v269 = vld [vmem:[%s1 + $0x1f0] sm:$0xff]
  %v270 = vld [vmem:[%s1 + $0x1f8] sm:$0xff]
  %v271 = vpack.c.bf16 %v208, %v207
  %v272 = vpack.c.bf16 %v210, %v209
  %v273 = vpack.c.bf16 %v212, %v211
  %v274 = vpack.c.bf16 %v214, %v213
  %v275 = vpack.c.bf16 %v216, %v215
  %v276 = vpack.c.bf16 %v218, %v217
  %v277 = vpack.c.bf16 %v220, %v219
  %v278 = vpack.c.bf16 %v222, %v221
  %v279 = vpack.c.bf16 %v224, %v223
  %v280 = vpack.c.bf16 %v226, %v225
  %v281 = vpack.c.bf16 %v228, %v227
  %v282 = vpack.c.bf16 %v230, %v229
  %v283 = vpack.c.bf16 %v232, %v231
  %v284 = vpack.c.bf16 %v234, %v233
  %v285 = vpack.c.bf16 %v236, %v235
  %v286 = vpack.c.bf16 %v238, %v237
  %v287 = vpack.c.bf16 %v240, %v239
  %v288 = vpack.c.bf16 %v242, %v241
  %v289 = vpack.c.bf16 %v244, %v243
  %v290 = vpack.c.bf16 %v246, %v245
  %v291 = vpack.c.bf16 %v248, %v247
  %v292 = vpack.c.bf16 %v250, %v249
  %v293 = vpack.c.bf16 %v252, %v251
  %v294 = vpack.c.bf16 %v254, %v253
  %v295 = vpack.c.bf16 %v256, %v255
  %v296 = vpack.c.bf16 %v258, %v257
  %v297 = vpack.c.bf16 %v260, %v259
  %v298 = vpack.c.bf16 %v262, %v261
  %v299 = vpack.c.bf16 %v264, %v263
  %v300 = vpack.c.bf16 %v266, %v265
  %v301 = vpack.c.bf16 %v268, %v267
  %v302 = vpack.c.bf16 %v270, %v269
  %v303 = vld [vmem:[%s2] sm:$0x1]
  %v305 = vlaneseq
  %v306 = vshrl.u32 %v305, 7
  %v307 = vsub.s32 0, %v306
  %v308 = vrot.slane %v303, %v307
  %310 = vmatprep.subr.bf16.mxu0 0
  %311 = vmatpush1.bf16.msra.mxu0 %v271
  %312 = vmatprep.subr.bf16.mxu0 0
  %313 = vmatpush1.bf16.msra.mxu0 %v272
  %314 = vmatprep.subr.bf16.mxu0 0
  %315 = vmatpush1.bf16.msra.mxu0 %v273
  %316 = vmatprep.subr.bf16.mxu0 0
  %317 = vmatpush1.bf16.msra.mxu0 %v274
  %318 = vmatprep.subr.bf16.mxu0 0
  %319 = vmatpush1.bf16.msra.mxu0 %v275
  %320 = vmatprep.subr.bf16.mxu0 0
  %321 = vmatpush1.bf16.msra.mxu0 %v276
  %322 = vmatprep.subr.bf16.mxu0 0
  %323 = vmatpush1.bf16.msra.mxu0 %v277
  %324 = vmatprep.subr.bf16.mxu0 0
  %325 = vmatpush1.bf16.msra.mxu0 %v278
  %326 = vmatprep.subr.bf16.mxu0 0
  %327 = vmatpush1.bf16.msra.mxu0 %v279
  %328 = vmatprep.subr.bf16.mxu0 0
  %329 = vmatpush1.bf16.msra.mxu0 %v280
  %330 = vmatprep.subr.bf16.mxu0 0
  %331 = vmatpush1.bf16.msra.mxu0 %v281
  %332 = vmatprep.subr.bf16.mxu0 0
  %333 = vmatpush1.bf16.msra.mxu0 %v282
  %334 = vmatprep.subr.bf16.mxu0 0
  %335 = vmatpush1.bf16.msra.mxu0 %v283
  %336 = vmatprep.subr.bf16.mxu0 0
  %337 = vmatpush1.bf16.msra.mxu0 %v284
  %338 = vmatprep.subr.bf16.mxu0 0
  %339 = vmatpush1.bf16.msra.mxu0 %v285
  %340 = vmatprep.subr.bf16.mxu0 0
  %341 = vmatpush1.bf16.msra.mxu0 %v286
  %342 = vmatprep.mubr.bf16.mxu0 %v144
  %343 = vmatmul.mubr.bf16.gmra.mrb[0].mxu0 %v143
  %v344 = vpop.f32.mrb[0].mxu0
  %v345 = vadd.f32 %v308, %v344
  %v346 = vpop.f32.mrb[0].mxu0
  %v347 = vpop.f32.mrb[0].mxu0
  %v348 = vadd.f32 %v308, %v347
  %v349 = vpop.f32.mrb[0].mxu0
  %350 = vmatprep.mubr.bf16.mxu0 %v148
  %351 = vmatmul.mubr.bf16.gmra.mrb[0].mxu0 %v147
  %v352 = vpop.f32.mrb[0].mxu0
  %v353 = vadd.f32 %v308, %v352
  %v354 = vpop.f32.mrb[0].mxu0
  %v355 = vpop.f32.mrb[0].mxu0
  %v356 = vadd.f32 %v308, %v355
  %v357 = vpop.f32.mrb[0].mxu0
  %358 = vmatprep.mubr.bf16.mxu0 %v152
  %359 = vmatmul.mubr.bf16.gmra.mrb[0].mxu0 %v151
  %v360 = vpop.f32.mrb[0].mxu0
  %v361 = vadd.f32 %v308, %v360
  %v362 = vpop.f32.mrb[0].mxu0
  %v363 = vpop.f32.mrb[0].mxu0
  %v364 = vadd.f32 %v308, %v363
  %v365 = vpop.f32.mrb[0].mxu0
  %366 = vmatprep.mubr.bf16.mxu0 %v156
  %367 = vmatmul.mubr.bf16.gmra.mrb[0].mxu0 %v155
  %v368 = vpop.f32.mrb[0].mxu0
  %v369 = vadd.f32 %v308, %v368
  %v370 = vpop.f32.mrb[0].mxu0
  %v371 = vpop.f32.mrb[0].mxu0
  %v372 = vadd.f32 %v308, %v371
  %v373 = vpop.f32.mrb[0].mxu0
  %374 = vmatprep.mubr.bf16.mxu0 %v160
  %375 = vmatmul.mubr.bf16.gmra.mrb[0].mxu0 %v159
  %v376 = vpop.f32.mrb[0].mxu0
  %v377 = vadd.f32 %v308, %v376
  %v378 = vpop.f32.mrb[0].mxu0
  %v379 = vpop.f32.mrb[0].mxu0
  %v380 = vadd.f32 %v308, %v379
  %v381 = vpop.f32.mrb[0].mxu0
  %382 = vmatprep.mubr.bf16.mxu0 %v164
  %383 = vmatmul.mubr.bf16.gmra.mrb[0].mxu0 %v163
  %v384 = vpop.f32.mrb[0].mxu0
  %v385 = vadd.f32 %v308, %v384
  %v386 = vpop.f32.mrb[0].mxu0
  %v387 = vpop.f32.mrb[0].mxu0
  %v388 = vadd.f32 %v308, %v387
  %v389 = vpop.f32.mrb[0].mxu0
  %390 = vmatprep.mubr.bf16.mxu0 %v168
  %391 = vmatmul.mubr.bf16.gmra.mrb[0].mxu0 %v167
  %v392 = vpop.f32.mrb[0].mxu0
  %v393 = vadd.f32 %v308, %v392
  %v394 = vpop.f32.mrb[0].mxu0
  %v395 = vpop.f32.mrb[0].mxu0
  %v396 = vadd.f32 %v308, %v395
  %v397 = vpop.f32.mrb[0].mxu0
  %398 = vmatprep.mubr.bf16.mxu0 %v172
  %399 = vmatmul.mubr.bf16.gmra.mrb[0].mxu0 %v171
  %v400 = vpop.f32.mrb[0].mxu0
  %v401 = vadd.f32 %v308, %v400
  %v402 = vpop.f32.mrb[0].mxu0
  %v403 = vpop.f32.mrb[0].mxu0
  %v404 = vadd.f32 %v308, %v403
  %v405 = vpop.f32.mrb[0].mxu0
  %406 = vmatprep.mubr.bf16.mxu0 %v176
  %407 = vmatmul.mubr.bf16.gmra.mrb[0].mxu0 %v175
  %v408 = vpop.f32.mrb[0].mxu0
  %v409 = vadd.f32 %v308, %v408
  %v410 = vpop.f32.mrb[0].mxu0
  %v411 = vpop.f32.mrb[0].mxu0
  %v412 = vadd.f32 %v308, %v411
  %v413 = vpop.f32.mrb[0].mxu0
  %414 = vmatprep.mubr.bf16.mxu0 %v180
  %415 = vmatmul.mubr.bf16.gmra.mrb[0].mxu0 %v179
  %v416 = vpop.f32.mrb[0].mxu0
  %v417 = vadd.f32 %v308, %v416
  %v418 = vpop.f32.mrb[0].mxu0
  %v419 = vpop.f32.mrb[0].mxu0
  %v420 = vadd.f32 %v308, %v419
  %v421 = vpop.f32.mrb[0].mxu0
  %422 = vmatprep.mubr.bf16.mxu0 %v184
  %423 = vmatmul.mubr.bf16.gmra.mrb[0].mxu0 %v183
  %v424 = vpop.f32.mrb[0].mxu0
  %v425 = vadd.f32 %v308, %v424
  %v426 = vpop.f32.mrb[0].mxu0
  %v427 = vpop.f32.mrb[0].mxu0
  %v428 = vadd.f32 %v308, %v427
  %v429 = vpop.f32.mrb[0].mxu0
  %430 = vmatprep.mubr.bf16.mxu0 %v188
  %431 = vmatmul.mubr.bf16.gmra.mrb[0].mxu0 %v187
  %v432 = vpop.f32.mrb[0].mxu0
  %v433 = vadd.f32 %v308, %v432
  %v434 = vpop.f32.mrb[0].mxu0
  %v435 = vpop.f32.mrb[0].mxu0
  %v436 = vadd.f32 %v308, %v435
  %v437 = vpop.f32.mrb[0].mxu0
  %438 = vmatprep.mubr.bf16.mxu0 %v192
  %439 = vmatmul.mubr.bf16.gmra.mrb[0].mxu0 %v191
  %v440 = vpop.f32.mrb[0].mxu0
  %v441 = vadd.f32 %v308, %v440
  %v442 = vpop.f32.mrb[0].mxu0
  %v443 = vpop.f32.mrb[0].mxu0
  %v444 = vadd.f32 %v308, %v443
  %v445 = vpop.f32.mrb[0].mxu0
  %446 = vmatprep.mubr.bf16.mxu0 %v196
  %447 = vmatmul.mubr.bf16.gmra.mrb[0].mxu0 %v195
  %v448 = vpop.f32.mrb[0].mxu0
  %v449 = vadd.f32 %v308, %v448
  %v450 = vpop.f32.mrb[0].mxu0
  %v451 = vpop.f32.mrb[0].mxu0
  %v452 = vadd.f32 %v308, %v451
  %v453 = vpop.f32.mrb[0].mxu0
  %454 = vmatprep.mubr.bf16.mxu0 %v200
  %455 = vmatmul.mubr.bf16.gmra.mrb[0].mxu0 %v199
  %v456 = vpop.f32.mrb[0].mxu0
  %v457 = vadd.f32 %v308, %v456
  %v458 = vpop.f32.mrb[0].mxu0
  %v459 = vpop.f32.mrb[0].mxu0
  %v460 = vadd.f32 %v308, %v459
  %v461 = vpop.f32.mrb[0].mxu0
  %462 = vmatprep.mubr.bf16.mxu0 %v204
  %463 = vmatmul.mubr.bf16.gmra.mrb[0].mxu0 %v203
  %v464 = vpop.f32.mrb[0].mxu0
  %v465 = vadd.f32 %v308, %v464
  %v466 = vpop.f32.mrb[0].mxu0
  %v467 = vpop.f32.mrb[0].mxu0
  %v468 = vadd.f32 %v308, %v467
  %v469 = vpop.f32.mrb[0].mxu0
  %470 = vdwg.mxu0
  %471 = vmatprep.subr.bf16.mxu0 0
  %472 = vmatpush1.bf16.msra.mxu0 %v287
  %473 = vmatprep.subr.bf16.mxu0 0
  %474 = vmatpush1.bf16.msra.mxu0 %v288
  %475 = vmatprep.subr.bf16.mxu0 0
  %476 = vmatpush1.bf16.msra.mxu0 %v289
  %477 = vmatprep.subr.bf16.mxu0 0
  %478 = vmatpush1.bf16.msra.mxu0 %v290
  %479 = vmatprep.subr.bf16.mxu0 0
  %480 = vmatpush1.bf16.msra.mxu0 %v291
  %481 = vmatprep.subr.bf16.mxu0 0
  %482 = vmatpush1.bf16.msra.mxu0 %v292
  %483 = vmatprep.subr.bf16.mxu0 0
  %484 = vmatpush1.bf16.msra.mxu0 %v293
  %485 = vmatprep.subr.bf16.mxu0 0
  %486 = vmatpush1.bf16.msra.mxu0 %v294
  %487 = vmatprep.subr.bf16.mxu0 0
  %488 = vmatpush1.bf16.msra.mxu0 %v295
  %489 = vmatprep.subr.bf16.mxu0 0
  %490 = vmatpush1.bf16.msra.mxu0 %v296
  %491 = vmatprep.subr.bf16.mxu0 0
  %492 = vmatpush1.bf16.msra.mxu0 %v297
  %493 = vmatprep.subr.bf16.mxu0 0
  %494 = vmatpush1.bf16.msra.mxu0 %v298
  %495 = vmatprep.subr.bf16.mxu0 0
  %496 = vmatpush1.bf16.msra.mxu0 %v299
  %497 = vmatprep.subr.bf16.mxu0 0
  %498 = vmatpush1.bf16.msra.mxu0 %v300
  %499 = vmatprep.subr.bf16.mxu0 0
  %500 = vmatpush1.bf16.msra.mxu0 %v301
  %501 = vmatprep.subr.bf16.mxu0 0
  %502 = vmatpush1.bf16.msra.mxu0 %v302
  %503 = vmatprep.mubr.bf16.mxu0 %v146
  %504 = vmatmul.mubr.bf16.gmra.mrb[0].mxu0 %v145
  %v505 = vpop.f32.mrb[0].mxu0
  %v506 = vadd.f32 %v345, %v505
  %v507 = vpop.f32.mrb[0].mxu0
  %v508 = vpop.f32.mrb[0].mxu0
  %v509 = vadd.f32 %v348, %v508
  %v510 = vpop.f32.mrb[0].mxu0
  %511 = vmatprep.mubr.bf16.mxu0 %v150
  %512 = vmatmul.mubr.bf16.gmra.mrb[0].mxu0 %v149
  %v513 = vpop.f32.mrb[0].mxu0
  %v514 = vadd.f32 %v353, %v513
  %v515 = vpop.f32.mrb[0].mxu0
  %v516 = vpop.f32.mrb[0].mxu0
  %v517 = vadd.f32 %v356, %v516
  %v518 = vpop.f32.mrb[0].mxu0
  %519 = vmatprep.mubr.bf16.mxu0 %v154
  %520 = vmatmul.mubr.bf16.gmra.mrb[0].mxu0 %v153
  %v521 = vpop.f32.mrb[0].mxu0
  %v522 = vadd.f32 %v361, %v521
  %v523 = vpop.f32.mrb[0].mxu0
  %v524 = vpop.f32.mrb[0].mxu0
  %v525 = vadd.f32 %v364, %v524
  %v526 = vpop.f32.mrb[0].mxu0
  %527 = vmatprep.mubr.bf16.mxu0 %v158
  %528 = vmatmul.mubr.bf16.gmra.mrb[0].mxu0 %v157
  %v529 = vpop.f32.mrb[0].mxu0
  %v530 = vadd.f32 %v369, %v529
  %v531 = vpop.f32.mrb[0].mxu0
  %v532 = vpop.f32.mrb[0].mxu0
  %v533 = vadd.f32 %v372, %v532
  %v534 = vpop.f32.mrb[0].mxu0
  %535 = vmatprep.mubr.bf16.mxu0 %v162
  %536 = vmatmul.mubr.bf16.gmra.mrb[0].mxu0 %v161
  %v537 = vpop.f32.mrb[0].mxu0
  %v538 = vadd.f32 %v377, %v537
  %v539 = vpop.f32.mrb[0].mxu0
  %v540 = vpop.f32.mrb[0].mxu0
  %v541 = vadd.f32 %v380, %v540
  %v542 = vpop.f32.mrb[0].mxu0
  %543 = vmatprep.mubr.bf16.mxu0 %v166
  %544 = vmatmul.mubr.bf16.gmra.mrb[0].mxu0 %v165
  %v545 = vpop.f32.mrb[0].mxu0
  %v546 = vadd.f32 %v385, %v545
  %v547 = vpop.f32.mrb[0].mxu0
  %v548 = vpop.f32.mrb[0].mxu0
  %v549 = vadd.f32 %v388, %v548
  %v550 = vpop.f32.mrb[0].mxu0
  %551 = vmatprep.mubr.bf16.mxu0 %v170
  %552 = vmatmul.mubr.bf16.gmra.mrb[0].mxu0 %v169
  %v553 = vpop.f32.mrb[0].mxu0
  %v554 = vadd.f32 %v393, %v553
  %v555 = vpop.f32.mrb[0].mxu0
  %v556 = vpop.f32.mrb[0].mxu0
  %v557 = vadd.f32 %v396, %v556
  %v558 = vpop.f32.mrb[0].mxu0
  %559 = vmatprep.mubr.bf16.mxu0 %v174
  %560 = vmatmul.mubr.bf16.gmra.mrb[0].mxu0 %v173
  %v561 = vpop.f32.mrb[0].mxu0
  %v562 = vadd.f32 %v401, %v561
  %v563 = vpop.f32.mrb[0].mxu0
  %v564 = vpop.f32.mrb[0].mxu0
  %v565 = vadd.f32 %v404, %v564
  %v566 = vpop.f32.mrb[0].mxu0
  %567 = vmatprep.mubr.bf16.mxu0 %v178
  %568 = vmatmul.mubr.bf16.gmra.mrb[0].mxu0 %v177
  %v569 = vpop.f32.mrb[0].mxu0
  %v570 = vadd.f32 %v409, %v569
  %v571 = vpop.f32.mrb[0].mxu0
  %v572 = vpop.f32.mrb[0].mxu0
  %v573 = vadd.f32 %v412, %v572
  %v574 = vpop.f32.mrb[0].mxu0
  %575 = vmatprep.mubr.bf16.mxu0 %v182
  %576 = vmatmul.mubr.bf16.gmra.mrb[0].mxu0 %v181
  %v577 = vpop.f32.mrb[0].mxu0
  %v578 = vadd.f32 %v417, %v577
  %v579 = vpop.f32.mrb[0].mxu0
  %v580 = vpop.f32.mrb[0].mxu0
  %v581 = vadd.f32 %v420, %v580
  %v582 = vpop.f32.mrb[0].mxu0
  %583 = vmatprep.mubr.bf16.mxu0 %v186
  %584 = vmatmul.mubr.bf16.gmra.mrb[0].mxu0 %v185
  %v585 = vpop.f32.mrb[0].mxu0
  %v586 = vadd.f32 %v425, %v585
  %v587 = vpop.f32.mrb[0].mxu0
  %v588 = vpop.f32.mrb[0].mxu0
  %v589 = vadd.f32 %v428, %v588
  %v590 = vpop.f32.mrb[0].mxu0
  %591 = vmatprep.mubr.bf16.mxu0 %v190
  %592 = vmatmul.mubr.bf16.gmra.mrb[0].mxu0 %v189
  %v593 = vpop.f32.mrb[0].mxu0
  %v594 = vadd.f32 %v433, %v593
  %v595 = vpop.f32.mrb[0].mxu0
  %v596 = vpop.f32.mrb[0].mxu0
  %v597 = vadd.f32 %v436, %v596
  %v598 = vpop.f32.mrb[0].mxu0
  %599 = vmatprep.mubr.bf16.mxu0 %v194
  %600 = vmatmul.mubr.bf16.gmra.mrb[0].mxu0 %v193
  %v601 = vpop.f32.mrb[0].mxu0
  %v602 = vadd.f32 %v441, %v601
  %v603 = vpop.f32.mrb[0].mxu0
  %v604 = vpop.f32.mrb[0].mxu0
  %v605 = vadd.f32 %v444, %v604
  %v606 = vpop.f32.mrb[0].mxu0
  %607 = vmatprep.mubr.bf16.mxu0 %v198
  %608 = vmatmul.mubr.bf16.gmra.mrb[0].mxu0 %v197
  %v609 = vpop.f32.mrb[0].mxu0
  %v610 = vadd.f32 %v449, %v609
  %v611 = vpop.f32.mrb[0].mxu0
  %v612 = vpop.f32.mrb[0].mxu0
  %v613 = vadd.f32 %v452, %v612
  %v614 = vpop.f32.mrb[0].mxu0
  %615 = vmatprep.mubr.bf16.mxu0 %v202
  %616 = vmatmul.mubr.bf16.gmra.mrb[0].mxu0 %v201
  %v617 = vpop.f32.mrb[0].mxu0
  %v618 = vadd.f32 %v457, %v617
  %v619 = vpop.f32.mrb[0].mxu0
  %v620 = vpop.f32.mrb[0].mxu0
  %v621 = vadd.f32 %v460, %v620
  %v622 = vpop.f32.mrb[0].mxu0
  %623 = vmatprep.mubr.bf16.mxu0 %v206
  %624 = vmatmul.mubr.bf16.gmra.mrb[0].mxu0 %v205
  %v625 = vpop.f32.mrb[0].mxu0
  %v626 = vadd.f32 %v465, %v625
  %v627 = vpop.f32.mrb[0].mxu0
  %v628 = vpop.f32.mrb[0].mxu0
  %v629 = vadd.f32 %v468, %v628
  %v630 = vpop.f32.mrb[0].mxu0
  %631 = vdwg.mxu0
  %v632 = vmax.f32 %v506, 0.0
  %v633 = vmax.f32 %v509, 0.0
  %v634 = vmax.f32 %v514, 0.0
  %v635 = vmax.f32 %v517, 0.0
  %v636 = vmax.f32 %v522, 0.0
  %v637 = vmax.f32 %v525, 0.0
  %v638 = vmax.f32 %v530, 0.0
  %v639 = vmax.f32 %v533, 0.0
  %v640 = vmax.f32 %v538, 0.0
  %v641 = vmax.f32 %v541, 0.0
  %v642 = vmax.f32 %v546, 0.0
  %v643 = vmax.f32 %v549, 0.0
  %v644 = vmax.f32 %v554, 0.0
  %v645 = vmax.f32 %v557, 0.0
  %v646 = vmax.f32 %v562, 0.0
  %v647 = vmax.f32 %v565, 0.0
  %v648 = vmax.f32 %v570, 0.0
  %v649 = vmax.f32 %v573, 0.0
  %v650 = vmax.f32 %v578, 0.0
  %v651 = vmax.f32 %v581, 0.0
  %v652 = vmax.f32 %v586, 0.0
  %v653 = vmax.f32 %v589, 0.0
  %v654 = vmax.f32 %v594, 0.0
  %v655 = vmax.f32 %v597, 0.0
  %v656 = vmax.f32 %v602, 0.0
  %v657 = vmax.f32 %v605, 0.0
  %v658 = vmax.f32 %v610, 0.0
  %v659 = vmax.f32 %v613, 0.0
  %v660 = vmax.f32 %v618, 0.0
  %v661 = vmax.f32 %v621, 0.0
  %v662 = vmax.f32 %v626, 0.0
  %v663 = vmax.f32 %v629, 0.0
  %vm664 = vcmask 261120
  %665 = vst.msk [vmem:[%s3] sm:$0xff] %vm664, %v632
  %666 = vst.msk [vmem:[%s3 + $0x8] sm:$0xff] %vm664, %v633
  %667 = vst.msk [vmem:[%s3 + $0x10] sm:$0xff] %vm664, %v634
  %668 = vst.msk [vmem:[%s3 + $0x18] sm:$0xff] %vm664, %v635
  %669 = vst.msk [vmem:[%s3 + $0x20] sm:$0xff] %vm664, %v636
  %670 = vst.msk [vmem:[%s3 + $0x28] sm:$0xff] %vm664, %v637
  %671 = vst.msk [vmem:[%s3 + $0x30] sm:$0xff] %vm664, %v638
  %672 = vst.msk [vmem:[%s3 + $0x38] sm:$0xff] %vm664, %v639
  %673 = vst.msk [vmem:[%s3 + $0x40] sm:$0xff] %vm664, %v640
  %674 = vst.msk [vmem:[%s3 + $0x48] sm:$0xff] %vm664, %v641
  %675 = vst.msk [vmem:[%s3 + $0x50] sm:$0xff] %vm664, %v642
  %676 = vst.msk [vmem:[%s3 + $0x58] sm:$0xff] %vm664, %v643
  %677 = vst.msk [vmem:[%s3 + $0x60] sm:$0xff] %vm664, %v644
  %678 = vst.msk [vmem:[%s3 + $0x68] sm:$0xff] %vm664, %v645
  %679 = vst.msk [vmem:[%s3 + $0x70] sm:$0xff] %vm664, %v646
  %680 = vst.msk [vmem:[%s3 + $0x78] sm:$0xff] %vm664, %v647
  %681 = vst.msk [vmem:[%s3 + $0x80] sm:$0xff] %vm664, %v648
  %682 = vst.msk [vmem:[%s3 + $0x88] sm:$0xff] %vm664, %v649
  %683 = vst.msk [vmem:[%s3 + $0x90] sm:$0xff] %vm664, %v650
  %684 = vst.msk [vmem:[%s3 + $0x98] sm:$0xff] %vm664, %v651
  %685 = vst.msk [vmem:[%s3 + $0xa0] sm:$0xff] %vm664, %v652
  %686 = vst.msk [vmem:[%s3 + $0xa8] sm:$0xff] %vm664, %v653
  %687 = vst.msk [vmem:[%s3 + $0xb0] sm:$0xff] %vm664, %v654
  %688 = vst.msk [vmem:[%s3 + $0xb8] sm:$0xff] %vm664, %v655
  %689 = vst.msk [vmem:[%s3 + $0xc0] sm:$0xff] %vm664, %v656
  %690 = vst.msk [vmem:[%s3 + $0xc8] sm:$0xff] %vm664, %v657
  %691 = vst.msk [vmem:[%s3 + $0xd0] sm:$0xff] %vm664, %v658
  %692 = vst.msk [vmem:[%s3 + $0xd8] sm:$0xff] %vm664, %v659
  %693 = vst.msk [vmem:[%s3 + $0xe0] sm:$0xff] %vm664, %v660
  %694 = vst.msk [vmem:[%s3 + $0xe8] sm:$0xff] %vm664, %v661
  %695 = vst.msk [vmem:[%s3 + $0xf0] sm:$0xff] %vm664, %v662
  %696 = vst.msk [vmem:[%s3 + $0xf8] sm:$0xff] %vm664, %v663
  // Predicated region
  $region14: #{esbn_trans_forward.6} parent=0 // pred_check
    _
  $region15: #{esbn_trans_forward.6} parent=0 // pred_check_branch
    %698 = sbr.rel (0) target = $region17
  $region16: #{esbn_trans_forward.6} parent=0 // pred_region
    _
  $region17: #{esbn_trans_forward.6} parent=0 // pred_fallthru
    _
  // Predicated region
  $region18: #{esbn_trans_forward.6} parent=0 // pred_check
    _
  $region19: #{esbn_trans_forward.6} parent=0 // pred_check_branch
    %700 = sbr.rel (0) target = $region21
  $region20: #{esbn_trans_forward.6} parent=0 // pred_region
    _
  $region21: #{esbn_trans_forward.6} parent=0 // pred_fallthru
    _

// kernel: esbn_trans_forward.7
$region0: #{esbn_trans_forward.7}
  #allocation0 [shape = 'u32[]', space=smem, size = 0x4, offset = 0x4, fixed_abs, tag = 'smem constant byte address 0x4 - core index']
  #allocation1 [shape = 'u32[144,128]{1,0:T(1,128)}', space=vmem, size = 0x12000, scoped, tag = 'internal scratch']
  %s0 = inlined_call_operand.vmem [shape: f32[16,512], index: 0, kind: input, shape index: {}]
  %s1 = inlined_call_operand.vmem [shape: f32[512,256], index: 1, kind: input, shape index: {}]
  %s2 = inlined_call_operand.vmem [shape: f32[1,256], index: 2, kind: input, shape index: {}]
  %s3 = inlined_call_operand.vmem [shape: f32[256,128], index: 3, kind: input, shape index: {}]
  %s4 = inlined_call_operand.vmem [shape: f32[1,128], index: 4, kind: input, shape index: {}]
  %s5 = inlined_call_operand.vmem [shape: f32[1,128], index: 5, kind: input, shape index: {}]
  %s6 = inlined_call_operand.vmem [shape: f32[1,128], index: 6, kind: input, shape index: {}]
  %s7 = inlined_call_operand.vmem [shape: f32[8,128], index: 7, kind: input, shape index: {}]
  %s8 = inlined_call_operand.vmem [shape: f32[128,384], index: 8, kind: input, shape index: {}]
  %s9 = inlined_call_operand.vmem [shape: f32[1,384], index: 9, kind: input, shape index: {}]
  %s10 = inlined_call_operand.vmem [shape: f32[128,128], index: 10, kind: input, shape index: {}]
  %s11 = inlined_call_operand.vmem [shape: f32[1,128], index: 11, kind: input, shape index: {}]
  %s12 = inlined_call_operand.vmem [shape: f32[1,128], index: 12, kind: input, shape index: {}]
  %s13 = inlined_call_operand.vmem [shape: f32[1,128], index: 13, kind: input, shape index: {}]
  %s14 = inlined_call_operand.vmem [shape: f32[128,512], index: 14, kind: input, shape index: {}]
  %s15 = inlined_call_operand.vmem [shape: f32[1,512], index: 15, kind: input, shape index: {}]
  %s16 = inlined_call_operand.vmem [shape: f32[512,128], index: 16, kind: input, shape index: {}]
  %s17 = inlined_call_operand.vmem [shape: f32[1,128], index: 17, kind: input, shape index: {}]
  %s18 = inlined_call_operand.vmem [shape: f32[1,128], index: 18, kind: input, shape index: {}]
  %s19 = inlined_call_operand.vmem [shape: f32[1,128], index: 19, kind: input, shape index: {}]
  %s20 = inlined_call_operand.vmem [shape: f32[1,128], index: 20, kind: input, shape index: {}]
  %s21 = inlined_call_operand.vmem [shape: f32[1,128], index: 21, kind: input, shape index: {}]
  %s22 = inlined_call_operand.vmem [shape: f32[128,4], index: 22, kind: input, shape index: {}]
  %s23 = inlined_call_operand.vmem [shape: f32[1,4], index: 23, kind: input, shape index: {}]
  %s24 = inlined_call_operand.vmem [shape: f32[2,4], index: 24, kind: output, shape index: {}]
  %s25 = sld [smem:[#allocation0]]
  $region106: #{esbn_trans_forward.7} parent=0
    _
  %s27 = ssub.s32 1, %s25
  %s28 = scalar_select 0, %s27, %s25
  // Predicated region
  $region2: #{esbn_trans_forward.7} parent=0 // pred_check
    _
  $region3: #{esbn_trans_forward.7} parent=0 // pred_check_branch
    %30 = sbr.rel (0) target = $region5
  $region4: #{esbn_trans_forward.7} parent=0 // pred_region
    _
  $region5: #{esbn_trans_forward.7} parent=0 // pred_fallthru
    _
  // Predicated region
  $region6: #{esbn_trans_forward.7} parent=0 // pred_check
    _
  $region7: #{esbn_trans_forward.7} parent=0 // pred_check_branch
    %32 = sbr.rel (0) target = $region9
  $region8: #{esbn_trans_forward.7} parent=0 // pred_region
    _
  $region9: #{esbn_trans_forward.7} parent=0 // pred_fallthru
    _
  // Predicated region
  $region10: #{esbn_trans_forward.7} parent=0 // pred_check
    _
  $region11: #{esbn_trans_forward.7} parent=0 // pred_check_branch
    %34 = sbr.rel (0) target = $region13
  $region12: #{esbn_trans_forward.7} parent=0 // pred_region
    _
  $region13: #{esbn_trans_forward.7} parent=0 // pred_fallthru
    _
  // Predicated region
  $region14: #{esbn_trans_forward.7} parent=0 // pred_check
    _
  $region15: #{esbn_trans_forward.7} parent=0 // pred_check_branch
    %36 = sbr.rel (0) target = $region17
  $region16: #{esbn_trans_forward.7} parent=0 // pred_region
    _
  $region17: #{esbn_trans_forward.7} parent=0 // pred_fallthru
    _
  // Predicated region
  $region18: #{esbn_trans_forward.7} parent=0 // pred_check
    _
  $region19: #{esbn_trans_forward.7} parent=0 // pred_check_branch
    %38 = sbr.rel (0) target = $region21
  $region20: #{esbn_trans_forward.7} parent=0 // pred_region
    _
  $region21: #{esbn_trans_forward.7} parent=0 // pred_fallthru
    _
  // Predicated region
  $region22: #{esbn_trans_forward.7} parent=0 // pred_check
    _
  $region23: #{esbn_trans_forward.7} parent=0 // pred_check_branch
    %40 = sbr.rel (0) target = $region25
  $region24: #{esbn_trans_forward.7} parent=0 // pred_region
    _
  $region25: #{esbn_trans_forward.7} parent=0 // pred_fallthru
    _
  // Predicated region
  $region26: #{esbn_trans_forward.7} parent=0 // pred_check
    _
  $region27: #{esbn_trans_forward.7} parent=0 // pred_check_branch
    %42 = sbr.rel (0) target = $region29
  $region28: #{esbn_trans_forward.7} parent=0 // pred_region
    _
  $region29: #{esbn_trans_forward.7} parent=0 // pred_fallthru
    _
  // Predicated region
  $region30: #{esbn_trans_forward.7} parent=0 // pred_check
    _
  $region31: #{esbn_trans_forward.7} parent=0 // pred_check_branch
    %44 = sbr.rel (0) target = $region33
  $region32: #{esbn_trans_forward.7} parent=0 // pred_region
    _
  $region33: #{esbn_trans_forward.7} parent=0 // pred_fallthru
    _
  // Predicated region
  $region34: #{esbn_trans_forward.7} parent=0 // pred_check
    _
  $region35: #{esbn_trans_forward.7} parent=0 // pred_check_branch
    %46 = sbr.rel (0) target = $region37
  $region36: #{esbn_trans_forward.7} parent=0 // pred_region
    _
  $region37: #{esbn_trans_forward.7} parent=0 // pred_fallthru
    _
  // Predicated region
  $region38: #{esbn_trans_forward.7} parent=0 // pred_check
    _
  $region39: #{esbn_trans_forward.7} parent=0 // pred_check_branch
    %48 = sbr.rel (0) target = $region41
  $region40: #{esbn_trans_forward.7} parent=0 // pred_region
    _
  $region41: #{esbn_trans_forward.7} parent=0 // pred_fallthru
    _
  // Predicated region
  $region42: #{esbn_trans_forward.7} parent=0 // pred_check
    _
  $region43: #{esbn_trans_forward.7} parent=0 // pred_check_branch
    %50 = sbr.rel (0) target = $region45
  $region44: #{esbn_trans_forward.7} parent=0 // pred_region
    _
  $region45: #{esbn_trans_forward.7} parent=0 // pred_fallthru
    _
  // Predicated region
  $region46: #{esbn_trans_forward.7} parent=0 // pred_check
    _
  $region47: #{esbn_trans_forward.7} parent=0 // pred_check_branch
    %52 = sbr.rel (0) target = $region49
  $region48: #{esbn_trans_forward.7} parent=0 // pred_region
    _
  $region49: #{esbn_trans_forward.7} parent=0 // pred_fallthru
    _
  // Predicated region
  $region50: #{esbn_trans_forward.7} parent=0 // pred_check
    _
  $region51: #{esbn_trans_forward.7} parent=0 // pred_check_branch
    %54 = sbr.rel (0) target = $region53
  $region52: #{esbn_trans_forward.7} parent=0 // pred_region
    _
  $region53: #{esbn_trans_forward.7} parent=0 // pred_fallthru
    _
  // Predicated region
  $region54: #{esbn_trans_forward.7} parent=0 // pred_check
    _
  $region55: #{esbn_trans_forward.7} parent=0 // pred_check_branch
    %56 = sbr.rel (0) target = $region57
  $region56: #{esbn_trans_forward.7} parent=0 // pred_region
    _
  $region57: #{esbn_trans_forward.7} parent=0 // pred_fallthru
    _
  // Predicated region
  $region58: #{esbn_trans_forward.7} parent=0 // pred_check
    _
  $region59: #{esbn_trans_forward.7} parent=0 // pred_check_branch
    %58 = sbr.rel (0) target = $region61
  $region60: #{esbn_trans_forward.7} parent=0 // pred_region
    _
  $region61: #{esbn_trans_forward.7} parent=0 // pred_fallthru
    _
  // Predicated region
  $region62: #{esbn_trans_forward.7} parent=0 // pred_check
    _
  $region63: #{esbn_trans_forward.7} parent=0 // pred_check_branch
    %60 = sbr.rel (0) target = $region65
  $region64: #{esbn_trans_forward.7} parent=0 // pred_region
    _
  $region65: #{esbn_trans_forward.7} parent=0 // pred_fallthru
    _
  // Predicated region
  $region66: #{esbn_trans_forward.7} parent=0 // pred_check
    _
  $region67: #{esbn_trans_forward.7} parent=0 // pred_check_branch
    %62 = sbr.rel (0) target = $region69
  $region68: #{esbn_trans_forward.7} parent=0 // pred_region
    _
  $region69: #{esbn_trans_forward.7} parent=0 // pred_fallthru
    _
  // Predicated region
  $region70: #{esbn_trans_forward.7} parent=0 // pred_check
    _
  $region71: #{esbn_trans_forward.7} parent=0 // pred_check_branch
    %64 = sbr.rel (0) target = $region73
  $region72: #{esbn_trans_forward.7} parent=0 // pred_region
    _
  $region73: #{esbn_trans_forward.7} parent=0 // pred_fallthru
    _
  // Predicated region
  $region74: #{esbn_trans_forward.7} parent=0 // pred_check
    _
  $region75: #{esbn_trans_forward.7} parent=0 // pred_check_branch
    %66 = sbr.rel (0) target = $region77
  $region76: #{esbn_trans_forward.7} parent=0 // pred_region
    _
  $region77: #{esbn_trans_forward.7} parent=0 // pred_fallthru
    _
  // Predicated region
  $region78: #{esbn_trans_forward.7} parent=0 // pred_check
    _
  $region79: #{esbn_trans_forward.7} parent=0 // pred_check_branch
    %68 = sbr.rel (0) target = $region81
  $region80: #{esbn_trans_forward.7} parent=0 // pred_region
    _
  $region81: #{esbn_trans_forward.7} parent=0 // pred_fallthru
    _
  // Predicated region
  $region82: #{esbn_trans_forward.7} parent=0 // pred_check
    _
  $region83: #{esbn_trans_forward.7} parent=0 // pred_check_branch
    %70 = sbr.rel (0) target = $region85
  $region84: #{esbn_trans_forward.7} parent=0 // pred_region
    _
  $region85: #{esbn_trans_forward.7} parent=0 // pred_fallthru
    _
  // Predicated region
  $region86: #{esbn_trans_forward.7} parent=0 // pred_check
    _
  $region87: #{esbn_trans_forward.7} parent=0 // pred_check_branch
    %72 = sbr.rel (0) target = $region89
  $region88: #{esbn_trans_forward.7} parent=0 // pred_region
    _
  $region89: #{esbn_trans_forward.7} parent=0 // pred_fallthru
    _
  // Predicated region
  $region90: #{esbn_trans_forward.7} parent=0 // pred_check
    _
  $region91: #{esbn_trans_forward.7} parent=0 // pred_check_branch
    %74 = sbr.rel (0) target = $region93
  $region92: #{esbn_trans_forward.7} parent=0 // pred_region
    _
  $region93: #{esbn_trans_forward.7} parent=0 // pred_fallthru
    _
  // Predicated region
  $region94: #{esbn_trans_forward.7} parent=0 // pred_check
    _
  $region95: #{esbn_trans_forward.7} parent=0 // pred_check_branch
    %76 = sbr.rel (0) target = $region97
  $region96: #{esbn_trans_forward.7} parent=0 // pred_region
    _
  $region97: #{esbn_trans_forward.7} parent=0 // pred_fallthru
    _
  %v78 = vld [vmem:[%s0] sm:$0xff]
  %v79 = vld [vmem:[%s0 + $0x8] sm:$0xff]
  %v80 = vld [vmem:[%s0 + $0x10] sm:$0xff]
  %v81 = vld [vmem:[%s0 + $0x18] sm:$0xff]
  %v82 = vld [vmem:[%s0 + $0x20] sm:$0xff]
  %v83 = vld [vmem:[%s0 + $0x28] sm:$0xff]
  %v84 = vld [vmem:[%s0 + $0x30] sm:$0xff]
  %v85 = vld [vmem:[%s0 + $0x38] sm:$0xff]
  %v86 = vld [vmem:[%s1] sm:$0xff]
  %v87 = vld [vmem:[%s1 + $0x8] sm:$0xff]
  %v88 = vld [vmem:[%s1 + $0x10] sm:$0xff]
  %v89 = vld [vmem:[%s1 + $0x18] sm:$0xff]
  %v90 = vld [vmem:[%s1 + $0x20] sm:$0xff]
  %v91 = vld [vmem:[%s1 + $0x28] sm:$0xff]
  %v92 = vld [vmem:[%s1 + $0x30] sm:$0xff]
  %v93 = vld [vmem:[%s1 + $0x38] sm:$0xff]
  %v94 = vld [vmem:[%s1 + $0x40] sm:$0xff]
  %v95 = vld [vmem:[%s1 + $0x48] sm:$0xff]
  %v96 = vld [vmem:[%s1 + $0x50] sm:$0xff]
  %v97 = vld [vmem:[%s1 + $0x58] sm:$0xff]
  %v98 = vld [vmem:[%s1 + $0x60] sm:$0xff]
  %v99 = vld [vmem:[%s1 + $0x68] sm:$0xff]
  %v100 = vld [vmem:[%s1 + $0x70] sm:$0xff]
  %v101 = vld [vmem:[%s1 + $0x78] sm:$0xff]
  %v102 = vld [vmem:[%s1 + $0x80] sm:$0xff]
  %v103 = vld [vmem:[%s1 + $0x88] sm:$0xff]
  %v104 = vld [vmem:[%s1 + $0x90] sm:$0xff]
  %v105 = vld [vmem:[%s1 + $0x98] sm:$0xff]
  %v106 = vld [vmem:[%s1 + $0xa0] sm:$0xff]
  %v107 = vld [vmem:[%s1 + $0xa8] sm:$0xff]
  %v108 = vld [vmem:[%s1 + $0xb0] sm:$0xff]
  %v109 = vld [vmem:[%s1 + $0xb8] sm:$0xff]
  %v110 = vld [vmem:[%s1 + $0xc0] sm:$0xff]
  %v111 = vld [vmem:[%s1 + $0xc8] sm:$0xff]
  %v112 = vld [vmem:[%s1 + $0xd0] sm:$0xff]
  %v113 = vld [vmem:[%s1 + $0xd8] sm:$0xff]
  %v114 = vld [vmem:[%s1 + $0xe0] sm:$0xff]
  %v115 = vld [vmem:[%s1 + $0xe8] sm:$0xff]
  %v116 = vld [vmem:[%s1 + $0xf0] sm:$0xff]
  %v117 = vld [vmem:[%s1 + $0xf8] sm:$0xff]
  %v118 = vld [vmem:[%s1 + $0x100] sm:$0xff]
  %v119 = vld [vmem:[%s1 + $0x108] sm:$0xff]
  %v120 = vld [vmem:[%s1 + $0x110] sm:$0xff]
  %v121 = vld [vmem:[%s1 + $0x118] sm:$0xff]
  %v122 = vld [vmem:[%s1 + $0x120] sm:$0xff]
  %v123 = vld [vmem:[%s1 + $0x128] sm:$0xff]
  %v124 = vld [vmem:[%s1 + $0x130] sm:$0xff]
  %v125 = vld [vmem:[%s1 + $0x138] sm:$0xff]
  %v126 = vld [vmem:[%s1 + $0x140] sm:$0xff]
  %v127 = vld [vmem:[%s1 + $0x148] sm:$0xff]
  %v128 = vld [vmem:[%s1 + $0x150] sm:$0xff]
  %v129 = vld [vmem:[%s1 + $0x158] sm:$0xff]
  %v130 = vld [vmem:[%s1 + $0x160] sm:$0xff]
  %v131 = vld [vmem:[%s1 + $0x168] sm:$0xff]
  %v132 = vld [vmem:[%s1 + $0x170] sm:$0xff]
  %v133 = vld [vmem:[%s1 + $0x178] sm:$0xff]
  %v134 = vld [vmem:[%s1 + $0x180] sm:$0xff]
  %v135 = vld [vmem:[%s1 + $0x188] sm:$0xff]
  %v136 = vld [vmem:[%s1 + $0x190] sm:$0xff]
  %v137 = vld [vmem:[%s1 + $0x198] sm:$0xff]
  %v138 = vld [vmem:[%s1 + $0x1a0] sm:$0xff]
  %v139 = vld [vmem:[%s1 + $0x1a8] sm:$0xff]
  %v140 = vld [vmem:[%s1 + $0x1b0] sm:$0xff]
  %v141 = vld [vmem:[%s1 + $0x1b8] sm:$0xff]
  %v142 = vld [vmem:[%s1 + $0x1c0] sm:$0xff]
  %v143 = vld [vmem:[%s1 + $0x1c8] sm:$0xff]
  %v144 = vld [vmem:[%s1 + $0x1d0] sm:$0xff]
  %v145 = vld [vmem:[%s1 + $0x1d8] sm:$0xff]
  %v146 = vld [vmem:[%s1 + $0x1e0] sm:$0xff]
  %v147 = vld [vmem:[%s1 + $0x1e8] sm:$0xff]
  %v148 = vld [vmem:[%s1 + $0x1f0] sm:$0xff]
  %v149 = vld [vmem:[%s1 + $0x1f8] sm:$0xff]
  %v150 = vld [vmem:[%s1 + $0x200] sm:$0xff]
  %v151 = vld [vmem:[%s1 + $0x208] sm:$0xff]
  %v152 = vld [vmem:[%s1 + $0x210] sm:$0xff]
  %v153 = vld [vmem:[%s1 + $0x218] sm:$0xff]
  %v154 = vld [vmem:[%s1 + $0x220] sm:$0xff]
  %v155 = vld [vmem:[%s1 + $0x228] sm:$0xff]
  %v156 = vld [vmem:[%s1 + $0x230] sm:$0xff]
  %v157 = vld [vmem:[%s1 + $0x238] sm:$0xff]
  %v158 = vld [vmem:[%s1 + $0x240] sm:$0xff]
  %v159 = vld [vmem:[%s1 + $0x248] sm:$0xff]
  %v160 = vld [vmem:[%s1 + $0x250] sm:$0xff]
  %v161 = vld [vmem:[%s1 + $0x258] sm:$0xff]
  %v162 = vld [vmem:[%s1 + $0x260] sm:$0xff]
  %v163 = vld [vmem:[%s1 + $0x268] sm:$0xff]
  %v164 = vld [vmem:[%s1 + $0x270] sm:$0xff]
  %v165 = vld [vmem:[%s1 + $0x278] sm:$0xff]
  %v166 = vld [vmem:[%s1 + $0x280] sm:$0xff]
  %v167 = vld [vmem:[%s1 + $0x288] sm:$0xff]
  %v168 = vld [vmem:[%s1 + $0x290] sm:$0xff]
  %v169 = vld [vmem:[%s1 + $0x298] sm:$0xff]
  %v170 = vld [vmem:[%s1 + $0x2a0] sm:$0xff]
  %v171 = vld [vmem:[%s1 + $0x2a8] sm:$0xff]
  %v172 = vld [vmem:[%s1 + $0x2b0] sm:$0xff]
  %v173 = vld [vmem:[%s1 + $0x2b8] sm:$0xff]
  %v174 = vld [vmem:[%s1 + $0x2c0] sm:$0xff]
  %v175 = vld [vmem:[%s1 + $0x2c8] sm:$0xff]
  %v176 = vld [vmem:[%s1 + $0x2d0] sm:$0xff]
  %v177 = vld [vmem:[%s1 + $0x2d8] sm:$0xff]
  %v178 = vld [vmem:[%s1 + $0x2e0] sm:$0xff]
  %v179 = vld [vmem:[%s1 + $0x2e8] sm:$0xff]
  %v180 = vld [vmem:[%s1 + $0x2f0] sm:$0xff]
  %v181 = vld [vmem:[%s1 + $0x2f8] sm:$0xff]
  %v182 = vld [vmem:[%s1 + $0x300] sm:$0xff]
  %v183 = vld [vmem:[%s1 + $0x308] sm:$0xff]
  %v184 = vld [vmem:[%s1 + $0x310] sm:$0xff]
  %v185 = vld [vmem:[%s1 + $0x318] sm:$0xff]
  %v186 = vld [vmem:[%s1 + $0x320] sm:$0xff]
  %v187 = vld [vmem:[%s1 + $0x328] sm:$0xff]
  %v188 = vld [vmem:[%s1 + $0x330] sm:$0xff]
  %v189 = vld [vmem:[%s1 + $0x338] sm:$0xff]
  %v190 = vld [vmem:[%s1 + $0x340] sm:$0xff]
  %v191 = vld [vmem:[%s1 + $0x348] sm:$0xff]
  %v192 = vld [vmem:[%s1 + $0x350] sm:$0xff]
  %v193 = vld [vmem:[%s1 + $0x358] sm:$0xff]
  %v194 = vld [vmem:[%s1 + $0x360] sm:$0xff]
  %v195 = vld [vmem:[%s1 + $0x368] sm:$0xff]
  %v196 = vld [vmem:[%s1 + $0x370] sm:$0xff]
  %v197 = vld [vmem:[%s1 + $0x378] sm:$0xff]
  %v198 = vld [vmem:[%s1 + $0x380] sm:$0xff]
  %v199 = vld [vmem:[%s1 + $0x388] sm:$0xff]
  %v200 = vld [vmem:[%s1 + $0x390] sm:$0xff]
  %v201 = vld [vmem:[%s1 + $0x398] sm:$0xff]
  %v202 = vld [vmem:[%s1 + $0x3a0] sm:$0xff]
  %v203 = vld [vmem:[%s1 + $0x3a8] sm:$0xff]
  %v204 = vld [vmem:[%s1 + $0x3b0] sm:$0xff]
  %v205 = vld [vmem:[%s1 + $0x3b8] sm:$0xff]
  %v206 = vld [vmem:[%s1 + $0x3c0] sm:$0xff]
  %v207 = vld [vmem:[%s1 + $0x3c8] sm:$0xff]
  %v208 = vld [vmem:[%s1 + $0x3d0] sm:$0xff]
  %v209 = vld [vmem:[%s1 + $0x3d8] sm:$0xff]
  %v210 = vld [vmem:[%s1 + $0x3e0] sm:$0xff]
  %v211 = vld [vmem:[%s1 + $0x3e8] sm:$0xff]
  %v212 = vld [vmem:[%s1 + $0x3f0] sm:$0xff]
  %v213 = vld [vmem:[%s1 + $0x3f8] sm:$0xff]
  %v214 = vpack.c.bf16 %v82, %v78
  %v215 = vpack.c.bf16 %v83, %v79
  %v216 = vpack.c.bf16 %v84, %v80
  %v217 = vpack.c.bf16 %v85, %v81
  %v218 = vpack.c.bf16 %v88, %v86
  %v219 = vpack.c.bf16 %v89, %v87
  %v220 = vpack.c.bf16 %v92, %v90
  %v221 = vpack.c.bf16 %v93, %v91
  %v222 = vpack.c.bf16 %v96, %v94
  %v223 = vpack.c.bf16 %v97, %v95
  %v224 = vpack.c.bf16 %v100, %v98
  %v225 = vpack.c.bf16 %v101, %v99
  %v226 = vpack.c.bf16 %v104, %v102
  %v227 = vpack.c.bf16 %v105, %v103
  %v228 = vpack.c.bf16 %v108, %v106
  %v229 = vpack.c.bf16 %v109, %v107
  %v230 = vpack.c.bf16 %v112, %v110
  %v231 = vpack.c.bf16 %v113, %v111
  %v232 = vpack.c.bf16 %v116, %v114
  %v233 = vpack.c.bf16 %v117, %v115
  %v234 = vpack.c.bf16 %v120, %v118
  %v235 = vpack.c.bf16 %v121, %v119
  %v236 = vpack.c.bf16 %v124, %v122
  %v237 = vpack.c.bf16 %v125, %v123
  %v238 = vpack.c.bf16 %v128, %v126
  %v239 = vpack.c.bf16 %v129, %v127
  %v240 = vpack.c.bf16 %v132, %v130
  %v241 = vpack.c.bf16 %v133, %v131
  %v242 = vpack.c.bf16 %v136, %v134
  %v243 = vpack.c.bf16 %v137, %v135
  %v244 = vpack.c.bf16 %v140, %v138
  %v245 = vpack.c.bf16 %v141, %v139
  %v246 = vpack.c.bf16 %v144, %v142
  %v247 = vpack.c.bf16 %v145, %v143
  %v248 = vpack.c.bf16 %v148, %v146
  %v249 = vpack.c.bf16 %v149, %v147
  %v250 = vpack.c.bf16 %v152, %v150
  %v251 = vpack.c.bf16 %v153, %v151
  %v252 = vpack.c.bf16 %v156, %v154
  %v253 = vpack.c.bf16 %v157, %v155
  %v254 = vpack.c.bf16 %v160, %v158
  %v255 = vpack.c.bf16 %v161, %v159
  %v256 = vpack.c.bf16 %v164, %v162
  %v257 = vpack.c.bf16 %v165, %v163
  %v258 = vpack.c.bf16 %v168, %v166
  %v259 = vpack.c.bf16 %v169, %v167
  %v260 = vpack.c.bf16 %v172, %v170
  %v261 = vpack.c.bf16 %v173, %v171
  %v262 = vpack.c.bf16 %v176, %v174
  %v263 = vpack.c.bf16 %v177, %v175
  %v264 = vpack.c.bf16 %v180, %v178
  %v265 = vpack.c.bf16 %v181, %v179
  %v266 = vpack.c.bf16 %v184, %v182
  %v267 = vpack.c.bf16 %v185, %v183
  %v268 = vpack.c.bf16 %v188, %v186
  %v269 = vpack.c.bf16 %v189, %v187
  %v270 = vpack.c.bf16 %v192, %v190
  %v271 = vpack.c.bf16 %v193, %v191
  %v272 = vpack.c.bf16 %v196, %v194
  %v273 = vpack.c.bf16 %v197, %v195
  %v274 = vpack.c.bf16 %v200, %v198
  %v275 = vpack.c.bf16 %v201, %v199
  %v276 = vpack.c.bf16 %v204, %v202
  %v277 = vpack.c.bf16 %v205, %v203
  %v278 = vpack.c.bf16 %v208, %v206
  %v279 = vpack.c.bf16 %v209, %v207
  %v280 = vpack.c.bf16 %v212, %v210
  %v281 = vpack.c.bf16 %v213, %v211
  %v282 = vld [vmem:[%s2] sm:$0x3]
  %v284 = vlaneseq
  %v285 = vshrl.u32 %v284, 7
  %v286 = vsub.s32 0, %v285
  %v287 = vrot.slane %v282, %v286
  %v288 = vlaneseq
  %v289 = vshrl.u32 %v288, 7
  %v290 = vsub.s32 1, %v289
  %v291 = vrot.slane %v282, %v290
  %294 = vmatprep.subr.bf16.mxu0 %v219
  %295 = vmatpush1.bf16.msra.mxu0 %v218
  %296 = vmatprep.subr.bf16.mxu0 %v221
  %297 = vmatpush1.bf16.msra.mxu0 %v220
  %298 = vmatprep.subr.bf16.mxu0 %v223
  %299 = vmatpush1.bf16.msra.mxu0 %v222
  %300 = vmatprep.subr.bf16.mxu0 %v225
  %301 = vmatpush1.bf16.msra.mxu0 %v224
  %302 = vmatprep.subr.bf16.mxu0 %v227
  %303 = vmatpush1.bf16.msra.mxu0 %v226
  %304 = vmatprep.subr.bf16.mxu0 %v229
  %305 = vmatpush1.bf16.msra.mxu0 %v228
  %306 = vmatprep.subr.bf16.mxu0 %v231
  %307 = vmatpush1.bf16.msra.mxu0 %v230
  %308 = vmatprep.subr.bf16.mxu0 %v233
  %309 = vmatpush1.bf16.msra.mxu0 %v232
  %310 = vmatprep.subr.bf16.mxu0 %v235
  %311 = vmatpush1.bf16.msra.mxu0 %v234
  %312 = vmatprep.subr.bf16.mxu0 %v237
  %313 = vmatpush1.bf16.msra.mxu0 %v236
  %314 = vmatprep.subr.bf16.mxu0 %v239
  %315 = vmatpush1.bf16.msra.mxu0 %v238
  %316 = vmatprep.subr.bf16.mxu0 %v241
  %317 = vmatpush1.bf16.msra.mxu0 %v240
  %318 = vmatprep.subr.bf16.mxu0 %v243
  %319 = vmatpush1.bf16.msra.mxu0 %v242
  %320 = vmatprep.subr.bf16.mxu0 %v245
  %321 = vmatpush1.bf16.msra.mxu0 %v244
  %322 = vmatprep.subr.bf16.mxu0 %v247
  %323 = vmatpush1.bf16.msra.mxu0 %v246
  %324 = vmatprep.subr.bf16.mxu0 %v249
  %325 = vmatpush1.bf16.msra.mxu0 %v248
  %326 = vmatprep.mubr.bf16.mxu0 %v215
  %327 = vmatmul.mubr.bf16.gmra.mrb[0].mxu0 %v214
  %v328 = vpop.f32.mrb[0].mxu0
  %v329 = vadd.f32 %v287, %v328
  %v330 = vpop.f32.mrb[0].mxu0
  %v331 = vadd.f32 %v291, %v330
  %v332 = vpop.f32.mrb[0].mxu0
  %v333 = vadd.f32 %v287, %v332
  %v334 = vpop.f32.mrb[0].mxu0
  %v335 = vadd.f32 %v291, %v334
  %336 = vdwg.mxu0
  %337 = vmatprep.subr.bf16.mxu0 %v251
  %338 = vmatpush1.bf16.msra.mxu0 %v250
  %339 = vmatprep.subr.bf16.mxu0 %v253
  %340 = vmatpush1.bf16.msra.mxu0 %v252
  %341 = vmatprep.subr.bf16.mxu0 %v255
  %342 = vmatpush1.bf16.msra.mxu0 %v254
  %343 = vmatprep.subr.bf16.mxu0 %v257
  %344 = vmatpush1.bf16.msra.mxu0 %v256
  %345 = vmatprep.subr.bf16.mxu0 %v259
  %346 = vmatpush1.bf16.msra.mxu0 %v258
  %347 = vmatprep.subr.bf16.mxu0 %v261
  %348 = vmatpush1.bf16.msra.mxu0 %v260
  %349 = vmatprep.subr.bf16.mxu0 %v263
  %350 = vmatpush1.bf16.msra.mxu0 %v262
  %351 = vmatprep.subr.bf16.mxu0 %v265
  %352 = vmatpush1.bf16.msra.mxu0 %v264
  %353 = vmatprep.subr.bf16.mxu0 %v267
  %354 = vmatpush1.bf16.msra.mxu0 %v266
  %355 = vmatprep.subr.bf16.mxu0 %v269
  %356 = vmatpush1.bf16.msra.mxu0 %v268
  %357 = vmatprep.subr.bf16.mxu0 %v271
  %358 = vmatpush1.bf16.msra.mxu0 %v270
  %359 = vmatprep.subr.bf16.mxu0 %v273
  %360 = vmatpush1.bf16.msra.mxu0 %v272
  %361 = vmatprep.subr.bf16.mxu0 %v275
  %362 = vmatpush1.bf16.msra.mxu0 %v274
  %363 = vmatprep.subr.bf16.mxu0 %v277
  %364 = vmatpush1.bf16.msra.mxu0 %v276
  %365 = vmatprep.subr.bf16.mxu0 %v279
  %366 = vmatpush1.bf16.msra.mxu0 %v278
  %367 = vmatprep.subr.bf16.mxu0 %v281
  %368 = vmatpush1.bf16.msra.mxu0 %v280
  %369 = vmatprep.mubr.bf16.mxu0 %v217
  %370 = vmatmul.mubr.bf16.gmra.mrb[0].mxu0 %v216
  %v371 = vpop.f32.mrb[0].mxu0
  %v372 = vadd.f32 %v329, %v371
  %v373 = vpop.f32.mrb[0].mxu0
  %v374 = vadd.f32 %v331, %v373
  %v375 = vpop.f32.mrb[0].mxu0
  %v376 = vadd.f32 %v333, %v375
  %v377 = vpop.f32.mrb[0].mxu0
  %v378 = vadd.f32 %v335, %v377
  %379 = vdwg.mxu0
  %v380 = vmax.f32 %v372, 0.0
  %v381 = vmax.f32 %v374, 0.0
  %v382 = vmax.f32 %v376, 0.0
  %v383 = vmax.f32 %v378, 0.0
  %v384 = vld [vmem:[%s3] sm:$0xff]
  %v385 = vld [vmem:[%s3 + $0x8] sm:$0xff]
  %v386 = vld [vmem:[%s3 + $0x10] sm:$0xff]
  %v387 = vld [vmem:[%s3 + $0x18] sm:$0xff]
  %v388 = vld [vmem:[%s3 + $0x20] sm:$0xff]
  %v389 = vld [vmem:[%s3 + $0x28] sm:$0xff]
  %v390 = vld [vmem:[%s3 + $0x30] sm:$0xff]
  %v391 = vld [vmem:[%s3 + $0x38] sm:$0xff]
  %v392 = vld [vmem:[%s3 + $0x40] sm:$0xff]
  %v393 = vld [vmem:[%s3 + $0x48] sm:$0xff]
  %v394 = vld [vmem:[%s3 + $0x50] sm:$0xff]
  %v395 = vld [vmem:[%s3 + $0x58] sm:$0xff]
  %v396 = vld [vmem:[%s3 + $0x60] sm:$0xff]
  %v397 = vld [vmem:[%s3 + $0x68] sm:$0xff]
  %v398 = vld [vmem:[%s3 + $0x70] sm:$0xff]
  %v399 = vld [vmem:[%s3 + $0x78] sm:$0xff]
  %v400 = vld [vmem:[%s3 + $0x80] sm:$0xff]
  %v401 = vld [vmem:[%s3 + $0x88] sm:$0xff]
  %v402 = vld [vmem:[%s3 + $0x90] sm:$0xff]
  %v403 = vld [vmem:[%s3 + $0x98] sm:$0xff]
  %v404 = vld [vmem:[%s3 + $0xa0] sm:$0xff]
  %v405 = vld [vmem:[%s3 + $0xa8] sm:$0xff]
  %v406 = vld [vmem:[%s3 + $0xb0] sm:$0xff]
  %v407 = vld [vmem:[%s3 + $0xb8] sm:$0xff]
  %v408 = vld [vmem:[%s3 + $0xc0] sm:$0xff]
  %v409 = vld [vmem:[%s3 + $0xc8] sm:$0xff]
  %v410 = vld [vmem:[%s3 + $0xd0] sm:$0xff]
  %v411 = vld [vmem:[%s3 + $0xd8] sm:$0xff]
  %v412 = vld [vmem:[%s3 + $0xe0] sm:$0xff]
  %v413 = vld [vmem:[%s3 + $0xe8] sm:$0xff]
  %v414 = vld [vmem:[%s3 + $0xf0] sm:$0xff]
  %v415 = vld [vmem:[%s3 + $0xf8] sm:$0xff]
  %v416 = vpack.c.bf16 %v382, %v380
  %v417 = vpack.c.bf16 %v383, %v381
  %v418 = vpack.c.bf16 %v385, %v384
  %v419 = vpack.c.bf16 %v387, %v386
  %v420 = vpack.c.bf16 %v389, %v388
  %v421 = vpack.c.bf16 %v391, %v390
  %v422 = vpack.c.bf16 %v393, %v392
  %v423 = vpack.c.bf16 %v395, %v394
  %v424 = vpack.c.bf16 %v397, %v396
  %v425 = vpack.c.bf16 %v399, %v398
  %v426 = vpack.c.bf16 %v401, %v400
  %v427 = vpack.c.bf16 %v403, %v402
  %v428 = vpack.c.bf16 %v405, %v404
  %v429 = vpack.c.bf16 %v407, %v406
  %v430 = vpack.c.bf16 %v409, %v408
  %v431 = vpack.c.bf16 %v411, %v410
  %v432 = vpack.c.bf16 %v413, %v412
  %v433 = vpack.c.bf16 %v415, %v414
  %v434 = vld [vmem:[%s4] sm:$0x1]
  %v436 = vlaneseq
  %v437 = vshrl.u32 %v436, 7
  %v438 = vsub.s32 0, %v437
  %v439 = vrot.slane %v434, %v438
  %441 = vmatprep.subr.bf16.mxu0 0
  %442 = vmatpush1.bf16.msra.mxu0 %v418
  %443 = vmatprep.subr.bf16.mxu0 0
  %444 = vmatpush1.bf16.msra.mxu0 %v419
  %445 = vmatprep.subr.bf16.mxu0 0
  %446 = vmatpush1.bf16.msra.mxu0 %v420
  %447 = vmatprep.subr.bf16.mxu0 0
  %448 = vmatpush1.bf16.msra.mxu0 %v421
  %449 = vmatprep.subr.bf16.mxu0 0
  %450 = vmatpush1.bf16.msra.mxu0 %v422
  %451 = vmatprep.subr.bf16.mxu0 0
  %452 = vmatpush1.bf16.msra.mxu0 %v423
  %453 = vmatprep.subr.bf16.mxu0 0
  %454 = vmatpush1.bf16.msra.mxu0 %v424
  %455 = vmatprep.subr.bf16.mxu0 0
  %456 = vmatpush1.bf16.msra.mxu0 %v425
  %457 = vmatprep.subr.bf16.mxu0 0
  %458 = vmatpush1.bf16.msra.mxu0 %v426
  %459 = vmatprep.subr.bf16.mxu0 0
  %460 = vmatpush1.bf16.msra.mxu0 %v427
  %461 = vmatprep.subr.bf16.mxu0 0
  %462 = vmatpush1.bf16.msra.mxu0 %v428
  %463 = vmatprep.subr.bf16.mxu0 0
  %464 = vmatpush1.bf16.msra.mxu0 %v429
  %465 = vmatprep.subr.bf16.mxu0 0
  %466 = vmatpush1.bf16.msra.mxu0 %v430
  %467 = vmatprep.subr.bf16.mxu0 0
  %468 = vmatpush1.bf16.msra.mxu0 %v431
  %469 = vmatprep.subr.bf16.mxu0 0
  %470 = vmatpush1.bf16.msra.mxu0 %v432
  %471 = vmatprep.subr.bf16.mxu0 0
  %472 = vmatpush1.bf16.msra.mxu0 %v433
  %473 = vmatprep.mubr.bf16.mxu0 %v417
  %474 = vmatmul.mubr.bf16.gmra.mrb[0].mxu0 %v416
  %v475 = vpop.f32.mrb[0].mxu0
  %v476 = vadd.f32 %v439, %v475
  %v477 = vpop.f32.mrb[0].mxu0
  %v478 = vpop.f32.mrb[0].mxu0
  %v479 = vadd.f32 %v439, %v478
  %v480 = vpop.f32.mrb[0].mxu0
  %481 = vdwg.mxu0
  %v482 = vmax.f32 %v476, 0.0
  %v483 = vmax.f32 %v479, 0.0
  %v484 = vld [vmem:[%s5] sm:$0x1]
  %v485 = vld [vmem:[%s6] sm:$0x1]
  %v486 = vld [vmem:[%s7] sm:$0xff]
  %v487 = vrot.slane %v482, 4
  %v488 = vadd.f32 %v482, %v487
  %v489 = vrot.slane %v488, 2
  %v490 = vadd.f32 %v488, %v489
  %v491 = vrot.slane %v490, 1
  %v492 = vadd.f32 %v490, %v491
  %v493 = vrcp.pop 8.0
  %v494 = vmul.f32 %v492, %v493
  %v495 = vsub.f32 %v482, %v494
  %v496 = vmul.f32 %v495, %v495
  %v497 = vrot.slane %v496, 4
  %v498 = vadd.f32 %v496, %v497
  %v499 = vrot.slane %v498, 2
  %v500 = vadd.f32 %v498, %v499
  %v501 = vrot.slane %v500, 1
  %v502 = vadd.f32 %v500, %v501
  %v503 = vrcp.pop 7.0
  %v504 = vmul.f32 %v502, %v503
  %v505 = vadd.f32 %v504, 1e-08
  %v506 = vrsqrt.pop %v505
  %v507 = vmul.f32 %v505, %v506
  %vm508 = vcmp.eq.f32.partialorder %v505, inf
  %v509 = vsel %vm508, %v505, %v507
  %vm510 = vcmp.eq.f32.partialorder %v505, 0.0
  %v511 = vand.u32 %v505, 2147483648
  %v512 = vsel %vm510, %v511, %v509
  %v513 = vrcp.pop %v512
  %v514 = vmul.f32 %v495, %v513
  %v516 = vlaneseq
  %v517 = vshrl.u32 %v516, 7
  %v518 = vsub.s32 0, %v517
  %v519 = vrot.slane %v484, %v518
  %v521 = vmul.f32 %v514, %v519
  %v523 = vlaneseq
  %v524 = vshrl.u32 %v523, 7
  %v525 = vsub.s32 0, %v524
  %v526 = vrot.slane %v485, %v525
  %v528 = vadd.f32 %v521, %v526
  %v529 = vadd.f32 %v528, %v486
  %v530 = vrot.slane %v483, 4
  %v531 = vadd.f32 %v483, %v530
  %v532 = vrot.slane %v531, 2
  %v533 = vadd.f32 %v531, %v532
  %v534 = vrot.slane %v533, 1
  %v535 = vadd.f32 %v533, %v534
  %v536 = vmul.f32 %v535, %v493
  %v537 = vsub.f32 %v483, %v536
  %v538 = vmul.f32 %v537, %v537
  %v539 = vrot.slane %v538, 4
  %v540 = vadd.f32 %v538, %v539
  %v541 = vrot.slane %v540, 2
  %v542 = vadd.f32 %v540, %v541
  %v543 = vrot.slane %v542, 1
  %v544 = vadd.f32 %v542, %v543
  %v545 = vmul.f32 %v544, %v503
  %v546 = vadd.f32 %v545, 1e-08
  %v547 = vrsqrt.pop %v546
  %v548 = vmul.f32 %v546, %v547
  %vm549 = vcmp.eq.f32.partialorder %v546, inf
  %v550 = vsel %vm549, %v546, %v548
  %vm551 = vcmp.eq.f32.partialorder %v546, 0.0
  %v552 = vand.u32 %v546, 2147483648
  %v553 = vsel %vm551, %v552, %v550
  %v554 = vrcp.pop %v553
  %v555 = vmul.f32 %v537, %v554
  %v556 = vmul.f32 %v555, %v519
  %v557 = vadd.f32 %v556, %v526
  %v558 = vadd.f32 %v557, %v486
  %v559 = vld [vmem:[%s8] sm:$0xff]
  %v560 = vld [vmem:[%s8 + $0x8] sm:$0xff]
  %v561 = vld [vmem:[%s8 + $0x10] sm:$0xff]
  %v562 = vld [vmem:[%s8 + $0x18] sm:$0xff]
  %v563 = vld [vmem:[%s8 + $0x20] sm:$0xff]
  %v564 = vld [vmem:[%s8 + $0x28] sm:$0xff]
  %v565 = vld [vmem:[%s8 + $0x30] sm:$0xff]
  %v566 = vld [vmem:[%s8 + $0x38] sm:$0xff]
  %v567 = vld [vmem:[%s8 + $0x40] sm:$0xff]
  %v568 = vld [vmem:[%s8 + $0x48] sm:$0xff]
  %v569 = vld [vmem:[%s8 + $0x50] sm:$0xff]
  %v570 = vld [vmem:[%s8 + $0x58] sm:$0xff]
  %v571 = vld [vmem:[%s8 + $0x60] sm:$0xff]
  %v572 = vld [vmem:[%s8 + $0x68] sm:$0xff]
  %v573 = vld [vmem:[%s8 + $0x70] sm:$0xff]
  %v574 = vld [vmem:[%s8 + $0x78] sm:$0xff]
  %v575 = vld [vmem:[%s8 + $0x80] sm:$0xff]
  %v576 = vld [vmem:[%s8 + $0x88] sm:$0xff]
  %v577 = vld [vmem:[%s8 + $0x90] sm:$0xff]
  %v578 = vld [vmem:[%s8 + $0x98] sm:$0xff]
  %v579 = vld [vmem:[%s8 + $0xa0] sm:$0xff]
  %v580 = vld [vmem:[%s8 + $0xa8] sm:$0xff]
  %v581 = vld [vmem:[%s8 + $0xb0] sm:$0xff]
  %v582 = vld [vmem:[%s8 + $0xb8] sm:$0xff]
  %v583 = vld [vmem:[%s8 + $0xc0] sm:$0xff]
  %v584 = vld [vmem:[%s8 + $0xc8] sm:$0xff]
  %v585 = vld [vmem:[%s8 + $0xd0] sm:$0xff]
  %v586 = vld [vmem:[%s8 + $0xd8] sm:$0xff]
  %v587 = vld [vmem:[%s8 + $0xe0] sm:$0xff]
  %v588 = vld [vmem:[%s8 + $0xe8] sm:$0xff]
  %v589 = vld [vmem:[%s8 + $0xf0] sm:$0xff]
  %v590 = vld [vmem:[%s8 + $0xf8] sm:$0xff]
  %v591 = vld [vmem:[%s8 + $0x100] sm:$0xff]
  %v592 = vld [vmem:[%s8 + $0x108] sm:$0xff]
  %v593 = vld [vmem:[%s8 + $0x110] sm:$0xff]
  %v594 = vld [vmem:[%s8 + $0x118] sm:$0xff]
  %v595 = vld [vmem:[%s8 + $0x120] sm:$0xff]
  %v596 = vld [vmem:[%s8 + $0x128] sm:$0xff]
  %v597 = vld [vmem:[%s8 + $0x130] sm:$0xff]
  %v598 = vld [vmem:[%s8 + $0x138] sm:$0xff]
  %v599 = vld [vmem:[%s8 + $0x140] sm:$0xff]
  %v600 = vld [vmem:[%s8 + $0x148] sm:$0xff]
  %v601 = vld [vmem:[%s8 + $0x150] sm:$0xff]
  %v602 = vld [vmem:[%s8 + $0x158] sm:$0xff]
  %v603 = vld [vmem:[%s8 + $0x160] sm:$0xff]
  %v604 = vld [vmem:[%s8 + $0x168] sm:$0xff]
  %v605 = vld [vmem:[%s8 + $0x170] sm:$0xff]
  %v606 = vld [vmem:[%s8 + $0x178] sm:$0xff]
  %v607 = vpack.c.bf16 %v558, %v529
  %v608 = vpack.c.bf16 %v562, %v559
  %v609 = vpack.c.bf16 %v563, %v560
  %v610 = vpack.c.bf16 %v564, %v561
  %v611 = vpack.c.bf16 %v568, %v565
  %v612 = vpack.c.bf16 %v569, %v566
  %v613 = vpack.c.bf16 %v570, %v567
  %v614 = vpack.c.bf16 %v574, %v571
  %v615 = vpack.c.bf16 %v575, %v572
  %v616 = vpack.c.bf16 %v576, %v573
  %v617 = vpack.c.bf16 %v580, %v577
  %v618 = vpack.c.bf16 %v581, %v578
  %v619 = vpack.c.bf16 %v582, %v579
  %v620 = vpack.c.bf16 %v586, %v583
  %v621 = vpack.c.bf16 %v587, %v584
  %v622 = vpack.c.bf16 %v588, %v585
  %v623 = vpack.c.bf16 %v592, %v589
  %v624 = vpack.c.bf16 %v593, %v590
  %v625 = vpack.c.bf16 %v594, %v591
  %v626 = vpack.c.bf16 %v598, %v595
  %v627 = vpack.c.bf16 %v599, %v596
  %v628 = vpack.c.bf16 %v600, %v597
  %v629 = vpack.c.bf16 %v604, %v601
  %v630 = vpack.c.bf16 %v605, %v602
  %v631 = vpack.c.bf16 %v606, %v603
  %v632 = vld [vmem:[%s9] sm:$0x7]
  %v634 = vlaneseq
  %v635 = vshrl.u32 %v634, 7
  %v636 = vsub.s32 0, %v635
  %v637 = vrot.slane %v632, %v636
  %v638 = vlaneseq
  %v639 = vshrl.u32 %v638, 7
  %v640 = vsub.s32 1, %v639
  %v641 = vrot.slane %v632, %v640
  %v642 = vlaneseq
  %v643 = vshrl.u32 %v642, 7
  %v644 = vsub.s32 2, %v643
  %v645 = vrot.slane %v632, %v644
  %649 = vmatprep.subr.bf16.mxu0 %v609
  %650 = vmatpush1.bf16.msra.mxu0 %v608
  %651 = vmatprep.subr.bf16.mxu0 %v612
  %652 = vmatpush1.bf16.msra.mxu0 %v611
  %653 = vmatprep.subr.bf16.mxu0 %v615
  %654 = vmatpush1.bf16.msra.mxu0 %v614
  %655 = vmatprep.subr.bf16.mxu0 %v618
  %656 = vmatpush1.bf16.msra.mxu0 %v617
  %657 = vmatprep.subr.bf16.mxu0 %v621
  %658 = vmatpush1.bf16.msra.mxu0 %v620
  %659 = vmatprep.subr.bf16.mxu0 %v624
  %660 = vmatpush1.bf16.msra.mxu0 %v623
  %661 = vmatprep.subr.bf16.mxu0 %v627
  %662 = vmatpush1.bf16.msra.mxu0 %v626
  %663 = vmatprep.subr.bf16.mxu0 %v630
  %664 = vmatpush1.bf16.msra.mxu0 %v629
  %665 = vmatprep.subr.bf16.mxu0 0
  %666 = vmatpush1.bf16.msra.mxu0 0
  %667 = vmatprep.subr.bf16.mxu0 0
  %668 = vmatpush1.bf16.msra.mxu0 0
  %669 = vmatprep.subr.bf16.mxu0 0
  %670 = vmatpush1.bf16.msra.mxu0 0
  %671 = vmatprep.subr.bf16.mxu0 0
  %672 = vmatpush1.bf16.msra.mxu0 0
  %673 = vmatprep.subr.bf16.mxu0 0
  %674 = vmatpush1.bf16.msra.mxu0 0
  %675 = vmatprep.subr.bf16.mxu0 0
  %676 = vmatpush1.bf16.msra.mxu0 0
  %677 = vmatprep.subr.bf16.mxu0 0
  %678 = vmatpush1.bf16.msra.mxu0 0
  %679 = vmatprep.subr.bf16.mxu0 0
  %680 = vmatpush1.bf16.msra.mxu0 0
  %681 = vmatprep.mubr.bf16.mxu0 0
  %682 = vmatmul.mubr.bf16.gmra.mrb[0].mxu0 %v607
  %v683 = vpop.f32.mrb[0].mxu0
  %v684 = vadd.f32 %v637, %v683
  %v685 = vpop.f32.mrb[0].mxu0
  %v686 = vadd.f32 %v641, %v685
  %v687 = vpop.f32.mrb[0].mxu0
  %v688 = vadd.f32 %v637, %v687
  %v689 = vpop.f32.mrb[0].mxu0
  %v690 = vadd.f32 %v641, %v689
  %691 = vdwg.mxu0
  %692 = vmatprep.subr.bf16.mxu0 0
  %693 = vmatpush1.bf16.msra.mxu0 %v610
  %694 = vmatprep.subr.bf16.mxu0 0
  %695 = vmatpush1.bf16.msra.mxu0 %v613
  %696 = vmatprep.subr.bf16.mxu0 0
  %697 = vmatpush1.bf16.msra.mxu0 %v616
  %698 = vmatprep.subr.bf16.mxu0 0
  %699 = vmatpush1.bf16.msra.mxu0 %v619
  %700 = vmatprep.subr.bf16.mxu0 0
  %701 = vmatpush1.bf16.msra.mxu0 %v622
  %702 = vmatprep.subr.bf16.mxu0 0
  %703 = vmatpush1.bf16.msra.mxu0 %v625
  %704 = vmatprep.subr.bf16.mxu0 0
  %705 = vmatpush1.bf16.msra.mxu0 %v628
  %706 = vmatprep.subr.bf16.mxu0 0
  %707 = vmatpush1.bf16.msra.mxu0 %v631
  %708 = vmatprep.subr.bf16.mxu0 0
  %709 = vmatpush1.bf16.msra.mxu0 0
  %710 = vmatprep.subr.bf16.mxu0 0
  %711 = vmatpush1.bf16.msra.mxu0 0
  %712 = vmatprep.subr.bf16.mxu0 0
  %713 = vmatpush1.bf16.msra.mxu0 0
  %714 = vmatprep.subr.bf16.mxu0 0
  %715 = vmatpush1.bf16.msra.mxu0 0
  %716 = vmatprep.subr.bf16.mxu0 0
  %717 = vmatpush1.bf16.msra.mxu0 0
  %718 = vmatprep.subr.bf16.mxu0 0
  %719 = vmatpush1.bf16.msra.mxu0 0
  %720 = vmatprep.subr.bf16.mxu0 0
  %721 = vmatpush1.bf16.msra.mxu0 0
  %722 = vmatprep.subr.bf16.mxu0 0
  %723 = vmatpush1.bf16.msra.mxu0 0
  %724 = vmatprep.mubr.bf16.mxu0 0
  %725 = vmatmul.mubr.bf16.gmra.mrb[0].mxu0 %v607
  %v726 = vpop.f32.mrb[0].mxu0
  %v727 = vadd.f32 %v645, %v726
  %v728 = vpop.f32.mrb[0].mxu0
  %v729 = vpop.f32.mrb[0].mxu0
  %v730 = vadd.f32 %v645, %v729
  %v731 = vpop.f32.mrb[0].mxu0
  %732 = vdwg.mxu0
  %vm733 = vcmask 130048
  %v735 = vsel %vm733, %v684, 0
  %v738 = vsel %vm733, %v686, 0
  %740 = vmatprep.subr.mxu0 0.0
  %741 = vmatpush1.xpose.msra.mxu0 %v738
  %742 = vmatprep.subr.mxu0 0.0
  %743 = vmatpush1.xpose.msra.mxu0 0.0
  %744 = vmatprep.subr.mxu0 0.0
  %745 = vmatpush1.xpose.msra.mxu0 0.0
  %746 = vmatprep.subr.mxu0 0.0
  %747 = vmatpush1.xpose.msra.mxu0 0.0
  %748 = vmatprep.subr.mxu0 0.0
  %749 = vmatpush1.xpose.msra.mxu0 0.0
  %750 = vmatprep.subr.mxu0 0.0
  %751 = vmatpush1.xpose.msra.mxu0 0.0
  %752 = vmatprep.subr.mxu0 0.0
  %753 = vmatpush1.xpose.msra.mxu0 0.0
  %754 = vmatprep.subr.mxu0 0.0
  %755 = vmatpush1.xpose.msra.mxu0 0.0
  %756 = vmatprep.subr.mxu0 0.0
  %757 = vmatpush1.xpose.msra.mxu0 0.0
  %758 = vmatprep.subr.mxu0 0.0
  %759 = vmatpush1.xpose.msra.mxu0 0.0
  %760 = vmatprep.subr.mxu0 0.0
  %761 = vmatpush1.xpose.msra.mxu0 0.0
  %762 = vmatprep.subr.mxu0 0.0
  %763 = vmatpush1.xpose.msra.mxu0 0.0
  %764 = vmatprep.subr.mxu0 0.0
  %765 = vmatpush1.xpose.msra.mxu0 0.0
  %766 = vmatprep.subr.mxu0 0.0
  %767 = vmatpush1.xpose.msra.mxu0 0.0
  %768 = vmatprep.subr.mxu0 0.0
  %769 = vmatpush1.xpose.msra.mxu0 0.0
  %770 = vmatprep.subr.mxu0 0.0
  %771 = vmatpush1.xpose.msra.mxu0 0.0
  %772 = vmatprep.subr.mxu0 0.0
  %773 = vmatpush1.xpose.msra.mxu0 0.0
  %774 = vmatprep.subr.mxu0 0.0
  %775 = vmatpush1.xpose.msra.mxu0 0.0
  %776 = vmatprep.subr.mxu0 0.0
  %777 = vmatpush1.xpose.msra.mxu0 0.0
  %778 = vmatprep.subr.mxu0 0.0
  %779 = vmatpush1.xpose.msra.mxu0 0.0
  %780 = vmatprep.subr.mxu0 0.0
  %781 = vmatpush1.xpose.msra.mxu0 0.0
  %782 = vmatprep.subr.mxu0 0.0
  %783 = vmatpush1.xpose.msra.mxu0 0.0
  %784 = vmatprep.subr.mxu0 0.0
  %785 = vmatpush1.xpose.msra.mxu0 0.0
  %786 = vmatprep.subr.mxu0 0.0
  %787 = vmatpush1.xpose.msra.mxu0 0.0
  %788 = vmatprep.subr.mxu0 0.0
  %789 = vmatpush1.xpose.msra.mxu0 0.0
  %790 = vmatprep.subr.mxu0 0.0
  %791 = vmatpush1.xpose.msra.mxu0 0.0
  %792 = vmatprep.subr.mxu0 0.0
  %793 = vmatpush1.xpose.msra.mxu0 0.0
  %794 = vmatprep.subr.mxu0 0.0
  %795 = vmatpush1.xpose.msra.mxu0 0.0
  %796 = vmatprep.subr.mxu0 0.0
  %797 = vmatpush1.xpose.msra.mxu0 0.0
  %798 = vmatprep.subr.mxu0 0.0
  %799 = vmatpush1.xpose.msra.mxu0 0.0
  %800 = vmatprep.subr.mxu0 0.0
  %801 = vmatpush1.xpose.msra.mxu0 0.0
  %802 = vmatprep.subr.mxu0 0.0
  %803 = vmatpush1.xpose.msra.mxu0 0.0
  %804 = vmatprep.mubr.f32.mxu0 0.0
  %805 = vmatmul.mubr.f32.gmra.mrb[0].mxu0 %v735
  %v806 = vpop.f32.mrb[0].mxu0
  %v807 = vadd.f32 0.0, %v806
  %v808 = vpop.f32.mrb[0].mxu0
  %809 = vdwg.mxu0
  %v810 = vmul.f32 %v807, 0.25
  %vm811 = vcmask 64512
  %v812 = vsel %vm811, %v810, -inf
  %813 = vmax.xlane.f32.xlu0 %v812
  %v814 = vpop.xlane.xlu0 %813
  %v815 = vsub.f32 %v810, %v814
  %v816 = vmul.f32 %v815, 1.442695
  %v817 = vpow.pop %v816
  %v818 = vsel %vm811, %v817, 0.0
  %819 = vadd.xlane.f32.xlu0 %v818
  %v820 = vpop.xlane.xlu0 %819
  %v821 = vrcp.pop %v820
  %v822 = vmul.f32 %v817, %v821
  %v824 = vsel %vm811, %v822, 0
  %826 = vmatprep.subr.mxu0 0.0
  %827 = vmatpush1.msra.mxu0 %v727
  %828 = vmatprep.subr.mxu0 0.0
  %829 = vmatpush1.msra.mxu0 0.0
  %830 = vmatprep.subr.mxu0 0.0
  %831 = vmatpush1.msra.mxu0 0.0
  %832 = vmatprep.subr.mxu0 0.0
  %833 = vmatpush1.msra.mxu0 0.0
  %834 = vmatprep.subr.mxu0 0.0
  %835 = vmatpush1.msra.mxu0 0.0
  %836 = vmatprep.subr.mxu0 0.0
  %837 = vmatpush1.msra.mxu0 0.0
  %838 = vmatprep.subr.mxu0 0.0
  %839 = vmatpush1.msra.mxu0 0.0
  %840 = vmatprep.subr.mxu0 0.0
  %841 = vmatpush1.msra.mxu0 0.0
  %842 = vmatprep.subr.mxu0 0.0
  %843 = vmatpush1.msra.mxu0 0.0
  %844 = vmatprep.subr.mxu0 0.0
  %845 = vmatpush1.msra.mxu0 0.0
  %846 = vmatprep.subr.mxu0 0.0
  %847 = vmatpush1.msra.mxu0 0.0
  %848 = vmatprep.subr.mxu0 0.0
  %849 = vmatpush1.msra.mxu0 0.0
  %850 = vmatprep.subr.mxu0 0.0
  %851 = vmatpush1.msra.mxu0 0.0
  %852 = vmatprep.subr.mxu0 0.0
  %853 = vmatpush1.msra.mxu0 0.0
  %854 = vmatprep.subr.mxu0 0.0
  %855 = vmatpush1.msra.mxu0 0.0
  %856 = vmatprep.subr.mxu0 0.0
  %857 = vmatpush1.msra.mxu0 0.0
  %858 = vmatprep.subr.mxu0 0.0
  %859 = vmatpush1.msra.mxu0 0.0
  %860 = vmatprep.subr.mxu0 0.0
  %861 = vmatpush1.msra.mxu0 0.0
  %862 = vmatprep.subr.mxu0 0.0
  %863 = vmatpush1.msra.mxu0 0.0
  %864 = vmatprep.subr.mxu0 0.0
  %865 = vmatpush1.msra.mxu0 0.0
  %866 = vmatprep.subr.mxu0 0.0
  %867 = vmatpush1.msra.mxu0 0.0
  %868 = vmatprep.subr.mxu0 0.0
  %869 = vmatpush1.msra.mxu0 0.0
  %870 = vmatprep.subr.mxu0 0.0
  %871 = vmatpush1.msra.mxu0 0.0
  %872 = vmatprep.subr.mxu0 0.0
  %873 = vmatpush1.msra.mxu0 0.0
  %874 = vmatprep.subr.mxu0 0.0
  %875 = vmatpush1.msra.mxu0 0.0
  %876 = vmatprep.subr.mxu0 0.0
  %877 = vmatpush1.msra.mxu0 0.0
  %878 = vmatprep.subr.mxu0 0.0
  %879 = vmatpush1.msra.mxu0 0.0
  %880 = vmatprep.subr.mxu0 0.0
  %881 = vmatpush1.msra.mxu0 0.0
  %882 = vmatprep.subr.mxu0 0.0
  %883 = vmatpush1.msra.mxu0 0.0
  %884 = vmatprep.subr.mxu0 0.0
  %885 = vmatpush1.msra.mxu0 0.0
  %886 = vmatprep.subr.mxu0 0.0
  %887 = vmatpush1.msra.mxu0 0.0
  %888 = vmatprep.subr.mxu0 0.0
  %889 = vmatpush1.msra.mxu0 0.0
  %890 = vmatprep.mubr.f32.mxu0 0.0
  %891 = vmatmul.mubr.f32.gmra.mrb[0].mxu0 %v824
  %v892 = vpop.f32.mrb[0].mxu0
  %v893 = vadd.f32 0.0, %v892
  %v894 = vpop.f32.mrb[0].mxu0
  %895 = vdwg.mxu0
  %896 = vrot.lane.b32.xlu0 %v684, 112
  %v897 = vpop.permute.xlu0 %896
  %898 = vrot.lane.b32.xlu0 %v686, 112
  %v899 = vpop.permute.xlu0 %898
  %v900 = vsel %vm733, %v897, 0
  %v902 = vsel %vm733, %v899, 0
  %904 = vmatprep.subr.mxu0 0.0
  %905 = vmatpush1.xpose.msra.mxu0 %v902
  %906 = vmatprep.subr.mxu0 0.0
  %907 = vmatpush1.xpose.msra.mxu0 0.0
  %908 = vmatprep.subr.mxu0 0.0
  %909 = vmatpush1.xpose.msra.mxu0 0.0
  %910 = vmatprep.subr.mxu0 0.0
  %911 = vmatpush1.xpose.msra.mxu0 0.0
  %912 = vmatprep.subr.mxu0 0.0
  %913 = vmatpush1.xpose.msra.mxu0 0.0
  %914 = vmatprep.subr.mxu0 0.0
  %915 = vmatpush1.xpose.msra.mxu0 0.0
  %916 = vmatprep.subr.mxu0 0.0
  %917 = vmatpush1.xpose.msra.mxu0 0.0
  %918 = vmatprep.subr.mxu0 0.0
  %919 = vmatpush1.xpose.msra.mxu0 0.0
  %920 = vmatprep.subr.mxu0 0.0
  %921 = vmatpush1.xpose.msra.mxu0 0.0
  %922 = vmatprep.subr.mxu0 0.0
  %923 = vmatpush1.xpose.msra.mxu0 0.0
  %924 = vmatprep.subr.mxu0 0.0
  %925 = vmatpush1.xpose.msra.mxu0 0.0
  %926 = vmatprep.subr.mxu0 0.0
  %927 = vmatpush1.xpose.msra.mxu0 0.0
  %928 = vmatprep.subr.mxu0 0.0
  %929 = vmatpush1.xpose.msra.mxu0 0.0
  %930 = vmatprep.subr.mxu0 0.0
  %931 = vmatpush1.xpose.msra.mxu0 0.0
  %932 = vmatprep.subr.mxu0 0.0
  %933 = vmatpush1.xpose.msra.mxu0 0.0
  %934 = vmatprep.subr.mxu0 0.0
  %935 = vmatpush1.xpose.msra.mxu0 0.0
  %936 = vmatprep.subr.mxu0 0.0
  %937 = vmatpush1.xpose.msra.mxu0 0.0
  %938 = vmatprep.subr.mxu0 0.0
  %939 = vmatpush1.xpose.msra.mxu0 0.0
  %940 = vmatprep.subr.mxu0 0.0
  %941 = vmatpush1.xpose.msra.mxu0 0.0
  %942 = vmatprep.subr.mxu0 0.0
  %943 = vmatpush1.xpose.msra.mxu0 0.0
  %944 = vmatprep.subr.mxu0 0.0
  %945 = vmatpush1.xpose.msra.mxu0 0.0
  %946 = vmatprep.subr.mxu0 0.0
  %947 = vmatpush1.xpose.msra.mxu0 0.0
  %948 = vmatprep.subr.mxu0 0.0
  %949 = vmatpush1.xpose.msra.mxu0 0.0
  %950 = vmatprep.subr.mxu0 0.0
  %951 = vmatpush1.xpose.msra.mxu0 0.0
  %952 = vmatprep.subr.mxu0 0.0
  %953 = vmatpush1.xpose.msra.mxu0 0.0
  %954 = vmatprep.subr.mxu0 0.0
  %955 = vmatpush1.xpose.msra.mxu0 0.0
  %956 = vmatprep.subr.mxu0 0.0
  %957 = vmatpush1.xpose.msra.mxu0 0.0
  %958 = vmatprep.subr.mxu0 0.0
  %959 = vmatpush1.xpose.msra.mxu0 0.0
  %960 = vmatprep.subr.mxu0 0.0
  %961 = vmatpush1.xpose.msra.mxu0 0.0
  %962 = vmatprep.subr.mxu0 0.0
  %963 = vmatpush1.xpose.msra.mxu0 0.0
  %964 = vmatprep.subr.mxu0 0.0
  %965 = vmatpush1.xpose.msra.mxu0 0.0
  %966 = vmatprep.subr.mxu0 0.0
  %967 = vmatpush1.xpose.msra.mxu0 0.0
  %968 = vmatprep.mubr.f32.mxu0 0.0
  %969 = vmatmul.mubr.f32.gmra.mrb[0].mxu0 %v900
  %v970 = vpop.f32.mrb[0].mxu0
  %v971 = vadd.f32 0.0, %v970
  %v972 = vpop.f32.mrb[0].mxu0
  %973 = vdwg.mxu0
  %v974 = vmul.f32 %v971, 0.25
  %v975 = vsel %vm811, %v974, -inf
  %976 = vmax.xlane.f32.xlu0 %v975
  %v977 = vpop.xlane.xlu0 %976
  %v978 = vsub.f32 %v974, %v977
  %v979 = vmul.f32 %v978, 1.442695
  %v980 = vpow.pop %v979
  %v981 = vsel %vm811, %v980, 0.0
  %982 = vadd.xlane.f32.xlu0 %v981
  %v983 = vpop.xlane.xlu0 %982
  %v984 = vrcp.pop %v983
  %v985 = vmul.f32 %v980, %v984
  %987 = vrot.lane.b32.xlu0 %v727, 112
  %v988 = vpop.permute.xlu0 %987
  %v991 = vsel %vm811, %v985, 0
  %993 = vmatprep.subr.mxu0 0.0
  %994 = vmatpush1.msra.mxu0 %v988
  %995 = vmatprep.subr.mxu0 0.0
  %996 = vmatpush1.msra.mxu0 0.0
  %997 = vmatprep.subr.mxu0 0.0
  %998 = vmatpush1.msra.mxu0 0.0
  %999 = vmatprep.subr.mxu0 0.0
  %1000 = vmatpush1.msra.mxu0 0.0
  %1001 = vmatprep.subr.mxu0 0.0
  %1002 = vmatpush1.msra.mxu0 0.0
  %1003 = vmatprep.subr.mxu0 0.0
  %1004 = vmatpush1.msra.mxu0 0.0
  %1005 = vmatprep.subr.mxu0 0.0
  %1006 = vmatpush1.msra.mxu0 0.0
  %1007 = vmatprep.subr.mxu0 0.0
  %1008 = vmatpush1.msra.mxu0 0.0
  %1009 = vmatprep.subr.mxu0 0.0
  %1010 = vmatpush1.msra.mxu0 0.0
  %1011 = vmatprep.subr.mxu0 0.0
  %1012 = vmatpush1.msra.mxu0 0.0
  %1013 = vmatprep.subr.mxu0 0.0
  %1014 = vmatpush1.msra.mxu0 0.0
  %1015 = vmatprep.subr.mxu0 0.0
  %1016 = vmatpush1.msra.mxu0 0.0
  %1017 = vmatprep.subr.mxu0 0.0
  %1018 = vmatpush1.msra.mxu0 0.0
  %1019 = vmatprep.subr.mxu0 0.0
  %1020 = vmatpush1.msra.mxu0 0.0
  %1021 = vmatprep.subr.mxu0 0.0
  %1022 = vmatpush1.msra.mxu0 0.0
  %1023 = vmatprep.subr.mxu0 0.0
  %1024 = vmatpush1.msra.mxu0 0.0
  %1025 = vmatprep.subr.mxu0 0.0
  %1026 = vmatpush1.msra.mxu0 0.0
  %1027 = vmatprep.subr.mxu0 0.0
  %1028 = vmatpush1.msra.mxu0 0.0
  %1029 = vmatprep.subr.mxu0 0.0
  %1030 = vmatpush1.msra.mxu0 0.0
  %1031 = vmatprep.subr.mxu0 0.0
  %1032 = vmatpush1.msra.mxu0 0.0
  %1033 = vmatprep.subr.mxu0 0.0
  %1034 = vmatpush1.msra.mxu0 0.0
  %1035 = vmatprep.subr.mxu0 0.0
  %1036 = vmatpush1.msra.mxu0 0.0
  %1037 = vmatprep.subr.mxu0 0.0
  %1038 = vmatpush1.msra.mxu0 0.0
  %1039 = vmatprep.subr.mxu0 0.0
  %1040 = vmatpush1.msra.mxu0 0.0
  %1041 = vmatprep.subr.mxu0 0.0
  %1042 = vmatpush1.msra.mxu0 0.0
  %1043 = vmatprep.subr.mxu0 0.0
  %1044 = vmatpush1.msra.mxu0 0.0
  %1045 = vmatprep.subr.mxu0 0.0
  %1046 = vmatpush1.msra.mxu0 0.0
  %1047 = vmatprep.subr.mxu0 0.0
  %1048 = vmatpush1.msra.mxu0 0.0
  %1049 = vmatprep.subr.mxu0 0.0
  %1050 = vmatpush1.msra.mxu0 0.0
  %1051 = vmatprep.subr.mxu0 0.0
  %1052 = vmatpush1.msra.mxu0 0.0
  %1053 = vmatprep.subr.mxu0 0.0
  %1054 = vmatpush1.msra.mxu0 0.0
  %1055 = vmatprep.subr.mxu0 0.0
  %1056 = vmatpush1.msra.mxu0 0.0
  %1057 = vmatprep.mubr.f32.mxu0 0.0
  %1058 = vmatmul.mubr.f32.gmra.mrb[0].mxu0 %v991
  %v1059 = vpop.f32.mrb[0].mxu0
  %v1060 = vadd.f32 0.0, %v1059
  %v1061 = vpop.f32.mrb[0].mxu0
  %1062 = vdwg.mxu0
  %1063 = vrot.lane.b32.xlu0 %v684, 96
  %v1064 = vpop.permute.xlu0 %1063
  %1065 = vrot.lane.b32.xlu0 %v686, 96
  %v1066 = vpop.permute.xlu0 %1065
  %v1067 = vsel %vm733, %v1064, 0
  %v1069 = vsel %vm733, %v1066, 0
  %1071 = vmatprep.subr.mxu0 0.0
  %1072 = vmatpush1.xpose.msra.mxu0 %v1069
  %1073 = vmatprep.subr.mxu0 0.0
  %1074 = vmatpush1.xpose.msra.mxu0 0.0
  %1075 = vmatprep.subr.mxu0 0.0
  %1076 = vmatpush1.xpose.msra.mxu0 0.0
  %1077 = vmatprep.subr.mxu0 0.0
  %1078 = vmatpush1.xpose.msra.mxu0 0.0
  %1079 = vmatprep.subr.mxu0 0.0
  %1080 = vmatpush1.xpose.msra.mxu0 0.0
  %1081 = vmatprep.subr.mxu0 0.0
  %1082 = vmatpush1.xpose.msra.mxu0 0.0
  %1083 = vmatprep.subr.mxu0 0.0
  %1084 = vmatpush1.xpose.msra.mxu0 0.0
  %1085 = vmatprep.subr.mxu0 0.0
  %1086 = vmatpush1.xpose.msra.mxu0 0.0
  %1087 = vmatprep.subr.mxu0 0.0
  %1088 = vmatpush1.xpose.msra.mxu0 0.0
  %1089 = vmatprep.subr.mxu0 0.0
  %1090 = vmatpush1.xpose.msra.mxu0 0.0
  %1091 = vmatprep.subr.mxu0 0.0
  %1092 = vmatpush1.xpose.msra.mxu0 0.0
  %1093 = vmatprep.subr.mxu0 0.0
  %1094 = vmatpush1.xpose.msra.mxu0 0.0
  %1095 = vmatprep.subr.mxu0 0.0
  %1096 = vmatpush1.xpose.msra.mxu0 0.0
  %1097 = vmatprep.subr.mxu0 0.0
  %1098 = vmatpush1.xpose.msra.mxu0 0.0
  %1099 = vmatprep.subr.mxu0 0.0
  %1100 = vmatpush1.xpose.msra.mxu0 0.0
  %1101 = vmatprep.subr.mxu0 0.0
  %1102 = vmatpush1.xpose.msra.mxu0 0.0
  %1103 = vmatprep.subr.mxu0 0.0
  %1104 = vmatpush1.xpose.msra.mxu0 0.0
  %1105 = vmatprep.subr.mxu0 0.0
  %1106 = vmatpush1.xpose.msra.mxu0 0.0
  %1107 = vmatprep.subr.mxu0 0.0
  %1108 = vmatpush1.xpose.msra.mxu0 0.0
  %1109 = vmatprep.subr.mxu0 0.0
  %1110 = vmatpush1.xpose.msra.mxu0 0.0
  %1111 = vmatprep.subr.mxu0 0.0
  %1112 = vmatpush1.xpose.msra.mxu0 0.0
  %1113 = vmatprep.subr.mxu0 0.0
  %1114 = vmatpush1.xpose.msra.mxu0 0.0
  %1115 = vmatprep.subr.mxu0 0.0
  %1116 = vmatpush1.xpose.msra.mxu0 0.0
  %1117 = vmatprep.subr.mxu0 0.0
  %1118 = vmatpush1.xpose.msra.mxu0 0.0
  %1119 = vmatprep.subr.mxu0 0.0
  %1120 = vmatpush1.xpose.msra.mxu0 0.0
  %1121 = vmatprep.subr.mxu0 0.0
  %1122 = vmatpush1.xpose.msra.mxu0 0.0
  %1123 = vmatprep.subr.mxu0 0.0
  %1124 = vmatpush1.xpose.msra.mxu0 0.0
  %1125 = vmatprep.subr.mxu0 0.0
  %1126 = vmatpush1.xpose.msra.mxu0 0.0
  %1127 = vmatprep.subr.mxu0 0.0
  %1128 = vmatpush1.xpose.msra.mxu0 0.0
  %1129 = vmatprep.subr.mxu0 0.0
  %1130 = vmatpush1.xpose.msra.mxu0 0.0
  %1131 = vmatprep.subr.mxu0 0.0
  %1132 = vmatpush1.xpose.msra.mxu0 0.0
  %1133 = vmatprep.subr.mxu0 0.0
  %1134 = vmatpush1.xpose.msra.mxu0 0.0
  %1135 = vmatprep.mubr.f32.mxu0 0.0
  %1136 = vmatmul.mubr.f32.gmra.mrb[0].mxu0 %v1067
  %v1137 = vpop.f32.mrb[0].mxu0
  %v1138 = vadd.f32 0.0, %v1137
  %v1139 = vpop.f32.mrb[0].mxu0
  %1140 = vdwg.mxu0
  %v1141 = vmul.f32 %v1138, 0.25
  %v1142 = vsel %vm811, %v1141, -inf
  %1143 = vmax.xlane.f32.xlu0 %v1142
  %v1144 = vpop.xlane.xlu0 %1143
  %v1145 = vsub.f32 %v1141, %v1144
  %v1146 = vmul.f32 %v1145, 1.442695
  %v1147 = vpow.pop %v1146
  %v1148 = vsel %vm811, %v1147, 0.0
  %1149 = vadd.xlane.f32.xlu0 %v1148
  %v1150 = vpop.xlane.xlu0 %1149
  %v1151 = vrcp.pop %v1150
  %v1152 = vmul.f32 %v1147, %v1151
  %1153 = vrot.lane.b32.xlu0 %v727, 96
  %v1154 = vpop.permute.xlu0 %1153
  %v1157 = vsel %vm811, %v1152, 0
  %1159 = vmatprep.subr.mxu0 0.0
  %1160 = vmatpush1.msra.mxu0 %v1154
  %1161 = vmatprep.subr.mxu0 0.0
  %1162 = vmatpush1.msra.mxu0 0.0
  %1163 = vmatprep.subr.mxu0 0.0
  %1164 = vmatpush1.msra.mxu0 0.0
  %1165 = vmatprep.subr.mxu0 0.0
  %1166 = vmatpush1.msra.mxu0 0.0
  %1167 = vmatprep.subr.mxu0 0.0
  %1168 = vmatpush1.msra.mxu0 0.0
  %1169 = vmatprep.subr.mxu0 0.0
  %1170 = vmatpush1.msra.mxu0 0.0
  %1171 = vmatprep.subr.mxu0 0.0
  %1172 = vmatpush1.msra.mxu0 0.0
  %1173 = vmatprep.subr.mxu0 0.0
  %1174 = vmatpush1.msra.mxu0 0.0
  %1175 = vmatprep.subr.mxu0 0.0
  %1176 = vmatpush1.msra.mxu0 0.0
  %1177 = vmatprep.subr.mxu0 0.0
  %1178 = vmatpush1.msra.mxu0 0.0
  %1179 = vmatprep.subr.mxu0 0.0
  %1180 = vmatpush1.msra.mxu0 0.0
  %1181 = vmatprep.subr.mxu0 0.0
  %1182 = vmatpush1.msra.mxu0 0.0
  %1183 = vmatprep.subr.mxu0 0.0
  %1184 = vmatpush1.msra.mxu0 0.0
  %1185 = vmatprep.subr.mxu0 0.0
  %1186 = vmatpush1.msra.mxu0 0.0
  %1187 = vmatprep.subr.mxu0 0.0
  %1188 = vmatpush1.msra.mxu0 0.0
  %1189 = vmatprep.subr.mxu0 0.0
  %1190 = vmatpush1.msra.mxu0 0.0
  %1191 = vmatprep.subr.mxu0 0.0
  %1192 = vmatpush1.msra.mxu0 0.0
  %1193 = vmatprep.subr.mxu0 0.0
  %1194 = vmatpush1.msra.mxu0 0.0
  %1195 = vmatprep.subr.mxu0 0.0
  %1196 = vmatpush1.msra.mxu0 0.0
  %1197 = vmatprep.subr.mxu0 0.0
  %1198 = vmatpush1.msra.mxu0 0.0
  %1199 = vmatprep.subr.mxu0 0.0
  %1200 = vmatpush1.msra.mxu0 0.0
  %1201 = vmatprep.subr.mxu0 0.0
  %1202 = vmatpush1.msra.mxu0 0.0
  %1203 = vmatprep.subr.mxu0 0.0
  %1204 = vmatpush1.msra.mxu0 0.0
  %1205 = vmatprep.subr.mxu0 0.0
  %1206 = vmatpush1.msra.mxu0 0.0
  %1207 = vmatprep.subr.mxu0 0.0
  %1208 = vmatpush1.msra.mxu0 0.0
  %1209 = vmatprep.subr.mxu0 0.0
  %1210 = vmatpush1.msra.mxu0 0.0
  %1211 = vmatprep.subr.mxu0 0.0
  %1212 = vmatpush1.msra.mxu0 0.0
  %1213 = vmatprep.subr.mxu0 0.0
  %1214 = vmatpush1.msra.mxu0 0.0
  %1215 = vmatprep.subr.mxu0 0.0
  %1216 = vmatpush1.msra.mxu0 0.0
  %1217 = vmatprep.subr.mxu0 0.0
  %1218 = vmatpush1.msra.mxu0 0.0
  %1219 = vmatprep.subr.mxu0 0.0
  %1220 = vmatpush1.msra.mxu0 0.0
  %1221 = vmatprep.subr.mxu0 0.0
  %1222 = vmatpush1.msra.mxu0 0.0
  %1223 = vmatprep.mubr.f32.mxu0 0.0
  %1224 = vmatmul.mubr.f32.gmra.mrb[0].mxu0 %v1157
  %v1225 = vpop.f32.mrb[0].mxu0
  %v1226 = vadd.f32 0.0, %v1225
  %v1227 = vpop.f32.mrb[0].mxu0
  %1228 = vdwg.mxu0
  %1229 = vrot.lane.b32.xlu0 %v684, 80
  %v1230 = vpop.permute.xlu0 %1229
  %1231 = vrot.lane.b32.xlu0 %v686, 80
  %v1232 = vpop.permute.xlu0 %1231
  %v1233 = vsel %vm733, %v1230, 0
  %v1235 = vsel %vm733, %v1232, 0
  %1237 = vmatprep.subr.mxu0 0.0
  %1238 = vmatpush1.xpose.msra.mxu0 %v1235
  %1239 = vmatprep.subr.mxu0 0.0
  %1240 = vmatpush1.xpose.msra.mxu0 0.0
  %1241 = vmatprep.subr.mxu0 0.0
  %1242 = vmatpush1.xpose.msra.mxu0 0.0
  %1243 = vmatprep.subr.mxu0 0.0
  %1244 = vmatpush1.xpose.msra.mxu0 0.0
  %1245 = vmatprep.subr.mxu0 0.0
  %1246 = vmatpush1.xpose.msra.mxu0 0.0
  %1247 = vmatprep.subr.mxu0 0.0
  %1248 = vmatpush1.xpose.msra.mxu0 0.0
  %1249 = vmatprep.subr.mxu0 0.0
  %1250 = vmatpush1.xpose.msra.mxu0 0.0
  %1251 = vmatprep.subr.mxu0 0.0
  %1252 = vmatpush1.xpose.msra.mxu0 0.0
  %1253 = vmatprep.subr.mxu0 0.0
  %1254 = vmatpush1.xpose.msra.mxu0 0.0
  %1255 = vmatprep.subr.mxu0 0.0
  %1256 = vmatpush1.xpose.msra.mxu0 0.0
  %1257 = vmatprep.subr.mxu0 0.0
  %1258 = vmatpush1.xpose.msra.mxu0 0.0
  %1259 = vmatprep.subr.mxu0 0.0
  %1260 = vmatpush1.xpose.msra.mxu0 0.0
  %1261 = vmatprep.subr.mxu0 0.0
  %1262 = vmatpush1.xpose.msra.mxu0 0.0
  %1263 = vmatprep.subr.mxu0 0.0
  %1264 = vmatpush1.xpose.msra.mxu0 0.0
  %1265 = vmatprep.subr.mxu0 0.0
  %1266 = vmatpush1.xpose.msra.mxu0 0.0
  %1267 = vmatprep.subr.mxu0 0.0
  %1268 = vmatpush1.xpose.msra.mxu0 0.0
  %1269 = vmatprep.subr.mxu0 0.0
  %1270 = vmatpush1.xpose.msra.mxu0 0.0
  %1271 = vmatprep.subr.mxu0 0.0
  %1272 = vmatpush1.xpose.msra.mxu0 0.0
  %1273 = vmatprep.subr.mxu0 0.0
  %1274 = vmatpush1.xpose.msra.mxu0 0.0
  %1275 = vmatprep.subr.mxu0 0.0
  %1276 = vmatpush1.xpose.msra.mxu0 0.0
  %1277 = vmatprep.subr.mxu0 0.0
  %1278 = vmatpush1.xpose.msra.mxu0 0.0
  %1279 = vmatprep.subr.mxu0 0.0
  %1280 = vmatpush1.xpose.msra.mxu0 0.0
  %1281 = vmatprep.subr.mxu0 0.0
  %1282 = vmatpush1.xpose.msra.mxu0 0.0
  %1283 = vmatprep.subr.mxu0 0.0
  %1284 = vmatpush1.xpose.msra.mxu0 0.0
  %1285 = vmatprep.subr.mxu0 0.0
  %1286 = vmatpush1.xpose.msra.mxu0 0.0
  %1287 = vmatprep.subr.mxu0 0.0
  %1288 = vmatpush1.xpose.msra.mxu0 0.0
  %1289 = vmatprep.subr.mxu0 0.0
  %1290 = vmatpush1.xpose.msra.mxu0 0.0
  %1291 = vmatprep.subr.mxu0 0.0
  %1292 = vmatpush1.xpose.msra.mxu0 0.0
  %1293 = vmatprep.subr.mxu0 0.0
  %1294 = vmatpush1.xpose.msra.mxu0 0.0
  %1295 = vmatprep.subr.mxu0 0.0
  %1296 = vmatpush1.xpose.msra.mxu0 0.0
  %1297 = vmatprep.subr.mxu0 0.0
  %1298 = vmatpush1.xpose.msra.mxu0 0.0
  %1299 = vmatprep.subr.mxu0 0.0
  %1300 = vmatpush1.xpose.msra.mxu0 0.0
  %1301 = vmatprep.mubr.f32.mxu0 0.0
  %1302 = vmatmul.mubr.f32.gmra.mrb[0].mxu0 %v1233
  %v1303 = vpop.f32.mrb[0].mxu0
  %v1304 = vadd.f32 0.0, %v1303
  %v1305 = vpop.f32.mrb[0].mxu0
  %1306 = vdwg.mxu0
  %v1307 = vmul.f32 %v1304, 0.25
  %v1308 = vsel %vm811, %v1307, -inf
  %1309 = vmax.xlane.f32.xlu0 %v1308
  %v1310 = vpop.xlane.xlu0 %1309
  %v1311 = vsub.f32 %v1307, %v1310
  %v1312 = vmul.f32 %v1311, 1.442695
  %v1313 = vpow.pop %v1312
  %v1314 = vsel %vm811, %v1313, 0.0
  %1315 = vadd.xlane.f32.xlu0 %v1314
  %v1316 = vpop.xlane.xlu0 %1315
  %v1317 = vrcp.pop %v1316
  %v1318 = vmul.f32 %v1313, %v1317
  %1319 = vrot.lane.b32.xlu0 %v727, 80
  %v1320 = vpop.permute.xlu0 %1319
  %v1323 = vsel %vm811, %v1318, 0
  %1325 = vmatprep.subr.mxu0 0.0
  %1326 = vmatpush1.msra.mxu0 %v1320
  %1327 = vmatprep.subr.mxu0 0.0
  %1328 = vmatpush1.msra.mxu0 0.0
  %1329 = vmatprep.subr.mxu0 0.0
  %1330 = vmatpush1.msra.mxu0 0.0
  %1331 = vmatprep.subr.mxu0 0.0
  %1332 = vmatpush1.msra.mxu0 0.0
  %1333 = vmatprep.subr.mxu0 0.0
  %1334 = vmatpush1.msra.mxu0 0.0
  %1335 = vmatprep.subr.mxu0 0.0
  %1336 = vmatpush1.msra.mxu0 0.0
  %1337 = vmatprep.subr.mxu0 0.0
  %1338 = vmatpush1.msra.mxu0 0.0
  %1339 = vmatprep.subr.mxu0 0.0
  %1340 = vmatpush1.msra.mxu0 0.0
  %1341 = vmatprep.subr.mxu0 0.0
  %1342 = vmatpush1.msra.mxu0 0.0
  %1343 = vmatprep.subr.mxu0 0.0
  %1344 = vmatpush1.msra.mxu0 0.0
  %1345 = vmatprep.subr.mxu0 0.0
  %1346 = vmatpush1.msra.mxu0 0.0
  %1347 = vmatprep.subr.mxu0 0.0
  %1348 = vmatpush1.msra.mxu0 0.0
  %1349 = vmatprep.subr.mxu0 0.0
  %1350 = vmatpush1.msra.mxu0 0.0
  %1351 = vmatprep.subr.mxu0 0.0
  %1352 = vmatpush1.msra.mxu0 0.0
  %1353 = vmatprep.subr.mxu0 0.0
  %1354 = vmatpush1.msra.mxu0 0.0
  %1355 = vmatprep.subr.mxu0 0.0
  %1356 = vmatpush1.msra.mxu0 0.0
  %1357 = vmatprep.subr.mxu0 0.0
  %1358 = vmatpush1.msra.mxu0 0.0
  %1359 = vmatprep.subr.mxu0 0.0
  %1360 = vmatpush1.msra.mxu0 0.0
  %1361 = vmatprep.subr.mxu0 0.0
  %1362 = vmatpush1.msra.mxu0 0.0
  %1363 = vmatprep.subr.mxu0 0.0
  %1364 = vmatpush1.msra.mxu0 0.0
  %1365 = vmatprep.subr.mxu0 0.0
  %1366 = vmatpush1.msra.mxu0 0.0
  %1367 = vmatprep.subr.mxu0 0.0
  %1368 = vmatpush1.msra.mxu0 0.0
  %1369 = vmatprep.subr.mxu0 0.0
  %1370 = vmatpush1.msra.mxu0 0.0
  %1371 = vmatprep.subr.mxu0 0.0
  %1372 = vmatpush1.msra.mxu0 0.0
  %1373 = vmatprep.subr.mxu0 0.0
  %1374 = vmatpush1.msra.mxu0 0.0
  %1375 = vmatprep.subr.mxu0 0.0
  %1376 = vmatpush1.msra.mxu0 0.0
  %1377 = vmatprep.subr.mxu0 0.0
  %1378 = vmatpush1.msra.mxu0 0.0
  %1379 = vmatprep.subr.mxu0 0.0
  %1380 = vmatpush1.msra.mxu0 0.0
  %1381 = vmatprep.subr.mxu0 0.0
  %1382 = vmatpush1.msra.mxu0 0.0
  %1383 = vmatprep.subr.mxu0 0.0
  %1384 = vmatpush1.msra.mxu0 0.0
  %1385 = vmatprep.subr.mxu0 0.0
  %1386 = vmatpush1.msra.mxu0 0.0
  %1387 = vmatprep.subr.mxu0 0.0
  %1388 = vmatpush1.msra.mxu0 0.0
  %1389 = vmatprep.mubr.f32.mxu0 0.0
  %1390 = vmatmul.mubr.f32.gmra.mrb[0].mxu0 %v1323
  %v1391 = vpop.f32.mrb[0].mxu0
  %v1392 = vadd.f32 0.0, %v1391
  %v1393 = vpop.f32.mrb[0].mxu0
  %1394 = vdwg.mxu0
  %1395 = vrot.lane.b32.xlu0 %v684, 64
  %v1396 = vpop.permute.xlu0 %1395
  %1397 = vrot.lane.b32.xlu0 %v686, 64
  %v1398 = vpop.permute.xlu0 %1397
  %v1399 = vsel %vm733, %v1396, 0
  %v1401 = vsel %vm733, %v1398, 0
  %1403 = vmatprep.subr.mxu0 0.0
  %1404 = vmatpush1.xpose.msra.mxu0 %v1401
  %1405 = vmatprep.subr.mxu0 0.0
  %1406 = vmatpush1.xpose.msra.mxu0 0.0
  %1407 = vmatprep.subr.mxu0 0.0
  %1408 = vmatpush1.xpose.msra.mxu0 0.0
  %1409 = vmatprep.subr.mxu0 0.0
  %1410 = vmatpush1.xpose.msra.mxu0 0.0
  %1411 = vmatprep.subr.mxu0 0.0
  %1412 = vmatpush1.xpose.msra.mxu0 0.0
  %1413 = vmatprep.subr.mxu0 0.0
  %1414 = vmatpush1.xpose.msra.mxu0 0.0
  %1415 = vmatprep.subr.mxu0 0.0
  %1416 = vmatpush1.xpose.msra.mxu0 0.0
  %1417 = vmatprep.subr.mxu0 0.0
  %1418 = vmatpush1.xpose.msra.mxu0 0.0
  %1419 = vmatprep.subr.mxu0 0.0
  %1420 = vmatpush1.xpose.msra.mxu0 0.0
  %1421 = vmatprep.subr.mxu0 0.0
  %1422 = vmatpush1.xpose.msra.mxu0 0.0
  %1423 = vmatprep.subr.mxu0 0.0
  %1424 = vmatpush1.xpose.msra.mxu0 0.0
  %1425 = vmatprep.subr.mxu0 0.0
  %1426 = vmatpush1.xpose.msra.mxu0 0.0
  %1427 = vmatprep.subr.mxu0 0.0
  %1428 = vmatpush1.xpose.msra.mxu0 0.0
  %1429 = vmatprep.subr.mxu0 0.0
  %1430 = vmatpush1.xpose.msra.mxu0 0.0
  %1431 = vmatprep.subr.mxu0 0.0
  %1432 = vmatpush1.xpose.msra.mxu0 0.0
  %1433 = vmatprep.subr.mxu0 0.0
  %1434 = vmatpush1.xpose.msra.mxu0 0.0
  %1435 = vmatprep.subr.mxu0 0.0
  %1436 = vmatpush1.xpose.msra.mxu0 0.0
  %1437 = vmatprep.subr.mxu0 0.0
  %1438 = vmatpush1.xpose.msra.mxu0 0.0
  %1439 = vmatprep.subr.mxu0 0.0
  %1440 = vmatpush1.xpose.msra.mxu0 0.0
  %1441 = vmatprep.subr.mxu0 0.0
  %1442 = vmatpush1.xpose.msra.mxu0 0.0
  %1443 = vmatprep.subr.mxu0 0.0
  %1444 = vmatpush1.xpose.msra.mxu0 0.0
  %1445 = vmatprep.subr.mxu0 0.0
  %1446 = vmatpush1.xpose.msra.mxu0 0.0
  %1447 = vmatprep.subr.mxu0 0.0
  %1448 = vmatpush1.xpose.msra.mxu0 0.0
  %1449 = vmatprep.subr.mxu0 0.0
  %1450 = vmatpush1.xpose.msra.mxu0 0.0
  %1451 = vmatprep.subr.mxu0 0.0
  %1452 = vmatpush1.xpose.msra.mxu0 0.0
  %1453 = vmatprep.subr.mxu0 0.0
  %1454 = vmatpush1.xpose.msra.mxu0 0.0
  %1455 = vmatprep.subr.mxu0 0.0
  %1456 = vmatpush1.xpose.msra.mxu0 0.0
  %1457 = vmatprep.subr.mxu0 0.0
  %1458 = vmatpush1.xpose.msra.mxu0 0.0
  %1459 = vmatprep.subr.mxu0 0.0
  %1460 = vmatpush1.xpose.msra.mxu0 0.0
  %1461 = vmatprep.subr.mxu0 0.0
  %1462 = vmatpush1.xpose.msra.mxu0 0.0
  %1463 = vmatprep.subr.mxu0 0.0
  %1464 = vmatpush1.xpose.msra.mxu0 0.0
  %1465 = vmatprep.subr.mxu0 0.0
  %1466 = vmatpush1.xpose.msra.mxu0 0.0
  %1467 = vmatprep.mubr.f32.mxu0 0.0
  %1468 = vmatmul.mubr.f32.gmra.mrb[0].mxu0 %v1399
  %v1469 = vpop.f32.mrb[0].mxu0
  %v1470 = vadd.f32 0.0, %v1469
  %v1471 = vpop.f32.mrb[0].mxu0
  %1472 = vdwg.mxu0
  %v1473 = vmul.f32 %v1470, 0.25
  %v1474 = vsel %vm811, %v1473, -inf
  %1475 = vmax.xlane.f32.xlu0 %v1474
  %v1476 = vpop.xlane.xlu0 %1475
  %v1477 = vsub.f32 %v1473, %v1476
  %v1478 = vmul.f32 %v1477, 1.442695
  %v1479 = vpow.pop %v1478
  %v1480 = vsel %vm811, %v1479, 0.0
  %1481 = vadd.xlane.f32.xlu0 %v1480
  %v1482 = vpop.xlane.xlu0 %1481
  %v1483 = vrcp.pop %v1482
  %v1484 = vmul.f32 %v1479, %v1483
  %1485 = vrot.lane.b32.xlu0 %v727, 64
  %v1486 = vpop.permute.xlu0 %1485
  %v1489 = vsel %vm811, %v1484, 0
  %1491 = vmatprep.subr.mxu0 0.0
  %1492 = vmatpush1.msra.mxu0 %v1486
  %1493 = vmatprep.subr.mxu0 0.0
  %1494 = vmatpush1.msra.mxu0 0.0
  %1495 = vmatprep.subr.mxu0 0.0
  %1496 = vmatpush1.msra.mxu0 0.0
  %1497 = vmatprep.subr.mxu0 0.0
  %1498 = vmatpush1.msra.mxu0 0.0
  %1499 = vmatprep.subr.mxu0 0.0
  %1500 = vmatpush1.msra.mxu0 0.0
  %1501 = vmatprep.subr.mxu0 0.0
  %1502 = vmatpush1.msra.mxu0 0.0
  %1503 = vmatprep.subr.mxu0 0.0
  %1504 = vmatpush1.msra.mxu0 0.0
  %1505 = vmatprep.subr.mxu0 0.0
  %1506 = vmatpush1.msra.mxu0 0.0
  %1507 = vmatprep.subr.mxu0 0.0
  %1508 = vmatpush1.msra.mxu0 0.0
  %1509 = vmatprep.subr.mxu0 0.0
  %1510 = vmatpush1.msra.mxu0 0.0
  %1511 = vmatprep.subr.mxu0 0.0
  %1512 = vmatpush1.msra.mxu0 0.0
  %1513 = vmatprep.subr.mxu0 0.0
  %1514 = vmatpush1.msra.mxu0 0.0
  %1515 = vmatprep.subr.mxu0 0.0
  %1516 = vmatpush1.msra.mxu0 0.0
  %1517 = vmatprep.subr.mxu0 0.0
  %1518 = vmatpush1.msra.mxu0 0.0
  %1519 = vmatprep.subr.mxu0 0.0
  %1520 = vmatpush1.msra.mxu0 0.0
  %1521 = vmatprep.subr.mxu0 0.0
  %1522 = vmatpush1.msra.mxu0 0.0
  %1523 = vmatprep.subr.mxu0 0.0
  %1524 = vmatpush1.msra.mxu0 0.0
  %1525 = vmatprep.subr.mxu0 0.0
  %1526 = vmatpush1.msra.mxu0 0.0
  %1527 = vmatprep.subr.mxu0 0.0
  %1528 = vmatpush1.msra.mxu0 0.0
  %1529 = vmatprep.subr.mxu0 0.0
  %1530 = vmatpush1.msra.mxu0 0.0
  %1531 = vmatprep.subr.mxu0 0.0
  %1532 = vmatpush1.msra.mxu0 0.0
  %1533 = vmatprep.subr.mxu0 0.0
  %1534 = vmatpush1.msra.mxu0 0.0
  %1535 = vmatprep.subr.mxu0 0.0
  %1536 = vmatpush1.msra.mxu0 0.0
  %1537 = vmatprep.subr.mxu0 0.0
  %1538 = vmatpush1.msra.mxu0 0.0
  %1539 = vmatprep.subr.mxu0 0.0
  %1540 = vmatpush1.msra.mxu0 0.0
  %1541 = vmatprep.subr.mxu0 0.0
  %1542 = vmatpush1.msra.mxu0 0.0
  %1543 = vmatprep.subr.mxu0 0.0
  %1544 = vmatpush1.msra.mxu0 0.0
  %1545 = vmatprep.subr.mxu0 0.0
  %1546 = vmatpush1.msra.mxu0 0.0
  %1547 = vmatprep.subr.mxu0 0.0
  %1548 = vmatpush1.msra.mxu0 0.0
  %1549 = vmatprep.subr.mxu0 0.0
  %1550 = vmatpush1.msra.mxu0 0.0
  %1551 = vmatprep.subr.mxu0 0.0
  %1552 = vmatpush1.msra.mxu0 0.0
  %1553 = vmatprep.subr.mxu0 0.0
  %1554 = vmatpush1.msra.mxu0 0.0
  %1555 = vmatprep.mubr.f32.mxu0 0.0
  %1556 = vmatmul.mubr.f32.gmra.mrb[0].mxu0 %v1489
  %v1557 = vpop.f32.mrb[0].mxu0
  %v1558 = vadd.f32 0.0, %v1557
  %v1559 = vpop.f32.mrb[0].mxu0
  %1560 = vdwg.mxu0
  %1561 = vrot.lane.b32.xlu0 %v684, 48
  %v1562 = vpop.permute.xlu0 %1561
  %1563 = vrot.lane.b32.xlu0 %v686, 48
  %v1564 = vpop.permute.xlu0 %1563
  %v1565 = vsel %vm733, %v1562, 0
  %v1567 = vsel %vm733, %v1564, 0
  %1569 = vmatprep.subr.mxu0 0.0
  %1570 = vmatpush1.xpose.msra.mxu0 %v1567
  %1571 = vmatprep.subr.mxu0 0.0
  %1572 = vmatpush1.xpose.msra.mxu0 0.0
  %1573 = vmatprep.subr.mxu0 0.0
  %1574 = vmatpush1.xpose.msra.mxu0 0.0
  %1575 = vmatprep.subr.mxu0 0.0
  %1576 = vmatpush1.xpose.msra.mxu0 0.0
  %1577 = vmatprep.subr.mxu0 0.0
  %1578 = vmatpush1.xpose.msra.mxu0 0.0
  %1579 = vmatprep.subr.mxu0 0.0
  %1580 = vmatpush1.xpose.msra.mxu0 0.0
  %1581 = vmatprep.subr.mxu0 0.0
  %1582 = vmatpush1.xpose.msra.mxu0 0.0
  %1583 = vmatprep.subr.mxu0 0.0
  %1584 = vmatpush1.xpose.msra.mxu0 0.0
  %1585 = vmatprep.subr.mxu0 0.0
  %1586 = vmatpush1.xpose.msra.mxu0 0.0
  %1587 = vmatprep.subr.mxu0 0.0
  %1588 = vmatpush1.xpose.msra.mxu0 0.0
  %1589 = vmatprep.subr.mxu0 0.0
  %1590 = vmatpush1.xpose.msra.mxu0 0.0
  %1591 = vmatprep.subr.mxu0 0.0
  %1592 = vmatpush1.xpose.msra.mxu0 0.0
  %1593 = vmatprep.subr.mxu0 0.0
  %1594 = vmatpush1.xpose.msra.mxu0 0.0
  %1595 = vmatprep.subr.mxu0 0.0
  %1596 = vmatpush1.xpose.msra.mxu0 0.0
  %1597 = vmatprep.subr.mxu0 0.0
  %1598 = vmatpush1.xpose.msra.mxu0 0.0
  %1599 = vmatprep.subr.mxu0 0.0
  %1600 = vmatpush1.xpose.msra.mxu0 0.0
  %1601 = vmatprep.subr.mxu0 0.0
  %1602 = vmatpush1.xpose.msra.mxu0 0.0
  %1603 = vmatprep.subr.mxu0 0.0
  %1604 = vmatpush1.xpose.msra.mxu0 0.0
  %1605 = vmatprep.subr.mxu0 0.0
  %1606 = vmatpush1.xpose.msra.mxu0 0.0
  %1607 = vmatprep.subr.mxu0 0.0
  %1608 = vmatpush1.xpose.msra.mxu0 0.0
  %1609 = vmatprep.subr.mxu0 0.0
  %1610 = vmatpush1.xpose.msra.mxu0 0.0
  %1611 = vmatprep.subr.mxu0 0.0
  %1612 = vmatpush1.xpose.msra.mxu0 0.0
  %1613 = vmatprep.subr.mxu0 0.0
  %1614 = vmatpush1.xpose.msra.mxu0 0.0
  %1615 = vmatprep.subr.mxu0 0.0
  %1616 = vmatpush1.xpose.msra.mxu0 0.0
  %1617 = vmatprep.subr.mxu0 0.0
  %1618 = vmatpush1.xpose.msra.mxu0 0.0
  %1619 = vmatprep.subr.mxu0 0.0
  %1620 = vmatpush1.xpose.msra.mxu0 0.0
  %1621 = vmatprep.subr.mxu0 0.0
  %1622 = vmatpush1.xpose.msra.mxu0 0.0
  %1623 = vmatprep.subr.mxu0 0.0
  %1624 = vmatpush1.xpose.msra.mxu0 0.0
  %1625 = vmatprep.subr.mxu0 0.0
  %1626 = vmatpush1.xpose.msra.mxu0 0.0
  %1627 = vmatprep.subr.mxu0 0.0
  %1628 = vmatpush1.xpose.msra.mxu0 0.0
  %1629 = vmatprep.subr.mxu0 0.0
  %1630 = vmatpush1.xpose.msra.mxu0 0.0
  %1631 = vmatprep.subr.mxu0 0.0
  %1632 = vmatpush1.xpose.msra.mxu0 0.0
  %1633 = vmatprep.mubr.f32.mxu0 0.0
  %1634 = vmatmul.mubr.f32.gmra.mrb[0].mxu0 %v1565
  %v1635 = vpop.f32.mrb[0].mxu0
  %v1636 = vadd.f32 0.0, %v1635
  %v1637 = vpop.f32.mrb[0].mxu0
  %1638 = vdwg.mxu0
  %v1639 = vmul.f32 %v1636, 0.25
  %v1640 = vsel %vm811, %v1639, -inf
  %1641 = vmax.xlane.f32.xlu0 %v1640
  %v1642 = vpop.xlane.xlu0 %1641
  %v1643 = vsub.f32 %v1639, %v1642
  %v1644 = vmul.f32 %v1643, 1.442695
  %v1645 = vpow.pop %v1644
  %v1646 = vsel %vm811, %v1645, 0.0
  %1647 = vadd.xlane.f32.xlu0 %v1646
  %v1648 = vpop.xlane.xlu0 %1647
  %v1649 = vrcp.pop %v1648
  %v1650 = vmul.f32 %v1645, %v1649
  %1651 = vrot.lane.b32.xlu0 %v727, 48
  %v1652 = vpop.permute.xlu0 %1651
  %v1655 = vsel %vm811, %v1650, 0
  %1657 = vmatprep.subr.mxu0 0.0
  %1658 = vmatpush1.msra.mxu0 %v1652
  %1659 = vmatprep.subr.mxu0 0.0
  %1660 = vmatpush1.msra.mxu0 0.0
  %1661 = vmatprep.subr.mxu0 0.0
  %1662 = vmatpush1.msra.mxu0 0.0
  %1663 = vmatprep.subr.mxu0 0.0
  %1664 = vmatpush1.msra.mxu0 0.0
  %1665 = vmatprep.subr.mxu0 0.0
  %1666 = vmatpush1.msra.mxu0 0.0
  %1667 = vmatprep.subr.mxu0 0.0
  %1668 = vmatpush1.msra.mxu0 0.0
  %1669 = vmatprep.subr.mxu0 0.0
  %1670 = vmatpush1.msra.mxu0 0.0
  %1671 = vmatprep.subr.mxu0 0.0
  %1672 = vmatpush1.msra.mxu0 0.0
  %1673 = vmatprep.subr.mxu0 0.0
  %1674 = vmatpush1.msra.mxu0 0.0
  %1675 = vmatprep.subr.mxu0 0.0
  %1676 = vmatpush1.msra.mxu0 0.0
  %1677 = vmatprep.subr.mxu0 0.0
  %1678 = vmatpush1.msra.mxu0 0.0
  %1679 = vmatprep.subr.mxu0 0.0
  %1680 = vmatpush1.msra.mxu0 0.0
  %1681 = vmatprep.subr.mxu0 0.0
  %1682 = vmatpush1.msra.mxu0 0.0
  %1683 = vmatprep.subr.mxu0 0.0
  %1684 = vmatpush1.msra.mxu0 0.0
  %1685 = vmatprep.subr.mxu0 0.0
  %1686 = vmatpush1.msra.mxu0 0.0
  %1687 = vmatprep.subr.mxu0 0.0
  %1688 = vmatpush1.msra.mxu0 0.0
  %1689 = vmatprep.subr.mxu0 0.0
  %1690 = vmatpush1.msra.mxu0 0.0
  %1691 = vmatprep.subr.mxu0 0.0
  %1692 = vmatpush1.msra.mxu0 0.0
  %1693 = vmatprep.subr.mxu0 0.0
  %1694 = vmatpush1.msra.mxu0 0.0
  %1695 = vmatprep.subr.mxu0 0.0
  %1696 = vmatpush1.msra.mxu0 0.0
  %1697 = vmatprep.subr.mxu0 0.0
  %1698 = vmatpush1.msra.mxu0 0.0
  %1699 = vmatprep.subr.mxu0 0.0
  %1700 = vmatpush1.msra.mxu0 0.0
  %1701 = vmatprep.subr.mxu0 0.0
  %1702 = vmatpush1.msra.mxu0 0.0
  %1703 = vmatprep.subr.mxu0 0.0
  %1704 = vmatpush1.msra.mxu0 0.0
  %1705 = vmatprep.subr.mxu0 0.0
  %1706 = vmatpush1.msra.mxu0 0.0
  %1707 = vmatprep.subr.mxu0 0.0
  %1708 = vmatpush1.msra.mxu0 0.0
  %1709 = vmatprep.subr.mxu0 0.0
  %1710 = vmatpush1.msra.mxu0 0.0
  %1711 = vmatprep.subr.mxu0 0.0
  %1712 = vmatpush1.msra.mxu0 0.0
  %1713 = vmatprep.subr.mxu0 0.0
  %1714 = vmatpush1.msra.mxu0 0.0
  %1715 = vmatprep.subr.mxu0 0.0
  %1716 = vmatpush1.msra.mxu0 0.0
  %1717 = vmatprep.subr.mxu0 0.0
  %1718 = vmatpush1.msra.mxu0 0.0
  %1719 = vmatprep.subr.mxu0 0.0
  %1720 = vmatpush1.msra.mxu0 0.0
  %1721 = vmatprep.mubr.f32.mxu0 0.0
  %1722 = vmatmul.mubr.f32.gmra.mrb[0].mxu0 %v1655
  %v1723 = vpop.f32.mrb[0].mxu0
  %v1724 = vadd.f32 0.0, %v1723
  %v1725 = vpop.f32.mrb[0].mxu0
  %1726 = vdwg.mxu0
  %1727 = vrot.lane.b32.xlu0 %v684, 32
  %v1728 = vpop.permute.xlu0 %1727
  %1729 = vrot.lane.b32.xlu0 %v686, 32
  %v1730 = vpop.permute.xlu0 %1729
  %v1731 = vsel %vm733, %v1728, 0
  %v1733 = vsel %vm733, %v1730, 0
  %1735 = vmatprep.subr.mxu0 0.0
  %1736 = vmatpush1.xpose.msra.mxu0 %v1733
  %1737 = vmatprep.subr.mxu0 0.0
  %1738 = vmatpush1.xpose.msra.mxu0 0.0
  %1739 = vmatprep.subr.mxu0 0.0
  %1740 = vmatpush1.xpose.msra.mxu0 0.0
  %1741 = vmatprep.subr.mxu0 0.0
  %1742 = vmatpush1.xpose.msra.mxu0 0.0
  %1743 = vmatprep.subr.mxu0 0.0
  %1744 = vmatpush1.xpose.msra.mxu0 0.0
  %1745 = vmatprep.subr.mxu0 0.0
  %1746 = vmatpush1.xpose.msra.mxu0 0.0
  %1747 = vmatprep.subr.mxu0 0.0
  %1748 = vmatpush1.xpose.msra.mxu0 0.0
  %1749 = vmatprep.subr.mxu0 0.0
  %1750 = vmatpush1.xpose.msra.mxu0 0.0
  %1751 = vmatprep.subr.mxu0 0.0
  %1752 = vmatpush1.xpose.msra.mxu0 0.0
  %1753 = vmatprep.subr.mxu0 0.0
  %1754 = vmatpush1.xpose.msra.mxu0 0.0
  %1755 = vmatprep.subr.mxu0 0.0
  %1756 = vmatpush1.xpose.msra.mxu0 0.0
  %1757 = vmatprep.subr.mxu0 0.0
  %1758 = vmatpush1.xpose.msra.mxu0 0.0
  %1759 = vmatprep.subr.mxu0 0.0
  %1760 = vmatpush1.xpose.msra.mxu0 0.0
  %1761 = vmatprep.subr.mxu0 0.0
  %1762 = vmatpush1.xpose.msra.mxu0 0.0
  %1763 = vmatprep.subr.mxu0 0.0
  %1764 = vmatpush1.xpose.msra.mxu0 0.0
  %1765 = vmatprep.subr.mxu0 0.0
  %1766 = vmatpush1.xpose.msra.mxu0 0.0
  %1767 = vmatprep.subr.mxu0 0.0
  %1768 = vmatpush1.xpose.msra.mxu0 0.0
  %1769 = vmatprep.subr.mxu0 0.0
  %1770 = vmatpush1.xpose.msra.mxu0 0.0
  %1771 = vmatprep.subr.mxu0 0.0
  %1772 = vmatpush1.xpose.msra.mxu0 0.0
  %1773 = vmatprep.subr.mxu0 0.0
  %1774 = vmatpush1.xpose.msra.mxu0 0.0
  %1775 = vmatprep.subr.mxu0 0.0
  %1776 = vmatpush1.xpose.msra.mxu0 0.0
  %1777 = vmatprep.subr.mxu0 0.0
  %1778 = vmatpush1.xpose.msra.mxu0 0.0
  %1779 = vmatprep.subr.mxu0 0.0
  %1780 = vmatpush1.xpose.msra.mxu0 0.0
  %1781 = vmatprep.subr.mxu0 0.0
  %1782 = vmatpush1.xpose.msra.mxu0 0.0
  %1783 = vmatprep.subr.mxu0 0.0
  %1784 = vmatpush1.xpose.msra.mxu0 0.0
  %1785 = vmatprep.subr.mxu0 0.0
  %1786 = vmatpush1.xpose.msra.mxu0 0.0
  %1787 = vmatprep.subr.mxu0 0.0
  %1788 = vmatpush1.xpose.msra.mxu0 0.0
  %1789 = vmatprep.subr.mxu0 0.0
  %1790 = vmatpush1.xpose.msra.mxu0 0.0
  %1791 = vmatprep.subr.mxu0 0.0
  %1792 = vmatpush1.xpose.msra.mxu0 0.0
  %1793 = vmatprep.subr.mxu0 0.0
  %1794 = vmatpush1.xpose.msra.mxu0 0.0
  %1795 = vmatprep.subr.mxu0 0.0
  %1796 = vmatpush1.xpose.msra.mxu0 0.0
  %1797 = vmatprep.subr.mxu0 0.0
  %1798 = vmatpush1.xpose.msra.mxu0 0.0
  %1799 = vmatprep.mubr.f32.mxu0 0.0
  %1800 = vmatmul.mubr.f32.gmra.mrb[0].mxu0 %v1731
  %v1801 = vpop.f32.mrb[0].mxu0
  %v1802 = vadd.f32 0.0, %v1801
  %v1803 = vpop.f32.mrb[0].mxu0
  %1804 = vdwg.mxu0
  %v1805 = vmul.f32 %v1802, 0.25
  %v1806 = vsel %vm811, %v1805, -inf
  %1807 = vmax.xlane.f32.xlu0 %v1806
  %v1808 = vpop.xlane.xlu0 %1807
  %v1809 = vsub.f32 %v1805, %v1808
  %v1810 = vmul.f32 %v1809, 1.442695
  %v1811 = vpow.pop %v1810
  %v1812 = vsel %vm811, %v1811, 0.0
  %1813 = vadd.xlane.f32.xlu0 %v1812
  %v1814 = vpop.xlane.xlu0 %1813
  %v1815 = vrcp.pop %v1814
  %v1816 = vmul.f32 %v1811, %v1815
  %1817 = vrot.lane.b32.xlu0 %v727, 32
  %v1818 = vpop.permute.xlu0 %1817
  %v1821 = vsel %vm811, %v1816, 0
  %1823 = vmatprep.subr.mxu0 0.0
  %1824 = vmatpush1.msra.mxu0 %v1818
  %1825 = vmatprep.subr.mxu0 0.0
  %1826 = vmatpush1.msra.mxu0 0.0
  %1827 = vmatprep.subr.mxu0 0.0
  %1828 = vmatpush1.msra.mxu0 0.0
  %1829 = vmatprep.subr.mxu0 0.0
  %1830 = vmatpush1.msra.mxu0 0.0
  %1831 = vmatprep.subr.mxu0 0.0
  %1832 = vmatpush1.msra.mxu0 0.0
  %1833 = vmatprep.subr.mxu0 0.0
  %1834 = vmatpush1.msra.mxu0 0.0
  %1835 = vmatprep.subr.mxu0 0.0
  %1836 = vmatpush1.msra.mxu0 0.0
  %1837 = vmatprep.subr.mxu0 0.0
  %1838 = vmatpush1.msra.mxu0 0.0
  %1839 = vmatprep.subr.mxu0 0.0
  %1840 = vmatpush1.msra.mxu0 0.0
  %1841 = vmatprep.subr.mxu0 0.0
  %1842 = vmatpush1.msra.mxu0 0.0
  %1843 = vmatprep.subr.mxu0 0.0
  %1844 = vmatpush1.msra.mxu0 0.0
  %1845 = vmatprep.subr.mxu0 0.0
  %1846 = vmatpush1.msra.mxu0 0.0
  %1847 = vmatprep.subr.mxu0 0.0
  %1848 = vmatpush1.msra.mxu0 0.0
  %1849 = vmatprep.subr.mxu0 0.0
  %1850 = vmatpush1.msra.mxu0 0.0
  %1851 = vmatprep.subr.mxu0 0.0
  %1852 = vmatpush1.msra.mxu0 0.0
  %1853 = vmatprep.subr.mxu0 0.0
  %1854 = vmatpush1.msra.mxu0 0.0
  %1855 = vmatprep.subr.mxu0 0.0
  %1856 = vmatpush1.msra.mxu0 0.0
  %1857 = vmatprep.subr.mxu0 0.0
  %1858 = vmatpush1.msra.mxu0 0.0
  %1859 = vmatprep.subr.mxu0 0.0
  %1860 = vmatpush1.msra.mxu0 0.0
  %1861 = vmatprep.subr.mxu0 0.0
  %1862 = vmatpush1.msra.mxu0 0.0
  %1863 = vmatprep.subr.mxu0 0.0
  %1864 = vmatpush1.msra.mxu0 0.0
  %1865 = vmatprep.subr.mxu0 0.0
  %1866 = vmatpush1.msra.mxu0 0.0
  %1867 = vmatprep.subr.mxu0 0.0
  %1868 = vmatpush1.msra.mxu0 0.0
  %1869 = vmatprep.subr.mxu0 0.0
  %1870 = vmatpush1.msra.mxu0 0.0
  %1871 = vmatprep.subr.mxu0 0.0
  %1872 = vmatpush1.msra.mxu0 0.0
  %1873 = vmatprep.subr.mxu0 0.0
  %1874 = vmatpush1.msra.mxu0 0.0
  %1875 = vmatprep.subr.mxu0 0.0
  %1876 = vmatpush1.msra.mxu0 0.0
  %1877 = vmatprep.subr.mxu0 0.0
  %1878 = vmatpush1.msra.mxu0 0.0
  %1879 = vmatprep.subr.mxu0 0.0
  %1880 = vmatpush1.msra.mxu0 0.0
  %1881 = vmatprep.subr.mxu0 0.0
  %1882 = vmatpush1.msra.mxu0 0.0
  %1883 = vmatprep.subr.mxu0 0.0
  %1884 = vmatpush1.msra.mxu0 0.0
  %1885 = vmatprep.subr.mxu0 0.0
  %1886 = vmatpush1.msra.mxu0 0.0
  %1887 = vmatprep.mubr.f32.mxu0 0.0
  %1888 = vmatmul.mubr.f32.gmra.mrb[0].mxu0 %v1821
  %v1889 = vpop.f32.mrb[0].mxu0
  %v1890 = vadd.f32 0.0, %v1889
  %v1891 = vpop.f32.mrb[0].mxu0
  %1892 = vdwg.mxu0
  %1893 = vrot.lane.b32.xlu0 %v684, 16
  %v1894 = vpop.permute.xlu0 %1893
  %1895 = vrot.lane.b32.xlu0 %v686, 16
  %v1896 = vpop.permute.xlu0 %1895
  %v1897 = vsel %vm733, %v1894, 0
  %v1899 = vsel %vm733, %v1896, 0
  %1901 = vmatprep.subr.mxu0 0.0
  %1902 = vmatpush1.xpose.msra.mxu0 %v1899
  %1903 = vmatprep.subr.mxu0 0.0
  %1904 = vmatpush1.xpose.msra.mxu0 0.0
  %1905 = vmatprep.subr.mxu0 0.0
  %1906 = vmatpush1.xpose.msra.mxu0 0.0
  %1907 = vmatprep.subr.mxu0 0.0
  %1908 = vmatpush1.xpose.msra.mxu0 0.0
  %1909 = vmatprep.subr.mxu0 0.0
  %1910 = vmatpush1.xpose.msra.mxu0 0.0
  %1911 = vmatprep.subr.mxu0 0.0
  %1912 = vmatpush1.xpose.msra.mxu0 0.0
  %1913 = vmatprep.subr.mxu0 0.0
  %1914 = vmatpush1.xpose.msra.mxu0 0.0
  %1915 = vmatprep.subr.mxu0 0.0
  %1916 = vmatpush1.xpose.msra.mxu0 0.0
  %1917 = vmatprep.subr.mxu0 0.0
  %1918 = vmatpush1.xpose.msra.mxu0 0.0
  %1919 = vmatprep.subr.mxu0 0.0
  %1920 = vmatpush1.xpose.msra.mxu0 0.0
  %1921 = vmatprep.subr.mxu0 0.0
  %1922 = vmatpush1.xpose.msra.mxu0 0.0
  %1923 = vmatprep.subr.mxu0 0.0
  %1924 = vmatpush1.xpose.msra.mxu0 0.0
  %1925 = vmatprep.subr.mxu0 0.0
  %1926 = vmatpush1.xpose.msra.mxu0 0.0
  %1927 = vmatprep.subr.mxu0 0.0
  %1928 = vmatpush1.xpose.msra.mxu0 0.0
  %1929 = vmatprep.subr.mxu0 0.0
  %1930 = vmatpush1.xpose.msra.mxu0 0.0
  %1931 = vmatprep.subr.mxu0 0.0
  %1932 = vmatpush1.xpose.msra.mxu0 0.0
  %1933 = vmatprep.subr.mxu0 0.0
  %1934 = vmatpush1.xpose.msra.mxu0 0.0
  %1935 = vmatprep.subr.mxu0 0.0
  %1936 = vmatpush1.xpose.msra.mxu0 0.0
  %1937 = vmatprep.subr.mxu0 0.0
  %1938 = vmatpush1.xpose.msra.mxu0 0.0
  %1939 = vmatprep.subr.mxu0 0.0
  %1940 = vmatpush1.xpose.msra.mxu0 0.0
  %1941 = vmatprep.subr.mxu0 0.0
  %1942 = vmatpush1.xpose.msra.mxu0 0.0
  %1943 = vmatprep.subr.mxu0 0.0
  %1944 = vmatpush1.xpose.msra.mxu0 0.0
  %1945 = vmatprep.subr.mxu0 0.0
  %1946 = vmatpush1.xpose.msra.mxu0 0.0
  %1947 = vmatprep.subr.mxu0 0.0
  %1948 = vmatpush1.xpose.msra.mxu0 0.0
  %1949 = vmatprep.subr.mxu0 0.0
  %1950 = vmatpush1.xpose.msra.mxu0 0.0
  %1951 = vmatprep.subr.mxu0 0.0
  %1952 = vmatpush1.xpose.msra.mxu0 0.0
  %1953 = vmatprep.subr.mxu0 0.0
  %1954 = vmatpush1.xpose.msra.mxu0 0.0
  %1955 = vmatprep.subr.mxu0 0.0
  %1956 = vmatpush1.xpose.msra.mxu0 0.0
  %1957 = vmatprep.subr.mxu0 0.0
  %1958 = vmatpush1.xpose.msra.mxu0 0.0
  %1959 = vmatprep.subr.mxu0 0.0
  %1960 = vmatpush1.xpose.msra.mxu0 0.0
  %1961 = vmatprep.subr.mxu0 0.0
  %1962 = vmatpush1.xpose.msra.mxu0 0.0
  %1963 = vmatprep.subr.mxu0 0.0
  %1964 = vmatpush1.xpose.msra.mxu0 0.0
  %1965 = vmatprep.mubr.f32.mxu0 0.0
  %1966 = vmatmul.mubr.f32.gmra.mrb[0].mxu0 %v1897
  %v1967 = vpop.f32.mrb[0].mxu0
  %v1968 = vadd.f32 0.0, %v1967
  %v1969 = vpop.f32.mrb[0].mxu0
  %1970 = vdwg.mxu0
  %v1971 = vmul.f32 %v1968, 0.25
  %v1972 = vsel %vm811, %v1971, -inf
  %1973 = vmax.xlane.f32.xlu0 %v1972
  %v1974 = vpop.xlane.xlu0 %1973
  %v1975 = vsub.f32 %v1971, %v1974
  %v1976 = vmul.f32 %v1975, 1.442695
  %v1977 = vpow.pop %v1976
  %v1978 = vsel %vm811, %v1977, 0.0
  %1979 = vadd.xlane.f32.xlu0 %v1978
  %v1980 = vpop.xlane.xlu0 %1979
  %v1981 = vrcp.pop %v1980
  %v1982 = vmul.f32 %v1977, %v1981
  %1983 = vrot.lane.b32.xlu0 %v727, 16
  %v1984 = vpop.permute.xlu0 %1983
  %v1987 = vsel %vm811, %v1982, 0
  %1989 = vmatprep.subr.mxu0 0.0
  %1990 = vmatpush1.msra.mxu0 %v1984
  %1991 = vmatprep.subr.mxu0 0.0
  %1992 = vmatpush1.msra.mxu0 0.0
  %1993 = vmatprep.subr.mxu0 0.0
  %1994 = vmatpush1.msra.mxu0 0.0
  %1995 = vmatprep.subr.mxu0 0.0
  %1996 = vmatpush1.msra.mxu0 0.0
  %1997 = vmatprep.subr.mxu0 0.0
  %1998 = vmatpush1.msra.mxu0 0.0
  %1999 = vmatprep.subr.mxu0 0.0
  %2000 = vmatpush1.msra.mxu0 0.0
  %2001 = vmatprep.subr.mxu0 0.0
  %2002 = vmatpush1.msra.mxu0 0.0
  %2003 = vmatprep.subr.mxu0 0.0
  %2004 = vmatpush1.msra.mxu0 0.0
  %2005 = vmatprep.subr.mxu0 0.0
  %2006 = vmatpush1.msra.mxu0 0.0
  %2007 = vmatprep.subr.mxu0 0.0
  %2008 = vmatpush1.msra.mxu0 0.0
  %2009 = vmatprep.subr.mxu0 0.0
  %2010 = vmatpush1.msra.mxu0 0.0
  %2011 = vmatprep.subr.mxu0 0.0
  %2012 = vmatpush1.msra.mxu0 0.0
  %2013 = vmatprep.subr.mxu0 0.0
  %2014 = vmatpush1.msra.mxu0 0.0
  %2015 = vmatprep.subr.mxu0 0.0
  %2016 = vmatpush1.msra.mxu0 0.0
  %2017 = vmatprep.subr.mxu0 0.0
  %2018 = vmatpush1.msra.mxu0 0.0
  %2019 = vmatprep.subr.mxu0 0.0
  %2020 = vmatpush1.msra.mxu0 0.0
  %2021 = vmatprep.subr.mxu0 0.0
  %2022 = vmatpush1.msra.mxu0 0.0
  %2023 = vmatprep.subr.mxu0 0.0
  %2024 = vmatpush1.msra.mxu0 0.0
  %2025 = vmatprep.subr.mxu0 0.0
  %2026 = vmatpush1.msra.mxu0 0.0
  %2027 = vmatprep.subr.mxu0 0.0
  %2028 = vmatpush1.msra.mxu0 0.0
  %2029 = vmatprep.subr.mxu0 0.0
  %2030 = vmatpush1.msra.mxu0 0.0
  %2031 = vmatprep.subr.mxu0 0.0
  %2032 = vmatpush1.msra.mxu0 0.0
  %2033 = vmatprep.subr.mxu0 0.0
  %2034 = vmatpush1.msra.mxu0 0.0
  %2035 = vmatprep.subr.mxu0 0.0
  %2036 = vmatpush1.msra.mxu0 0.0
  %2037 = vmatprep.subr.mxu0 0.0
  %2038 = vmatpush1.msra.mxu0 0.0
  %2039 = vmatprep.subr.mxu0 0.0
  %2040 = vmatpush1.msra.mxu0 0.0
  %2041 = vmatprep.subr.mxu0 0.0
  %2042 = vmatpush1.msra.mxu0 0.0
  %2043 = vmatprep.subr.mxu0 0.0
  %2044 = vmatpush1.msra.mxu0 0.0
  %2045 = vmatprep.subr.mxu0 0.0
  %2046 = vmatpush1.msra.mxu0 0.0
  %2047 = vmatprep.subr.mxu0 0.0
  %2048 = vmatpush1.msra.mxu0 0.0
  %2049 = vmatprep.subr.mxu0 0.0
  %2050 = vmatpush1.msra.mxu0 0.0
  %2051 = vmatprep.subr.mxu0 0.0
  %2052 = vmatpush1.msra.mxu0 0.0
  %2053 = vmatprep.mubr.f32.mxu0 0.0
  %2054 = vmatmul.mubr.f32.gmra.mrb[0].mxu0 %v1987
  %v2055 = vpop.f32.mrb[0].mxu0
  %v2056 = vadd.f32 0.0, %v2055
  %v2057 = vpop.f32.mrb[0].mxu0
  %2058 = vdwg.mxu0
  %2060 = vrot.lane.b32.xlu0 %v1060, 16
  %v2061 = vpop.permute.xlu0 %2060
  %2064 = vrot.lane.b32.xlu0 %v1226, 32
  %v2065 = vpop.permute.xlu0 %2064
  %2068 = vrot.lane.b32.xlu0 %v1392, 48
  %v2069 = vpop.permute.xlu0 %2068
  %2072 = vrot.lane.b32.xlu0 %v1558, 64
  %v2073 = vpop.permute.xlu0 %2072
  %2076 = vrot.lane.b32.xlu0 %v1724, 80
  %v2077 = vpop.permute.xlu0 %2076
  %2080 = vrot.lane.b32.xlu0 %v1890, 96
  %v2081 = vpop.permute.xlu0 %2080
  %2084 = vrot.lane.b32.xlu0 %v2056, 112
  %v2085 = vpop.permute.xlu0 %2084
  %v2087 = vsel %vm733, %v893, %v2061
  %vm2088 = vcmask 261120
  %v2089 = vsel %vm2088, %v2087, %v2065
  %vm2090 = vcmask 392192
  %v2091 = vsel %vm2090, %v2089, %v2069
  %vm2092 = vcmask 523264
  %v2093 = vsel %vm2092, %v2091, %v2073
  %vm2094 = vcmask 654336
  %v2095 = vsel %vm2094, %v2093, %v2077
  %vm2096 = vcmask 785408
  %v2097 = vsel %vm2096, %v2095, %v2081
  %vm2098 = vcmask 916480
  %v2099 = vsel %vm2098, %v2097, %v2085
  %v2101 = vsel %vm733, %v688, 0
  %v2104 = vsel %vm733, %v690, 0
  %2106 = vmatprep.subr.mxu0 0.0
  %2107 = vmatpush1.xpose.msra.mxu0 %v2104
  %2108 = vmatprep.subr.mxu0 0.0
  %2109 = vmatpush1.xpose.msra.mxu0 0.0
  %2110 = vmatprep.subr.mxu0 0.0
  %2111 = vmatpush1.xpose.msra.mxu0 0.0
  %2112 = vmatprep.subr.mxu0 0.0
  %2113 = vmatpush1.xpose.msra.mxu0 0.0
  %2114 = vmatprep.subr.mxu0 0.0
  %2115 = vmatpush1.xpose.msra.mxu0 0.0
  %2116 = vmatprep.subr.mxu0 0.0
  %2117 = vmatpush1.xpose.msra.mxu0 0.0
  %2118 = vmatprep.subr.mxu0 0.0
  %2119 = vmatpush1.xpose.msra.mxu0 0.0
  %2120 = vmatprep.subr.mxu0 0.0
  %2121 = vmatpush1.xpose.msra.mxu0 0.0
  %2122 = vmatprep.subr.mxu0 0.0
  %2123 = vmatpush1.xpose.msra.mxu0 0.0
  %2124 = vmatprep.subr.mxu0 0.0
  %2125 = vmatpush1.xpose.msra.mxu0 0.0
  %2126 = vmatprep.subr.mxu0 0.0
  %2127 = vmatpush1.xpose.msra.mxu0 0.0
  %2128 = vmatprep.subr.mxu0 0.0
  %2129 = vmatpush1.xpose.msra.mxu0 0.0
  %2130 = vmatprep.subr.mxu0 0.0
  %2131 = vmatpush1.xpose.msra.mxu0 0.0
  %2132 = vmatprep.subr.mxu0 0.0
  %2133 = vmatpush1.xpose.msra.mxu0 0.0
  %2134 = vmatprep.subr.mxu0 0.0
  %2135 = vmatpush1.xpose.msra.mxu0 0.0
  %2136 = vmatprep.subr.mxu0 0.0
  %2137 = vmatpush1.xpose.msra.mxu0 0.0
  %2138 = vmatprep.subr.mxu0 0.0
  %2139 = vmatpush1.xpose.msra.mxu0 0.0
  %2140 = vmatprep.subr.mxu0 0.0
  %2141 = vmatpush1.xpose.msra.mxu0 0.0
  %2142 = vmatprep.subr.mxu0 0.0
  %2143 = vmatpush1.xpose.msra.mxu0 0.0
  %2144 = vmatprep.subr.mxu0 0.0
  %2145 = vmatpush1.xpose.msra.mxu0 0.0
  %2146 = vmatprep.subr.mxu0 0.0
  %2147 = vmatpush1.xpose.msra.mxu0 0.0
  %2148 = vmatprep.subr.mxu0 0.0
  %2149 = vmatpush1.xpose.msra.mxu0 0.0
  %2150 = vmatprep.subr.mxu0 0.0
  %2151 = vmatpush1.xpose.msra.mxu0 0.0
  %2152 = vmatprep.subr.mxu0 0.0
  %2153 = vmatpush1.xpose.msra.mxu0 0.0
  %2154 = vmatprep.subr.mxu0 0.0
  %2155 = vmatpush1.xpose.msra.mxu0 0.0
  %2156 = vmatprep.subr.mxu0 0.0
  %2157 = vmatpush1.xpose.msra.mxu0 0.0
  %2158 = vmatprep.subr.mxu0 0.0
  %2159 = vmatpush1.xpose.msra.mxu0 0.0
  %2160 = vmatprep.subr.mxu0 0.0
  %2161 = vmatpush1.xpose.msra.mxu0 0.0
  %2162 = vmatprep.subr.mxu0 0.0
  %2163 = vmatpush1.xpose.msra.mxu0 0.0
  %2164 = vmatprep.subr.mxu0 0.0
  %2165 = vmatpush1.xpose.msra.mxu0 0.0
  %2166 = vmatprep.subr.mxu0 0.0
  %2167 = vmatpush1.xpose.msra.mxu0 0.0
  %2168 = vmatprep.subr.mxu0 0.0
  %2169 = vmatpush1.xpose.msra.mxu0 0.0
  %2170 = vmatprep.mubr.f32.mxu0 0.0
  %2171 = vmatmul.mubr.f32.gmra.mrb[0].mxu0 %v2101
  %v2172 = vpop.f32.mrb[0].mxu0
  %v2173 = vadd.f32 0.0, %v2172
  %v2174 = vpop.f32.mrb[0].mxu0
  %2175 = vdwg.mxu0
  %v2176 = vmul.f32 %v2173, 0.25
  %v2177 = vsel %vm811, %v2176, -inf
  %2178 = vmax.xlane.f32.xlu0 %v2177
  %v2179 = vpop.xlane.xlu0 %2178
  %v2180 = vsub.f32 %v2176, %v2179
  %v2181 = vmul.f32 %v2180, 1.442695
  %v2182 = vpow.pop %v2181
  %v2183 = vsel %vm811, %v2182, 0.0
  %2184 = vadd.xlane.f32.xlu0 %v2183
  %v2185 = vpop.xlane.xlu0 %2184
  %v2186 = vrcp.pop %v2185
  %v2187 = vmul.f32 %v2182, %v2186
  %v2189 = vsel %vm811, %v2187, 0
  %2191 = vmatprep.subr.mxu0 0.0
  %2192 = vmatpush1.msra.mxu0 %v730
  %2193 = vmatprep.subr.mxu0 0.0
  %2194 = vmatpush1.msra.mxu0 0.0
  %2195 = vmatprep.subr.mxu0 0.0
  %2196 = vmatpush1.msra.mxu0 0.0
  %2197 = vmatprep.subr.mxu0 0.0
  %2198 = vmatpush1.msra.mxu0 0.0
  %2199 = vmatprep.subr.mxu0 0.0
  %2200 = vmatpush1.msra.mxu0 0.0
  %2201 = vmatprep.subr.mxu0 0.0
  %2202 = vmatpush1.msra.mxu0 0.0
  %2203 = vmatprep.subr.mxu0 0.0
  %2204 = vmatpush1.msra.mxu0 0.0
  %2205 = vmatprep.subr.mxu0 0.0
  %2206 = vmatpush1.msra.mxu0 0.0
  %2207 = vmatprep.subr.mxu0 0.0
  %2208 = vmatpush1.msra.mxu0 0.0
  %2209 = vmatprep.subr.mxu0 0.0
  %2210 = vmatpush1.msra.mxu0 0.0
  %2211 = vmatprep.subr.mxu0 0.0
  %2212 = vmatpush1.msra.mxu0 0.0
  %2213 = vmatprep.subr.mxu0 0.0
  %2214 = vmatpush1.msra.mxu0 0.0
  %2215 = vmatprep.subr.mxu0 0.0
  %2216 = vmatpush1.msra.mxu0 0.0
  %2217 = vmatprep.subr.mxu0 0.0
  %2218 = vmatpush1.msra.mxu0 0.0
  %2219 = vmatprep.subr.mxu0 0.0
  %2220 = vmatpush1.msra.mxu0 0.0
  %2221 = vmatprep.subr.mxu0 0.0
  %2222 = vmatpush1.msra.mxu0 0.0
  %2223 = vmatprep.subr.mxu0 0.0
  %2224 = vmatpush1.msra.mxu0 0.0
  %2225 = vmatprep.subr.mxu0 0.0
  %2226 = vmatpush1.msra.mxu0 0.0
  %2227 = vmatprep.subr.mxu0 0.0
  %2228 = vmatpush1.msra.mxu0 0.0
  %2229 = vmatprep.subr.mxu0 0.0
  %2230 = vmatpush1.msra.mxu0 0.0
  %2231 = vmatprep.subr.mxu0 0.0
  %2232 = vmatpush1.msra.mxu0 0.0
  %2233 = vmatprep.subr.mxu0 0.0
  %2234 = vmatpush1.msra.mxu0 0.0
  %2235 = vmatprep.subr.mxu0 0.0
  %2236 = vmatpush1.msra.mxu0 0.0
  %2237 = vmatprep.subr.mxu0 0.0
  %2238 = vmatpush1.msra.mxu0 0.0
  %2239 = vmatprep.subr.mxu0 0.0
  %2240 = vmatpush1.msra.mxu0 0.0
  %2241 = vmatprep.subr.mxu0 0.0
  %2242 = vmatpush1.msra.mxu0 0.0
  %2243 = vmatprep.subr.mxu0 0.0
  %2244 = vmatpush1.msra.mxu0 0.0
  %2245 = vmatprep.subr.mxu0 0.0
  %2246 = vmatpush1.msra.mxu0 0.0
  %2247 = vmatprep.subr.mxu0 0.0
  %2248 = vmatpush1.msra.mxu0 0.0
  %2249 = vmatprep.subr.mxu0 0.0
  %2250 = vmatpush1.msra.mxu0 0.0
  %2251 = vmatprep.subr.mxu0 0.0
  %2252 = vmatpush1.msra.mxu0 0.0
  %2253 = vmatprep.subr.mxu0 0.0
  %2254 = vmatpush1.msra.mxu0 0.0
  %2255 = vmatprep.mubr.f32.mxu0 0.0
  %2256 = vmatmul.mubr.f32.gmra.mrb[0].mxu0 %v2189
  %v2257 = vpop.f32.mrb[0].mxu0
  %v2258 = vadd.f32 0.0, %v2257
  %v2259 = vpop.f32.mrb[0].mxu0
  %2260 = vdwg.mxu0
  %2261 = vrot.lane.b32.xlu0 %v688, 112
  %v2262 = vpop.permute.xlu0 %2261
  %2263 = vrot.lane.b32.xlu0 %v690, 112
  %v2264 = vpop.permute.xlu0 %2263
  %v2265 = vsel %vm733, %v2262, 0
  %v2267 = vsel %vm733, %v2264, 0
  %2269 = vmatprep.subr.mxu0 0.0
  %2270 = vmatpush1.xpose.msra.mxu0 %v2267
  %2271 = vmatprep.subr.mxu0 0.0
  %2272 = vmatpush1.xpose.msra.mxu0 0.0
  %2273 = vmatprep.subr.mxu0 0.0
  %2274 = vmatpush1.xpose.msra.mxu0 0.0
  %2275 = vmatprep.subr.mxu0 0.0
  %2276 = vmatpush1.xpose.msra.mxu0 0.0
  %2277 = vmatprep.subr.mxu0 0.0
  %2278 = vmatpush1.xpose.msra.mxu0 0.0
  %2279 = vmatprep.subr.mxu0 0.0
  %2280 = vmatpush1.xpose.msra.mxu0 0.0
  %2281 = vmatprep.subr.mxu0 0.0
  %2282 = vmatpush1.xpose.msra.mxu0 0.0
  %2283 = vmatprep.subr.mxu0 0.0
  %2284 = vmatpush1.xpose.msra.mxu0 0.0
  %2285 = vmatprep.subr.mxu0 0.0
  %2286 = vmatpush1.xpose.msra.mxu0 0.0
  %2287 = vmatprep.subr.mxu0 0.0
  %2288 = vmatpush1.xpose.msra.mxu0 0.0
  %2289 = vmatprep.subr.mxu0 0.0
  %2290 = vmatpush1.xpose.msra.mxu0 0.0
  %2291 = vmatprep.subr.mxu0 0.0
  %2292 = vmatpush1.xpose.msra.mxu0 0.0
  %2293 = vmatprep.subr.mxu0 0.0
  %2294 = vmatpush1.xpose.msra.mxu0 0.0
  %2295 = vmatprep.subr.mxu0 0.0
  %2296 = vmatpush1.xpose.msra.mxu0 0.0
  %2297 = vmatprep.subr.mxu0 0.0
  %2298 = vmatpush1.xpose.msra.mxu0 0.0
  %2299 = vmatprep.subr.mxu0 0.0
  %2300 = vmatpush1.xpose.msra.mxu0 0.0
  %2301 = vmatprep.subr.mxu0 0.0
  %2302 = vmatpush1.xpose.msra.mxu0 0.0
  %2303 = vmatprep.subr.mxu0 0.0
  %2304 = vmatpush1.xpose.msra.mxu0 0.0
  %2305 = vmatprep.subr.mxu0 0.0
  %2306 = vmatpush1.xpose.msra.mxu0 0.0
  %2307 = vmatprep.subr.mxu0 0.0
  %2308 = vmatpush1.xpose.msra.mxu0 0.0
  %2309 = vmatprep.subr.mxu0 0.0
  %2310 = vmatpush1.xpose.msra.mxu0 0.0
  %2311 = vmatprep.subr.mxu0 0.0
  %2312 = vmatpush1.xpose.msra.mxu0 0.0
  %2313 = vmatprep.subr.mxu0 0.0
  %2314 = vmatpush1.xpose.msra.mxu0 0.0
  %2315 = vmatprep.subr.mxu0 0.0
  %2316 = vmatpush1.xpose.msra.mxu0 0.0
  %2317 = vmatprep.subr.mxu0 0.0
  %2318 = vmatpush1.xpose.msra.mxu0 0.0
  %2319 = vmatprep.subr.mxu0 0.0
  %2320 = vmatpush1.xpose.msra.mxu0 0.0
  %2321 = vmatprep.subr.mxu0 0.0
  %2322 = vmatpush1.xpose.msra.mxu0 0.0
  %2323 = vmatprep.subr.mxu0 0.0
  %2324 = vmatpush1.xpose.msra.mxu0 0.0
  %2325 = vmatprep.subr.mxu0 0.0
  %2326 = vmatpush1.xpose.msra.mxu0 0.0
  %2327 = vmatprep.subr.mxu0 0.0
  %2328 = vmatpush1.xpose.msra.mxu0 0.0
  %2329 = vmatprep.subr.mxu0 0.0
  %2330 = vmatpush1.xpose.msra.mxu0 0.0
  %2331 = vmatprep.subr.mxu0 0.0
  %2332 = vmatpush1.xpose.msra.mxu0 0.0
  %2333 = vmatprep.mubr.f32.mxu0 0.0
  %2334 = vmatmul.mubr.f32.gmra.mrb[0].mxu0 %v2265
  %v2335 = vpop.f32.mrb[0].mxu0
  %v2336 = vadd.f32 0.0, %v2335
  %v2337 = vpop.f32.mrb[0].mxu0
  %2338 = vdwg.mxu0
  %v2339 = vmul.f32 %v2336, 0.25
  %v2340 = vsel %vm811, %v2339, -inf
  %2341 = vmax.xlane.f32.xlu0 %v2340
  %v2342 = vpop.xlane.xlu0 %2341
  %v2343 = vsub.f32 %v2339, %v2342
  %v2344 = vmul.f32 %v2343, 1.442695
  %v2345 = vpow.pop %v2344
  %v2346 = vsel %vm811, %v2345, 0.0
  %2347 = vadd.xlane.f32.xlu0 %v2346
  %v2348 = vpop.xlane.xlu0 %2347
  %v2349 = vrcp.pop %v2348
  %v2350 = vmul.f32 %v2345, %v2349
  %2352 = vrot.lane.b32.xlu0 %v730, 112
  %v2353 = vpop.permute.xlu0 %2352
  %v2356 = vsel %vm811, %v2350, 0
  %2358 = vmatprep.subr.mxu0 0.0
  %2359 = vmatpush1.msra.mxu0 %v2353
  %2360 = vmatprep.subr.mxu0 0.0
  %2361 = vmatpush1.msra.mxu0 0.0
  %2362 = vmatprep.subr.mxu0 0.0
  %2363 = vmatpush1.msra.mxu0 0.0
  %2364 = vmatprep.subr.mxu0 0.0
  %2365 = vmatpush1.msra.mxu0 0.0
  %2366 = vmatprep.subr.mxu0 0.0
  %2367 = vmatpush1.msra.mxu0 0.0
  %2368 = vmatprep.subr.mxu0 0.0
  %2369 = vmatpush1.msra.mxu0 0.0
  %2370 = vmatprep.subr.mxu0 0.0
  %2371 = vmatpush1.msra.mxu0 0.0
  %2372 = vmatprep.subr.mxu0 0.0
  %2373 = vmatpush1.msra.mxu0 0.0
  %2374 = vmatprep.subr.mxu0 0.0
  %2375 = vmatpush1.msra.mxu0 0.0
  %2376 = vmatprep.subr.mxu0 0.0
  %2377 = vmatpush1.msra.mxu0 0.0
  %2378 = vmatprep.subr.mxu0 0.0
  %2379 = vmatpush1.msra.mxu0 0.0
  %2380 = vmatprep.subr.mxu0 0.0
  %2381 = vmatpush1.msra.mxu0 0.0
  %2382 = vmatprep.subr.mxu0 0.0
  %2383 = vmatpush1.msra.mxu0 0.0
  %2384 = vmatprep.subr.mxu0 0.0
  %2385 = vmatpush1.msra.mxu0 0.0
  %2386 = vmatprep.subr.mxu0 0.0
  %2387 = vmatpush1.msra.mxu0 0.0
  %2388 = vmatprep.subr.mxu0 0.0
  %2389 = vmatpush1.msra.mxu0 0.0
  %2390 = vmatprep.subr.mxu0 0.0
  %2391 = vmatpush1.msra.mxu0 0.0
  %2392 = vmatprep.subr.mxu0 0.0
  %2393 = vmatpush1.msra.mxu0 0.0
  %2394 = vmatprep.subr.mxu0 0.0
  %2395 = vmatpush1.msra.mxu0 0.0
  %2396 = vmatprep.subr.mxu0 0.0
  %2397 = vmatpush1.msra.mxu0 0.0
  %2398 = vmatprep.subr.mxu0 0.0
  %2399 = vmatpush1.msra.mxu0 0.0
  %2400 = vmatprep.subr.mxu0 0.0
  %2401 = vmatpush1.msra.mxu0 0.0
  %2402 = vmatprep.subr.mxu0 0.0
  %2403 = vmatpush1.msra.mxu0 0.0
  %2404 = vmatprep.subr.mxu0 0.0
  %2405 = vmatpush1.msra.mxu0 0.0
  %2406 = vmatprep.subr.mxu0 0.0
  %2407 = vmatpush1.msra.mxu0 0.0
  %2408 = vmatprep.subr.mxu0 0.0
  %2409 = vmatpush1.msra.mxu0 0.0
  %2410 = vmatprep.subr.mxu0 0.0
  %2411 = vmatpush1.msra.mxu0 0.0
  %2412 = vmatprep.subr.mxu0 0.0
  %2413 = vmatpush1.msra.mxu0 0.0
  %2414 = vmatprep.subr.mxu0 0.0
  %2415 = vmatpush1.msra.mxu0 0.0
  %2416 = vmatprep.subr.mxu0 0.0
  %2417 = vmatpush1.msra.mxu0 0.0
  %2418 = vmatprep.subr.mxu0 0.0
  %2419 = vmatpush1.msra.mxu0 0.0
  %2420 = vmatprep.subr.mxu0 0.0
  %2421 = vmatpush1.msra.mxu0 0.0
  %2422 = vmatprep.mubr.f32.mxu0 0.0
  %2423 = vmatmul.mubr.f32.gmra.mrb[0].mxu0 %v2356
  %v2424 = vpop.f32.mrb[0].mxu0
  %v2425 = vadd.f32 0.0, %v2424
  %v2426 = vpop.f32.mrb[0].mxu0
  %2427 = vdwg.mxu0
  %2428 = vrot.lane.b32.xlu0 %v688, 96
  %v2429 = vpop.permute.xlu0 %2428
  %2430 = vrot.lane.b32.xlu0 %v690, 96
  %v2431 = vpop.permute.xlu0 %2430
  %v2432 = vsel %vm733, %v2429, 0
  %v2434 = vsel %vm733, %v2431, 0
  %2436 = vmatprep.subr.mxu0 0.0
  %2437 = vmatpush1.xpose.msra.mxu0 %v2434
  %2438 = vmatprep.subr.mxu0 0.0
  %2439 = vmatpush1.xpose.msra.mxu0 0.0
  %2440 = vmatprep.subr.mxu0 0.0
  %2441 = vmatpush1.xpose.msra.mxu0 0.0
  %2442 = vmatprep.subr.mxu0 0.0
  %2443 = vmatpush1.xpose.msra.mxu0 0.0
  %2444 = vmatprep.subr.mxu0 0.0
  %2445 = vmatpush1.xpose.msra.mxu0 0.0
  %2446 = vmatprep.subr.mxu0 0.0
  %2447 = vmatpush1.xpose.msra.mxu0 0.0
  %2448 = vmatprep.subr.mxu0 0.0
  %2449 = vmatpush1.xpose.msra.mxu0 0.0
  %2450 = vmatprep.subr.mxu0 0.0
  %2451 = vmatpush1.xpose.msra.mxu0 0.0
  %2452 = vmatprep.subr.mxu0 0.0
  %2453 = vmatpush1.xpose.msra.mxu0 0.0
  %2454 = vmatprep.subr.mxu0 0.0
  %2455 = vmatpush1.xpose.msra.mxu0 0.0
  %2456 = vmatprep.subr.mxu0 0.0
  %2457 = vmatpush1.xpose.msra.mxu0 0.0
  %2458 = vmatprep.subr.mxu0 0.0
  %2459 = vmatpush1.xpose.msra.mxu0 0.0
  %2460 = vmatprep.subr.mxu0 0.0
  %2461 = vmatpush1.xpose.msra.mxu0 0.0
  %2462 = vmatprep.subr.mxu0 0.0
  %2463 = vmatpush1.xpose.msra.mxu0 0.0
  %2464 = vmatprep.subr.mxu0 0.0
  %2465 = vmatpush1.xpose.msra.mxu0 0.0
  %2466 = vmatprep.subr.mxu0 0.0
  %2467 = vmatpush1.xpose.msra.mxu0 0.0
  %2468 = vmatprep.subr.mxu0 0.0
  %2469 = vmatpush1.xpose.msra.mxu0 0.0
  %2470 = vmatprep.subr.mxu0 0.0
  %2471 = vmatpush1.xpose.msra.mxu0 0.0
  %2472 = vmatprep.subr.mxu0 0.0
  %2473 = vmatpush1.xpose.msra.mxu0 0.0
  %2474 = vmatprep.subr.mxu0 0.0
  %2475 = vmatpush1.xpose.msra.mxu0 0.0
  %2476 = vmatprep.subr.mxu0 0.0
  %2477 = vmatpush1.xpose.msra.mxu0 0.0
  %2478 = vmatprep.subr.mxu0 0.0
  %2479 = vmatpush1.xpose.msra.mxu0 0.0
  %2480 = vmatprep.subr.mxu0 0.0
  %2481 = vmatpush1.xpose.msra.mxu0 0.0
  %2482 = vmatprep.subr.mxu0 0.0
  %2483 = vmatpush1.xpose.msra.mxu0 0.0
  %2484 = vmatprep.subr.mxu0 0.0
  %2485 = vmatpush1.xpose.msra.mxu0 0.0
  %2486 = vmatprep.subr.mxu0 0.0
  %2487 = vmatpush1.xpose.msra.mxu0 0.0
  %2488 = vmatprep.subr.mxu0 0.0
  %2489 = vmatpush1.xpose.msra.mxu0 0.0
  %2490 = vmatprep.subr.mxu0 0.0
  %2491 = vmatpush1.xpose.msra.mxu0 0.0
  %2492 = vmatprep.subr.mxu0 0.0
  %2493 = vmatpush1.xpose.msra.mxu0 0.0
  %2494 = vmatprep.subr.mxu0 0.0
  %2495 = vmatpush1.xpose.msra.mxu0 0.0
  %2496 = vmatprep.subr.mxu0 0.0
  %2497 = vmatpush1.xpose.msra.mxu0 0.0
  %2498 = vmatprep.subr.mxu0 0.0
  %2499 = vmatpush1.xpose.msra.mxu0 0.0
  %2500 = vmatprep.mubr.f32.mxu0 0.0
  %2501 = vmatmul.mubr.f32.gmra.mrb[0].mxu0 %v2432
  %v2502 = vpop.f32.mrb[0].mxu0
  %v2503 = vadd.f32 0.0, %v2502
  %v2504 = vpop.f32.mrb[0].mxu0
  %2505 = vdwg.mxu0
  %v2506 = vmul.f32 %v2503, 0.25
  %v2507 = vsel %vm811, %v2506, -inf
  %2508 = vmax.xlane.f32.xlu0 %v2507
  %v2509 = vpop.xlane.xlu0 %2508
  %v2510 = vsub.f32 %v2506, %v2509
  %v2511 = vmul.f32 %v2510, 1.442695
  %v2512 = vpow.pop %v2511
  %v2513 = vsel %vm811, %v2512, 0.0
  %2514 = vadd.xlane.f32.xlu0 %v2513
  %v2515 = vpop.xlane.xlu0 %2514
  %v2516 = vrcp.pop %v2515
  %v2517 = vmul.f32 %v2512, %v2516
  %2518 = vrot.lane.b32.xlu0 %v730, 96
  %v2519 = vpop.permute.xlu0 %2518
  %v2522 = vsel %vm811, %v2517, 0
  %2524 = vmatprep.subr.mxu0 0.0
  %2525 = vmatpush1.msra.mxu0 %v2519
  %2526 = vmatprep.subr.mxu0 0.0
  %2527 = vmatpush1.msra.mxu0 0.0
  %2528 = vmatprep.subr.mxu0 0.0
  %2529 = vmatpush1.msra.mxu0 0.0
  %2530 = vmatprep.subr.mxu0 0.0
  %2531 = vmatpush1.msra.mxu0 0.0
  %2532 = vmatprep.subr.mxu0 0.0
  %2533 = vmatpush1.msra.mxu0 0.0
  %2534 = vmatprep.subr.mxu0 0.0
  %2535 = vmatpush1.msra.mxu0 0.0
  %2536 = vmatprep.subr.mxu0 0.0
  %2537 = vmatpush1.msra.mxu0 0.0
  %2538 = vmatprep.subr.mxu0 0.0
  %2539 = vmatpush1.msra.mxu0 0.0
  %2540 = vmatprep.subr.mxu0 0.0
  %2541 = vmatpush1.msra.mxu0 0.0
  %2542 = vmatprep.subr.mxu0 0.0
  %2543 = vmatpush1.msra.mxu0 0.0
  %2544 = vmatprep.subr.mxu0 0.0
  %2545 = vmatpush1.msra.mxu0 0.0
  %2546 = vmatprep.subr.mxu0 0.0
  %2547 = vmatpush1.msra.mxu0 0.0
  %2548 = vmatprep.subr.mxu0 0.0
  %2549 = vmatpush1.msra.mxu0 0.0
  %2550 = vmatprep.subr.mxu0 0.0
  %2551 = vmatpush1.msra.mxu0 0.0
  %2552 = vmatprep.subr.mxu0 0.0
  %2553 = vmatpush1.msra.mxu0 0.0
  %2554 = vmatprep.subr.mxu0 0.0
  %2555 = vmatpush1.msra.mxu0 0.0
  %2556 = vmatprep.subr.mxu0 0.0
  %2557 = vmatpush1.msra.mxu0 0.0
  %2558 = vmatprep.subr.mxu0 0.0
  %2559 = vmatpush1.msra.mxu0 0.0
  %2560 = vmatprep.subr.mxu0 0.0
  %2561 = vmatpush1.msra.mxu0 0.0
  %2562 = vmatprep.subr.mxu0 0.0
  %2563 = vmatpush1.msra.mxu0 0.0
  %2564 = vmatprep.subr.mxu0 0.0
  %2565 = vmatpush1.msra.mxu0 0.0
  %2566 = vmatprep.subr.mxu0 0.0
  %2567 = vmatpush1.msra.mxu0 0.0
  %2568 = vmatprep.subr.mxu0 0.0
  %2569 = vmatpush1.msra.mxu0 0.0
  %2570 = vmatprep.subr.mxu0 0.0
  %2571 = vmatpush1.msra.mxu0 0.0
  %2572 = vmatprep.subr.mxu0 0.0
  %2573 = vmatpush1.msra.mxu0 0.0
  %2574 = vmatprep.subr.mxu0 0.0
  %2575 = vmatpush1.msra.mxu0 0.0
  %2576 = vmatprep.subr.mxu0 0.0
  %2577 = vmatpush1.msra.mxu0 0.0
  %2578 = vmatprep.subr.mxu0 0.0
  %2579 = vmatpush1.msra.mxu0 0.0
  %2580 = vmatprep.subr.mxu0 0.0
  %2581 = vmatpush1.msra.mxu0 0.0
  %2582 = vmatprep.subr.mxu0 0.0
  %2583 = vmatpush1.msra.mxu0 0.0
  %2584 = vmatprep.subr.mxu0 0.0
  %2585 = vmatpush1.msra.mxu0 0.0
  %2586 = vmatprep.subr.mxu0 0.0
  %2587 = vmatpush1.msra.mxu0 0.0
  %2588 = vmatprep.mubr.f32.mxu0 0.0
  %2589 = vmatmul.mubr.f32.gmra.mrb[0].mxu0 %v2522
  %v2590 = vpop.f32.mrb[0].mxu0
  %v2591 = vadd.f32 0.0, %v2590
  %v2592 = vpop.f32.mrb[0].mxu0
  %2593 = vdwg.mxu0
  %2594 = vrot.lane.b32.xlu0 %v688, 80
  %v2595 = vpop.permute.xlu0 %2594
  %2596 = vrot.lane.b32.xlu0 %v690, 80
  %v2597 = vpop.permute.xlu0 %2596
  %v2598 = vsel %vm733, %v2595, 0
  %v2600 = vsel %vm733, %v2597, 0
  %2602 = vmatprep.subr.mxu0 0.0
  %2603 = vmatpush1.xpose.msra.mxu0 %v2600
  %2604 = vmatprep.subr.mxu0 0.0
  %2605 = vmatpush1.xpose.msra.mxu0 0.0
  %2606 = vmatprep.subr.mxu0 0.0
  %2607 = vmatpush1.xpose.msra.mxu0 0.0
  %2608 = vmatprep.subr.mxu0 0.0
  %2609 = vmatpush1.xpose.msra.mxu0 0.0
  %2610 = vmatprep.subr.mxu0 0.0
  %2611 = vmatpush1.xpose.msra.mxu0 0.0
  %2612 = vmatprep.subr.mxu0 0.0
  %2613 = vmatpush1.xpose.msra.mxu0 0.0
  %2614 = vmatprep.subr.mxu0 0.0
  %2615 = vmatpush1.xpose.msra.mxu0 0.0
  %2616 = vmatprep.subr.mxu0 0.0
  %2617 = vmatpush1.xpose.msra.mxu0 0.0
  %2618 = vmatprep.subr.mxu0 0.0
  %2619 = vmatpush1.xpose.msra.mxu0 0.0
  %2620 = vmatprep.subr.mxu0 0.0
  %2621 = vmatpush1.xpose.msra.mxu0 0.0
  %2622 = vmatprep.subr.mxu0 0.0
  %2623 = vmatpush1.xpose.msra.mxu0 0.0
  %2624 = vmatprep.subr.mxu0 0.0
  %2625 = vmatpush1.xpose.msra.mxu0 0.0
  %2626 = vmatprep.subr.mxu0 0.0
  %2627 = vmatpush1.xpose.msra.mxu0 0.0
  %2628 = vmatprep.subr.mxu0 0.0
  %2629 = vmatpush1.xpose.msra.mxu0 0.0
  %2630 = vmatprep.subr.mxu0 0.0
  %2631 = vmatpush1.xpose.msra.mxu0 0.0
  %2632 = vmatprep.subr.mxu0 0.0
  %2633 = vmatpush1.xpose.msra.mxu0 0.0
  %2634 = vmatprep.subr.mxu0 0.0
  %2635 = vmatpush1.xpose.msra.mxu0 0.0
  %2636 = vmatprep.subr.mxu0 0.0
  %2637 = vmatpush1.xpose.msra.mxu0 0.0
  %2638 = vmatprep.subr.mxu0 0.0
  %2639 = vmatpush1.xpose.msra.mxu0 0.0
  %2640 = vmatprep.subr.mxu0 0.0
  %2641 = vmatpush1.xpose.msra.mxu0 0.0
  %2642 = vmatprep.subr.mxu0 0.0
  %2643 = vmatpush1.xpose.msra.mxu0 0.0
  %2644 = vmatprep.subr.mxu0 0.0
  %2645 = vmatpush1.xpose.msra.mxu0 0.0
  %2646 = vmatprep.subr.mxu0 0.0
  %2647 = vmatpush1.xpose.msra.mxu0 0.0
  %2648 = vmatprep.subr.mxu0 0.0
  %2649 = vmatpush1.xpose.msra.mxu0 0.0
  %2650 = vmatprep.subr.mxu0 0.0
  %2651 = vmatpush1.xpose.msra.mxu0 0.0
  %2652 = vmatprep.subr.mxu0 0.0
  %2653 = vmatpush1.xpose.msra.mxu0 0.0
  %2654 = vmatprep.subr.mxu0 0.0
  %2655 = vmatpush1.xpose.msra.mxu0 0.0
  %2656 = vmatprep.subr.mxu0 0.0
  %2657 = vmatpush1.xpose.msra.mxu0 0.0
  %2658 = vmatprep.subr.mxu0 0.0
  %2659 = vmatpush1.xpose.msra.mxu0 0.0
  %2660 = vmatprep.subr.mxu0 0.0
  %2661 = vmatpush1.xpose.msra.mxu0 0.0
  %2662 = vmatprep.subr.mxu0 0.0
  %2663 = vmatpush1.xpose.msra.mxu0 0.0
  %2664 = vmatprep.subr.mxu0 0.0
  %2665 = vmatpush1.xpose.msra.mxu0 0.0
  %2666 = vmatprep.mubr.f32.mxu0 0.0
  %2667 = vmatmul.mubr.f32.gmra.mrb[0].mxu0 %v2598
  %v2668 = vpop.f32.mrb[0].mxu0
  %v2669 = vadd.f32 0.0, %v2668
  %v2670 = vpop.f32.mrb[0].mxu0
  %2671 = vdwg.mxu0
  %v2672 = vmul.f32 %v2669, 0.25
  %v2673 = vsel %vm811, %v2672, -inf
  %2674 = vmax.xlane.f32.xlu0 %v2673
  %v2675 = vpop.xlane.xlu0 %2674
  %v2676 = vsub.f32 %v2672, %v2675
  %v2677 = vmul.f32 %v2676, 1.442695
  %v2678 = vpow.pop %v2677
  %v2679 = vsel %vm811, %v2678, 0.0
  %2680 = vadd.xlane.f32.xlu0 %v2679
  %v2681 = vpop.xlane.xlu0 %2680
  %v2682 = vrcp.pop %v2681
  %v2683 = vmul.f32 %v2678, %v2682
  %2684 = vrot.lane.b32.xlu0 %v730, 80
  %v2685 = vpop.permute.xlu0 %2684
  %v2688 = vsel %vm811, %v2683, 0
  %2690 = vmatprep.subr.mxu0 0.0
  %2691 = vmatpush1.msra.mxu0 %v2685
  %2692 = vmatprep.subr.mxu0 0.0
  %2693 = vmatpush1.msra.mxu0 0.0
  %2694 = vmatprep.subr.mxu0 0.0
  %2695 = vmatpush1.msra.mxu0 0.0
  %2696 = vmatprep.subr.mxu0 0.0
  %2697 = vmatpush1.msra.mxu0 0.0
  %2698 = vmatprep.subr.mxu0 0.0
  %2699 = vmatpush1.msra.mxu0 0.0
  %2700 = vmatprep.subr.mxu0 0.0
  %2701 = vmatpush1.msra.mxu0 0.0
  %2702 = vmatprep.subr.mxu0 0.0
  %2703 = vmatpush1.msra.mxu0 0.0
  %2704 = vmatprep.subr.mxu0 0.0
  %2705 = vmatpush1.msra.mxu0 0.0
  %2706 = vmatprep.subr.mxu0 0.0
  %2707 = vmatpush1.msra.mxu0 0.0
  %2708 = vmatprep.subr.mxu0 0.0
  %2709 = vmatpush1.msra.mxu0 0.0
  %2710 = vmatprep.subr.mxu0 0.0
  %2711 = vmatpush1.msra.mxu0 0.0
  %2712 = vmatprep.subr.mxu0 0.0
  %2713 = vmatpush1.msra.mxu0 0.0
  %2714 = vmatprep.subr.mxu0 0.0
  %2715 = vmatpush1.msra.mxu0 0.0
  %2716 = vmatprep.subr.mxu0 0.0
  %2717 = vmatpush1.msra.mxu0 0.0
  %2718 = vmatprep.subr.mxu0 0.0
  %2719 = vmatpush1.msra.mxu0 0.0
  %2720 = vmatprep.subr.mxu0 0.0
  %2721 = vmatpush1.msra.mxu0 0.0
  %2722 = vmatprep.subr.mxu0 0.0
  %2723 = vmatpush1.msra.mxu0 0.0
  %2724 = vmatprep.subr.mxu0 0.0
  %2725 = vmatpush1.msra.mxu0 0.0
  %2726 = vmatprep.subr.mxu0 0.0
  %2727 = vmatpush1.msra.mxu0 0.0
  %2728 = vmatprep.subr.mxu0 0.0
  %2729 = vmatpush1.msra.mxu0 0.0
  %2730 = vmatprep.subr.mxu0 0.0
  %2731 = vmatpush1.msra.mxu0 0.0
  %2732 = vmatprep.subr.mxu0 0.0
  %2733 = vmatpush1.msra.mxu0 0.0
  %2734 = vmatprep.subr.mxu0 0.0
  %2735 = vmatpush1.msra.mxu0 0.0
  %2736 = vmatprep.subr.mxu0 0.0
  %2737 = vmatpush1.msra.mxu0 0.0
  %2738 = vmatprep.subr.mxu0 0.0
  %2739 = vmatpush1.msra.mxu0 0.0
  %2740 = vmatprep.subr.mxu0 0.0
  %2741 = vmatpush1.msra.mxu0 0.0
  %2742 = vmatprep.subr.mxu0 0.0
  %2743 = vmatpush1.msra.mxu0 0.0
  %2744 = vmatprep.subr.mxu0 0.0
  %2745 = vmatpush1.msra.mxu0 0.0
  %2746 = vmatprep.subr.mxu0 0.0
  %2747 = vmatpush1.msra.mxu0 0.0
  %2748 = vmatprep.subr.mxu0 0.0
  %2749 = vmatpush1.msra.mxu0 0.0
  %2750 = vmatprep.subr.mxu0 0.0
  %2751 = vmatpush1.msra.mxu0 0.0
  %2752 = vmatprep.subr.mxu0 0.0
  %2753 = vmatpush1.msra.mxu0 0.0
  %2754 = vmatprep.mubr.f32.mxu0 0.0
  %2755 = vmatmul.mubr.f32.gmra.mrb[0].mxu0 %v2688
  %v2756 = vpop.f32.mrb[0].mxu0
  %v2757 = vadd.f32 0.0, %v2756
  %v2758 = vpop.f32.mrb[0].mxu0
  %2759 = vdwg.mxu0
  %2760 = vrot.lane.b32.xlu0 %v688, 64
  %v2761 = vpop.permute.xlu0 %2760
  %2762 = vrot.lane.b32.xlu0 %v690, 64
  %v2763 = vpop.permute.xlu0 %2762
  %v2764 = vsel %vm733, %v2761, 0
  %v2766 = vsel %vm733, %v2763, 0
  %2768 = vmatprep.subr.mxu0 0.0
  %2769 = vmatpush1.xpose.msra.mxu0 %v2766
  %2770 = vmatprep.subr.mxu0 0.0
  %2771 = vmatpush1.xpose.msra.mxu0 0.0
  %2772 = vmatprep.subr.mxu0 0.0
  %2773 = vmatpush1.xpose.msra.mxu0 0.0
  %2774 = vmatprep.subr.mxu0 0.0
  %2775 = vmatpush1.xpose.msra.mxu0 0.0
  %2776 = vmatprep.subr.mxu0 0.0
  %2777 = vmatpush1.xpose.msra.mxu0 0.0
  %2778 = vmatprep.subr.mxu0 0.0
  %2779 = vmatpush1.xpose.msra.mxu0 0.0
  %2780 = vmatprep.subr.mxu0 0.0
  %2781 = vmatpush1.xpose.msra.mxu0 0.0
  %2782 = vmatprep.subr.mxu0 0.0
  %2783 = vmatpush1.xpose.msra.mxu0 0.0
  %2784 = vmatprep.subr.mxu0 0.0
  %2785 = vmatpush1.xpose.msra.mxu0 0.0
  %2786 = vmatprep.subr.mxu0 0.0
  %2787 = vmatpush1.xpose.msra.mxu0 0.0
  %2788 = vmatprep.subr.mxu0 0.0
  %2789 = vmatpush1.xpose.msra.mxu0 0.0
  %2790 = vmatprep.subr.mxu0 0.0
  %2791 = vmatpush1.xpose.msra.mxu0 0.0
  %2792 = vmatprep.subr.mxu0 0.0
  %2793 = vmatpush1.xpose.msra.mxu0 0.0
  %2794 = vmatprep.subr.mxu0 0.0
  %2795 = vmatpush1.xpose.msra.mxu0 0.0
  %2796 = vmatprep.subr.mxu0 0.0
  %2797 = vmatpush1.xpose.msra.mxu0 0.0
  %2798 = vmatprep.subr.mxu0 0.0
  %2799 = vmatpush1.xpose.msra.mxu0 0.0
  %2800 = vmatprep.subr.mxu0 0.0
  %2801 = vmatpush1.xpose.msra.mxu0 0.0
  %2802 = vmatprep.subr.mxu0 0.0
  %2803 = vmatpush1.xpose.msra.mxu0 0.0
  %2804 = vmatprep.subr.mxu0 0.0
  %2805 = vmatpush1.xpose.msra.mxu0 0.0
  %2806 = vmatprep.subr.mxu0 0.0
  %2807 = vmatpush1.xpose.msra.mxu0 0.0
  %2808 = vmatprep.subr.mxu0 0.0
  %2809 = vmatpush1.xpose.msra.mxu0 0.0
  %2810 = vmatprep.subr.mxu0 0.0
  %2811 = vmatpush1.xpose.msra.mxu0 0.0
  %2812 = vmatprep.subr.mxu0 0.0
  %2813 = vmatpush1.xpose.msra.mxu0 0.0
  %2814 = vmatprep.subr.mxu0 0.0
  %2815 = vmatpush1.xpose.msra.mxu0 0.0
  %2816 = vmatprep.subr.mxu0 0.0
  %2817 = vmatpush1.xpose.msra.mxu0 0.0
  %2818 = vmatprep.subr.mxu0 0.0
  %2819 = vmatpush1.xpose.msra.mxu0 0.0
  %2820 = vmatprep.subr.mxu0 0.0
  %2821 = vmatpush1.xpose.msra.mxu0 0.0
  %2822 = vmatprep.subr.mxu0 0.0
  %2823 = vmatpush1.xpose.msra.mxu0 0.0
  %2824 = vmatprep.subr.mxu0 0.0
  %2825 = vmatpush1.xpose.msra.mxu0 0.0
  %2826 = vmatprep.subr.mxu0 0.0
  %2827 = vmatpush1.xpose.msra.mxu0 0.0
  %2828 = vmatprep.subr.mxu0 0.0
  %2829 = vmatpush1.xpose.msra.mxu0 0.0
  %2830 = vmatprep.subr.mxu0 0.0
  %2831 = vmatpush1.xpose.msra.mxu0 0.0
  %2832 = vmatprep.mubr.f32.mxu0 0.0
  %2833 = vmatmul.mubr.f32.gmra.mrb[0].mxu0 %v2764
  %v2834 = vpop.f32.mrb[0].mxu0
  %v2835 = vadd.f32 0.0, %v2834
  %v2836 = vpop.f32.mrb[0].mxu0
  %2837 = vdwg.mxu0
  %v2838 = vmul.f32 %v2835, 0.25
  %v2839 = vsel %vm811, %v2838, -inf
  %2840 = vmax.xlane.f32.xlu0 %v2839
  %v2841 = vpop.xlane.xlu0 %2840
  %v2842 = vsub.f32 %v2838, %v2841
  %v2843 = vmul.f32 %v2842, 1.442695
  %v2844 = vpow.pop %v2843
  %v2845 = vsel %vm811, %v2844, 0.0
  %2846 = vadd.xlane.f32.xlu0 %v2845
  %v2847 = vpop.xlane.xlu0 %2846
  %v2848 = vrcp.pop %v2847
  %v2849 = vmul.f32 %v2844, %v2848
  %2850 = vrot.lane.b32.xlu0 %v730, 64
  %v2851 = vpop.permute.xlu0 %2850
  %v2854 = vsel %vm811, %v2849, 0
  %2856 = vmatprep.subr.mxu0 0.0
  %2857 = vmatpush1.msra.mxu0 %v2851
  %2858 = vmatprep.subr.mxu0 0.0
  %2859 = vmatpush1.msra.mxu0 0.0
  %2860 = vmatprep.subr.mxu0 0.0
  %2861 = vmatpush1.msra.mxu0 0.0
  %2862 = vmatprep.subr.mxu0 0.0
  %2863 = vmatpush1.msra.mxu0 0.0
  %2864 = vmatprep.subr.mxu0 0.0
  %2865 = vmatpush1.msra.mxu0 0.0
  %2866 = vmatprep.subr.mxu0 0.0
  %2867 = vmatpush1.msra.mxu0 0.0
  %2868 = vmatprep.subr.mxu0 0.0
  %2869 = vmatpush1.msra.mxu0 0.0
  %2870 = vmatprep.subr.mxu0 0.0
  %2871 = vmatpush1.msra.mxu0 0.0
  %2872 = vmatprep.subr.mxu0 0.0
  %2873 = vmatpush1.msra.mxu0 0.0
  %2874 = vmatprep.subr.mxu0 0.0
  %2875 = vmatpush1.msra.mxu0 0.0
  %2876 = vmatprep.subr.mxu0 0.0
  %2877 = vmatpush1.msra.mxu0 0.0
  %2878 = vmatprep.subr.mxu0 0.0
  %2879 = vmatpush1.msra.mxu0 0.0
  %2880 = vmatprep.subr.mxu0 0.0
  %2881 = vmatpush1.msra.mxu0 0.0
  %2882 = vmatprep.subr.mxu0 0.0
  %2883 = vmatpush1.msra.mxu0 0.0
  %2884 = vmatprep.subr.mxu0 0.0
  %2885 = vmatpush1.msra.mxu0 0.0
  %2886 = vmatprep.subr.mxu0 0.0
  %2887 = vmatpush1.msra.mxu0 0.0
  %2888 = vmatprep.subr.mxu0 0.0
  %2889 = vmatpush1.msra.mxu0 0.0
  %2890 = vmatprep.subr.mxu0 0.0
  %2891 = vmatpush1.msra.mxu0 0.0
  %2892 = vmatprep.subr.mxu0 0.0
  %2893 = vmatpush1.msra.mxu0 0.0
  %2894 = vmatprep.subr.mxu0 0.0
  %2895 = vmatpush1.msra.mxu0 0.0
  %2896 = vmatprep.subr.mxu0 0.0
  %2897 = vmatpush1.msra.mxu0 0.0
  %2898 = vmatprep.subr.mxu0 0.0
  %2899 = vmatpush1.msra.mxu0 0.0
  %2900 = vmatprep.subr.mxu0 0.0
  %2901 = vmatpush1.msra.mxu0 0.0
  %2902 = vmatprep.subr.mxu0 0.0
  %2903 = vmatpush1.msra.mxu0 0.0
  %2904 = vmatprep.subr.mxu0 0.0
  %2905 = vmatpush1.msra.mxu0 0.0
  %2906 = vmatprep.subr.mxu0 0.0
  %2907 = vmatpush1.msra.mxu0 0.0
  %2908 = vmatprep.subr.mxu0 0.0
  %2909 = vmatpush1.msra.mxu0 0.0
  %2910 = vmatprep.subr.mxu0 0.0
  %2911 = vmatpush1.msra.mxu0 0.0
  %2912 = vmatprep.subr.mxu0 0.0
  %2913 = vmatpush1.msra.mxu0 0.0
  %2914 = vmatprep.subr.mxu0 0.0
  %2915 = vmatpush1.msra.mxu0 0.0
  %2916 = vmatprep.subr.mxu0 0.0
  %2917 = vmatpush1.msra.mxu0 0.0
  %2918 = vmatprep.subr.mxu0 0.0
  %2919 = vmatpush1.msra.mxu0 0.0
  %2920 = vmatprep.mubr.f32.mxu0 0.0
  %2921 = vmatmul.mubr.f32.gmra.mrb[0].mxu0 %v2854
  %v2922 = vpop.f32.mrb[0].mxu0
  %v2923 = vadd.f32 0.0, %v2922
  %v2924 = vpop.f32.mrb[0].mxu0
  %2925 = vdwg.mxu0
  %2926 = vrot.lane.b32.xlu0 %v688, 48
  %v2927 = vpop.permute.xlu0 %2926
  %2928 = vrot.lane.b32.xlu0 %v690, 48
  %v2929 = vpop.permute.xlu0 %2928
  %v2930 = vsel %vm733, %v2927, 0
  %v2932 = vsel %vm733, %v2929, 0
  %2934 = vmatprep.subr.mxu0 0.0
  %2935 = vmatpush1.xpose.msra.mxu0 %v2932
  %2936 = vmatprep.subr.mxu0 0.0
  %2937 = vmatpush1.xpose.msra.mxu0 0.0
  %2938 = vmatprep.subr.mxu0 0.0
  %2939 = vmatpush1.xpose.msra.mxu0 0.0
  %2940 = vmatprep.subr.mxu0 0.0
  %2941 = vmatpush1.xpose.msra.mxu0 0.0
  %2942 = vmatprep.subr.mxu0 0.0
  %2943 = vmatpush1.xpose.msra.mxu0 0.0
  %2944 = vmatprep.subr.mxu0 0.0
  %2945 = vmatpush1.xpose.msra.mxu0 0.0
  %2946 = vmatprep.subr.mxu0 0.0
  %2947 = vmatpush1.xpose.msra.mxu0 0.0
  %2948 = vmatprep.subr.mxu0 0.0
  %2949 = vmatpush1.xpose.msra.mxu0 0.0
  %2950 = vmatprep.subr.mxu0 0.0
  %2951 = vmatpush1.xpose.msra.mxu0 0.0
  %2952 = vmatprep.subr.mxu0 0.0
  %2953 = vmatpush1.xpose.msra.mxu0 0.0
  %2954 = vmatprep.subr.mxu0 0.0
  %2955 = vmatpush1.xpose.msra.mxu0 0.0
  %2956 = vmatprep.subr.mxu0 0.0
  %2957 = vmatpush1.xpose.msra.mxu0 0.0
  %2958 = vmatprep.subr.mxu0 0.0
  %2959 = vmatpush1.xpose.msra.mxu0 0.0
  %2960 = vmatprep.subr.mxu0 0.0
  %2961 = vmatpush1.xpose.msra.mxu0 0.0
  %2962 = vmatprep.subr.mxu0 0.0
  %2963 = vmatpush1.xpose.msra.mxu0 0.0
  %2964 = vmatprep.subr.mxu0 0.0
  %2965 = vmatpush1.xpose.msra.mxu0 0.0
  %2966 = vmatprep.subr.mxu0 0.0
  %2967 = vmatpush1.xpose.msra.mxu0 0.0
  %2968 = vmatprep.subr.mxu0 0.0
  %2969 = vmatpush1.xpose.msra.mxu0 0.0
  %2970 = vmatprep.subr.mxu0 0.0
  %2971 = vmatpush1.xpose.msra.mxu0 0.0
  %2972 = vmatprep.subr.mxu0 0.0
  %2973 = vmatpush1.xpose.msra.mxu0 0.0
  %2974 = vmatprep.subr.mxu0 0.0
  %2975 = vmatpush1.xpose.msra.mxu0 0.0
  %2976 = vmatprep.subr.mxu0 0.0
  %2977 = vmatpush1.xpose.msra.mxu0 0.0
  %2978 = vmatprep.subr.mxu0 0.0
  %2979 = vmatpush1.xpose.msra.mxu0 0.0
  %2980 = vmatprep.subr.mxu0 0.0
  %2981 = vmatpush1.xpose.msra.mxu0 0.0
  %2982 = vmatprep.subr.mxu0 0.0
  %2983 = vmatpush1.xpose.msra.mxu0 0.0
  %2984 = vmatprep.subr.mxu0 0.0
  %2985 = vmatpush1.xpose.msra.mxu0 0.0
  %2986 = vmatprep.subr.mxu0 0.0
  %2987 = vmatpush1.xpose.msra.mxu0 0.0
  %2988 = vmatprep.subr.mxu0 0.0
  %2989 = vmatpush1.xpose.msra.mxu0 0.0
  %2990 = vmatprep.subr.mxu0 0.0
  %2991 = vmatpush1.xpose.msra.mxu0 0.0
  %2992 = vmatprep.subr.mxu0 0.0
  %2993 = vmatpush1.xpose.msra.mxu0 0.0
  %2994 = vmatprep.subr.mxu0 0.0
  %2995 = vmatpush1.xpose.msra.mxu0 0.0
  %2996 = vmatprep.subr.mxu0 0.0
  %2997 = vmatpush1.xpose.msra.mxu0 0.0
  %2998 = vmatprep.mubr.f32.mxu0 0.0
  %2999 = vmatmul.mubr.f32.gmra.mrb[0].mxu0 %v2930
  %v3000 = vpop.f32.mrb[0].mxu0
  %v3001 = vadd.f32 0.0, %v3000
  %v3002 = vpop.f32.mrb[0].mxu0
  %3003 = vdwg.mxu0
  %v3004 = vmul.f32 %v3001, 0.25
  %v3005 = vsel %vm811, %v3004, -inf
  %3006 = vmax.xlane.f32.xlu0 %v3005
  %v3007 = vpop.xlane.xlu0 %3006
  %v3008 = vsub.f32 %v3004, %v3007
  %v3009 = vmul.f32 %v3008, 1.442695
  %v3010 = vpow.pop %v3009
  %v3011 = vsel %vm811, %v3010, 0.0
  %3012 = vadd.xlane.f32.xlu0 %v3011
  %v3013 = vpop.xlane.xlu0 %3012
  %v3014 = vrcp.pop %v3013
  %v3015 = vmul.f32 %v3010, %v3014
  %3016 = vrot.lane.b32.xlu0 %v730, 48
  %v3017 = vpop.permute.xlu0 %3016
  %v3020 = vsel %vm811, %v3015, 0
  %3022 = vmatprep.subr.mxu0 0.0
  %3023 = vmatpush1.msra.mxu0 %v3017
  %3024 = vmatprep.subr.mxu0 0.0
  %3025 = vmatpush1.msra.mxu0 0.0
  %3026 = vmatprep.subr.mxu0 0.0
  %3027 = vmatpush1.msra.mxu0 0.0
  %3028 = vmatprep.subr.mxu0 0.0
  %3029 = vmatpush1.msra.mxu0 0.0
  %3030 = vmatprep.subr.mxu0 0.0
  %3031 = vmatpush1.msra.mxu0 0.0
  %3032 = vmatprep.subr.mxu0 0.0
  %3033 = vmatpush1.msra.mxu0 0.0
  %3034 = vmatprep.subr.mxu0 0.0
  %3035 = vmatpush1.msra.mxu0 0.0
  %3036 = vmatprep.subr.mxu0 0.0
  %3037 = vmatpush1.msra.mxu0 0.0
  %3038 = vmatprep.subr.mxu0 0.0
  %3039 = vmatpush1.msra.mxu0 0.0
  %3040 = vmatprep.subr.mxu0 0.0
  %3041 = vmatpush1.msra.mxu0 0.0
  %3042 = vmatprep.subr.mxu0 0.0
  %3043 = vmatpush1.msra.mxu0 0.0
  %3044 = vmatprep.subr.mxu0 0.0
  %3045 = vmatpush1.msra.mxu0 0.0
  %3046 = vmatprep.subr.mxu0 0.0
  %3047 = vmatpush1.msra.mxu0 0.0
  %3048 = vmatprep.subr.mxu0 0.0
  %3049 = vmatpush1.msra.mxu0 0.0
  %3050 = vmatprep.subr.mxu0 0.0
  %3051 = vmatpush1.msra.mxu0 0.0
  %3052 = vmatprep.subr.mxu0 0.0
  %3053 = vmatpush1.msra.mxu0 0.0
  %3054 = vmatprep.subr.mxu0 0.0
  %3055 = vmatpush1.msra.mxu0 0.0
  %3056 = vmatprep.subr.mxu0 0.0
  %3057 = vmatpush1.msra.mxu0 0.0
  %3058 = vmatprep.subr.mxu0 0.0
  %3059 = vmatpush1.msra.mxu0 0.0
  %3060 = vmatprep.subr.mxu0 0.0
  %3061 = vmatpush1.msra.mxu0 0.0
  %3062 = vmatprep.subr.mxu0 0.0
  %3063 = vmatpush1.msra.mxu0 0.0
  %3064 = vmatprep.subr.mxu0 0.0
  %3065 = vmatpush1.msra.mxu0 0.0
  %3066 = vmatprep.subr.mxu0 0.0
  %3067 = vmatpush1.msra.mxu0 0.0
  %3068 = vmatprep.subr.mxu0 0.0
  %3069 = vmatpush1.msra.mxu0 0.0
  %3070 = vmatprep.subr.mxu0 0.0
  %3071 = vmatpush1.msra.mxu0 0.0
  %3072 = vmatprep.subr.mxu0 0.0
  %3073 = vmatpush1.msra.mxu0 0.0
  %3074 = vmatprep.subr.mxu0 0.0
  %3075 = vmatpush1.msra.mxu0 0.0
  %3076 = vmatprep.subr.mxu0 0.0
  %3077 = vmatpush1.msra.mxu0 0.0
  %3078 = vmatprep.subr.mxu0 0.0
  %3079 = vmatpush1.msra.mxu0 0.0
  %3080 = vmatprep.subr.mxu0 0.0
  %3081 = vmatpush1.msra.mxu0 0.0
  %3082 = vmatprep.subr.mxu0 0.0
  %3083 = vmatpush1.msra.mxu0 0.0
  %3084 = vmatprep.subr.mxu0 0.0
  %3085 = vmatpush1.msra.mxu0 0.0
  %3086 = vmatprep.mubr.f32.mxu0 0.0
  %3087 = vmatmul.mubr.f32.gmra.mrb[0].mxu0 %v3020
  %v3088 = vpop.f32.mrb[0].mxu0
  %v3089 = vadd.f32 0.0, %v3088
  %v3090 = vpop.f32.mrb[0].mxu0
  %3091 = vdwg.mxu0
  %3092 = vrot.lane.b32.xlu0 %v688, 32
  %v3093 = vpop.permute.xlu0 %3092
  %3094 = vrot.lane.b32.xlu0 %v690, 32
  %v3095 = vpop.permute.xlu0 %3094
  %v3096 = vsel %vm733, %v3093, 0
  %v3098 = vsel %vm733, %v3095, 0
  %3100 = vmatprep.subr.mxu0 0.0
  %3101 = vmatpush1.xpose.msra.mxu0 %v3098
  %3102 = vmatprep.subr.mxu0 0.0
  %3103 = vmatpush1.xpose.msra.mxu0 0.0
  %3104 = vmatprep.subr.mxu0 0.0
  %3105 = vmatpush1.xpose.msra.mxu0 0.0
  %3106 = vmatprep.subr.mxu0 0.0
  %3107 = vmatpush1.xpose.msra.mxu0 0.0
  %3108 = vmatprep.subr.mxu0 0.0
  %3109 = vmatpush1.xpose.msra.mxu0 0.0
  %3110 = vmatprep.subr.mxu0 0.0
  %3111 = vmatpush1.xpose.msra.mxu0 0.0
  %3112 = vmatprep.subr.mxu0 0.0
  %3113 = vmatpush1.xpose.msra.mxu0 0.0
  %3114 = vmatprep.subr.mxu0 0.0
  %3115 = vmatpush1.xpose.msra.mxu0 0.0
  %3116 = vmatprep.subr.mxu0 0.0
  %3117 = vmatpush1.xpose.msra.mxu0 0.0
  %3118 = vmatprep.subr.mxu0 0.0
  %3119 = vmatpush1.xpose.msra.mxu0 0.0
  %3120 = vmatprep.subr.mxu0 0.0
  %3121 = vmatpush1.xpose.msra.mxu0 0.0
  %3122 = vmatprep.subr.mxu0 0.0
  %3123 = vmatpush1.xpose.msra.mxu0 0.0
  %3124 = vmatprep.subr.mxu0 0.0
  %3125 = vmatpush1.xpose.msra.mxu0 0.0
  %3126 = vmatprep.subr.mxu0 0.0
  %3127 = vmatpush1.xpose.msra.mxu0 0.0
  %3128 = vmatprep.subr.mxu0 0.0
  %3129 = vmatpush1.xpose.msra.mxu0 0.0
  %3130 = vmatprep.subr.mxu0 0.0
  %3131 = vmatpush1.xpose.msra.mxu0 0.0
  %3132 = vmatprep.subr.mxu0 0.0
  %3133 = vmatpush1.xpose.msra.mxu0 0.0
  %3134 = vmatprep.subr.mxu0 0.0
  %3135 = vmatpush1.xpose.msra.mxu0 0.0
  %3136 = vmatprep.subr.mxu0 0.0
  %3137 = vmatpush1.xpose.msra.mxu0 0.0
  %3138 = vmatprep.subr.mxu0 0.0
  %3139 = vmatpush1.xpose.msra.mxu0 0.0
  %3140 = vmatprep.subr.mxu0 0.0
  %3141 = vmatpush1.xpose.msra.mxu0 0.0
  %3142 = vmatprep.subr.mxu0 0.0
  %3143 = vmatpush1.xpose.msra.mxu0 0.0
  %3144 = vmatprep.subr.mxu0 0.0
  %3145 = vmatpush1.xpose.msra.mxu0 0.0
  %3146 = vmatprep.subr.mxu0 0.0
  %3147 = vmatpush1.xpose.msra.mxu0 0.0
  %3148 = vmatprep.subr.mxu0 0.0
  %3149 = vmatpush1.xpose.msra.mxu0 0.0
  %3150 = vmatprep.subr.mxu0 0.0
  %3151 = vmatpush1.xpose.msra.mxu0 0.0
  %3152 = vmatprep.subr.mxu0 0.0
  %3153 = vmatpush1.xpose.msra.mxu0 0.0
  %3154 = vmatprep.subr.mxu0 0.0
  %3155 = vmatpush1.xpose.msra.mxu0 0.0
  %3156 = vmatprep.subr.mxu0 0.0
  %3157 = vmatpush1.xpose.msra.mxu0 0.0
  %3158 = vmatprep.subr.mxu0 0.0
  %3159 = vmatpush1.xpose.msra.mxu0 0.0
  %3160 = vmatprep.subr.mxu0 0.0
  %3161 = vmatpush1.xpose.msra.mxu0 0.0
  %3162 = vmatprep.subr.mxu0 0.0
  %3163 = vmatpush1.xpose.msra.mxu0 0.0
  %3164 = vmatprep.mubr.f32.mxu0 0.0
  %3165 = vmatmul.mubr.f32.gmra.mrb[0].mxu0 %v3096
  %v3166 = vpop.f32.mrb[0].mxu0
  %v3167 = vadd.f32 0.0, %v3166
  %v3168 = vpop.f32.mrb[0].mxu0
  %3169 = vdwg.mxu0
  %v3170 = vmul.f32 %v3167, 0.25
  %v3171 = vsel %vm811, %v3170, -inf
  %3172 = vmax.xlane.f32.xlu0 %v3171
  %v3173 = vpop.xlane.xlu0 %3172
  %v3174 = vsub.f32 %v3170, %v3173
  %v3175 = vmul.f32 %v3174, 1.442695
  %v3176 = vpow.pop %v3175
  %v3177 = vsel %vm811, %v3176, 0.0
  %3178 = vadd.xlane.f32.xlu0 %v3177
  %v3179 = vpop.xlane.xlu0 %3178
  %v3180 = vrcp.pop %v3179
  %v3181 = vmul.f32 %v3176, %v3180
  %3182 = vrot.lane.b32.xlu0 %v730, 32
  %v3183 = vpop.permute.xlu0 %3182
  %v3186 = vsel %vm811, %v3181, 0
  %3188 = vmatprep.subr.mxu0 0.0
  %3189 = vmatpush1.msra.mxu0 %v3183
  %3190 = vmatprep.subr.mxu0 0.0
  %3191 = vmatpush1.msra.mxu0 0.0
  %3192 = vmatprep.subr.mxu0 0.0
  %3193 = vmatpush1.msra.mxu0 0.0
  %3194 = vmatprep.subr.mxu0 0.0
  %3195 = vmatpush1.msra.mxu0 0.0
  %3196 = vmatprep.subr.mxu0 0.0
  %3197 = vmatpush1.msra.mxu0 0.0
  %3198 = vmatprep.subr.mxu0 0.0
  %3199 = vmatpush1.msra.mxu0 0.0
  %3200 = vmatprep.subr.mxu0 0.0
  %3201 = vmatpush1.msra.mxu0 0.0
  %3202 = vmatprep.subr.mxu0 0.0
  %3203 = vmatpush1.msra.mxu0 0.0
  %3204 = vmatprep.subr.mxu0 0.0
  %3205 = vmatpush1.msra.mxu0 0.0
  %3206 = vmatprep.subr.mxu0 0.0
  %3207 = vmatpush1.msra.mxu0 0.0
  %3208 = vmatprep.subr.mxu0 0.0
  %3209 = vmatpush1.msra.mxu0 0.0
  %3210 = vmatprep.subr.mxu0 0.0
  %3211 = vmatpush1.msra.mxu0 0.0
  %3212 = vmatprep.subr.mxu0 0.0
  %3213 = vmatpush1.msra.mxu0 0.0
  %3214 = vmatprep.subr.mxu0 0.0
  %3215 = vmatpush1.msra.mxu0 0.0
  %3216 = vmatprep.subr.mxu0 0.0
  %3217 = vmatpush1.msra.mxu0 0.0
  %3218 = vmatprep.subr.mxu0 0.0
  %3219 = vmatpush1.msra.mxu0 0.0
  %3220 = vmatprep.subr.mxu0 0.0
  %3221 = vmatpush1.msra.mxu0 0.0
  %3222 = vmatprep.subr.mxu0 0.0
  %3223 = vmatpush1.msra.mxu0 0.0
  %3224 = vmatprep.subr.mxu0 0.0
  %3225 = vmatpush1.msra.mxu0 0.0
  %3226 = vmatprep.subr.mxu0 0.0
  %3227 = vmatpush1.msra.mxu0 0.0
  %3228 = vmatprep.subr.mxu0 0.0
  %3229 = vmatpush1.msra.mxu0 0.0
  %3230 = vmatprep.subr.mxu0 0.0
  %3231 = vmatpush1.msra.mxu0 0.0
  %3232 = vmatprep.subr.mxu0 0.0
  %3233 = vmatpush1.msra.mxu0 0.0
  %3234 = vmatprep.subr.mxu0 0.0
  %3235 = vmatpush1.msra.mxu0 0.0
  %3236 = vmatprep.subr.mxu0 0.0
  %3237 = vmatpush1.msra.mxu0 0.0
  %3238 = vmatprep.subr.mxu0 0.0
  %3239 = vmatpush1.msra.mxu0 0.0
  %3240 = vmatprep.subr.mxu0 0.0
  %3241 = vmatpush1.msra.mxu0 0.0
  %3242 = vmatprep.subr.mxu0 0.0
  %3243 = vmatpush1.msra.mxu0 0.0
  %3244 = vmatprep.subr.mxu0 0.0
  %3245 = vmatpush1.msra.mxu0 0.0
  %3246 = vmatprep.subr.mxu0 0.0
  %3247 = vmatpush1.msra.mxu0 0.0
  %3248 = vmatprep.subr.mxu0 0.0
  %3249 = vmatpush1.msra.mxu0 0.0
  %3250 = vmatprep.subr.mxu0 0.0
  %3251 = vmatpush1.msra.mxu0 0.0
  %3252 = vmatprep.mubr.f32.mxu0 0.0
  %3253 = vmatmul.mubr.f32.gmra.mrb[0].mxu0 %v3186
  %v3254 = vpop.f32.mrb[0].mxu0
  %v3255 = vadd.f32 0.0, %v3254
  %v3256 = vpop.f32.mrb[0].mxu0
  %3257 = vdwg.mxu0
  %3258 = vrot.lane.b32.xlu0 %v688, 16
  %v3259 = vpop.permute.xlu0 %3258
  %3260 = vrot.lane.b32.xlu0 %v690, 16
  %v3261 = vpop.permute.xlu0 %3260
  %v3262 = vsel %vm733, %v3259, 0
  %v3264 = vsel %vm733, %v3261, 0
  %3266 = vmatprep.subr.mxu0 0.0
  %3267 = vmatpush1.xpose.msra.mxu0 %v3264
  %3268 = vmatprep.subr.mxu0 0.0
  %3269 = vmatpush1.xpose.msra.mxu0 0.0
  %3270 = vmatprep.subr.mxu0 0.0
  %3271 = vmatpush1.xpose.msra.mxu0 0.0
  %3272 = vmatprep.subr.mxu0 0.0
  %3273 = vmatpush1.xpose.msra.mxu0 0.0
  %3274 = vmatprep.subr.mxu0 0.0
  %3275 = vmatpush1.xpose.msra.mxu0 0.0
  %3276 = vmatprep.subr.mxu0 0.0
  %3277 = vmatpush1.xpose.msra.mxu0 0.0
  %3278 = vmatprep.subr.mxu0 0.0
  %3279 = vmatpush1.xpose.msra.mxu0 0.0
  %3280 = vmatprep.subr.mxu0 0.0
  %3281 = vmatpush1.xpose.msra.mxu0 0.0
  %3282 = vmatprep.subr.mxu0 0.0
  %3283 = vmatpush1.xpose.msra.mxu0 0.0
  %3284 = vmatprep.subr.mxu0 0.0
  %3285 = vmatpush1.xpose.msra.mxu0 0.0
  %3286 = vmatprep.subr.mxu0 0.0
  %3287 = vmatpush1.xpose.msra.mxu0 0.0
  %3288 = vmatprep.subr.mxu0 0.0
  %3289 = vmatpush1.xpose.msra.mxu0 0.0
  %3290 = vmatprep.subr.mxu0 0.0
  %3291 = vmatpush1.xpose.msra.mxu0 0.0
  %3292 = vmatprep.subr.mxu0 0.0
  %3293 = vmatpush1.xpose.msra.mxu0 0.0
  %3294 = vmatprep.subr.mxu0 0.0
  %3295 = vmatpush1.xpose.msra.mxu0 0.0
  %3296 = vmatprep.subr.mxu0 0.0
  %3297 = vmatpush1.xpose.msra.mxu0 0.0
  %3298 = vmatprep.subr.mxu0 0.0
  %3299 = vmatpush1.xpose.msra.mxu0 0.0
  %3300 = vmatprep.subr.mxu0 0.0
  %3301 = vmatpush1.xpose.msra.mxu0 0.0
  %3302 = vmatprep.subr.mxu0 0.0
  %3303 = vmatpush1.xpose.msra.mxu0 0.0
  %3304 = vmatprep.subr.mxu0 0.0
  %3305 = vmatpush1.xpose.msra.mxu0 0.0
  %3306 = vmatprep.subr.mxu0 0.0
  %3307 = vmatpush1.xpose.msra.mxu0 0.0
  %3308 = vmatprep.subr.mxu0 0.0
  %3309 = vmatpush1.xpose.msra.mxu0 0.0
  %3310 = vmatprep.subr.mxu0 0.0
  %3311 = vmatpush1.xpose.msra.mxu0 0.0
  %3312 = vmatprep.subr.mxu0 0.0
  %3313 = vmatpush1.xpose.msra.mxu0 0.0
  %3314 = vmatprep.subr.mxu0 0.0
  %3315 = vmatpush1.xpose.msra.mxu0 0.0
  %3316 = vmatprep.subr.mxu0 0.0
  %3317 = vmatpush1.xpose.msra.mxu0 0.0
  %3318 = vmatprep.subr.mxu0 0.0
  %3319 = vmatpush1.xpose.msra.mxu0 0.0
  %3320 = vmatprep.subr.mxu0 0.0
  %3321 = vmatpush1.xpose.msra.mxu0 0.0
  %3322 = vmatprep.subr.mxu0 0.0
  %3323 = vmatpush1.xpose.msra.mxu0 0.0
  %3324 = vmatprep.subr.mxu0 0.0
  %3325 = vmatpush1.xpose.msra.mxu0 0.0
  %3326 = vmatprep.subr.mxu0 0.0
  %3327 = vmatpush1.xpose.msra.mxu0 0.0
  %3328 = vmatprep.subr.mxu0 0.0
  %3329 = vmatpush1.xpose.msra.mxu0 0.0
  %3330 = vmatprep.mubr.f32.mxu0 0.0
  %3331 = vmatmul.mubr.f32.gmra.mrb[0].mxu0 %v3262
  %v3332 = vpop.f32.mrb[0].mxu0
  %v3333 = vadd.f32 0.0, %v3332
  %v3334 = vpop.f32.mrb[0].mxu0
  %3335 = vdwg.mxu0
  %v3336 = vmul.f32 %v3333, 0.25
  %v3337 = vsel %vm811, %v3336, -inf
  %3338 = vmax.xlane.f32.xlu0 %v3337
  %v3339 = vpop.xlane.xlu0 %3338
  %v3340 = vsub.f32 %v3336, %v3339
  %v3341 = vmul.f32 %v3340, 1.442695
  %v3342 = vpow.pop %v3341
  %v3343 = vsel %vm811, %v3342, 0.0
  %3344 = vadd.xlane.f32.xlu0 %v3343
  %v3345 = vpop.xlane.xlu0 %3344
  %v3346 = vrcp.pop %v3345
  %v3347 = vmul.f32 %v3342, %v3346
  %3348 = vrot.lane.b32.xlu0 %v730, 16
  %v3349 = vpop.permute.xlu0 %3348
  %v3352 = vsel %vm811, %v3347, 0
  %3354 = vmatprep.subr.mxu0 0.0
  %3355 = vmatpush1.msra.mxu0 %v3349
  %3356 = vmatprep.subr.mxu0 0.0
  %3357 = vmatpush1.msra.mxu0 0.0
  %3358 = vmatprep.subr.mxu0 0.0
  %3359 = vmatpush1.msra.mxu0 0.0
  %3360 = vmatprep.subr.mxu0 0.0
  %3361 = vmatpush1.msra.mxu0 0.0
  %3362 = vmatprep.subr.mxu0 0.0
  %3363 = vmatpush1.msra.mxu0 0.0
  %3364 = vmatprep.subr.mxu0 0.0
  %3365 = vmatpush1.msra.mxu0 0.0
  %3366 = vmatprep.subr.mxu0 0.0
  %3367 = vmatpush1.msra.mxu0 0.0
  %3368 = vmatprep.subr.mxu0 0.0
  %3369 = vmatpush1.msra.mxu0 0.0
  %3370 = vmatprep.subr.mxu0 0.0
  %3371 = vmatpush1.msra.mxu0 0.0
  %3372 = vmatprep.subr.mxu0 0.0
  %3373 = vmatpush1.msra.mxu0 0.0
  %3374 = vmatprep.subr.mxu0 0.0
  %3375 = vmatpush1.msra.mxu0 0.0
  %3376 = vmatprep.subr.mxu0 0.0
  %3377 = vmatpush1.msra.mxu0 0.0
  %3378 = vmatprep.subr.mxu0 0.0
  %3379 = vmatpush1.msra.mxu0 0.0
  %3380 = vmatprep.subr.mxu0 0.0
  %3381 = vmatpush1.msra.mxu0 0.0
  %3382 = vmatprep.subr.mxu0 0.0
  %3383 = vmatpush1.msra.mxu0 0.0
  %3384 = vmatprep.subr.mxu0 0.0
  %3385 = vmatpush1.msra.mxu0 0.0
  %3386 = vmatprep.subr.mxu0 0.0
  %3387 = vmatpush1.msra.mxu0 0.0
  %3388 = vmatprep.subr.mxu0 0.0
  %3389 = vmatpush1.msra.mxu0 0.0
  %3390 = vmatprep.subr.mxu0 0.0
  %3391 = vmatpush1.msra.mxu0 0.0
  %3392 = vmatprep.subr.mxu0 0.0
  %3393 = vmatpush1.msra.mxu0 0.0
  %3394 = vmatprep.subr.mxu0 0.0
  %3395 = vmatpush1.msra.mxu0 0.0
  %3396 = vmatprep.subr.mxu0 0.0
  %3397 = vmatpush1.msra.mxu0 0.0
  %3398 = vmatprep.subr.mxu0 0.0
  %3399 = vmatpush1.msra.mxu0 0.0
  %3400 = vmatprep.subr.mxu0 0.0
  %3401 = vmatpush1.msra.mxu0 0.0
  %3402 = vmatprep.subr.mxu0 0.0
  %3403 = vmatpush1.msra.mxu0 0.0
  %3404 = vmatprep.subr.mxu0 0.0
  %3405 = vmatpush1.msra.mxu0 0.0
  %3406 = vmatprep.subr.mxu0 0.0
  %3407 = vmatpush1.msra.mxu0 0.0
  %3408 = vmatprep.subr.mxu0 0.0
  %3409 = vmatpush1.msra.mxu0 0.0
  %3410 = vmatprep.subr.mxu0 0.0
  %3411 = vmatpush1.msra.mxu0 0.0
  %3412 = vmatprep.subr.mxu0 0.0
  %3413 = vmatpush1.msra.mxu0 0.0
  %3414 = vmatprep.subr.mxu0 0.0
  %3415 = vmatpush1.msra.mxu0 0.0
  %3416 = vmatprep.subr.mxu0 0.0
  %3417 = vmatpush1.msra.mxu0 0.0
  %3418 = vmatprep.mubr.f32.mxu0 0.0
  %3419 = vmatmul.mubr.f32.gmra.mrb[0].mxu0 %v3352
  %v3420 = vpop.f32.mrb[0].mxu0
  %v3421 = vadd.f32 0.0, %v3420
  %v3422 = vpop.f32.mrb[0].mxu0
  %3423 = vdwg.mxu0
  %3425 = vrot.lane.b32.xlu0 %v2425, 16
  %v3426 = vpop.permute.xlu0 %3425
  %3429 = vrot.lane.b32.xlu0 %v2591, 32
  %v3430 = vpop.permute.xlu0 %3429
  %3433 = vrot.lane.b32.xlu0 %v2757, 48
  %v3434 = vpop.permute.xlu0 %3433
  %3437 = vrot.lane.b32.xlu0 %v2923, 64
  %v3438 = vpop.permute.xlu0 %3437
  %3441 = vrot.lane.b32.xlu0 %v3089, 80
  %v3442 = vpop.permute.xlu0 %3441
  %3445 = vrot.lane.b32.xlu0 %v3255, 96
  %v3446 = vpop.permute.xlu0 %3445
  %3449 = vrot.lane.b32.xlu0 %v3421, 112
  %v3450 = vpop.permute.xlu0 %3449
  %v3452 = vsel %vm733, %v2258, %v3426
  %v3453 = vsel %vm2088, %v3452, %v3430
  %v3454 = vsel %vm2090, %v3453, %v3434
  %v3455 = vsel %vm2092, %v3454, %v3438
  %v3456 = vsel %vm2094, %v3455, %v3442
  %v3457 = vsel %vm2096, %v3456, %v3446
  %v3458 = vsel %vm2098, %v3457, %v3450
  %v3459 = vld [vmem:[%s10] sm:$0xff]
  %v3460 = vld [vmem:[%s10 + $0x8] sm:$0xff]
  %v3461 = vld [vmem:[%s10 + $0x10] sm:$0xff]
  %v3462 = vld [vmem:[%s10 + $0x18] sm:$0xff]
  %v3463 = vld [vmem:[%s10 + $0x20] sm:$0xff]
  %v3464 = vld [vmem:[%s10 + $0x28] sm:$0xff]
  %v3465 = vld [vmem:[%s10 + $0x30] sm:$0xff]
  %v3466 = vld [vmem:[%s10 + $0x38] sm:$0xff]
  %v3467 = vld [vmem:[%s10 + $0x40] sm:$0xff]
  %v3468 = vld [vmem:[%s10 + $0x48] sm:$0xff]
  %v3469 = vld [vmem:[%s10 + $0x50] sm:$0xff]
  %v3470 = vld [vmem:[%s10 + $0x58] sm:$0xff]
  %v3471 = vld [vmem:[%s10 + $0x60] sm:$0xff]
  %v3472 = vld [vmem:[%s10 + $0x68] sm:$0xff]
  %v3473 = vld [vmem:[%s10 + $0x70] sm:$0xff]
  %v3474 = vld [vmem:[%s10 + $0x78] sm:$0xff]
  %v3475 = vpack.c.bf16 %v3458, %v2099
  %v3476 = vpack.c.bf16 %v3460, %v3459
  %v3477 = vpack.c.bf16 %v3462, %v3461
  %v3478 = vpack.c.bf16 %v3464, %v3463
  %v3479 = vpack.c.bf16 %v3466, %v3465
  %v3480 = vpack.c.bf16 %v3468, %v3467
  %v3481 = vpack.c.bf16 %v3470, %v3469
  %v3482 = vpack.c.bf16 %v3472, %v3471
  %v3483 = vpack.c.bf16 %v3474, %v3473
  %v3484 = vld [vmem:[%s11] sm:$0x1]
  %v3486 = vlaneseq
  %v3487 = vshrl.u32 %v3486, 7
  %v3488 = vsub.s32 0, %v3487
  %v3489 = vrot.slane %v3484, %v3488
  %3491 = vmatprep.subr.bf16.mxu0 0
  %3492 = vmatpush1.bf16.msra.mxu0 %v3476
  %3493 = vmatprep.subr.bf16.mxu0 0
  %3494 = vmatpush1.bf16.msra.mxu0 %v3477
  %3495 = vmatprep.subr.bf16.mxu0 0
  %3496 = vmatpush1.bf16.msra.mxu0 %v3478
  %3497 = vmatprep.subr.bf16.mxu0 0
  %3498 = vmatpush1.bf16.msra.mxu0 %v3479
  %3499 = vmatprep.subr.bf16.mxu0 0
  %3500 = vmatpush1.bf16.msra.mxu0 %v3480
  %3501 = vmatprep.subr.bf16.mxu0 0
  %3502 = vmatpush1.bf16.msra.mxu0 %v3481
  %3503 = vmatprep.subr.bf16.mxu0 0
  %3504 = vmatpush1.bf16.msra.mxu0 %v3482
  %3505 = vmatprep.subr.bf16.mxu0 0
  %3506 = vmatpush1.bf16.msra.mxu0 %v3483
  %3507 = vmatprep.subr.bf16.mxu0 0
  %3508 = vmatpush1.bf16.msra.mxu0 0
  %3509 = vmatprep.subr.bf16.mxu0 0
  %3510 = vmatpush1.bf16.msra.mxu0 0
  %3511 = vmatprep.subr.bf16.mxu0 0
  %3512 = vmatpush1.bf16.msra.mxu0 0
  %3513 = vmatprep.subr.bf16.mxu0 0
  %3514 = vmatpush1.bf16.msra.mxu0 0
  %3515 = vmatprep.subr.bf16.mxu0 0
  %3516 = vmatpush1.bf16.msra.mxu0 0
  %3517 = vmatprep.subr.bf16.mxu0 0
  %3518 = vmatpush1.bf16.msra.mxu0 0
  %3519 = vmatprep.subr.bf16.mxu0 0
  %3520 = vmatpush1.bf16.msra.mxu0 0
  %3521 = vmatprep.subr.bf16.mxu0 0
  %3522 = vmatpush1.bf16.msra.mxu0 0
  %3523 = vmatprep.mubr.bf16.mxu0 0
  %3524 = vmatmul.mubr.bf16.gmra.mrb[0].mxu0 %v3475
  %v3525 = vpop.f32.mrb[0].mxu0
  %v3526 = vadd.f32 %v3489, %v3525
  %v3527 = vpop.f32.mrb[0].mxu0
  %v3528 = vpop.f32.mrb[0].mxu0
  %v3529 = vadd.f32 %v3489, %v3528
  %v3530 = vpop.f32.mrb[0].mxu0
  %3531 = vdwg.mxu0
  %v3532 = vadd.f32 %v529, %v3526
  %v3533 = vadd.f32 %v558, %v3529
  %v3534 = vld [vmem:[%s12] sm:$0x1]
  %v3535 = vld [vmem:[%s13] sm:$0x1]
  %3536 = vadd.xlane.f32.xlu0 %v3532
  %v3537 = vpop.xlane.xlu0 %3536
  %3538 = vadd.xlane.f32.xlu0 %v3533
  %v3539 = vpop.xlane.xlu0 %3538
  %v3540 = vrcp.pop 128.0
  %v3541 = vmul.f32 %v3537, %v3540
  %v3542 = vmul.f32 %v3539, %v3540
  %v3543 = vsub.f32 %v3532, %v3541
  %v3544 = vsub.f32 %v3533, %v3542
  %v3545 = vmul.f32 %v3543, %v3543
  %v3546 = vmul.f32 %v3544, %v3544
  %3547 = vadd.xlane.f32.xlu0 %v3545
  %v3548 = vpop.xlane.xlu0 %3547
  %3549 = vadd.xlane.f32.xlu0 %v3546
  %v3550 = vpop.xlane.xlu0 %3549
  %v3551 = vmul.f32 %v3548, %v3540
  %v3552 = vmul.f32 %v3550, %v3540
  %v3553 = vadd.f32 %v3551, 1e-05
  %v3554 = vadd.f32 %v3552, 1e-05
  %v3555 = vrsqrt.pop %v3553
  %v3556 = vrsqrt.pop %v3554
  %v3557 = vmul.f32 %v3543, %v3555
  %v3558 = vmul.f32 %v3544, %v3556
  %v3560 = vlaneseq
  %v3561 = vshrl.u32 %v3560, 7
  %v3562 = vsub.s32 0, %v3561
  %v3563 = vrot.slane %v3534, %v3562
  %v3565 = vmul.f32 %v3557, %v3563
  %v3566 = vmul.f32 %v3558, %v3563
  %v3568 = vlaneseq
  %v3569 = vshrl.u32 %v3568, 7
  %v3570 = vsub.s32 0, %v3569
  %v3571 = vrot.slane %v3535, %v3570
  %v3573 = vadd.f32 %v3565, %v3571
  %v3574 = vadd.f32 %v3566, %v3571
  %v3575 = vld [vmem:[%s14] sm:$0xff]
  %v3576 = vld [vmem:[%s14 + $0x8] sm:$0xff]
  %v3577 = vld [vmem:[%s14 + $0x10] sm:$0xff]
  %v3578 = vld [vmem:[%s14 + $0x18] sm:$0xff]
  %v3579 = vld [vmem:[%s14 + $0x20] sm:$0xff]
  %v3580 = vld [vmem:[%s14 + $0x28] sm:$0xff]
  %v3581 = vld [vmem:[%s14 + $0x30] sm:$0xff]
  %v3582 = vld [vmem:[%s14 + $0x38] sm:$0xff]
  %v3583 = vld [vmem:[%s14 + $0x40] sm:$0xff]
  %v3584 = vld [vmem:[%s14 + $0x48] sm:$0xff]
  %v3585 = vld [vmem:[%s14 + $0x50] sm:$0xff]
  %v3586 = vld [vmem:[%s14 + $0x58] sm:$0xff]
  %v3587 = vld [vmem:[%s14 + $0x60] sm:$0xff]
  %v3588 = vld [vmem:[%s14 + $0x68] sm:$0xff]
  %v3589 = vld [vmem:[%s14 + $0x70] sm:$0xff]
  %v3590 = vld [vmem:[%s14 + $0x78] sm:$0xff]
  %v3591 = vld [vmem:[%s14 + $0x80] sm:$0xff]
  %v3592 = vld [vmem:[%s14 + $0x88] sm:$0xff]
  %v3593 = vld [vmem:[%s14 + $0x90] sm:$0xff]
  %v3594 = vld [vmem:[%s14 + $0x98] sm:$0xff]
  %v3595 = vld [vmem:[%s14 + $0xa0] sm:$0xff]
  %v3596 = vld [vmem:[%s14 + $0xa8] sm:$0xff]
  %v3597 = vld [vmem:[%s14 + $0xb0] sm:$0xff]
  %v3598 = vld [vmem:[%s14 + $0xb8] sm:$0xff]
  %v3599 = vld [vmem:[%s14 + $0xc0] sm:$0xff]
  %v3600 = vld [vmem:[%s14 + $0xc8] sm:$0xff]
  %v3601 = vld [vmem:[%s14 + $0xd0] sm:$0xff]
  %v3602 = vld [vmem:[%s14 + $0xd8] sm:$0xff]
  %v3603 = vld [vmem:[%s14 + $0xe0] sm:$0xff]
  %v3604 = vld [vmem:[%s14 + $0xe8] sm:$0xff]
  %v3605 = vld [vmem:[%s14 + $0xf0] sm:$0xff]
  %v3606 = vld [vmem:[%s14 + $0xf8] sm:$0xff]
  %v3607 = vld [vmem:[%s14 + $0x100] sm:$0xff]
  %v3608 = vld [vmem:[%s14 + $0x108] sm:$0xff]
  %v3609 = vld [vmem:[%s14 + $0x110] sm:$0xff]
  %v3610 = vld [vmem:[%s14 + $0x118] sm:$0xff]
  %v3611 = vld [vmem:[%s14 + $0x120] sm:$0xff]
  %v3612 = vld [vmem:[%s14 + $0x128] sm:$0xff]
  %v3613 = vld [vmem:[%s14 + $0x130] sm:$0xff]
  %v3614 = vld [vmem:[%s14 + $0x138] sm:$0xff]
  %v3615 = vld [vmem:[%s14 + $0x140] sm:$0xff]
  %v3616 = vld [vmem:[%s14 + $0x148] sm:$0xff]
  %v3617 = vld [vmem:[%s14 + $0x150] sm:$0xff]
  %v3618 = vld [vmem:[%s14 + $0x158] sm:$0xff]
  %v3619 = vld [vmem:[%s14 + $0x160] sm:$0xff]
  %v3620 = vld [vmem:[%s14 + $0x168] sm:$0xff]
  %v3621 = vld [vmem:[%s14 + $0x170] sm:$0xff]
  %v3622 = vld [vmem:[%s14 + $0x178] sm:$0xff]
  %v3623 = vld [vmem:[%s14 + $0x180] sm:$0xff]
  %v3624 = vld [vmem:[%s14 + $0x188] sm:$0xff]
  %v3625 = vld [vmem:[%s14 + $0x190] sm:$0xff]
  %v3626 = vld [vmem:[%s14 + $0x198] sm:$0xff]
  %v3627 = vld [vmem:[%s14 + $0x1a0] sm:$0xff]
  %v3628 = vld [vmem:[%s14 + $0x1a8] sm:$0xff]
  %v3629 = vld [vmem:[%s14 + $0x1b0] sm:$0xff]
  %v3630 = vld [vmem:[%s14 + $0x1b8] sm:$0xff]
  %v3631 = vld [vmem:[%s14 + $0x1c0] sm:$0xff]
  %v3632 = vld [vmem:[%s14 + $0x1c8] sm:$0xff]
  %v3633 = vld [vmem:[%s14 + $0x1d0] sm:$0xff]
  %v3634 = vld [vmem:[%s14 + $0x1d8] sm:$0xff]
  %v3635 = vld [vmem:[%s14 + $0x1e0] sm:$0xff]
  %v3636 = vld [vmem:[%s14 + $0x1e8] sm:$0xff]
  %v3637 = vld [vmem:[%s14 + $0x1f0] sm:$0xff]
  %v3638 = vld [vmem:[%s14 + $0x1f8] sm:$0xff]
  %v3639 = vpack.c.bf16 %v3574, %v3573
  %v3640 = vpack.c.bf16 %v3579, %v3575
  %v3641 = vpack.c.bf16 %v3580, %v3576
  %v3642 = vpack.c.bf16 %v3581, %v3577
  %v3643 = vpack.c.bf16 %v3582, %v3578
  %v3644 = vpack.c.bf16 %v3587, %v3583
  %v3645 = vpack.c.bf16 %v3588, %v3584
  %v3646 = vpack.c.bf16 %v3589, %v3585
  %v3647 = vpack.c.bf16 %v3590, %v3586
  %v3648 = vpack.c.bf16 %v3595, %v3591
  %v3649 = vpack.c.bf16 %v3596, %v3592
  %v3650 = vpack.c.bf16 %v3597, %v3593
  %v3651 = vpack.c.bf16 %v3598, %v3594
  %v3652 = vpack.c.bf16 %v3603, %v3599
  %v3653 = vpack.c.bf16 %v3604, %v3600
  %v3654 = vpack.c.bf16 %v3605, %v3601
  %v3655 = vpack.c.bf16 %v3606, %v3602
  %v3656 = vpack.c.bf16 %v3611, %v3607
  %v3657 = vpack.c.bf16 %v3612, %v3608
  %v3658 = vpack.c.bf16 %v3613, %v3609
  %v3659 = vpack.c.bf16 %v3614, %v3610
  %v3660 = vpack.c.bf16 %v3619, %v3615
  %v3661 = vpack.c.bf16 %v3620, %v3616
  %v3662 = vpack.c.bf16 %v3621, %v3617
  %v3663 = vpack.c.bf16 %v3622, %v3618
  %v3664 = vpack.c.bf16 %v3627, %v3623
  %v3665 = vpack.c.bf16 %v3628, %v3624
  %v3666 = vpack.c.bf16 %v3629, %v3625
  %v3667 = vpack.c.bf16 %v3630, %v3626
  %v3668 = vpack.c.bf16 %v3635, %v3631
  %v3669 = vpack.c.bf16 %v3636, %v3632
  %v3670 = vpack.c.bf16 %v3637, %v3633
  %v3671 = vpack.c.bf16 %v3638, %v3634
  %v3672 = vld [vmem:[%s15] sm:$0xf]
  %v3674 = vlaneseq
  %v3675 = vshrl.u32 %v3674, 7
  %v3676 = vsub.s32 0, %v3675
  %v3677 = vrot.slane %v3672, %v3676
  %v3678 = vlaneseq
  %v3679 = vshrl.u32 %v3678, 7
  %v3680 = vsub.s32 1, %v3679
  %v3681 = vrot.slane %v3672, %v3680
  %v3682 = vlaneseq
  %v3683 = vshrl.u32 %v3682, 7
  %v3684 = vsub.s32 2, %v3683
  %v3685 = vrot.slane %v3672, %v3684
  %v3686 = vlaneseq
  %v3687 = vshrl.u32 %v3686, 7
  %v3688 = vsub.s32 3, %v3687
  %v3689 = vrot.slane %v3672, %v3688
  %3694 = vmatprep.subr.bf16.mxu0 %v3641
  %3695 = vmatpush1.bf16.msra.mxu0 %v3640
  %3696 = vmatprep.subr.bf16.mxu0 %v3645
  %3697 = vmatpush1.bf16.msra.mxu0 %v3644
  %3698 = vmatprep.subr.bf16.mxu0 %v3649
  %3699 = vmatpush1.bf16.msra.mxu0 %v3648
  %3700 = vmatprep.subr.bf16.mxu0 %v3653
  %3701 = vmatpush1.bf16.msra.mxu0 %v3652
  %3702 = vmatprep.subr.bf16.mxu0 %v3657
  %3703 = vmatpush1.bf16.msra.mxu0 %v3656
  %3704 = vmatprep.subr.bf16.mxu0 %v3661
  %3705 = vmatpush1.bf16.msra.mxu0 %v3660
  %3706 = vmatprep.subr.bf16.mxu0 %v3665
  %3707 = vmatpush1.bf16.msra.mxu0 %v3664
  %3708 = vmatprep.subr.bf16.mxu0 %v3669
  %3709 = vmatpush1.bf16.msra.mxu0 %v3668
  %3710 = vmatprep.subr.bf16.mxu0 0
  %3711 = vmatpush1.bf16.msra.mxu0 0
  %3712 = vmatprep.subr.bf16.mxu0 0
  %3713 = vmatpush1.bf16.msra.mxu0 0
  %3714 = vmatprep.subr.bf16.mxu0 0
  %3715 = vmatpush1.bf16.msra.mxu0 0
  %3716 = vmatprep.subr.bf16.mxu0 0
  %3717 = vmatpush1.bf16.msra.mxu0 0
  %3718 = vmatprep.subr.bf16.mxu0 0
  %3719 = vmatpush1.bf16.msra.mxu0 0
  %3720 = vmatprep.subr.bf16.mxu0 0
  %3721 = vmatpush1.bf16.msra.mxu0 0
  %3722 = vmatprep.subr.bf16.mxu0 0
  %3723 = vmatpush1.bf16.msra.mxu0 0
  %3724 = vmatprep.subr.bf16.mxu0 0
  %3725 = vmatpush1.bf16.msra.mxu0 0
  %3726 = vmatprep.mubr.bf16.mxu0 0
  %3727 = vmatmul.mubr.bf16.gmra.mrb[0].mxu0 %v3639
  %v3728 = vpop.f32.mrb[0].mxu0
  %v3729 = vadd.f32 %v3677, %v3728
  %v3730 = vpop.f32.mrb[0].mxu0
  %v3731 = vadd.f32 %v3681, %v3730
  %v3732 = vpop.f32.mrb[0].mxu0
  %v3733 = vadd.f32 %v3677, %v3732
  %v3734 = vpop.f32.mrb[0].mxu0
  %v3735 = vadd.f32 %v3681, %v3734
  %3736 = vdwg.mxu0
  %3737 = vmatprep.subr.bf16.mxu0 %v3643
  %3738 = vmatpush1.bf16.msra.mxu0 %v3642
  %3739 = vmatprep.subr.bf16.mxu0 %v3647
  %3740 = vmatpush1.bf16.msra.mxu0 %v3646
  %3741 = vmatprep.subr.bf16.mxu0 %v3651
  %3742 = vmatpush1.bf16.msra.mxu0 %v3650
  %3743 = vmatprep.subr.bf16.mxu0 %v3655
  %3744 = vmatpush1.bf16.msra.mxu0 %v3654
  %3745 = vmatprep.subr.bf16.mxu0 %v3659
  %3746 = vmatpush1.bf16.msra.mxu0 %v3658
  %3747 = vmatprep.subr.bf16.mxu0 %v3663
  %3748 = vmatpush1.bf16.msra.mxu0 %v3662
  %3749 = vmatprep.subr.bf16.mxu0 %v3667
  %3750 = vmatpush1.bf16.msra.mxu0 %v3666
  %3751 = vmatprep.subr.bf16.mxu0 %v3671
  %3752 = vmatpush1.bf16.msra.mxu0 %v3670
  %3753 = vmatprep.subr.bf16.mxu0 0
  %3754 = vmatpush1.bf16.msra.mxu0 0
  %3755 = vmatprep.subr.bf16.mxu0 0
  %3756 = vmatpush1.bf16.msra.mxu0 0
  %3757 = vmatprep.subr.bf16.mxu0 0
  %3758 = vmatpush1.bf16.msra.mxu0 0
  %3759 = vmatprep.subr.bf16.mxu0 0
  %3760 = vmatpush1.bf16.msra.mxu0 0
  %3761 = vmatprep.subr.bf16.mxu0 0
  %3762 = vmatpush1.bf16.msra.mxu0 0
  %3763 = vmatprep.subr.bf16.mxu0 0
  %3764 = vmatpush1.bf16.msra.mxu0 0
  %3765 = vmatprep.subr.bf16.mxu0 0
  %3766 = vmatpush1.bf16.msra.mxu0 0
  %3767 = vmatprep.subr.bf16.mxu0 0
  %3768 = vmatpush1.bf16.msra.mxu0 0
  %3769 = vmatprep.mubr.bf16.mxu0 0
  %3770 = vmatmul.mubr.bf16.gmra.mrb[0].mxu0 %v3639
  %v3771 = vpop.f32.mrb[0].mxu0
  %v3772 = vadd.f32 %v3685, %v3771
  %v3773 = vpop.f32.mrb[0].mxu0
  %v3774 = vadd.f32 %v3689, %v3773
  %v3775 = vpop.f32.mrb[0].mxu0
  %v3776 = vadd.f32 %v3685, %v3775
  %v3777 = vpop.f32.mrb[0].mxu0
  %v3778 = vadd.f32 %v3689, %v3777
  %3779 = vdwg.mxu0
  %v3780 = vmax.f32 %v3729, 0.0
  %v3781 = vmax.f32 %v3731, 0.0
  %v3782 = vmax.f32 %v3772, 0.0
  %v3783 = vmax.f32 %v3774, 0.0
  %v3784 = vmax.f32 %v3733, 0.0
  %v3785 = vmax.f32 %v3735, 0.0
  %v3786 = vmax.f32 %v3776, 0.0
  %v3787 = vmax.f32 %v3778, 0.0
  %v3788 = vld [vmem:[%s16] sm:$0xff]
  %v3789 = vld [vmem:[%s16 + $0x8] sm:$0xff]
  %v3790 = vld [vmem:[%s16 + $0x10] sm:$0xff]
  %v3791 = vld [vmem:[%s16 + $0x18] sm:$0xff]
  %v3792 = vld [vmem:[%s16 + $0x20] sm:$0xff]
  %v3793 = vld [vmem:[%s16 + $0x28] sm:$0xff]
  %v3794 = vld [vmem:[%s16 + $0x30] sm:$0xff]
  %v3795 = vld [vmem:[%s16 + $0x38] sm:$0xff]
  %v3796 = vld [vmem:[%s16 + $0x40] sm:$0xff]
  %v3797 = vld [vmem:[%s16 + $0x48] sm:$0xff]
  %v3798 = vld [vmem:[%s16 + $0x50] sm:$0xff]
  %v3799 = vld [vmem:[%s16 + $0x58] sm:$0xff]
  %v3800 = vld [vmem:[%s16 + $0x60] sm:$0xff]
  %v3801 = vld [vmem:[%s16 + $0x68] sm:$0xff]
  %v3802 = vld [vmem:[%s16 + $0x70] sm:$0xff]
  %v3803 = vld [vmem:[%s16 + $0x78] sm:$0xff]
  %v3804 = vld [vmem:[%s16 + $0x80] sm:$0xff]
  %v3805 = vld [vmem:[%s16 + $0x88] sm:$0xff]
  %v3806 = vld [vmem:[%s16 + $0x90] sm:$0xff]
  %v3807 = vld [vmem:[%s16 + $0x98] sm:$0xff]
  %v3808 = vld [vmem:[%s16 + $0xa0] sm:$0xff]
  %v3809 = vld [vmem:[%s16 + $0xa8] sm:$0xff]
  %v3810 = vld [vmem:[%s16 + $0xb0] sm:$0xff]
  %v3811 = vld [vmem:[%s16 + $0xb8] sm:$0xff]
  %v3812 = vld [vmem:[%s16 + $0xc0] sm:$0xff]
  %v3813 = vld [vmem:[%s16 + $0xc8] sm:$0xff]
  %v3814 = vld [vmem:[%s16 + $0xd0] sm:$0xff]
  %v3815 = vld [vmem:[%s16 + $0xd8] sm:$0xff]
  %v3816 = vld [vmem:[%s16 + $0xe0] sm:$0xff]
  %v3817 = vld [vmem:[%s16 + $0xe8] sm:$0xff]
  %v3818 = vld [vmem:[%s16 + $0xf0] sm:$0xff]
  %v3819 = vld [vmem:[%s16 + $0xf8] sm:$0xff]
  %v3820 = vld [vmem:[%s16 + $0x100] sm:$0xff]
  %v3821 = vld [vmem:[%s16 + $0x108] sm:$0xff]
  %v3822 = vld [vmem:[%s16 + $0x110] sm:$0xff]
  %v3823 = vld [vmem:[%s16 + $0x118] sm:$0xff]
  %v3824 = vld [vmem:[%s16 + $0x120] sm:$0xff]
  %v3825 = vld [vmem:[%s16 + $0x128] sm:$0xff]
  %v3826 = vld [vmem:[%s16 + $0x130] sm:$0xff]
  %v3827 = vld [vmem:[%s16 + $0x138] sm:$0xff]
  %v3828 = vld [vmem:[%s16 + $0x140] sm:$0xff]
  %v3829 = vld [vmem:[%s16 + $0x148] sm:$0xff]
  %v3830 = vld [vmem:[%s16 + $0x150] sm:$0xff]
  %v3831 = vld [vmem:[%s16 + $0x158] sm:$0xff]
  %v3832 = vld [vmem:[%s16 + $0x160] sm:$0xff]
  %v3833 = vld [vmem:[%s16 + $0x168] sm:$0xff]
  %v3834 = vld [vmem:[%s16 + $0x170] sm:$0xff]
  %v3835 = vld [vmem:[%s16 + $0x178] sm:$0xff]
  %v3836 = vld [vmem:[%s16 + $0x180] sm:$0xff]
  %v3837 = vld [vmem:[%s16 + $0x188] sm:$0xff]
  %v3838 = vld [vmem:[%s16 + $0x190] sm:$0xff]
  %v3839 = vld [vmem:[%s16 + $0x198] sm:$0xff]
  %v3840 = vld [vmem:[%s16 + $0x1a0] sm:$0xff]
  %v3841 = vld [vmem:[%s16 + $0x1a8] sm:$0xff]
  %v3842 = vld [vmem:[%s16 + $0x1b0] sm:$0xff]
  %v3843 = vld [vmem:[%s16 + $0x1b8] sm:$0xff]
  %v3844 = vld [vmem:[%s16 + $0x1c0] sm:$0xff]
  %v3845 = vld [vmem:[%s16 + $0x1c8] sm:$0xff]
  %v3846 = vld [vmem:[%s16 + $0x1d0] sm:$0xff]
  %v3847 = vld [vmem:[%s16 + $0x1d8] sm:$0xff]
  %v3848 = vld [vmem:[%s16 + $0x1e0] sm:$0xff]
  %v3849 = vld [vmem:[%s16 + $0x1e8] sm:$0xff]
  %v3850 = vld [vmem:[%s16 + $0x1f0] sm:$0xff]
  %v3851 = vld [vmem:[%s16 + $0x1f8] sm:$0xff]
  %v3852 = vpack.c.bf16 %v3784, %v3780
  %v3853 = vpack.c.bf16 %v3785, %v3781
  %v3854 = vpack.c.bf16 %v3786, %v3782
  %v3855 = vpack.c.bf16 %v3787, %v3783
  %v3856 = vpack.c.bf16 %v3789, %v3788
  %v3857 = vpack.c.bf16 %v3791, %v3790
  %v3858 = vpack.c.bf16 %v3793, %v3792
  %v3859 = vpack.c.bf16 %v3795, %v3794
  %v3860 = vpack.c.bf16 %v3797, %v3796
  %v3861 = vpack.c.bf16 %v3799, %v3798
  %v3862 = vpack.c.bf16 %v3801, %v3800
  %v3863 = vpack.c.bf16 %v3803, %v3802
  %v3864 = vpack.c.bf16 %v3805, %v3804
  %v3865 = vpack.c.bf16 %v3807, %v3806
  %v3866 = vpack.c.bf16 %v3809, %v3808
  %v3867 = vpack.c.bf16 %v3811, %v3810
  %v3868 = vpack.c.bf16 %v3813, %v3812
  %v3869 = vpack.c.bf16 %v3815, %v3814
  %v3870 = vpack.c.bf16 %v3817, %v3816
  %v3871 = vpack.c.bf16 %v3819, %v3818
  %v3872 = vpack.c.bf16 %v3821, %v3820
  %v3873 = vpack.c.bf16 %v3823, %v3822
  %v3874 = vpack.c.bf16 %v3825, %v3824
  %v3875 = vpack.c.bf16 %v3827, %v3826
  %v3876 = vpack.c.bf16 %v3829, %v3828
  %v3877 = vpack.c.bf16 %v3831, %v3830
  %v3878 = vpack.c.bf16 %v3833, %v3832
  %v3879 = vpack.c.bf16 %v3835, %v3834
  %v3880 = vpack.c.bf16 %v3837, %v3836
  %v3881 = vpack.c.bf16 %v3839, %v3838
  %v3882 = vpack.c.bf16 %v3841, %v3840
  %v3883 = vpack.c.bf16 %v3843, %v3842
  %v3884 = vpack.c.bf16 %v3845, %v3844
  %v3885 = vpack.c.bf16 %v3847, %v3846
  %v3886 = vpack.c.bf16 %v3849, %v3848
  %v3887 = vpack.c.bf16 %v3851, %v3850
  %v3888 = vld [vmem:[%s17] sm:$0x1]
  %v3890 = vlaneseq
  %v3891 = vshrl.u32 %v3890, 7
  %v3892 = vsub.s32 0, %v3891
  %v3893 = vrot.slane %v3888, %v3892
  %3895 = vmatprep.subr.bf16.mxu0 0
  %3896 = vmatpush1.bf16.msra.mxu0 %v3856
  %3897 = vmatprep.subr.bf16.mxu0 0
  %3898 = vmatpush1.bf16.msra.mxu0 %v3857
  %3899 = vmatprep.subr.bf16.mxu0 0
  %3900 = vmatpush1.bf16.msra.mxu0 %v3858
  %3901 = vmatprep.subr.bf16.mxu0 0
  %3902 = vmatpush1.bf16.msra.mxu0 %v3859
  %3903 = vmatprep.subr.bf16.mxu0 0
  %3904 = vmatpush1.bf16.msra.mxu0 %v3860
  %3905 = vmatprep.subr.bf16.mxu0 0
  %3906 = vmatpush1.bf16.msra.mxu0 %v3861
  %3907 = vmatprep.subr.bf16.mxu0 0
  %3908 = vmatpush1.bf16.msra.mxu0 %v3862
  %3909 = vmatprep.subr.bf16.mxu0 0
  %3910 = vmatpush1.bf16.msra.mxu0 %v3863
  %3911 = vmatprep.subr.bf16.mxu0 0
  %3912 = vmatpush1.bf16.msra.mxu0 %v3864
  %3913 = vmatprep.subr.bf16.mxu0 0
  %3914 = vmatpush1.bf16.msra.mxu0 %v3865
  %3915 = vmatprep.subr.bf16.mxu0 0
  %3916 = vmatpush1.bf16.msra.mxu0 %v3866
  %3917 = vmatprep.subr.bf16.mxu0 0
  %3918 = vmatpush1.bf16.msra.mxu0 %v3867
  %3919 = vmatprep.subr.bf16.mxu0 0
  %3920 = vmatpush1.bf16.msra.mxu0 %v3868
  %3921 = vmatprep.subr.bf16.mxu0 0
  %3922 = vmatpush1.bf16.msra.mxu0 %v3869
  %3923 = vmatprep.subr.bf16.mxu0 0
  %3924 = vmatpush1.bf16.msra.mxu0 %v3870
  %3925 = vmatprep.subr.bf16.mxu0 0
  %3926 = vmatpush1.bf16.msra.mxu0 %v3871
  %3927 = vmatprep.mubr.bf16.mxu0 %v3853
  %3928 = vmatmul.mubr.bf16.gmra.mrb[0].mxu0 %v3852
  %v3929 = vpop.f32.mrb[0].mxu0
  %v3930 = vadd.f32 %v3893, %v3929
  %v3931 = vpop.f32.mrb[0].mxu0
  %v3932 = vpop.f32.mrb[0].mxu0
  %v3933 = vadd.f32 %v3893, %v3932
  %v3934 = vpop.f32.mrb[0].mxu0
  %3935 = vdwg.mxu0
  %3936 = vmatprep.subr.bf16.mxu0 0
  %3937 = vmatpush1.bf16.msra.mxu0 %v3872
  %3938 = vmatprep.subr.bf16.mxu0 0
  %3939 = vmatpush1.bf16.msra.mxu0 %v3873
  %3940 = vmatprep.subr.bf16.mxu0 0
  %3941 = vmatpush1.bf16.msra.mxu0 %v3874
  %3942 = vmatprep.subr.bf16.mxu0 0
  %3943 = vmatpush1.bf16.msra.mxu0 %v3875
  %3944 = vmatprep.subr.bf16.mxu0 0
  %3945 = vmatpush1.bf16.msra.mxu0 %v3876
  %3946 = vmatprep.subr.bf16.mxu0 0
  %3947 = vmatpush1.bf16.msra.mxu0 %v3877
  %3948 = vmatprep.subr.bf16.mxu0 0
  %3949 = vmatpush1.bf16.msra.mxu0 %v3878
  %3950 = vmatprep.subr.bf16.mxu0 0
  %3951 = vmatpush1.bf16.msra.mxu0 %v3879
  %3952 = vmatprep.subr.bf16.mxu0 0
  %3953 = vmatpush1.bf16.msra.mxu0 %v3880
  %3954 = vmatprep.subr.bf16.mxu0 0
  %3955 = vmatpush1.bf16.msra.mxu0 %v3881
  %3956 = vmatprep.subr.bf16.mxu0 0
  %3957 = vmatpush1.bf16.msra.mxu0 %v3882
  %3958 = vmatprep.subr.bf16.mxu0 0
  %3959 = vmatpush1.bf16.msra.mxu0 %v3883
  %3960 = vmatprep.subr.bf16.mxu0 0
  %3961 = vmatpush1.bf16.msra.mxu0 %v3884
  %3962 = vmatprep.subr.bf16.mxu0 0
  %3963 = vmatpush1.bf16.msra.mxu0 %v3885
  %3964 = vmatprep.subr.bf16.mxu0 0
  %3965 = vmatpush1.bf16.msra.mxu0 %v3886
  %3966 = vmatprep.subr.bf16.mxu0 0
  %3967 = vmatpush1.bf16.msra.mxu0 %v3887
  %3968 = vmatprep.mubr.bf16.mxu0 %v3855
  %3969 = vmatmul.mubr.bf16.gmra.mrb[0].mxu0 %v3854
  %v3970 = vpop.f32.mrb[0].mxu0
  %v3971 = vadd.f32 %v3930, %v3970
  %v3972 = vpop.f32.mrb[0].mxu0
  %v3973 = vpop.f32.mrb[0].mxu0
  %v3974 = vadd.f32 %v3933, %v3973
  %v3975 = vpop.f32.mrb[0].mxu0
  %3976 = vdwg.mxu0
  %v3977 = vadd.f32 %v3573, %v3971
  %v3978 = vadd.f32 %v3574, %v3974
  %v3979 = vld [vmem:[%s18] sm:$0x1]
  %v3980 = vld [vmem:[%s19] sm:$0x1]
  %3981 = vadd.xlane.f32.xlu0 %v3977
  %v3982 = vpop.xlane.xlu0 %3981
  %3983 = vadd.xlane.f32.xlu0 %v3978
  %v3984 = vpop.xlane.xlu0 %3983
  %v3985 = vmul.f32 %v3982, %v3540
  %v3986 = vmul.f32 %v3984, %v3540
  %v3987 = vsub.f32 %v3977, %v3985
  %v3988 = vsub.f32 %v3978, %v3986
  %v3989 = vmul.f32 %v3987, %v3987
  %v3990 = vmul.f32 %v3988, %v3988
  %3991 = vadd.xlane.f32.xlu0 %v3989
  %v3992 = vpop.xlane.xlu0 %3991
  %3993 = vadd.xlane.f32.xlu0 %v3990
  %v3994 = vpop.xlane.xlu0 %3993
  %v3995 = vmul.f32 %v3992, %v3540
  %v3996 = vmul.f32 %v3994, %v3540
  %v3997 = vadd.f32 %v3995, 1e-05
  %v3998 = vadd.f32 %v3996, 1e-05
  %v3999 = vrsqrt.pop %v3997
  %v4000 = vrsqrt.pop %v3998
  %v4001 = vmul.f32 %v3987, %v3999
  %v4002 = vmul.f32 %v3988, %v4000
  %v4004 = vlaneseq
  %v4005 = vshrl.u32 %v4004, 7
  %v4006 = vsub.s32 0, %v4005
  %v4007 = vrot.slane %v3979, %v4006
  %v4009 = vmul.f32 %v4001, %v4007
  %v4010 = vmul.f32 %v4002, %v4007
  %v4012 = vlaneseq
  %v4013 = vshrl.u32 %v4012, 7
  %v4014 = vsub.s32 0, %v4013
  %v4015 = vrot.slane %v3980, %v4014
  %v4017 = vadd.f32 %v4009, %v4015
  %v4018 = vadd.f32 %v4010, %v4015
  %v4019 = vld [vmem:[%s20] sm:$0x1]
  %v4020 = vld [vmem:[%s21] sm:$0x1]
  %4021 = vadd.xlane.f32.xlu0 %v4017
  %v4022 = vpop.xlane.xlu0 %4021
  %4023 = vadd.xlane.f32.xlu0 %v4018
  %v4024 = vpop.xlane.xlu0 %4023
  %v4025 = vmul.f32 %v4022, %v3540
  %v4026 = vmul.f32 %v4024, %v3540
  %v4027 = vsub.f32 %v4017, %v4025
  %v4028 = vsub.f32 %v4018, %v4026
  %v4029 = vmul.f32 %v4027, %v4027
  %v4030 = vmul.f32 %v4028, %v4028
  %4031 = vadd.xlane.f32.xlu0 %v4029
  %v4032 = vpop.xlane.xlu0 %4031
  %4033 = vadd.xlane.f32.xlu0 %v4030
  %v4034 = vpop.xlane.xlu0 %4033
  %v4035 = vmul.f32 %v4032, %v3540
  %v4036 = vmul.f32 %v4034, %v3540
  %v4037 = vadd.f32 %v4035, 1e-05
  %v4038 = vadd.f32 %v4036, 1e-05
  %v4039 = vrsqrt.pop %v4037
  %v4040 = vrsqrt.pop %v4038
  %v4041 = vmul.f32 %v4027, %v4039
  %v4042 = vmul.f32 %v4028, %v4040
  %v4044 = vlaneseq
  %v4045 = vshrl.u32 %v4044, 7
  %v4046 = vsub.s32 0, %v4045
  %v4047 = vrot.slane %v4019, %v4046
  %v4049 = vmul.f32 %v4041, %v4047
  %v4050 = vmul.f32 %v4042, %v4047
  %v4052 = vlaneseq
  %v4053 = vshrl.u32 %v4052, 7
  %v4054 = vsub.s32 0, %v4053
  %v4055 = vrot.slane %v4020, %v4054
  %v4057 = vadd.f32 %v4049, %v4055
  %v4058 = vadd.f32 %v4050, %v4055
  %v4059 = vrot.slane %v4057, 4
  %v4060 = vadd.f32 %v4057, %v4059
  %v4061 = vrot.slane %v4060, 2
  %v4062 = vadd.f32 %v4060, %v4061
  %v4063 = vrot.slane %v4062, 1
  %v4064 = vadd.f32 %v4062, %v4063
  %v4065 = vmul.f32 %v4064, %v493
  %v4066 = vrot.slane %v4058, 4
  %v4067 = vadd.f32 %v4058, %v4066
  %v4068 = vrot.slane %v4067, 2
  %v4069 = vadd.f32 %v4067, %v4068
  %v4070 = vrot.slane %v4069, 1
  %v4071 = vadd.f32 %v4069, %v4070
  %v4072 = vmul.f32 %v4071, %v493
  %vm4073 = vcmask 1040384
  %v4074 = vsel %vm4073, %v4065, %v4072
  %v4075 = vld [vmem:[%s22] sm:$0xff]
  %v4076 = vld [vmem:[%s22 + $0x8] sm:$0xff]
  %v4077 = vld [vmem:[%s22 + $0x10] sm:$0xff]
  %v4078 = vld [vmem:[%s22 + $0x18] sm:$0xff]
  %v4079 = vld [vmem:[%s22 + $0x20] sm:$0xff]
  %v4080 = vld [vmem:[%s22 + $0x28] sm:$0xff]
  %v4081 = vld [vmem:[%s22 + $0x30] sm:$0xff]
  %v4082 = vld [vmem:[%s22 + $0x38] sm:$0xff]
  %v4083 = vld [vmem:[%s22 + $0x40] sm:$0xff]
  %v4084 = vld [vmem:[%s22 + $0x48] sm:$0xff]
  %v4085 = vld [vmem:[%s22 + $0x50] sm:$0xff]
  %v4086 = vld [vmem:[%s22 + $0x58] sm:$0xff]
  %v4087 = vld [vmem:[%s22 + $0x60] sm:$0xff]
  %v4088 = vld [vmem:[%s22 + $0x68] sm:$0xff]
  %v4089 = vld [vmem:[%s22 + $0x70] sm:$0xff]
  %v4090 = vld [vmem:[%s22 + $0x78] sm:$0xff]
  %v4091 = vld [vmem:[%s23] sm:$0x1]
  %v4093 = vlaneseq
  %v4094 = vshrl.u32 %v4093, 7
  %v4095 = vsub.s32 0, %v4094
  %v4096 = vrot.slane %v4091, %v4095
  %4098 = vmatprep.subr.mxu0 0.0
  %4099 = vmatpush1.msra.mxu0 %v4075
  %4100 = vmatprep.subr.mxu0 0.0
  %4101 = vmatpush1.msra.mxu0 %v4076
  %4102 = vmatprep.subr.mxu0 0.0
  %4103 = vmatpush1.msra.mxu0 %v4077
  %4104 = vmatprep.subr.mxu0 0.0
  %4105 = vmatpush1.msra.mxu0 %v4078
  %4106 = vmatprep.subr.mxu0 0.0
  %4107 = vmatpush1.msra.mxu0 %v4079
  %4108 = vmatprep.subr.mxu0 0.0
  %4109 = vmatpush1.msra.mxu0 %v4080
  %4110 = vmatprep.subr.mxu0 0.0
  %4111 = vmatpush1.msra.mxu0 %v4081
  %4112 = vmatprep.subr.mxu0 0.0
  %4113 = vmatpush1.msra.mxu0 %v4082
  %4114 = vmatprep.subr.mxu0 0.0
  %4115 = vmatpush1.msra.mxu0 %v4083
  %4116 = vmatprep.subr.mxu0 0.0
  %4117 = vmatpush1.msra.mxu0 %v4084
  %4118 = vmatprep.subr.mxu0 0.0
  %4119 = vmatpush1.msra.mxu0 %v4085
  %4120 = vmatprep.subr.mxu0 0.0
  %4121 = vmatpush1.msra.mxu0 %v4086
  %4122 = vmatprep.subr.mxu0 0.0
  %4123 = vmatpush1.msra.mxu0 %v4087
  %4124 = vmatprep.subr.mxu0 0.0
  %4125 = vmatpush1.msra.mxu0 %v4088
  %4126 = vmatprep.subr.mxu0 0.0
  %4127 = vmatpush1.msra.mxu0 %v4089
  %4128 = vmatprep.subr.mxu0 0.0
  %4129 = vmatpush1.msra.mxu0 %v4090
  %4130 = vmatprep.subr.mxu0 0.0
  %4131 = vmatpush1.msra.mxu0 0.0
  %4132 = vmatprep.subr.mxu0 0.0
  %4133 = vmatpush1.msra.mxu0 0.0
  %4134 = vmatprep.subr.mxu0 0.0
  %4135 = vmatpush1.msra.mxu0 0.0
  %4136 = vmatprep.subr.mxu0 0.0
  %4137 = vmatpush1.msra.mxu0 0.0
  %4138 = vmatprep.subr.mxu0 0.0
  %4139 = vmatpush1.msra.mxu0 0.0
  %4140 = vmatprep.subr.mxu0 0.0
  %4141 = vmatpush1.msra.mxu0 0.0
  %4142 = vmatprep.subr.mxu0 0.0
  %4143 = vmatpush1.msra.mxu0 0.0
  %4144 = vmatprep.subr.mxu0 0.0
  %4145 = vmatpush1.msra.mxu0 0.0
  %4146 = vmatprep.subr.mxu0 0.0
  %4147 = vmatpush1.msra.mxu0 0.0
  %4148 = vmatprep.subr.mxu0 0.0
  %4149 = vmatpush1.msra.mxu0 0.0
  %4150 = vmatprep.subr.mxu0 0.0
  %4151 = vmatpush1.msra.mxu0 0.0
  %4152 = vmatprep.subr.mxu0 0.0
  %4153 = vmatpush1.msra.mxu0 0.0
  %4154 = vmatprep.subr.mxu0 0.0
  %4155 = vmatpush1.msra.mxu0 0.0
  %4156 = vmatprep.subr.mxu0 0.0
  %4157 = vmatpush1.msra.mxu0 0.0
  %4158 = vmatprep.subr.mxu0 0.0
  %4159 = vmatpush1.msra.mxu0 0.0
  %4160 = vmatprep.subr.mxu0 0.0
  %4161 = vmatpush1.msra.mxu0 0.0
  %4162 = vmatprep.mubr.f32.mxu0 0.0
  %4163 = vmatmul.mubr.f32.gmra.mrb[0].mxu0 %v4074
  %v4164 = vpop.f32.mrb[0].mxu0
  %v4165 = vadd.f32 %v4096, %v4164
  %v4166 = vpop.f32.mrb[0].mxu0
  %4167 = vdwg.mxu0
  %vm4168 = vcmask 25600
  %4169 = vst.msk [vmem:[%s24] sm:$0x3] %vm4168, %v4165
  // Predicated region
  $region98: #{esbn_trans_forward.7} parent=0 // pred_check
    _
  $region99: #{esbn_trans_forward.7} parent=0 // pred_check_branch
    %4171 = sbr.rel (0) target = $region101
  $region100: #{esbn_trans_forward.7} parent=0 // pred_region
    _
  $region101: #{esbn_trans_forward.7} parent=0 // pred_fallthru
    _
  // Predicated region
  $region102: #{esbn_trans_forward.7} parent=0 // pred_check
    _
  $region103: #{esbn_trans_forward.7} parent=0 // pred_check_branch
    %4173 = sbr.rel (0) target = $region105
  $region104: #{esbn_trans_forward.7} parent=0 // pred_region
    _
  $region105: #{esbn_trans_forward.7} parent=0 // pred_fallthru
    _

</llo_original>
